<compile_context>
chip_gen: v7x
topology: tpu7x:2x2x1
jax: 0.10.0
libtpu: 0.0.40
codegen_flags: <defaults>
</compile_context>

<pallas_src>
import jax
import jax.numpy as jnp
from jax.experimental import pallas as pl
from jax.experimental.pallas import tpu as pltpu

# ---------------------------------------------------------------- config -----
EMB_SIZE = 32
HIDDEN = 32
USER_NUM = 6
ITEM_NUM = 8
ATTR_NUM = 5
ENTITY = USER_NUM + ITEM_NUM + ATTR_NUM + 1          # +1 padding entity
PADDING_ID = ENTITY - 1
ATTR_ROWS = ENTITY - USER_NUM - ITEM_NUM             # attribute destinations (incl. padding row)


def _full_spec(shape):
    """Whole-array block at grid point 0 (all tensors are tiny; one VMEM tile)."""
    return pl.BlockSpec(shape, lambda i, _n=len(shape): (0,) * _n)


# ---------------------------------------------------------------- kernel -----
def _graph_encoder_kernel(
    emb_ref, af_ref, ai_ref, al_ref, ab_ref,
    wuc_ref, buc_ref, wbl_ref, bbl_ref,
    su_ref, si_ref, sa_ref,
    gnnw_ref, gnnb_ref,
    fcnw_ref, fcnb_ref, fc1w_ref, fc1b_ref,
    wih_ref, whh_ref, bih_ref, bhh_ref,
    eps_ref,
    xnb_ref, adj_ref, curoh_ref, curmask_ref, rejw_ref,
    seq_out_ref, mm_out_ref,
):
    f32 = jnp.float32
    H = HIDDEN
    slope = jnp.float32(0.2)

    def leaky(v):
        return jnp.where(v > 0, v, slope * v)

    def mm2(a, b):
        return jnp.dot(a, b, preferred_element_type=f32)

    # ---- hetero GCN (conv1): packed user-source support, fused LeakyReLU ----
    emb = emb_ref[...]
    h0_user = emb[:USER_NUM, :]
    h0_item = emb[USER_NUM:USER_NUM + ITEM_NUM, :]

    sup_u = mm2(h0_user, wuc_ref[...])                        # (U, 3H): [friends|interact|like]
    buc = buc_ref[...]                                        # (1, 3H)
    h_user = leaky(mm2(af_ref[...], sup_u[:, 0:H]) + buc[:, 0:H])
    h_item = leaky(mm2(ai_ref[...], sup_u[:, H:2 * H]) + buc[:, H:2 * H])
    h_like = mm2(al_ref[...], sup_u[:, 2 * H:3 * H]) + buc[:, 2 * H:3 * H]
    h_belong = mm2(ab_ref[...], mm2(h0_item, wbl_ref[...])) + bbl_ref[...]
    h_attr = leaky(0.5 * (h_like + h_belong))                 # aggregate='mean' over 2 relations

    # gnn_embedding (ENTITY, H) assembled via placement matmuls (no sublane concat)
    gnn_emb = (mm2(su_ref[...], h_user)
               + mm2(si_ref[...], h_item)
               + mm2(sa_ref[...], h_attr))

    eps = eps_ref[...]                                        # (1, 1) broadcast scalar
    one_m_eps = 1.0 - eps

    gnnw = gnnw_ref[...]
    gnnb = gnnb_ref[...]
    wih_r, wih_z, wih_n = wih_ref[0], wih_ref[1], wih_ref[2]  # gate-major (H, H) each
    whh_r, whh_z, whh_n = whh_ref[0], whh_ref[1], whh_ref[2]
    bih_r, bih_z, bih_n = bih_ref[0], bih_ref[1], bih_ref[2]  # (1, H) each
    bhh_r, bhh_z, bhh_n = bhh_ref[0], bhh_ref[1], bhh_ref[2]
    fc1w, fc1b = fc1w_ref[...], fc1b_ref[...]
    fcnw, fcnb = fcnw_ref[...], fcnb_ref[...]

    B = xnb_ref.shape[0]
    Lcur = curoh_ref.shape[1]

    for b in range(B):                                        # static unroll over batch states
        # ---- local GraphConvolution (layers=1): adj @ (x @ W) + b ----
        sup_b = mm2(xnb_ref[b], gnnw)                         # (Lnb, H)
        out_b = mm2(adj_ref[b], sup_b) + gnnb                 # (Lnb, H)

        # ---- seq embedding: (1-eps)*o[:len(cur)] + eps*gnn_emb[cur], zero-padded ----
        cur_b = mm2(curoh_ref[b], gnn_emb)                    # (Lcur, H)
        seq_b = curmask_ref[b] * (one_m_eps * out_b[:Lcur, :] + eps * cur_b)

        # ---- rejection embedding -> fc_neg (not used by the module output; kept for fidelity) ----
        rej_b = mm2(rejw_ref[b], gnn_emb)                     # (1, H)
        mm_out_ref[b] = jnp.maximum(mm2(rej_b, fcnw) + fcnb, 0.0)

        # ---- GRU (1 layer): hoisted input projection, gate-major, unrolled in time ----
        gi_r = mm2(seq_b, wih_r) + bih_r                      # (Lcur, H)
        gi_z = mm2(seq_b, wih_z) + bih_z
        gi_n = mm2(seq_b, wih_n) + bih_n
        h = jnp.zeros((1, H), f32)
        for t in range(Lcur):                                 # static unroll (small L)
            gh_r = mm2(h, whh_r) + bhh_r
            gh_z = mm2(h, whh_z) + bhh_z
            gh_n = mm2(h, whh_n) + bhh_n
            r = jax.nn.sigmoid(gi_r[t:t + 1, :] + gh_r)
            z = jax.nn.sigmoid(gi_z[t:t + 1, :] + gh_z)
            n = jnp.tanh(gi_n[t:t + 1, :] + r * gh_n)
            h = (1.0 - z) * n + z * h

        # ---- fc1 + ReLU on final hidden state ----
        seq_out_ref[b] = jnp.maximum(mm2(h, fc1w) + fc1b, 0.0)


# --------------------------------------------------------------- wrappers ----
def _fused_forward(prep, xnb, adj, curoh, curmask, rejw):
    B = xnb.shape[0]
    args = [
        prep["embedding"],
        prep["A_friends"], prep["A_interact"], prep["A_like"], prep["A_belong"],
        prep["W_user_cat"], prep["b_user_cat"], prep["W_belong"], prep["b_belong"],
        prep["S_user"], prep["S_item"], prep["S_attr"],
        prep["gnn_W"], prep["gnn_b"],
        prep["fc_neg_W"], prep["fc_neg_b"], prep["fc1_W"], prep["fc1_b"],
        prep["gru_wih"], prep["gru_whh"], prep["gru_bih"], prep["gru_bhh"],
        prep["eps"],
        xnb, adj, curoh, curmask, rejw,
    ]
    in_specs = [_full_spec(tuple(a.shape)) for a in args]
    out_shapes = (jax.ShapeDtypeStruct((B, 1, HIDDEN), jnp.float32),
                  jax.ShapeDtypeStruct((B, 1, HIDDEN), jnp.float32))
    out_specs = (_full_spec((B, 1, HIDDEN)), _full_spec((B, 1, HIDDEN)))
    seq_out, mm_out = pl.pallas_call(
        _graph_encoder_kernel,
        out_shape=out_shapes,
        grid=(1,),
        in_specs=in_specs,
        out_specs=out_specs,
        compiler_params=pltpu.CompilerParams(dimension_semantics=("arbitrary",)),
    )(*args)
    return seq_out, mm_out


def prepare_params(params):
    """One-time conversion to kernel-friendly layouts/dtypes (no per-forward casts)."""
    f32 = jnp.float32
    H = HIDDEN
    t = lambda x: jnp.asarray(x, f32)

    wih = t(params["gru_wih"])   # (3H, H), gate order [r | z | n] (PyTorch convention)
    whh = t(params["gru_whh"])
    bih = t(params["gru_bih"])   # (3H,)
    bhh = t(params["gru_bhh"])

    prep = {
        "embedding": t(params["embedding"]),
        "A_friends": t(params["A_friends"]),
        "A_interact": t(params["A_interact"]),
        "A_like": t(params["A_like"]),
        "A_belong": t(params["A_belong"]),
        # packed user-source relation weights: one (EMB, 3H) support matmul
        "W_user_cat": jnp.concatenate(
            [t(params["W_friends"]), t(params["W_interact"]), t(params["W_like"])], axis=1),
        "b_user_cat": jnp.concatenate(
            [t(params["b_friends"]), t(params["b_interact"]), t(params["b_like"])]).reshape(1, 3 * H),
        "W_belong": t(params["W_belong"]),
        "b_belong": t(params["b_belong"]).reshape(1, H),
        # placement matrices: gnn_embedding = S_u @ h_user + S_i @ h_item + S_a @ h_attr
        "S_user": jnp.eye(ENTITY, USER_NUM, dtype=f32),
        "S_item": jnp.eye(ENTITY, ITEM_NUM, k=-USER_NUM, dtype=f32),
        "S_attr": jnp.eye(ENTITY, ATTR_ROWS, k=-(USER_NUM + ITEM_NUM), dtype=f32),
        "gnn_W": t(params["gnn_W"]),
        "gnn_b": t(params["gnn_b"]).reshape(1, H),
        "fc_neg_W": t(params["fc_neg_W"]),
        "fc_neg_b": t(params["fc_neg_b"]).reshape(1, H),
        "fc1_W": t(params["fc1_W"]),
        "fc1_b": t(params["fc1_b"]).reshape(1, H),
        # GRU weights, gate-major + transposed for x @ W orientation
        "gru_wih": jnp.stack([wih[:H].T, wih[H:2 * H].T, wih[2 * H:].T], axis=0),   # (3, H, H)
        "gru_whh": jnp.stack([whh[:H].T, whh[H:2 * H].T, whh[2 * H:].T], axis=0),   # (3, H, H)
        "gru_bih": jnp.stack([bih[:H], bih[H:2 * H], bih[2 * H:]], axis=0).reshape(3, 1, H),
        "gru_bhh": jnp.stack([bhh[:H], bhh[H:2 * H], bhh[2 * H:]], axis=0).reshape(3, 1, H),
        "eps": t(params["eps"]).reshape(1, 1),
    }
    return prep


def graph_encoder_forward(prep, b_state):
    """Batch the variable-length states into padded tensors (plain JAX glue) and
    run the fused Pallas kernel once."""
    emb = prep["embedding"]
    B = len(b_state)
    Lnb = max(int(s["neighbors"].shape[1]) for s in b_state)
    Lcur = max(int(s["cur_node"].shape[0]) for s in b_state)

    xnb = jnp.zeros((B, Lnb, EMB_SIZE), jnp.float32)          # embedding(neighbors), padded
    adj = jnp.zeros((B, Lnb, Lnb), jnp.float32)               # per-state adjacency, padded
    curoh = jnp.zeros((B, Lcur, ENTITY), jnp.float32)         # one-hot(cur_node), padded
    curmask = jnp.zeros((B, Lcur, 1), jnp.float32)            # padding_seq zero mask
    rejw = jnp.zeros((B, 1, ENTITY), jnp.float32)             # mean weights for rej_item+rej_feature

    for i, s in enumerate(b_state):
        nb = s["neighbors"][0]
        ln = int(nb.shape[0])
        xnb = xnb.at[i, :ln, :].set(emb[nb])
        adj = adj.at[i, :ln, :ln].set(jnp.asarray(s["adj"], jnp.float32))
        lc = int(s["cur_node"].shape[0])
        curoh = curoh.at[i, :lc, :].set(jax.nn.one_hot(s["cur_node"], ENTITY, dtype=jnp.float32))
        curmask = curmask.at[i, :lc, :].set(1.0)
        w = jnp.zeros((ENTITY,), jnp.float32)
        nf = int(s["rej_feature"].shape[0])
        if nf > 0:
            w = w.at[s["rej_feature"]].add(1.0 / nf)
        ni = int(s["rej_item"].shape[0])
        if ni > 0:
            w = w.at[s["rej_item"]].add(1.0 / ni)
        rejw = rejw.at[i, 0, :].set(w)

    seq_out, _mm = _fused_forward(prep, xnb, adj, curoh, curmask, rejw)
    # user_em / interest_emb of the reference are not used by the returned value.
    return seq_out                                            # (B, 1, HIDDEN)


# ------------------------------------------------------------------ setup ----
def _row_normalize(a):
    return a / jnp.maximum(a.sum(axis=1, keepdims=True), 1e-6)


def make_params(key):
    ks = list(jax.random.split(key, 24))
    u = lambda k, shape, s=0.1: jax.random.uniform(k, shape, jnp.float32, -s, s)

    emb = u(ks[0], (ENTITY, EMB_SIZE), 0.5)
    emb = emb.at[PADDING_ID].set(0.0)   # padding_idx row is zero

    params = {
        "embedding": emb,
        "eps": jnp.float32(0.0),        # torch.nn.Parameter(torch.Tensor([0]))
        # HeteroGraphConv per-relation GraphConv weights (emb -> hidden)
        "W_friends": u(ks[1], (EMB_SIZE, HIDDEN)), "b_friends": u(ks[2], (HIDDEN,)),
        "W_interact": u(ks[3], (EMB_SIZE, HIDDEN)), "b_interact": u(ks[4], (HIDDEN,)),
        "W_like": u(ks[5], (EMB_SIZE, HIDDEN)), "b_like": u(ks[6], (HIDDEN,)),
        "W_belong": u(ks[7], (EMB_SIZE, HIDDEN)), "b_belong": u(ks[8], (HIDDEN,)),
        # local GraphConvolution (layers=1)
        "gnn_W": u(ks[9], (EMB_SIZE, HIDDEN)), "gnn_b": u(ks[10], (HIDDEN,)),
        # fc1 / fc_neg
        "fc1_W": u(ks[11], (HIDDEN, HIDDEN)), "fc1_b": u(ks[12], (HIDDEN,)),
        "fc_neg_W": u(ks[13], (HIDDEN, HIDDEN)), "fc_neg_b": u(ks[14], (HIDDEN,)),
        # GRU (1 layer, batch_first)
        "gru_wih": u(ks[15], (3 * HIDDEN, HIDDEN)), "gru_whh": u(ks[16], (3 * HIDDEN, HIDDEN)),
        "gru_bih": u(ks[17], (3 * HIDDEN,)), "gru_bhh": u(ks[18], (3 * HIDDEN,)),
        # dense normalized relation adjacencies of the hetero graph
        "A_friends": _row_normalize(jax.random.uniform(ks[19], (USER_NUM, USER_NUM))),
        "A_interact": _row_normalize(jax.random.uniform(ks[20], (ITEM_NUM, USER_NUM))),
        "A_like": _row_normalize(jax.random.uniform(ks[21], (ATTR_ROWS, USER_NUM))),
        "A_belong": _row_normalize(jax.random.uniform(ks[22], (ATTR_ROWS, ITEM_NUM))),
    }
    return params, ks[23]


def make_b_state(key):
    k0, k1, k2, k3 = jax.random.split(key, 4)
    neighbors0 = jax.random.randint(k0, (1, 10), 0, ENTITY)
    neighbors1 = jax.random.randint(k1, (1, 12), 0, ENTITY)
    adj0 = _row_normalize(jax.random.uniform(k2, (10, 10)))
    adj1 = _row_normalize(jax.random.uniform(k3, (12, 12)))
    state0 = {
        "neighbors": neighbors0, "adj": adj0,
        "cur_node": neighbors0[0, :4],
        "rej_feature": jnp.array([15, 16], jnp.int32),
        "rej_item": jnp.zeros((0,), jnp.int32),
        "user": jnp.array([2], jnp.int32),
    }
    state1 = {
        "neighbors": neighbors1, "adj": adj1,
        "cur_node": neighbors1[0, :6],
        "rej_feature": jnp.zeros((0,), jnp.int32),
        "rej_item": jnp.array([7, 8, 9], jnp.int32),
        "user": jnp.array([4], jnp.int32),
    }
    return [state0, state1]


if __name__ == "__main__":
    key = jax.random.PRNGKey(0)
    params, key = make_params(key)
    prep = prepare_params(params)
    b_state = make_b_state(key)

    out = graph_encoder_forward(prep, b_state)
    out = jax.block_until_ready(out)

    assert out.shape == (2, 1, HIDDEN), out.shape
    assert bool(jnp.all(jnp.isfinite(out)))
    print("KERNEL_OK")
</pallas_src>

<mosaic_0001>
module attributes {stable_mosaic.version = 11 : i64} {
  func.func @_graph_encoder_kernel(%arg0: i32, %arg1: memref<20x32xf32, #tpu.memory_space<vmem>>, %arg2: memref<6x6xf32, #tpu.memory_space<vmem>>, %arg3: memref<8x6xf32, #tpu.memory_space<vmem>>, %arg4: memref<6x6xf32, #tpu.memory_space<vmem>>, %arg5: memref<6x8xf32, #tpu.memory_space<vmem>>, %arg6: memref<32x96xf32, #tpu.memory_space<vmem>>, %arg7: memref<1x96xf32, #tpu.memory_space<vmem>>, %arg8: memref<32x32xf32, #tpu.memory_space<vmem>>, %arg9: memref<1x32xf32, #tpu.memory_space<vmem>>, %arg10: memref<20x6xf32, #tpu.memory_space<vmem>>, %arg11: memref<20x8xf32, #tpu.memory_space<vmem>>, %arg12: memref<20x6xf32, #tpu.memory_space<vmem>>, %arg13: memref<32x32xf32, #tpu.memory_space<vmem>>, %arg14: memref<1x32xf32, #tpu.memory_space<vmem>>, %arg15: memref<32x32xf32, #tpu.memory_space<vmem>>, %arg16: memref<1x32xf32, #tpu.memory_space<vmem>>, %arg17: memref<32x32xf32, #tpu.memory_space<vmem>>, %arg18: memref<1x32xf32, #tpu.memory_space<vmem>>, %arg19: memref<3x32x32xf32, #tpu.memory_space<vmem>>, %arg20: memref<3x32x32xf32, #tpu.memory_space<vmem>>, %arg21: memref<3x1x32xf32, #tpu.memory_space<vmem>>, %arg22: memref<3x1x32xf32, #tpu.memory_space<vmem>>, %arg23: memref<1x1xf32, #tpu.memory_space<vmem>>, %arg24: memref<2x12x32xf32, #tpu.memory_space<vmem>>, %arg25: memref<2x12x12xf32, #tpu.memory_space<vmem>>, %arg26: memref<2x6x20xf32, #tpu.memory_space<vmem>>, %arg27: memref<2x6x1xf32, #tpu.memory_space<vmem>>, %arg28: memref<2x1x20xf32, #tpu.memory_space<vmem>>, %arg29: memref<2x1x32xf32, #tpu.memory_space<vmem>>, %arg30: memref<2x1x32xf32, #tpu.memory_space<vmem>>) attributes {dimension_semantics = [#tpu.dimension_semantics<arbitrary>], iteration_bounds = array<i64: 1>, scalar_prefetch = 0 : i64, scratch_operands = 0 : i64, tpu.core_type = #tpu.core_type<tc>, window_params = [{pipeline_mode = #tpu.pipeline_mode<synchronous>, transform_indices = @transform_0, window_bounds = array<i64: 20, 32>}, {pipeline_mode = #tpu.pipeline_mode<synchronous>, transform_indices = @transform_1, window_bounds = array<i64: 6, 6>}, {pipeline_mode = #tpu.pipeline_mode<synchronous>, transform_indices = @transform_2, window_bounds = array<i64: 8, 6>}, {pipeline_mode = #tpu.pipeline_mode<synchronous>, transform_indices = @transform_3, window_bounds = array<i64: 6, 6>}, {pipeline_mode = #tpu.pipeline_mode<synchronous>, transform_indices = @transform_4, window_bounds = array<i64: 6, 8>}, {pipeline_mode = #tpu.pipeline_mode<synchronous>, transform_indices = @transform_5, window_bounds = array<i64: 32, 96>}, {pipeline_mode = #tpu.pipeline_mode<synchronous>, transform_indices = @transform_6, window_bounds = array<i64: 1, 96>}, {pipeline_mode = #tpu.pipeline_mode<synchronous>, transform_indices = @transform_7, window_bounds = array<i64: 32, 32>}, {pipeline_mode = #tpu.pipeline_mode<synchronous>, transform_indices = @transform_8, window_bounds = array<i64: 1, 32>}, {pipeline_mode = #tpu.pipeline_mode<synchronous>, transform_indices = @transform_9, window_bounds = array<i64: 20, 6>}, {pipeline_mode = #tpu.pipeline_mode<synchronous>, transform_indices = @transform_10, window_bounds = array<i64: 20, 8>}, {pipeline_mode = #tpu.pipeline_mode<synchronous>, transform_indices = @transform_11, window_bounds = array<i64: 20, 6>}, {pipeline_mode = #tpu.pipeline_mode<synchronous>, transform_indices = @transform_12, window_bounds = array<i64: 32, 32>}, {pipeline_mode = #tpu.pipeline_mode<synchronous>, transform_indices = @transform_13, window_bounds = array<i64: 1, 32>}, {pipeline_mode = #tpu.pipeline_mode<synchronous>, transform_indices = @transform_14, window_bounds = array<i64: 32, 32>}, {pipeline_mode = #tpu.pipeline_mode<synchronous>, transform_indices = @transform_15, window_bounds = array<i64: 1, 32>}, {pipeline_mode = #tpu.pipeline_mode<synchronous>, transform_indices = @transform_16, window_bounds = array<i64: 32, 32>}, {pipeline_mode = #tpu.pipeline_mode<synchronous>, transform_indices = @transform_17, window_bounds = array<i64: 1, 32>}, {pipeline_mode = #tpu.pipeline_mode<synchronous>, transform_indices = @transform_18, window_bounds = array<i64: 3, 32, 32>}, {pipeline_mode = #tpu.pipeline_mode<synchronous>, transform_indices = @transform_19, window_bounds = array<i64: 3, 32, 32>}, {pipeline_mode = #tpu.pipeline_mode<synchronous>, transform_indices = @transform_20, window_bounds = array<i64: 3, 1, 32>}, {pipeline_mode = #tpu.pipeline_mode<synchronous>, transform_indices = @transform_21, window_bounds = array<i64: 3, 1, 32>}, {pipeline_mode = #tpu.pipeline_mode<synchronous>, transform_indices = @transform_22, window_bounds = array<i64: 1, 1>}, {pipeline_mode = #tpu.pipeline_mode<synchronous>, transform_indices = @transform_23, window_bounds = array<i64: 2, 12, 32>}, {pipeline_mode = #tpu.pipeline_mode<synchronous>, transform_indices = @transform_24, window_bounds = array<i64: 2, 12, 12>}, {pipeline_mode = #tpu.pipeline_mode<synchronous>, transform_indices = @transform_25, window_bounds = array<i64: 2, 6, 20>}, {pipeline_mode = #tpu.pipeline_mode<synchronous>, transform_indices = @transform_26, window_bounds = array<i64: 2, 6, 1>}, {pipeline_mode = #tpu.pipeline_mode<synchronous>, transform_indices = @transform_27, window_bounds = array<i64: 2, 1, 20>}, {pipeline_mode = #tpu.pipeline_mode<synchronous>, transform_indices = @transform_28, window_bounds = array<i64: 2, 1, 32>}, {pipeline_mode = #tpu.pipeline_mode<synchronous>, transform_indices = @transform_29, window_bounds = array<i64: 2, 1, 32>}]} {
    %c0 = arith.constant 0 : index
    %c0_0 = arith.constant 0 : index
    %0 = vector.load %arg1[%c0, %c0_0] : memref<20x32xf32, #tpu.memory_space<vmem>>, vector<20x32xf32>
    %1 = vector.extract_strided_slice %0 {offsets = [0, 0], sizes = [6, 32], strides = [1, 1]} : vector<20x32xf32> to vector<6x32xf32>
    %2 = vector.extract_strided_slice %0 {offsets = [6, 0], sizes = [8, 32], strides = [1, 1]} : vector<20x32xf32> to vector<8x32xf32>
    %c0_1 = arith.constant 0 : index
    %c0_2 = arith.constant 0 : index
    %3 = vector.load %arg6[%c0_1, %c0_2] : memref<32x96xf32, #tpu.memory_space<vmem>>, vector<32x96xf32>
    %cst = arith.constant dense<0.000000e+00> : vector<6x96xf32>
    %4 = tpu.matmul %1, %3, %cst {dimension_numbers = #tpu.dot_dimension_numbers<[1], [0], [0], [1], [0, 0, 1, 1], [], []>} : vector<6x32xf32>, vector<32x96xf32>, vector<6x96xf32> -> vector<6x96xf32>
    %c0_3 = arith.constant 0 : index
    %c0_4 = arith.constant 0 : index
    %5 = vector.load %arg7[%c0_3, %c0_4] : memref<1x96xf32, #tpu.memory_space<vmem>>, vector<1x96xf32>
    %c0_5 = arith.constant 0 : index
    %c0_6 = arith.constant 0 : index
    %6 = vector.load %arg2[%c0_5, %c0_6] : memref<6x6xf32, #tpu.memory_space<vmem>>, vector<6x6xf32>
    %7 = vector.extract_strided_slice %4 {offsets = [0, 0], sizes = [6, 32], strides = [1, 1]} : vector<6x96xf32> to vector<6x32xf32>
    %cst_7 = arith.constant dense<0.000000e+00> : vector<6x32xf32>
    %8 = tpu.matmul %6, %7, %cst_7 {dimension_numbers = #tpu.dot_dimension_numbers<[1], [0], [0], [1], [0, 0, 1, 1], [], []>} : vector<6x6xf32>, vector<6x32xf32>, vector<6x32xf32> -> vector<6x32xf32>
    %9 = vector.extract_strided_slice %5 {offsets = [0, 0], sizes = [1, 32], strides = [1, 1]} : vector<1x96xf32> to vector<1x32xf32>
    %10 = vector.broadcast %9 : vector<1x32xf32> to vector<6x32xf32>
    %11 = arith.addf %8, %10 : vector<6x32xf32>
    %cst_8 = arith.constant 0.000000e+00 : f32
    %12 = vector.broadcast %cst_8 : f32 to vector<6x32xf32>
    %13 = arith.cmpf ogt, %11, %12 : vector<6x32xf32>
    %cst_9 = arith.constant 2.000000e-01 : f32
    %14 = vector.broadcast %cst_9 : f32 to vector<6x32xf32>
    %15 = arith.mulf %14, %11 : vector<6x32xf32>
    %16 = arith.select %13, %11, %15 : vector<6x32xi1>, vector<6x32xf32>
    %c0_10 = arith.constant 0 : index
    %c0_11 = arith.constant 0 : index
    %17 = vector.load %arg3[%c0_10, %c0_11] : memref<8x6xf32, #tpu.memory_space<vmem>>, vector<8x6xf32>
    %18 = vector.extract_strided_slice %4 {offsets = [0, 32], sizes = [6, 32], strides = [1, 1]} : vector<6x96xf32> to vector<6x32xf32>
    %cst_12 = arith.constant dense<0.000000e+00> : vector<8x32xf32>
    %19 = tpu.matmul %17, %18, %cst_12 {dimension_numbers = #tpu.dot_dimension_numbers<[1], [0], [0], [1], [0, 0, 1, 1], [], []>} : vector<8x6xf32>, vector<6x32xf32>, vector<8x32xf32> -> vector<8x32xf32>
    %20 = vector.extract_strided_slice %5 {offsets = [0, 32], sizes = [1, 32], strides = [1, 1]} : vector<1x96xf32> to vector<1x32xf32>
    %21 = vector.broadcast %20 : vector<1x32xf32> to vector<8x32xf32>
    %22 = arith.addf %19, %21 : vector<8x32xf32>
    %cst_13 = arith.constant 0.000000e+00 : f32
    %23 = vector.broadcast %cst_13 : f32 to vector<8x32xf32>
    %24 = arith.cmpf ogt, %22, %23 : vector<8x32xf32>
    %cst_14 = arith.constant 2.000000e-01 : f32
    %25 = vector.broadcast %cst_14 : f32 to vector<8x32xf32>
    %26 = arith.mulf %25, %22 : vector<8x32xf32>
    %27 = arith.select %24, %22, %26 : vector<8x32xi1>, vector<8x32xf32>
    %c0_15 = arith.constant 0 : index
    %c0_16 = arith.constant 0 : index
    %28 = vector.load %arg4[%c0_15, %c0_16] : memref<6x6xf32, #tpu.memory_space<vmem>>, vector<6x6xf32>
    %29 = vector.extract_strided_slice %4 {offsets = [0, 64], sizes = [6, 32], strides = [1, 1]} : vector<6x96xf32> to vector<6x32xf32>
    %cst_17 = arith.constant dense<0.000000e+00> : vector<6x32xf32>
    %30 = tpu.matmul %28, %29, %cst_17 {dimension_numbers = #tpu.dot_dimension_numbers<[1], [0], [0], [1], [0, 0, 1, 1], [], []>} : vector<6x6xf32>, vector<6x32xf32>, vector<6x32xf32> -> vector<6x32xf32>
    %31 = vector.extract_strided_slice %5 {offsets = [0, 64], sizes = [1, 32], strides = [1, 1]} : vector<1x96xf32> to vector<1x32xf32>
    %32 = vector.broadcast %31 : vector<1x32xf32> to vector<6x32xf32>
    %33 = arith.addf %30, %32 : vector<6x32xf32>
    %c0_18 = arith.constant 0 : index
    %c0_19 = arith.constant 0 : index
    %34 = vector.load %arg5[%c0_18, %c0_19] : memref<6x8xf32, #tpu.memory_space<vmem>>, vector<6x8xf32>
    %c0_20 = arith.constant 0 : index
    %c0_21 = arith.constant 0 : index
    %35 = vector.load %arg8[%c0_20, %c0_21] : memref<32x32xf32, #tpu.memory_space<vmem>>, vector<32x32xf32>
    %cst_22 = arith.constant dense<0.000000e+00> : vector<8x32xf32>
    %36 = tpu.matmul %2, %35, %cst_22 {dimension_numbers = #tpu.dot_dimension_numbers<[1], [0], [0], [1], [0, 0, 1, 1], [], []>} : vector<8x32xf32>, vector<32x32xf32>, vector<8x32xf32> -> vector<8x32xf32>
    %cst_23 = arith.constant dense<0.000000e+00> : vector<6x32xf32>
    %37 = tpu.matmul %34, %36, %cst_23 {dimension_numbers = #tpu.dot_dimension_numbers<[1], [0], [0], [1], [0, 0, 1, 1], [], []>} : vector<6x8xf32>, vector<8x32xf32>, vector<6x32xf32> -> vector<6x32xf32>
    %c0_24 = arith.constant 0 : index
    %c0_25 = arith.constant 0 : index
    %38 = vector.load %arg9[%c0_24, %c0_25] : memref<1x32xf32, #tpu.memory_space<vmem>>, vector<1x32xf32>
    %39 = vector.broadcast %38 : vector<1x32xf32> to vector<6x32xf32>
    %40 = arith.addf %37, %39 : vector<6x32xf32>
    %41 = arith.addf %33, %40 : vector<6x32xf32>
    %cst_26 = arith.constant 5.000000e-01 : f32
    %42 = vector.broadcast %cst_26 : f32 to vector<6x32xf32>
    %43 = arith.mulf %42, %41 : vector<6x32xf32>
    %cst_27 = arith.constant 0.000000e+00 : f32
    %44 = vector.broadcast %cst_27 : f32 to vector<6x32xf32>
    %45 = arith.cmpf ogt, %43, %44 : vector<6x32xf32>
    %cst_28 = arith.constant 2.000000e-01 : f32
    %46 = vector.broadcast %cst_28 : f32 to vector<6x32xf32>
    %47 = arith.mulf %46, %43 : vector<6x32xf32>
    %48 = arith.select %45, %43, %47 : vector<6x32xi1>, vector<6x32xf32>
    %c0_29 = arith.constant 0 : index
    %c0_30 = arith.constant 0 : index
    %49 = vector.load %arg10[%c0_29, %c0_30] : memref<20x6xf32, #tpu.memory_space<vmem>>, vector<20x6xf32>
    %cst_31 = arith.constant dense<0.000000e+00> : vector<20x32xf32>
    %50 = tpu.matmul %49, %16, %cst_31 {dimension_numbers = #tpu.dot_dimension_numbers<[1], [0], [0], [1], [0, 0, 1, 1], [], []>} : vector<20x6xf32>, vector<6x32xf32>, vector<20x32xf32> -> vector<20x32xf32>
    %c0_32 = arith.constant 0 : index
    %c0_33 = arith.constant 0 : index
    %51 = vector.load %arg11[%c0_32, %c0_33] : memref<20x8xf32, #tpu.memory_space<vmem>>, vector<20x8xf32>
    %cst_34 = arith.constant dense<0.000000e+00> : vector<20x32xf32>
    %52 = tpu.matmul %51, %27, %cst_34 {dimension_numbers = #tpu.dot_dimension_numbers<[1], [0], [0], [1], [0, 0, 1, 1], [], []>} : vector<20x8xf32>, vector<8x32xf32>, vector<20x32xf32> -> vector<20x32xf32>
    %53 = arith.addf %50, %52 : vector<20x32xf32>
    %c0_35 = arith.constant 0 : index
    %c0_36 = arith.constant 0 : index
    %54 = vector.load %arg12[%c0_35, %c0_36] : memref<20x6xf32, #tpu.memory_space<vmem>>, vector<20x6xf32>
    %cst_37 = arith.constant dense<0.000000e+00> : vector<20x32xf32>
    %55 = tpu.matmul %54, %48, %cst_37 {dimension_numbers = #tpu.dot_dimension_numbers<[1], [0], [0], [1], [0, 0, 1, 1], [], []>} : vector<20x6xf32>, vector<6x32xf32>, vector<20x32xf32> -> vector<20x32xf32>
    %56 = arith.addf %53, %55 : vector<20x32xf32>
    %c0_38 = arith.constant 0 : index
    %c0_39 = arith.constant 0 : index
    %57 = vector.load %arg23[%c0_38, %c0_39] : memref<1x1xf32, #tpu.memory_space<vmem>>, vector<1x1xf32>
    %cst_40 = arith.constant 1.000000e+00 : f32
    %58 = vector.broadcast %cst_40 : f32 to vector<1x1xf32>
    %59 = arith.subf %58, %57 : vector<1x1xf32>
    %c0_41 = arith.constant 0 : index
    %c0_42 = arith.constant 0 : index
    %60 = vector.load %arg13[%c0_41, %c0_42] : memref<32x32xf32, #tpu.memory_space<vmem>>, vector<32x32xf32>
    %c0_43 = arith.constant 0 : index
    %c0_44 = arith.constant 0 : index
    %61 = vector.load %arg14[%c0_43, %c0_44] : memref<1x32xf32, #tpu.memory_space<vmem>>, vector<1x32xf32>
    %c0_45 = arith.constant 0 : index
    %c0_46 = arith.constant 0 : index
    %c0_47 = arith.constant 0 : index
    %62 = vector.load %arg19[%c0_45, %c0_46, %c0_47] : memref<3x32x32xf32, #tpu.memory_space<vmem>>, vector<1x32x32xf32>
    %63 = vector.shape_cast %62 : vector<1x32x32xf32> to vector<32x32xf32>
    %c1 = arith.constant 1 : index
    %c0_48 = arith.constant 0 : index
    %c0_49 = arith.constant 0 : index
    %64 = vector.load %arg19[%c1, %c0_48, %c0_49] : memref<3x32x32xf32, #tpu.memory_space<vmem>>, vector<1x32x32xf32>
    %65 = vector.shape_cast %64 : vector<1x32x32xf32> to vector<32x32xf32>
    %c2 = arith.constant 2 : index
    %c0_50 = arith.constant 0 : index
    %c0_51 = arith.constant 0 : index
    %66 = vector.load %arg19[%c2, %c0_50, %c0_51] : memref<3x32x32xf32, #tpu.memory_space<vmem>>, vector<1x32x32xf32>
    %67 = vector.shape_cast %66 : vector<1x32x32xf32> to vector<32x32xf32>
    %c0_52 = arith.constant 0 : index
    %c0_53 = arith.constant 0 : index
    %c0_54 = arith.constant 0 : index
    %68 = vector.load %arg20[%c0_52, %c0_53, %c0_54] : memref<3x32x32xf32, #tpu.memory_space<vmem>>, vector<1x32x32xf32>
    %69 = vector.shape_cast %68 : vector<1x32x32xf32> to vector<32x32xf32>
    %c1_55 = arith.constant 1 : index
    %c0_56 = arith.constant 0 : index
    %c0_57 = arith.constant 0 : index
    %70 = vector.load %arg20[%c1_55, %c0_56, %c0_57] : memref<3x32x32xf32, #tpu.memory_space<vmem>>, vector<1x32x32xf32>
    %71 = vector.shape_cast %70 : vector<1x32x32xf32> to vector<32x32xf32>
    %c2_58 = arith.constant 2 : index
    %c0_59 = arith.constant 0 : index
    %c0_60 = arith.constant 0 : index
    %72 = vector.load %arg20[%c2_58, %c0_59, %c0_60] : memref<3x32x32xf32, #tpu.memory_space<vmem>>, vector<1x32x32xf32>
    %73 = vector.shape_cast %72 : vector<1x32x32xf32> to vector<32x32xf32>
    %c0_61 = arith.constant 0 : index
    %c0_62 = arith.constant 0 : index
    %c0_63 = arith.constant 0 : index
    %74 = vector.load %arg21[%c0_61, %c0_62, %c0_63] : memref<3x1x32xf32, #tpu.memory_space<vmem>>, vector<1x1x32xf32>
    %75 = vector.shape_cast %74 : vector<1x1x32xf32> to vector<1x32xf32>
    %c1_64 = arith.constant 1 : index
    %c0_65 = arith.constant 0 : index
    %c0_66 = arith.constant 0 : index
    %76 = vector.load %arg21[%c1_64, %c0_65, %c0_66] : memref<3x1x32xf32, #tpu.memory_space<vmem>>, vector<1x1x32xf32>
    %77 = vector.shape_cast %76 : vector<1x1x32xf32> to vector<1x32xf32>
    %c2_67 = arith.constant 2 : index
    %c0_68 = arith.constant 0 : index
    %c0_69 = arith.constant 0 : index
    %78 = vector.load %arg21[%c2_67, %c0_68, %c0_69] : memref<3x1x32xf32, #tpu.memory_space<vmem>>, vector<1x1x32xf32>
    %79 = vector.shape_cast %78 : vector<1x1x32xf32> to vector<1x32xf32>
    %c0_70 = arith.constant 0 : index
    %c0_71 = arith.constant 0 : index
    %c0_72 = arith.constant 0 : index
    %80 = vector.load %arg22[%c0_70, %c0_71, %c0_72] : memref<3x1x32xf32, #tpu.memory_space<vmem>>, vector<1x1x32xf32>
    %81 = vector.shape_cast %80 : vector<1x1x32xf32> to vector<1x32xf32>
    %c1_73 = arith.constant 1 : index
    %c0_74 = arith.constant 0 : index
    %c0_75 = arith.constant 0 : index
    %82 = vector.load %arg22[%c1_73, %c0_74, %c0_75] : memref<3x1x32xf32, #tpu.memory_space<vmem>>, vector<1x1x32xf32>
    %83 = vector.shape_cast %82 : vector<1x1x32xf32> to vector<1x32xf32>
    %c2_76 = arith.constant 2 : index
    %c0_77 = arith.constant 0 : index
    %c0_78 = arith.constant 0 : index
    %84 = vector.load %arg22[%c2_76, %c0_77, %c0_78] : memref<3x1x32xf32, #tpu.memory_space<vmem>>, vector<1x1x32xf32>
    %85 = vector.shape_cast %84 : vector<1x1x32xf32> to vector<1x32xf32>
    %c0_79 = arith.constant 0 : index
    %c0_80 = arith.constant 0 : index
    %86 = vector.load %arg17[%c0_79, %c0_80] : memref<32x32xf32, #tpu.memory_space<vmem>>, vector<32x32xf32>
    %c0_81 = arith.constant 0 : index
    %c0_82 = arith.constant 0 : index
    %87 = vector.load %arg18[%c0_81, %c0_82] : memref<1x32xf32, #tpu.memory_space<vmem>>, vector<1x32xf32>
    %c0_83 = arith.constant 0 : index
    %c0_84 = arith.constant 0 : index
    %88 = vector.load %arg15[%c0_83, %c0_84] : memref<32x32xf32, #tpu.memory_space<vmem>>, vector<32x32xf32>
    %c0_85 = arith.constant 0 : index
    %c0_86 = arith.constant 0 : index
    %89 = vector.load %arg16[%c0_85, %c0_86] : memref<1x32xf32, #tpu.memory_space<vmem>>, vector<1x32xf32>
    %c0_87 = arith.constant 0 : index
    %c0_88 = arith.constant 0 : index
    %c0_89 = arith.constant 0 : index
    %90 = vector.load %arg24[%c0_87, %c0_88, %c0_89] : memref<2x12x32xf32, #tpu.memory_space<vmem>>, vector<1x12x32xf32>
    %91 = vector.shape_cast %90 : vector<1x12x32xf32> to vector<12x32xf32>
    %cst_90 = arith.constant dense<0.000000e+00> : vector<12x32xf32>
    %92 = tpu.matmul %91, %60, %cst_90 {dimension_numbers = #tpu.dot_dimension_numbers<[1], [0], [0], [1], [0, 0, 1, 1], [], []>} : vector<12x32xf32>, vector<32x32xf32>, vector<12x32xf32> -> vector<12x32xf32>
    %c0_91 = arith.constant 0 : index
    %c0_92 = arith.constant 0 : index
    %c0_93 = arith.constant 0 : index
    %93 = vector.load %arg25[%c0_91, %c0_92, %c0_93] : memref<2x12x12xf32, #tpu.memory_space<vmem>>, vector<1x12x12xf32>
    %94 = vector.shape_cast %93 : vector<1x12x12xf32> to vector<12x12xf32>
    %cst_94 = arith.constant dense<0.000000e+00> : vector<12x32xf32>
    %95 = tpu.matmul %94, %92, %cst_94 {dimension_numbers = #tpu.dot_dimension_numbers<[1], [0], [0], [1], [0, 0, 1, 1], [], []>} : vector<12x12xf32>, vector<12x32xf32>, vector<12x32xf32> -> vector<12x32xf32>
    %96 = vector.broadcast %61 : vector<1x32xf32> to vector<12x32xf32>
    %97 = arith.addf %95, %96 : vector<12x32xf32>
    %c0_95 = arith.constant 0 : index
    %c0_96 = arith.constant 0 : index
    %c0_97 = arith.constant 0 : index
    %98 = vector.load %arg26[%c0_95, %c0_96, %c0_97] : memref<2x6x20xf32, #tpu.memory_space<vmem>>, vector<1x6x20xf32>
    %99 = vector.shape_cast %98 : vector<1x6x20xf32> to vector<6x20xf32>
    %cst_98 = arith.constant dense<0.000000e+00> : vector<6x32xf32>
    %100 = tpu.matmul %99, %56, %cst_98 {dimension_numbers = #tpu.dot_dimension_numbers<[1], [0], [0], [1], [0, 0, 1, 1], [], []>} : vector<6x20xf32>, vector<20x32xf32>, vector<6x32xf32> -> vector<6x32xf32>
    %c0_99 = arith.constant 0 : index
    %c0_100 = arith.constant 0 : index
    %c0_101 = arith.constant 0 : index
    %101 = vector.load %arg27[%c0_99, %c0_100, %c0_101] : memref<2x6x1xf32, #tpu.memory_space<vmem>>, vector<1x6x1xf32>
    %102 = vector.shape_cast %101 : vector<1x6x1xf32> to vector<6x1xf32>
    %103 = vector.extract_strided_slice %97 {offsets = [0, 0], sizes = [6, 32], strides = [1, 1]} : vector<12x32xf32> to vector<6x32xf32>
    %104 = vector.broadcast %59 : vector<1x1xf32> to vector<6x32xf32>
    %105 = arith.mulf %104, %103 : vector<6x32xf32>
    %106 = vector.broadcast %57 : vector<1x1xf32> to vector<6x32xf32>
    %107 = arith.mulf %106, %100 : vector<6x32xf32>
    %108 = arith.addf %105, %107 : vector<6x32xf32>
    %109 = vector.broadcast %102 : vector<6x1xf32> to vector<6x32xf32>
    %110 = arith.mulf %109, %108 : vector<6x32xf32>
    %c0_102 = arith.constant 0 : index
    %c0_103 = arith.constant 0 : index
    %c0_104 = arith.constant 0 : index
    %111 = vector.load %arg28[%c0_102, %c0_103, %c0_104] : memref<2x1x20xf32, #tpu.memory_space<vmem>>, vector<1x1x20xf32>
    %112 = vector.shape_cast %111 : vector<1x1x20xf32> to vector<1x20xf32>
    %cst_105 = arith.constant dense<0.000000e+00> : vector<1x32xf32>
    %113 = tpu.matmul %112, %56, %cst_105 {dimension_numbers = #tpu.dot_dimension_numbers<[1], [0], [0], [1], [0, 0, 1, 1], [], []>} : vector<1x20xf32>, vector<20x32xf32>, vector<1x32xf32> -> vector<1x32xf32>
    %cst_106 = arith.constant dense<0.000000e+00> : vector<1x32xf32>
    %114 = tpu.matmul %113, %88, %cst_106 {dimension_numbers = #tpu.dot_dimension_numbers<[1], [0], [0], [1], [0, 0, 1, 1], [], []>} : vector<1x32xf32>, vector<32x32xf32>, vector<1x32xf32> -> vector<1x32xf32>
    %115 = arith.addf %114, %89 : vector<1x32xf32>
    %cst_107 = arith.constant 0.000000e+00 : f32
    %116 = vector.broadcast %cst_107 : f32 to vector<1x32xf32>
    %117 = arith.maximumf %115, %116 : vector<1x32xf32>
    %c0_108 = arith.constant 0 : index
    %c0_109 = arith.constant 0 : index
    %c0_110 = arith.constant 0 : index
    %118 = vector.load %arg30[%c0_108, %c0_109, %c0_110] : memref<2x1x32xf32, #tpu.memory_space<vmem>>, vector<1x1x32xf32>
    %119 = vector.shape_cast %118 : vector<1x1x32xf32> to vector<1x32xf32>
    %120 = vector.shape_cast %117 : vector<1x32xf32> to vector<1x1x32xf32>
    tpu.vector_store %arg30[%c0_108, %c0_109, %c0_110], %120 {strides = array<i32>} : memref<2x1x32xf32, #tpu.memory_space<vmem>>, vector<1x1x32xf32>,
    %cst_111 = arith.constant dense<0.000000e+00> : vector<6x32xf32>
    %121 = tpu.matmul %110, %63, %cst_111 {dimension_numbers = #tpu.dot_dimension_numbers<[1], [0], [0], [1], [0, 0, 1, 1], [], []>} : vector<6x32xf32>, vector<32x32xf32>, vector<6x32xf32> -> vector<6x32xf32>
    %122 = vector.broadcast %75 : vector<1x32xf32> to vector<6x32xf32>
    %123 = arith.addf %121, %122 : vector<6x32xf32>
    %cst_112 = arith.constant dense<0.000000e+00> : vector<6x32xf32>
    %124 = tpu.matmul %110, %65, %cst_112 {dimension_numbers = #tpu.dot_dimension_numbers<[1], [0], [0], [1], [0, 0, 1, 1], [], []>} : vector<6x32xf32>, vector<32x32xf32>, vector<6x32xf32> -> vector<6x32xf32>
    %125 = vector.broadcast %77 : vector<1x32xf32> to vector<6x32xf32>
    %126 = arith.addf %124, %125 : vector<6x32xf32>
    %cst_113 = arith.constant dense<0.000000e+00> : vector<6x32xf32>
    %127 = tpu.matmul %110, %67, %cst_113 {dimension_numbers = #tpu.dot_dimension_numbers<[1], [0], [0], [1], [0, 0, 1, 1], [], []>} : vector<6x32xf32>, vector<32x32xf32>, vector<6x32xf32> -> vector<6x32xf32>
    %128 = vector.broadcast %79 : vector<1x32xf32> to vector<6x32xf32>
    %129 = arith.addf %127, %128 : vector<6x32xf32>
    %cst_114 = arith.constant 0.000000e+00 : f32
    %130 = vector.broadcast %cst_114 : f32 to vector<1x32xf32>
    %cst_115 = arith.constant dense<0.000000e+00> : vector<1x32xf32>
    %131 = tpu.matmul %130, %69, %cst_115 {dimension_numbers = #tpu.dot_dimension_numbers<[1], [0], [0], [1], [0, 0, 1, 1], [], []>} : vector<1x32xf32>, vector<32x32xf32>, vector<1x32xf32> -> vector<1x32xf32>
    %132 = arith.addf %131, %81 : vector<1x32xf32>
    %cst_116 = arith.constant dense<0.000000e+00> : vector<1x32xf32>
    %133 = tpu.matmul %130, %71, %cst_116 {dimension_numbers = #tpu.dot_dimension_numbers<[1], [0], [0], [1], [0, 0, 1, 1], [], []>} : vector<1x32xf32>, vector<32x32xf32>, vector<1x32xf32> -> vector<1x32xf32>
    %134 = arith.addf %133, %83 : vector<1x32xf32>
    %cst_117 = arith.constant dense<0.000000e+00> : vector<1x32xf32>
    %135 = tpu.matmul %130, %73, %cst_117 {dimension_numbers = #tpu.dot_dimension_numbers<[1], [0], [0], [1], [0, 0, 1, 1], [], []>} : vector<1x32xf32>, vector<32x32xf32>, vector<1x32xf32> -> vector<1x32xf32>
    %136 = arith.addf %135, %85 : vector<1x32xf32>
    %137 = vector.extract_strided_slice %123 {offsets = [0, 0], sizes = [1, 32], strides = [1, 1]} : vector<6x32xf32> to vector<1x32xf32>
    %138 = arith.addf %137, %132 : vector<1x32xf32>
    %139 = arith.negf %138 : vector<1x32xf32>
    %140 = math.exp %139 : vector<1x32xf32>
    %cst_118 = arith.constant 1.000000e+00 : f32
    %141 = vector.broadcast %cst_118 : f32 to vector<1x32xf32>
    %142 = arith.addf %141, %140 : vector<1x32xf32>
    %143 = arith.divf %141, %142 : vector<1x32xf32>
    %144 = vector.extract_strided_slice %126 {offsets = [0, 0], sizes = [1, 32], strides = [1, 1]} : vector<6x32xf32> to vector<1x32xf32>
    %145 = arith.addf %144, %134 : vector<1x32xf32>
    %146 = arith.negf %145 : vector<1x32xf32>
    %147 = math.exp %146 : vector<1x32xf32>
    %cst_119 = arith.constant 1.000000e+00 : f32
    %148 = vector.broadcast %cst_119 : f32 to vector<1x32xf32>
    %149 = arith.addf %148, %147 : vector<1x32xf32>
    %150 = arith.divf %148, %149 : vector<1x32xf32>
    %151 = vector.extract_strided_slice %129 {offsets = [0, 0], sizes = [1, 32], strides = [1, 1]} : vector<6x32xf32> to vector<1x32xf32>
    %152 = arith.mulf %143, %136 : vector<1x32xf32>
    %153 = arith.addf %151, %152 : vector<1x32xf32>
    %154 = math.tanh %153 : vector<1x32xf32>
    %cst_120 = arith.constant 1.000000e+00 : f32
    %155 = vector.broadcast %cst_120 : f32 to vector<1x32xf32>
    %156 = arith.subf %155, %150 : vector<1x32xf32>
    %157 = arith.mulf %156, %154 : vector<1x32xf32>
    %158 = arith.mulf %150, %130 : vector<1x32xf32>
    %159 = arith.addf %157, %158 : vector<1x32xf32>
    %cst_121 = arith.constant dense<0.000000e+00> : vector<1x32xf32>
    %160 = tpu.matmul %159, %69, %cst_121 {dimension_numbers = #tpu.dot_dimension_numbers<[1], [0], [0], [1], [0, 0, 1, 1], [], []>} : vector<1x32xf32>, vector<32x32xf32>, vector<1x32xf32> -> vector<1x32xf32>
    %161 = arith.addf %160, %81 : vector<1x32xf32>
    %cst_122 = arith.constant dense<0.000000e+00> : vector<1x32xf32>
    %162 = tpu.matmul %159, %71, %cst_122 {dimension_numbers = #tpu.dot_dimension_numbers<[1], [0], [0], [1], [0, 0, 1, 1], [], []>} : vector<1x32xf32>, vector<32x32xf32>, vector<1x32xf32> -> vector<1x32xf32>
    %163 = arith.addf %162, %83 : vector<1x32xf32>
    %cst_123 = arith.constant dense<0.000000e+00> : vector<1x32xf32>
    %164 = tpu.matmul %159, %73, %cst_123 {dimension_numbers = #tpu.dot_dimension_numbers<[1], [0], [0], [1], [0, 0, 1, 1], [], []>} : vector<1x32xf32>, vector<32x32xf32>, vector<1x32xf32> -> vector<1x32xf32>
    %165 = arith.addf %164, %85 : vector<1x32xf32>
    %166 = vector.extract_strided_slice %123 {offsets = [1, 0], sizes = [1, 32], strides = [1, 1]} : vector<6x32xf32> to vector<1x32xf32>
    %167 = arith.addf %166, %161 : vector<1x32xf32>
    %168 = arith.negf %167 : vector<1x32xf32>
    %169 = math.exp %168 : vector<1x32xf32>
    %cst_124 = arith.constant 1.000000e+00 : f32
    %170 = vector.broadcast %cst_124 : f32 to vector<1x32xf32>
    %171 = arith.addf %170, %169 : vector<1x32xf32>
    %172 = arith.divf %170, %171 : vector<1x32xf32>
    %173 = vector.extract_strided_slice %126 {offsets = [1, 0], sizes = [1, 32], strides = [1, 1]} : vector<6x32xf32> to vector<1x32xf32>
    %174 = arith.addf %173, %163 : vector<1x32xf32>
    %175 = arith.negf %174 : vector<1x32xf32>
    %176 = math.exp %175 : vector<1x32xf32>
    %cst_125 = arith.constant 1.000000e+00 : f32
    %177 = vector.broadcast %cst_125 : f32 to vector<1x32xf32>
    %178 = arith.addf %177, %176 : vector<1x32xf32>
    %179 = arith.divf %177, %178 : vector<1x32xf32>
    %180 = vector.extract_strided_slice %129 {offsets = [1, 0], sizes = [1, 32], strides = [1, 1]} : vector<6x32xf32> to vector<1x32xf32>
    %181 = arith.mulf %172, %165 : vector<1x32xf32>
    %182 = arith.addf %180, %181 : vector<1x32xf32>
    %183 = math.tanh %182 : vector<1x32xf32>
    %cst_126 = arith.constant 1.000000e+00 : f32
    %184 = vector.broadcast %cst_126 : f32 to vector<1x32xf32>
    %185 = arith.subf %184, %179 : vector<1x32xf32>
    %186 = arith.mulf %185, %183 : vector<1x32xf32>
    %187 = arith.mulf %179, %159 : vector<1x32xf32>
    %188 = arith.addf %186, %187 : vector<1x32xf32>
    %cst_127 = arith.constant dense<0.000000e+00> : vector<1x32xf32>
    %189 = tpu.matmul %188, %69, %cst_127 {dimension_numbers = #tpu.dot_dimension_numbers<[1], [0], [0], [1], [0, 0, 1, 1], [], []>} : vector<1x32xf32>, vector<32x32xf32>, vector<1x32xf32> -> vector<1x32xf32>
    %190 = arith.addf %189, %81 : vector<1x32xf32>
    %cst_128 = arith.constant dense<0.000000e+00> : vector<1x32xf32>
    %191 = tpu.matmul %188, %71, %cst_128 {dimension_numbers = #tpu.dot_dimension_numbers<[1], [0], [0], [1], [0, 0, 1, 1], [], []>} : vector<1x32xf32>, vector<32x32xf32>, vector<1x32xf32> -> vector<1x32xf32>
    %192 = arith.addf %191, %83 : vector<1x32xf32>
    %cst_129 = arith.constant dense<0.000000e+00> : vector<1x32xf32>
    %193 = tpu.matmul %188, %73, %cst_129 {dimension_numbers = #tpu.dot_dimension_numbers<[1], [0], [0], [1], [0, 0, 1, 1], [], []>} : vector<1x32xf32>, vector<32x32xf32>, vector<1x32xf32> -> vector<1x32xf32>
    %194 = arith.addf %193, %85 : vector<1x32xf32>
    %195 = vector.extract_strided_slice %123 {offsets = [2, 0], sizes = [1, 32], strides = [1, 1]} : vector<6x32xf32> to vector<1x32xf32>
    %196 = arith.addf %195, %190 : vector<1x32xf32>
    %197 = arith.negf %196 : vector<1x32xf32>
    %198 = math.exp %197 : vector<1x32xf32>
    %cst_130 = arith.constant 1.000000e+00 : f32
    %199 = vector.broadcast %cst_130 : f32 to vector<1x32xf32>
    %200 = arith.addf %199, %198 : vector<1x32xf32>
    %201 = arith.divf %199, %200 : vector<1x32xf32>
    %202 = vector.extract_strided_slice %126 {offsets = [2, 0], sizes = [1, 32], strides = [1, 1]} : vector<6x32xf32> to vector<1x32xf32>
    %203 = arith.addf %202, %192 : vector<1x32xf32>
    %204 = arith.negf %203 : vector<1x32xf32>
    %205 = math.exp %204 : vector<1x32xf32>
    %cst_131 = arith.constant 1.000000e+00 : f32
    %206 = vector.broadcast %cst_131 : f32 to vector<1x32xf32>
    %207 = arith.addf %206, %205 : vector<1x32xf32>
    %208 = arith.divf %206, %207 : vector<1x32xf32>
    %209 = vector.extract_strided_slice %129 {offsets = [2, 0], sizes = [1, 32], strides = [1, 1]} : vector<6x32xf32> to vector<1x32xf32>
    %210 = arith.mulf %201, %194 : vector<1x32xf32>
    %211 = arith.addf %209, %210 : vector<1x32xf32>
    %212 = math.tanh %211 : vector<1x32xf32>
    %cst_132 = arith.constant 1.000000e+00 : f32
    %213 = vector.broadcast %cst_132 : f32 to vector<1x32xf32>
    %214 = arith.subf %213, %208 : vector<1x32xf32>
    %215 = arith.mulf %214, %212 : vector<1x32xf32>
    %216 = arith.mulf %208, %188 : vector<1x32xf32>
    %217 = arith.addf %215, %216 : vector<1x32xf32>
    %cst_133 = arith.constant dense<0.000000e+00> : vector<1x32xf32>
    %218 = tpu.matmul %217, %69, %cst_133 {dimension_numbers = #tpu.dot_dimension_numbers<[1], [0], [0], [1], [0, 0, 1, 1], [], []>} : vector<1x32xf32>, vector<32x32xf32>, vector<1x32xf32> -> vector<1x32xf32>
    %219 = arith.addf %218, %81 : vector<1x32xf32>
    %cst_134 = arith.constant dense<0.000000e+00> : vector<1x32xf32>
    %220 = tpu.matmul %217, %71, %cst_134 {dimension_numbers = #tpu.dot_dimension_numbers<[1], [0], [0], [1], [0, 0, 1, 1], [], []>} : vector<1x32xf32>, vector<32x32xf32>, vector<1x32xf32> -> vector<1x32xf32>
    %221 = arith.addf %220, %83 : vector<1x32xf32>
    %cst_135 = arith.constant dense<0.000000e+00> : vector<1x32xf32>
    %222 = tpu.matmul %217, %73, %cst_135 {dimension_numbers = #tpu.dot_dimension_numbers<[1], [0], [0], [1], [0, 0, 1, 1], [], []>} : vector<1x32xf32>, vector<32x32xf32>, vector<1x32xf32> -> vector<1x32xf32>
    %223 = arith.addf %222, %85 : vector<1x32xf32>
    %224 = vector.extract_strided_slice %123 {offsets = [3, 0], sizes = [1, 32], strides = [1, 1]} : vector<6x32xf32> to vector<1x32xf32>
    %225 = arith.addf %224, %219 : vector<1x32xf32>
    %226 = arith.negf %225 : vector<1x32xf32>
    %227 = math.exp %226 : vector<1x32xf32>
    %cst_136 = arith.constant 1.000000e+00 : f32
    %228 = vector.broadcast %cst_136 : f32 to vector<1x32xf32>
    %229 = arith.addf %228, %227 : vector<1x32xf32>
    %230 = arith.divf %228, %229 : vector<1x32xf32>
    %231 = vector.extract_strided_slice %126 {offsets = [3, 0], sizes = [1, 32], strides = [1, 1]} : vector<6x32xf32> to vector<1x32xf32>
    %232 = arith.addf %231, %221 : vector<1x32xf32>
    %233 = arith.negf %232 : vector<1x32xf32>
    %234 = math.exp %233 : vector<1x32xf32>
    %cst_137 = arith.constant 1.000000e+00 : f32
    %235 = vector.broadcast %cst_137 : f32 to vector<1x32xf32>
    %236 = arith.addf %235, %234 : vector<1x32xf32>
    %237 = arith.divf %235, %236 : vector<1x32xf32>
    %238 = vector.extract_strided_slice %129 {offsets = [3, 0], sizes = [1, 32], strides = [1, 1]} : vector<6x32xf32> to vector<1x32xf32>
    %239 = arith.mulf %230, %223 : vector<1x32xf32>
    %240 = arith.addf %238, %239 : vector<1x32xf32>
    %241 = math.tanh %240 : vector<1x32xf32>
    %cst_138 = arith.constant 1.000000e+00 : f32
    %242 = vector.broadcast %cst_138 : f32 to vector<1x32xf32>
    %243 = arith.subf %242, %237 : vector<1x32xf32>
    %244 = arith.mulf %243, %241 : vector<1x32xf32>
    %245 = arith.mulf %237, %217 : vector<1x32xf32>
    %246 = arith.addf %244, %245 : vector<1x32xf32>
    %cst_139 = arith.constant dense<0.000000e+00> : vector<1x32xf32>
    %247 = tpu.matmul %246, %69, %cst_139 {dimension_numbers = #tpu.dot_dimension_numbers<[1], [0], [0], [1], [0, 0, 1, 1], [], []>} : vector<1x32xf32>, vector<32x32xf32>, vector<1x32xf32> -> vector<1x32xf32>
    %248 = arith.addf %247, %81 : vector<1x32xf32>
    %cst_140 = arith.constant dense<0.000000e+00> : vector<1x32xf32>
    %249 = tpu.matmul %246, %71, %cst_140 {dimension_numbers = #tpu.dot_dimension_numbers<[1], [0], [0], [1], [0, 0, 1, 1], [], []>} : vector<1x32xf32>, vector<32x32xf32>, vector<1x32xf32> -> vector<1x32xf32>
    %250 = arith.addf %249, %83 : vector<1x32xf32>
    %cst_141 = arith.constant dense<0.000000e+00> : vector<1x32xf32>
    %251 = tpu.matmul %246, %73, %cst_141 {dimension_numbers = #tpu.dot_dimension_numbers<[1], [0], [0], [1], [0, 0, 1, 1], [], []>} : vector<1x32xf32>, vector<32x32xf32>, vector<1x32xf32> -> vector<1x32xf32>
    %252 = arith.addf %251, %85 : vector<1x32xf32>
    %253 = vector.extract_strided_slice %123 {offsets = [4, 0], sizes = [1, 32], strides = [1, 1]} : vector<6x32xf32> to vector<1x32xf32>
    %254 = arith.addf %253, %248 : vector<1x32xf32>
    %255 = arith.negf %254 : vector<1x32xf32>
    %256 = math.exp %255 : vector<1x32xf32>
    %cst_142 = arith.constant 1.000000e+00 : f32
    %257 = vector.broadcast %cst_142 : f32 to vector<1x32xf32>
    %258 = arith.addf %257, %256 : vector<1x32xf32>
    %259 = arith.divf %257, %258 : vector<1x32xf32>
    %260 = vector.extract_strided_slice %126 {offsets = [4, 0], sizes = [1, 32], strides = [1, 1]} : vector<6x32xf32> to vector<1x32xf32>
    %261 = arith.addf %260, %250 : vector<1x32xf32>
    %262 = arith.negf %261 : vector<1x32xf32>
    %263 = math.exp %262 : vector<1x32xf32>
    %cst_143 = arith.constant 1.000000e+00 : f32
    %264 = vector.broadcast %cst_143 : f32 to vector<1x32xf32>
    %265 = arith.addf %264, %263 : vector<1x32xf32>
    %266 = arith.divf %264, %265 : vector<1x32xf32>
    %267 = vector.extract_strided_slice %129 {offsets = [4, 0], sizes = [1, 32], strides = [1, 1]} : vector<6x32xf32> to vector<1x32xf32>
    %268 = arith.mulf %259, %252 : vector<1x32xf32>
    %269 = arith.addf %267, %268 : vector<1x32xf32>
    %270 = math.tanh %269 : vector<1x32xf32>
    %cst_144 = arith.constant 1.000000e+00 : f32
    %271 = vector.broadcast %cst_144 : f32 to vector<1x32xf32>
    %272 = arith.subf %271, %266 : vector<1x32xf32>
    %273 = arith.mulf %272, %270 : vector<1x32xf32>
    %274 = arith.mulf %266, %246 : vector<1x32xf32>
    %275 = arith.addf %273, %274 : vector<1x32xf32>
    %cst_145 = arith.constant dense<0.000000e+00> : vector<1x32xf32>
    %276 = tpu.matmul %275, %69, %cst_145 {dimension_numbers = #tpu.dot_dimension_numbers<[1], [0], [0], [1], [0, 0, 1, 1], [], []>} : vector<1x32xf32>, vector<32x32xf32>, vector<1x32xf32> -> vector<1x32xf32>
    %277 = arith.addf %276, %81 : vector<1x32xf32>
    %cst_146 = arith.constant dense<0.000000e+00> : vector<1x32xf32>
    %278 = tpu.matmul %275, %71, %cst_146 {dimension_numbers = #tpu.dot_dimension_numbers<[1], [0], [0], [1], [0, 0, 1, 1], [], []>} : vector<1x32xf32>, vector<32x32xf32>, vector<1x32xf32> -> vector<1x32xf32>
    %279 = arith.addf %278, %83 : vector<1x32xf32>
    %cst_147 = arith.constant dense<0.000000e+00> : vector<1x32xf32>
    %280 = tpu.matmul %275, %73, %cst_147 {dimension_numbers = #tpu.dot_dimension_numbers<[1], [0], [0], [1], [0, 0, 1, 1], [], []>} : vector<1x32xf32>, vector<32x32xf32>, vector<1x32xf32> -> vector<1x32xf32>
    %281 = arith.addf %280, %85 : vector<1x32xf32>
    %282 = vector.extract_strided_slice %123 {offsets = [5, 0], sizes = [1, 32], strides = [1, 1]} : vector<6x32xf32> to vector<1x32xf32>
    %283 = arith.addf %282, %277 : vector<1x32xf32>
    %284 = arith.negf %283 : vector<1x32xf32>
    %285 = math.exp %284 : vector<1x32xf32>
    %cst_148 = arith.constant 1.000000e+00 : f32
    %286 = vector.broadcast %cst_148 : f32 to vector<1x32xf32>
    %287 = arith.addf %286, %285 : vector<1x32xf32>
    %288 = arith.divf %286, %287 : vector<1x32xf32>
    %289 = vector.extract_strided_slice %126 {offsets = [5, 0], sizes = [1, 32], strides = [1, 1]} : vector<6x32xf32> to vector<1x32xf32>
    %290 = arith.addf %289, %279 : vector<1x32xf32>
    %291 = arith.negf %290 : vector<1x32xf32>
    %292 = math.exp %291 : vector<1x32xf32>
    %cst_149 = arith.constant 1.000000e+00 : f32
    %293 = vector.broadcast %cst_149 : f32 to vector<1x32xf32>
    %294 = arith.addf %293, %292 : vector<1x32xf32>
    %295 = arith.divf %293, %294 : vector<1x32xf32>
    %296 = vector.extract_strided_slice %129 {offsets = [5, 0], sizes = [1, 32], strides = [1, 1]} : vector<6x32xf32> to vector<1x32xf32>
    %297 = arith.mulf %288, %281 : vector<1x32xf32>
    %298 = arith.addf %296, %297 : vector<1x32xf32>
    %299 = math.tanh %298 : vector<1x32xf32>
    %cst_150 = arith.constant 1.000000e+00 : f32
    %300 = vector.broadcast %cst_150 : f32 to vector<1x32xf32>
    %301 = arith.subf %300, %295 : vector<1x32xf32>
    %302 = arith.mulf %301, %299 : vector<1x32xf32>
    %303 = arith.mulf %295, %275 : vector<1x32xf32>
    %304 = arith.addf %302, %303 : vector<1x32xf32>
    %cst_151 = arith.constant dense<0.000000e+00> : vector<1x32xf32>
    %305 = tpu.matmul %304, %86, %cst_151 {dimension_numbers = #tpu.dot_dimension_numbers<[1], [0], [0], [1], [0, 0, 1, 1], [], []>} : vector<1x32xf32>, vector<32x32xf32>, vector<1x32xf32> -> vector<1x32xf32>
    %306 = arith.addf %305, %87 : vector<1x32xf32>
    %cst_152 = arith.constant 0.000000e+00 : f32
    %307 = vector.broadcast %cst_152 : f32 to vector<1x32xf32>
    %308 = arith.maximumf %306, %307 : vector<1x32xf32>
    %c0_153 = arith.constant 0 : index
    %c0_154 = arith.constant 0 : index
    %c0_155 = arith.constant 0 : index
    %309 = vector.load %arg29[%c0_153, %c0_154, %c0_155] : memref<2x1x32xf32, #tpu.memory_space<vmem>>, vector<1x1x32xf32>
    %310 = vector.shape_cast %309 : vector<1x1x32xf32> to vector<1x32xf32>
    %311 = vector.shape_cast %308 : vector<1x32xf32> to vector<1x1x32xf32>
    tpu.vector_store %arg29[%c0_153, %c0_154, %c0_155], %311 {strides = array<i32>} : memref<2x1x32xf32, #tpu.memory_space<vmem>>, vector<1x1x32xf32>,
    %c1_156 = arith.constant 1 : index
    %c0_157 = arith.constant 0 : index
    %c0_158 = arith.constant 0 : index
    %312 = vector.load %arg24[%c1_156, %c0_157, %c0_158] : memref<2x12x32xf32, #tpu.memory_space<vmem>>, vector<1x12x32xf32>
    %313 = vector.shape_cast %312 : vector<1x12x32xf32> to vector<12x32xf32>
    %cst_159 = arith.constant dense<0.000000e+00> : vector<12x32xf32>
    %314 = tpu.matmul %313, %60, %cst_159 {dimension_numbers = #tpu.dot_dimension_numbers<[1], [0], [0], [1], [0, 0, 1, 1], [], []>} : vector<12x32xf32>, vector<32x32xf32>, vector<12x32xf32> -> vector<12x32xf32>
    %c1_160 = arith.constant 1 : index
    %c0_161 = arith.constant 0 : index
    %c0_162 = arith.constant 0 : index
    %315 = vector.load %arg25[%c1_160, %c0_161, %c0_162] : memref<2x12x12xf32, #tpu.memory_space<vmem>>, vector<1x12x12xf32>
    %316 = vector.shape_cast %315 : vector<1x12x12xf32> to vector<12x12xf32>
    %cst_163 = arith.constant dense<0.000000e+00> : vector<12x32xf32>
    %317 = tpu.matmul %316, %314, %cst_163 {dimension_numbers = #tpu.dot_dimension_numbers<[1], [0], [0], [1], [0, 0, 1, 1], [], []>} : vector<12x12xf32>, vector<12x32xf32>, vector<12x32xf32> -> vector<12x32xf32>
    %318 = vector.broadcast %61 : vector<1x32xf32> to vector<12x32xf32>
    %319 = arith.addf %317, %318 : vector<12x32xf32>
    %c1_164 = arith.constant 1 : index
    %c0_165 = arith.constant 0 : index
    %c0_166 = arith.constant 0 : index
    %320 = vector.load %arg26[%c1_164, %c0_165, %c0_166] : memref<2x6x20xf32, #tpu.memory_space<vmem>>, vector<1x6x20xf32>
    %321 = vector.shape_cast %320 : vector<1x6x20xf32> to vector<6x20xf32>
    %cst_167 = arith.constant dense<0.000000e+00> : vector<6x32xf32>
    %322 = tpu.matmul %321, %56, %cst_167 {dimension_numbers = #tpu.dot_dimension_numbers<[1], [0], [0], [1], [0, 0, 1, 1], [], []>} : vector<6x20xf32>, vector<20x32xf32>, vector<6x32xf32> -> vector<6x32xf32>
    %c1_168 = arith.constant 1 : index
    %c0_169 = arith.constant 0 : index
    %c0_170 = arith.constant 0 : index
    %323 = vector.load %arg27[%c1_168, %c0_169, %c0_170] : memref<2x6x1xf32, #tpu.memory_space<vmem>>, vector<1x6x1xf32>
    %324 = vector.shape_cast %323 : vector<1x6x1xf32> to vector<6x1xf32>
    %325 = vector.extract_strided_slice %319 {offsets = [0, 0], sizes = [6, 32], strides = [1, 1]} : vector<12x32xf32> to vector<6x32xf32>
    %326 = vector.broadcast %59 : vector<1x1xf32> to vector<6x32xf32>
    %327 = arith.mulf %326, %325 : vector<6x32xf32>
    %328 = vector.broadcast %57 : vector<1x1xf32> to vector<6x32xf32>
    %329 = arith.mulf %328, %322 : vector<6x32xf32>
    %330 = arith.addf %327, %329 : vector<6x32xf32>
    %331 = vector.broadcast %324 : vector<6x1xf32> to vector<6x32xf32>
    %332 = arith.mulf %331, %330 : vector<6x32xf32>
    %c1_171 = arith.constant 1 : index
    %c0_172 = arith.constant 0 : index
    %c0_173 = arith.constant 0 : index
    %333 = vector.load %arg28[%c1_171, %c0_172, %c0_173] : memref<2x1x20xf32, #tpu.memory_space<vmem>>, vector<1x1x20xf32>
    %334 = vector.shape_cast %333 : vector<1x1x20xf32> to vector<1x20xf32>
    %cst_174 = arith.constant dense<0.000000e+00> : vector<1x32xf32>
    %335 = tpu.matmul %334, %56, %cst_174 {dimension_numbers = #tpu.dot_dimension_numbers<[1], [0], [0], [1], [0, 0, 1, 1], [], []>} : vector<1x20xf32>, vector<20x32xf32>, vector<1x32xf32> -> vector<1x32xf32>
    %cst_175 = arith.constant dense<0.000000e+00> : vector<1x32xf32>
    %336 = tpu.matmul %335, %88, %cst_175 {dimension_numbers = #tpu.dot_dimension_numbers<[1], [0], [0], [1], [0, 0, 1, 1], [], []>} : vector<1x32xf32>, vector<32x32xf32>, vector<1x32xf32> -> vector<1x32xf32>
    %337 = arith.addf %336, %89 : vector<1x32xf32>
    %cst_176 = arith.constant 0.000000e+00 : f32
    %338 = vector.broadcast %cst_176 : f32 to vector<1x32xf32>
    %339 = arith.maximumf %337, %338 : vector<1x32xf32>
    %c1_177 = arith.constant 1 : index
    %c0_178 = arith.constant 0 : index
    %c0_179 = arith.constant 0 : index
    %340 = vector.load %arg30[%c1_177, %c0_178, %c0_179] : memref<2x1x32xf32, #tpu.memory_space<vmem>>, vector<1x1x32xf32>
    %341 = vector.shape_cast %340 : vector<1x1x32xf32> to vector<1x32xf32>
    %342 = vector.shape_cast %339 : vector<1x32xf32> to vector<1x1x32xf32>
    tpu.vector_store %arg30[%c1_177, %c0_178, %c0_179], %342 {strides = array<i32>} : memref<2x1x32xf32, #tpu.memory_space<vmem>>, vector<1x1x32xf32>,
    %cst_180 = arith.constant dense<0.000000e+00> : vector<6x32xf32>
    %343 = tpu.matmul %332, %63, %cst_180 {dimension_numbers = #tpu.dot_dimension_numbers<[1], [0], [0], [1], [0, 0, 1, 1], [], []>} : vector<6x32xf32>, vector<32x32xf32>, vector<6x32xf32> -> vector<6x32xf32>
    %344 = vector.broadcast %75 : vector<1x32xf32> to vector<6x32xf32>
    %345 = arith.addf %343, %344 : vector<6x32xf32>
    %cst_181 = arith.constant dense<0.000000e+00> : vector<6x32xf32>
    %346 = tpu.matmul %332, %65, %cst_181 {dimension_numbers = #tpu.dot_dimension_numbers<[1], [0], [0], [1], [0, 0, 1, 1], [], []>} : vector<6x32xf32>, vector<32x32xf32>, vector<6x32xf32> -> vector<6x32xf32>
    %347 = vector.broadcast %77 : vector<1x32xf32> to vector<6x32xf32>
    %348 = arith.addf %346, %347 : vector<6x32xf32>
    %cst_182 = arith.constant dense<0.000000e+00> : vector<6x32xf32>
    %349 = tpu.matmul %332, %67, %cst_182 {dimension_numbers = #tpu.dot_dimension_numbers<[1], [0], [0], [1], [0, 0, 1, 1], [], []>} : vector<6x32xf32>, vector<32x32xf32>, vector<6x32xf32> -> vector<6x32xf32>
    %350 = vector.broadcast %79 : vector<1x32xf32> to vector<6x32xf32>
    %351 = arith.addf %349, %350 : vector<6x32xf32>
    %cst_183 = arith.constant 0.000000e+00 : f32
    %352 = vector.broadcast %cst_183 : f32 to vector<1x32xf32>
    %cst_184 = arith.constant dense<0.000000e+00> : vector<1x32xf32>
    %353 = tpu.matmul %352, %69, %cst_184 {dimension_numbers = #tpu.dot_dimension_numbers<[1], [0], [0], [1], [0, 0, 1, 1], [], []>} : vector<1x32xf32>, vector<32x32xf32>, vector<1x32xf32> -> vector<1x32xf32>
    %354 = arith.addf %353, %81 : vector<1x32xf32>
    %cst_185 = arith.constant dense<0.000000e+00> : vector<1x32xf32>
    %355 = tpu.matmul %352, %71, %cst_185 {dimension_numbers = #tpu.dot_dimension_numbers<[1], [0], [0], [1], [0, 0, 1, 1], [], []>} : vector<1x32xf32>, vector<32x32xf32>, vector<1x32xf32> -> vector<1x32xf32>
    %356 = arith.addf %355, %83 : vector<1x32xf32>
    %cst_186 = arith.constant dense<0.000000e+00> : vector<1x32xf32>
    %357 = tpu.matmul %352, %73, %cst_186 {dimension_numbers = #tpu.dot_dimension_numbers<[1], [0], [0], [1], [0, 0, 1, 1], [], []>} : vector<1x32xf32>, vector<32x32xf32>, vector<1x32xf32> -> vector<1x32xf32>
    %358 = arith.addf %357, %85 : vector<1x32xf32>
    %359 = vector.extract_strided_slice %345 {offsets = [0, 0], sizes = [1, 32], strides = [1, 1]} : vector<6x32xf32> to vector<1x32xf32>
    %360 = arith.addf %359, %354 : vector<1x32xf32>
    %361 = arith.negf %360 : vector<1x32xf32>
    %362 = math.exp %361 : vector<1x32xf32>
    %cst_187 = arith.constant 1.000000e+00 : f32
    %363 = vector.broadcast %cst_187 : f32 to vector<1x32xf32>
    %364 = arith.addf %363, %362 : vector<1x32xf32>
    %365 = arith.divf %363, %364 : vector<1x32xf32>
    %366 = vector.extract_strided_slice %348 {offsets = [0, 0], sizes = [1, 32], strides = [1, 1]} : vector<6x32xf32> to vector<1x32xf32>
    %367 = arith.addf %366, %356 : vector<1x32xf32>
    %368 = arith.negf %367 : vector<1x32xf32>
    %369 = math.exp %368 : vector<1x32xf32>
    %cst_188 = arith.constant 1.000000e+00 : f32
    %370 = vector.broadcast %cst_188 : f32 to vector<1x32xf32>
    %371 = arith.addf %370, %369 : vector<1x32xf32>
    %372 = arith.divf %370, %371 : vector<1x32xf32>
    %373 = vector.extract_strided_slice %351 {offsets = [0, 0], sizes = [1, 32], strides = [1, 1]} : vector<6x32xf32> to vector<1x32xf32>
    %374 = arith.mulf %365, %358 : vector<1x32xf32>
    %375 = arith.addf %373, %374 : vector<1x32xf32>
    %376 = math.tanh %375 : vector<1x32xf32>
    %cst_189 = arith.constant 1.000000e+00 : f32
    %377 = vector.broadcast %cst_189 : f32 to vector<1x32xf32>
    %378 = arith.subf %377, %372 : vector<1x32xf32>
    %379 = arith.mulf %378, %376 : vector<1x32xf32>
    %380 = arith.mulf %372, %352 : vector<1x32xf32>
    %381 = arith.addf %379, %380 : vector<1x32xf32>
    %cst_190 = arith.constant dense<0.000000e+00> : vector<1x32xf32>
    %382 = tpu.matmul %381, %69, %cst_190 {dimension_numbers = #tpu.dot_dimension_numbers<[1], [0], [0], [1], [0, 0, 1, 1], [], []>} : vector<1x32xf32>, vector<32x32xf32>, vector<1x32xf32> -> vector<1x32xf32>
    %383 = arith.addf %382, %81 : vector<1x32xf32>
    %cst_191 = arith.constant dense<0.000000e+00> : vector<1x32xf32>
    %384 = tpu.matmul %381, %71, %cst_191 {dimension_numbers = #tpu.dot_dimension_numbers<[1], [0], [0], [1], [0, 0, 1, 1], [], []>} : vector<1x32xf32>, vector<32x32xf32>, vector<1x32xf32> -> vector<1x32xf32>
    %385 = arith.addf %384, %83 : vector<1x32xf32>
    %cst_192 = arith.constant dense<0.000000e+00> : vector<1x32xf32>
    %386 = tpu.matmul %381, %73, %cst_192 {dimension_numbers = #tpu.dot_dimension_numbers<[1], [0], [0], [1], [0, 0, 1, 1], [], []>} : vector<1x32xf32>, vector<32x32xf32>, vector<1x32xf32> -> vector<1x32xf32>
    %387 = arith.addf %386, %85 : vector<1x32xf32>
    %388 = vector.extract_strided_slice %345 {offsets = [1, 0], sizes = [1, 32], strides = [1, 1]} : vector<6x32xf32> to vector<1x32xf32>
    %389 = arith.addf %388, %383 : vector<1x32xf32>
    %390 = arith.negf %389 : vector<1x32xf32>
    %391 = math.exp %390 : vector<1x32xf32>
    %cst_193 = arith.constant 1.000000e+00 : f32
    %392 = vector.broadcast %cst_193 : f32 to vector<1x32xf32>
    %393 = arith.addf %392, %391 : vector<1x32xf32>
    %394 = arith.divf %392, %393 : vector<1x32xf32>
    %395 = vector.extract_strided_slice %348 {offsets = [1, 0], sizes = [1, 32], strides = [1, 1]} : vector<6x32xf32> to vector<1x32xf32>
    %396 = arith.addf %395, %385 : vector<1x32xf32>
    %397 = arith.negf %396 : vector<1x32xf32>
    %398 = math.exp %397 : vector<1x32xf32>
    %cst_194 = arith.constant 1.000000e+00 : f32
    %399 = vector.broadcast %cst_194 : f32 to vector<1x32xf32>
    %400 = arith.addf %399, %398 : vector<1x32xf32>
    %401 = arith.divf %399, %400 : vector<1x32xf32>
    %402 = vector.extract_strided_slice %351 {offsets = [1, 0], sizes = [1, 32], strides = [1, 1]} : vector<6x32xf32> to vector<1x32xf32>
    %403 = arith.mulf %394, %387 : vector<1x32xf32>
    %404 = arith.addf %402, %403 : vector<1x32xf32>
    %405 = math.tanh %404 : vector<1x32xf32>
    %cst_195 = arith.constant 1.000000e+00 : f32
    %406 = vector.broadcast %cst_195 : f32 to vector<1x32xf32>
    %407 = arith.subf %406, %401 : vector<1x32xf32>
    %408 = arith.mulf %407, %405 : vector<1x32xf32>
    %409 = arith.mulf %401, %381 : vector<1x32xf32>
    %410 = arith.addf %408, %409 : vector<1x32xf32>
    %cst_196 = arith.constant dense<0.000000e+00> : vector<1x32xf32>
    %411 = tpu.matmul %410, %69, %cst_196 {dimension_numbers = #tpu.dot_dimension_numbers<[1], [0], [0], [1], [0, 0, 1, 1], [], []>} : vector<1x32xf32>, vector<32x32xf32>, vector<1x32xf32> -> vector<1x32xf32>
    %412 = arith.addf %411, %81 : vector<1x32xf32>
    %cst_197 = arith.constant dense<0.000000e+00> : vector<1x32xf32>
    %413 = tpu.matmul %410, %71, %cst_197 {dimension_numbers = #tpu.dot_dimension_numbers<[1], [0], [0], [1], [0, 0, 1, 1], [], []>} : vector<1x32xf32>, vector<32x32xf32>, vector<1x32xf32> -> vector<1x32xf32>
    %414 = arith.addf %413, %83 : vector<1x32xf32>
    %cst_198 = arith.constant dense<0.000000e+00> : vector<1x32xf32>
    %415 = tpu.matmul %410, %73, %cst_198 {dimension_numbers = #tpu.dot_dimension_numbers<[1], [0], [0], [1], [0, 0, 1, 1], [], []>} : vector<1x32xf32>, vector<32x32xf32>, vector<1x32xf32> -> vector<1x32xf32>
    %416 = arith.addf %415, %85 : vector<1x32xf32>
    %417 = vector.extract_strided_slice %345 {offsets = [2, 0], sizes = [1, 32], strides = [1, 1]} : vector<6x32xf32> to vector<1x32xf32>
    %418 = arith.addf %417, %412 : vector<1x32xf32>
    %419 = arith.negf %418 : vector<1x32xf32>
    %420 = math.exp %419 : vector<1x32xf32>
    %cst_199 = arith.constant 1.000000e+00 : f32
    %421 = vector.broadcast %cst_199 : f32 to vector<1x32xf32>
    %422 = arith.addf %421, %420 : vector<1x32xf32>
    %423 = arith.divf %421, %422 : vector<1x32xf32>
    %424 = vector.extract_strided_slice %348 {offsets = [2, 0], sizes = [1, 32], strides = [1, 1]} : vector<6x32xf32> to vector<1x32xf32>
    %425 = arith.addf %424, %414 : vector<1x32xf32>
    %426 = arith.negf %425 : vector<1x32xf32>
    %427 = math.exp %426 : vector<1x32xf32>
    %cst_200 = arith.constant 1.000000e+00 : f32
    %428 = vector.broadcast %cst_200 : f32 to vector<1x32xf32>
    %429 = arith.addf %428, %427 : vector<1x32xf32>
    %430 = arith.divf %428, %429 : vector<1x32xf32>
    %431 = vector.extract_strided_slice %351 {offsets = [2, 0], sizes = [1, 32], strides = [1, 1]} : vector<6x32xf32> to vector<1x32xf32>
    %432 = arith.mulf %423, %416 : vector<1x32xf32>
    %433 = arith.addf %431, %432 : vector<1x32xf32>
    %434 = math.tanh %433 : vector<1x32xf32>
    %cst_201 = arith.constant 1.000000e+00 : f32
    %435 = vector.broadcast %cst_201 : f32 to vector<1x32xf32>
    %436 = arith.subf %435, %430 : vector<1x32xf32>
    %437 = arith.mulf %436, %434 : vector<1x32xf32>
    %438 = arith.mulf %430, %410 : vector<1x32xf32>
    %439 = arith.addf %437, %438 : vector<1x32xf32>
    %cst_202 = arith.constant dense<0.000000e+00> : vector<1x32xf32>
    %440 = tpu.matmul %439, %69, %cst_202 {dimension_numbers = #tpu.dot_dimension_numbers<[1], [0], [0], [1], [0, 0, 1, 1], [], []>} : vector<1x32xf32>, vector<32x32xf32>, vector<1x32xf32> -> vector<1x32xf32>
    %441 = arith.addf %440, %81 : vector<1x32xf32>
    %cst_203 = arith.constant dense<0.000000e+00> : vector<1x32xf32>
    %442 = tpu.matmul %439, %71, %cst_203 {dimension_numbers = #tpu.dot_dimension_numbers<[1], [0], [0], [1], [0, 0, 1, 1], [], []>} : vector<1x32xf32>, vector<32x32xf32>, vector<1x32xf32> -> vector<1x32xf32>
    %443 = arith.addf %442, %83 : vector<1x32xf32>
    %cst_204 = arith.constant dense<0.000000e+00> : vector<1x32xf32>
    %444 = tpu.matmul %439, %73, %cst_204 {dimension_numbers = #tpu.dot_dimension_numbers<[1], [0], [0], [1], [0, 0, 1, 1], [], []>} : vector<1x32xf32>, vector<32x32xf32>, vector<1x32xf32> -> vector<1x32xf32>
    %445 = arith.addf %444, %85 : vector<1x32xf32>
    %446 = vector.extract_strided_slice %345 {offsets = [3, 0], sizes = [1, 32], strides = [1, 1]} : vector<6x32xf32> to vector<1x32xf32>
    %447 = arith.addf %446, %441 : vector<1x32xf32>
    %448 = arith.negf %447 : vector<1x32xf32>
    %449 = math.exp %448 : vector<1x32xf32>
    %cst_205 = arith.constant 1.000000e+00 : f32
    %450 = vector.broadcast %cst_205 : f32 to vector<1x32xf32>
    %451 = arith.addf %450, %449 : vector<1x32xf32>
    %452 = arith.divf %450, %451 : vector<1x32xf32>
    %453 = vector.extract_strided_slice %348 {offsets = [3, 0], sizes = [1, 32], strides = [1, 1]} : vector<6x32xf32> to vector<1x32xf32>
    %454 = arith.addf %453, %443 : vector<1x32xf32>
    %455 = arith.negf %454 : vector<1x32xf32>
    %456 = math.exp %455 : vector<1x32xf32>
    %cst_206 = arith.constant 1.000000e+00 : f32
    %457 = vector.broadcast %cst_206 : f32 to vector<1x32xf32>
    %458 = arith.addf %457, %456 : vector<1x32xf32>
    %459 = arith.divf %457, %458 : vector<1x32xf32>
    %460 = vector.extract_strided_slice %351 {offsets = [3, 0], sizes = [1, 32], strides = [1, 1]} : vector<6x32xf32> to vector<1x32xf32>
    %461 = arith.mulf %452, %445 : vector<1x32xf32>
    %462 = arith.addf %460, %461 : vector<1x32xf32>
    %463 = math.tanh %462 : vector<1x32xf32>
    %cst_207 = arith.constant 1.000000e+00 : f32
    %464 = vector.broadcast %cst_207 : f32 to vector<1x32xf32>
    %465 = arith.subf %464, %459 : vector<1x32xf32>
    %466 = arith.mulf %465, %463 : vector<1x32xf32>
    %467 = arith.mulf %459, %439 : vector<1x32xf32>
    %468 = arith.addf %466, %467 : vector<1x32xf32>
    %cst_208 = arith.constant dense<0.000000e+00> : vector<1x32xf32>
    %469 = tpu.matmul %468, %69, %cst_208 {dimension_numbers = #tpu.dot_dimension_numbers<[1], [0], [0], [1], [0, 0, 1, 1], [], []>} : vector<1x32xf32>, vector<32x32xf32>, vector<1x32xf32> -> vector<1x32xf32>
    %470 = arith.addf %469, %81 : vector<1x32xf32>
    %cst_209 = arith.constant dense<0.000000e+00> : vector<1x32xf32>
    %471 = tpu.matmul %468, %71, %cst_209 {dimension_numbers = #tpu.dot_dimension_numbers<[1], [0], [0], [1], [0, 0, 1, 1], [], []>} : vector<1x32xf32>, vector<32x32xf32>, vector<1x32xf32> -> vector<1x32xf32>
    %472 = arith.addf %471, %83 : vector<1x32xf32>
    %cst_210 = arith.constant dense<0.000000e+00> : vector<1x32xf32>
    %473 = tpu.matmul %468, %73, %cst_210 {dimension_numbers = #tpu.dot_dimension_numbers<[1], [0], [0], [1], [0, 0, 1, 1], [], []>} : vector<1x32xf32>, vector<32x32xf32>, vector<1x32xf32> -> vector<1x32xf32>
    %474 = arith.addf %473, %85 : vector<1x32xf32>
    %475 = vector.extract_strided_slice %345 {offsets = [4, 0], sizes = [1, 32], strides = [1, 1]} : vector<6x32xf32> to vector<1x32xf32>
    %476 = arith.addf %475, %470 : vector<1x32xf32>
    %477 = arith.negf %476 : vector<1x32xf32>
    %478 = math.exp %477 : vector<1x32xf32>
    %cst_211 = arith.constant 1.000000e+00 : f32
    %479 = vector.broadcast %cst_211 : f32 to vector<1x32xf32>
    %480 = arith.addf %479, %478 : vector<1x32xf32>
    %481 = arith.divf %479, %480 : vector<1x32xf32>
    %482 = vector.extract_strided_slice %348 {offsets = [4, 0], sizes = [1, 32], strides = [1, 1]} : vector<6x32xf32> to vector<1x32xf32>
    %483 = arith.addf %482, %472 : vector<1x32xf32>
    %484 = arith.negf %483 : vector<1x32xf32>
    %485 = math.exp %484 : vector<1x32xf32>
    %cst_212 = arith.constant 1.000000e+00 : f32
    %486 = vector.broadcast %cst_212 : f32 to vector<1x32xf32>
    %487 = arith.addf %486, %485 : vector<1x32xf32>
    %488 = arith.divf %486, %487 : vector<1x32xf32>
    %489 = vector.extract_strided_slice %351 {offsets = [4, 0], sizes = [1, 32], strides = [1, 1]} : vector<6x32xf32> to vector<1x32xf32>
    %490 = arith.mulf %481, %474 : vector<1x32xf32>
    %491 = arith.addf %489, %490 : vector<1x32xf32>
    %492 = math.tanh %491 : vector<1x32xf32>
    %cst_213 = arith.constant 1.000000e+00 : f32
    %493 = vector.broadcast %cst_213 : f32 to vector<1x32xf32>
    %494 = arith.subf %493, %488 : vector<1x32xf32>
    %495 = arith.mulf %494, %492 : vector<1x32xf32>
    %496 = arith.mulf %488, %468 : vector<1x32xf32>
    %497 = arith.addf %495, %496 : vector<1x32xf32>
    %cst_214 = arith.constant dense<0.000000e+00> : vector<1x32xf32>
    %498 = tpu.matmul %497, %69, %cst_214 {dimension_numbers = #tpu.dot_dimension_numbers<[1], [0], [0], [1], [0, 0, 1, 1], [], []>} : vector<1x32xf32>, vector<32x32xf32>, vector<1x32xf32> -> vector<1x32xf32>
    %499 = arith.addf %498, %81 : vector<1x32xf32>
    %cst_215 = arith.constant dense<0.000000e+00> : vector<1x32xf32>
    %500 = tpu.matmul %497, %71, %cst_215 {dimension_numbers = #tpu.dot_dimension_numbers<[1], [0], [0], [1], [0, 0, 1, 1], [], []>} : vector<1x32xf32>, vector<32x32xf32>, vector<1x32xf32> -> vector<1x32xf32>
    %501 = arith.addf %500, %83 : vector<1x32xf32>
    %cst_216 = arith.constant dense<0.000000e+00> : vector<1x32xf32>
    %502 = tpu.matmul %497, %73, %cst_216 {dimension_numbers = #tpu.dot_dimension_numbers<[1], [0], [0], [1], [0, 0, 1, 1], [], []>} : vector<1x32xf32>, vector<32x32xf32>, vector<1x32xf32> -> vector<1x32xf32>
    %503 = arith.addf %502, %85 : vector<1x32xf32>
    %504 = vector.extract_strided_slice %345 {offsets = [5, 0], sizes = [1, 32], strides = [1, 1]} : vector<6x32xf32> to vector<1x32xf32>
    %505 = arith.addf %504, %499 : vector<1x32xf32>
    %506 = arith.negf %505 : vector<1x32xf32>
    %507 = math.exp %506 : vector<1x32xf32>
    %cst_217 = arith.constant 1.000000e+00 : f32
    %508 = vector.broadcast %cst_217 : f32 to vector<1x32xf32>
    %509 = arith.addf %508, %507 : vector<1x32xf32>
    %510 = arith.divf %508, %509 : vector<1x32xf32>
    %511 = vector.extract_strided_slice %348 {offsets = [5, 0], sizes = [1, 32], strides = [1, 1]} : vector<6x32xf32> to vector<1x32xf32>
    %512 = arith.addf %511, %501 : vector<1x32xf32>
    %513 = arith.negf %512 : vector<1x32xf32>
    %514 = math.exp %513 : vector<1x32xf32>
    %cst_218 = arith.constant 1.000000e+00 : f32
    %515 = vector.broadcast %cst_218 : f32 to vector<1x32xf32>
    %516 = arith.addf %515, %514 : vector<1x32xf32>
    %517 = arith.divf %515, %516 : vector<1x32xf32>
    %518 = vector.extract_strided_slice %351 {offsets = [5, 0], sizes = [1, 32], strides = [1, 1]} : vector<6x32xf32> to vector<1x32xf32>
    %519 = arith.mulf %510, %503 : vector<1x32xf32>
    %520 = arith.addf %518, %519 : vector<1x32xf32>
    %521 = math.tanh %520 : vector<1x32xf32>
    %cst_219 = arith.constant 1.000000e+00 : f32
    %522 = vector.broadcast %cst_219 : f32 to vector<1x32xf32>
    %523 = arith.subf %522, %517 : vector<1x32xf32>
    %524 = arith.mulf %523, %521 : vector<1x32xf32>
    %525 = arith.mulf %517, %497 : vector<1x32xf32>
    %526 = arith.addf %524, %525 : vector<1x32xf32>
    %cst_220 = arith.constant dense<0.000000e+00> : vector<1x32xf32>
    %527 = tpu.matmul %526, %86, %cst_220 {dimension_numbers = #tpu.dot_dimension_numbers<[1], [0], [0], [1], [0, 0, 1, 1], [], []>} : vector<1x32xf32>, vector<32x32xf32>, vector<1x32xf32> -> vector<1x32xf32>
    %528 = arith.addf %527, %87 : vector<1x32xf32>
    %cst_221 = arith.constant 0.000000e+00 : f32
    %529 = vector.broadcast %cst_221 : f32 to vector<1x32xf32>
    %530 = arith.maximumf %528, %529 : vector<1x32xf32>
    %c1_222 = arith.constant 1 : index
    %c0_223 = arith.constant 0 : index
    %c0_224 = arith.constant 0 : index
    %531 = vector.load %arg29[%c1_222, %c0_223, %c0_224] : memref<2x1x32xf32, #tpu.memory_space<vmem>>, vector<1x1x32xf32>
    %532 = vector.shape_cast %531 : vector<1x1x32xf32> to vector<1x32xf32>
    %533 = vector.shape_cast %530 : vector<1x32xf32> to vector<1x1x32xf32>
    tpu.vector_store %arg29[%c1_222, %c0_223, %c0_224], %533 {strides = array<i32>} : memref<2x1x32xf32, #tpu.memory_space<vmem>>, vector<1x1x32xf32>,
    return
  }
  func.func @transform_0(%arg0: i32) -> (i32, i32) {
    %c0_i32 = arith.constant 0 : i32
    %c0_i32_0 = arith.constant 0 : i32
    %c0_i32_1 = arith.constant 0 : i32
    return %c0_i32, %c0_i32_0 : i32, i32
  }
  func.func @transform_1(%arg0: i32) -> (i32, i32) {
    %c0_i32 = arith.constant 0 : i32
    %c0_i32_0 = arith.constant 0 : i32
    %c0_i32_1 = arith.constant 0 : i32
    return %c0_i32, %c0_i32_0 : i32, i32
  }
  func.func @transform_2(%arg0: i32) -> (i32, i32) {
    %c0_i32 = arith.constant 0 : i32
    %c0_i32_0 = arith.constant 0 : i32
    %c0_i32_1 = arith.constant 0 : i32
    return %c0_i32, %c0_i32_0 : i32, i32
  }
  func.func @transform_3(%arg0: i32) -> (i32, i32) {
    %c0_i32 = arith.constant 0 : i32
    %c0_i32_0 = arith.constant 0 : i32
    %c0_i32_1 = arith.constant 0 : i32
    return %c0_i32, %c0_i32_0 : i32, i32
  }
  func.func @transform_4(%arg0: i32) -> (i32, i32) {
    %c0_i32 = arith.constant 0 : i32
    %c0_i32_0 = arith.constant 0 : i32
    %c0_i32_1 = arith.constant 0 : i32
    return %c0_i32, %c0_i32_0 : i32, i32
  }
  func.func @transform_5(%arg0: i32) -> (i32, i32) {
    %c0_i32 = arith.constant 0 : i32
    %c0_i32_0 = arith.constant 0 : i32
    %c0_i32_1 = arith.constant 0 : i32
    return %c0_i32, %c0_i32_0 : i32, i32
  }
  func.func @transform_6(%arg0: i32) -> (i32, i32) {
    %c0_i32 = arith.constant 0 : i32
    %c0_i32_0 = arith.constant 0 : i32
    %c0_i32_1 = arith.constant 0 : i32
    return %c0_i32, %c0_i32_0 : i32, i32
  }
  func.func @transform_7(%arg0: i32) -> (i32, i32) {
    %c0_i32 = arith.constant 0 : i32
    %c0_i32_0 = arith.constant 0 : i32
    %c0_i32_1 = arith.constant 0 : i32
    return %c0_i32, %c0_i32_0 : i32, i32
  }
  func.func @transform_8(%arg0: i32) -> (i32, i32) {
    %c0_i32 = arith.constant 0 : i32
    %c0_i32_0 = arith.constant 0 : i32
    %c0_i32_1 = arith.constant 0 : i32
    return %c0_i32, %c0_i32_0 : i32, i32
  }
  func.func @transform_9(%arg0: i32) -> (i32, i32) {
    %c0_i32 = arith.constant 0 : i32
    %c0_i32_0 = arith.constant 0 : i32
    %c0_i32_1 = arith.constant 0 : i32
    return %c0_i32, %c0_i32_0 : i32, i32
  }
  func.func @transform_10(%arg0: i32) -> (i32, i32) {
    %c0_i32 = arith.constant 0 : i32
    %c0_i32_0 = arith.constant 0 : i32
    %c0_i32_1 = arith.constant 0 : i32
    return %c0_i32, %c0_i32_0 : i32, i32
  }
  func.func @transform_11(%arg0: i32) -> (i32, i32) {
    %c0_i32 = arith.constant 0 : i32
    %c0_i32_0 = arith.constant 0 : i32
    %c0_i32_1 = arith.constant 0 : i32
    return %c0_i32, %c0_i32_0 : i32, i32
  }
  func.func @transform_12(%arg0: i32) -> (i32, i32) {
    %c0_i32 = arith.constant 0 : i32
    %c0_i32_0 = arith.constant 0 : i32
    %c0_i32_1 = arith.constant 0 : i32
    return %c0_i32, %c0_i32_0 : i32, i32
  }
  func.func @transform_13(%arg0: i32) -> (i32, i32) {
    %c0_i32 = arith.constant 0 : i32
    %c0_i32_0 = arith.constant 0 : i32
    %c0_i32_1 = arith.constant 0 : i32
    return %c0_i32, %c0_i32_0 : i32, i32
  }
  func.func @transform_14(%arg0: i32) -> (i32, i32) {
    %c0_i32 = arith.constant 0 : i32
    %c0_i32_0 = arith.constant 0 : i32
    %c0_i32_1 = arith.constant 0 : i32
    return %c0_i32, %c0_i32_0 : i32, i32
  }
  func.func @transform_15(%arg0: i32) -> (i32, i32) {
    %c0_i32 = arith.constant 0 : i32
    %c0_i32_0 = arith.constant 0 : i32
    %c0_i32_1 = arith.constant 0 : i32
    return %c0_i32, %c0_i32_0 : i32, i32
  }
  func.func @transform_16(%arg0: i32) -> (i32, i32) {
    %c0_i32 = arith.constant 0 : i32
    %c0_i32_0 = arith.constant 0 : i32
    %c0_i32_1 = arith.constant 0 : i32
    return %c0_i32, %c0_i32_0 : i32, i32
  }
  func.func @transform_17(%arg0: i32) -> (i32, i32) {
    %c0_i32 = arith.constant 0 : i32
    %c0_i32_0 = arith.constant 0 : i32
    %c0_i32_1 = arith.constant 0 : i32
    return %c0_i32, %c0_i32_0 : i32, i32
  }
  func.func @transform_18(%arg0: i32) -> (i32, i32, i32) {
    %c0_i32 = arith.constant 0 : i32
    %c0_i32_0 = arith.constant 0 : i32
    %c0_i32_1 = arith.constant 0 : i32
    %c0_i32_2 = arith.constant 0 : i32
    return %c0_i32, %c0_i32_0, %c0_i32_1 : i32, i32, i32
  }
  func.func @transform_19(%arg0: i32) -> (i32, i32, i32) {
    %c0_i32 = arith.constant 0 : i32
    %c0_i32_0 = arith.constant 0 : i32
    %c0_i32_1 = arith.constant 0 : i32
    %c0_i32_2 = arith.constant 0 : i32
    return %c0_i32, %c0_i32_0, %c0_i32_1 : i32, i32, i32
  }
  func.func @transform_20(%arg0: i32) -> (i32, i32, i32) {
    %c0_i32 = arith.constant 0 : i32
    %c0_i32_0 = arith.constant 0 : i32
    %c0_i32_1 = arith.constant 0 : i32
    %c0_i32_2 = arith.constant 0 : i32
    return %c0_i32, %c0_i32_0, %c0_i32_1 : i32, i32, i32
  }
  func.func @transform_21(%arg0: i32) -> (i32, i32, i32) {
    %c0_i32 = arith.constant 0 : i32
    %c0_i32_0 = arith.constant 0 : i32
    %c0_i32_1 = arith.constant 0 : i32
    %c0_i32_2 = arith.constant 0 : i32
    return %c0_i32, %c0_i32_0, %c0_i32_1 : i32, i32, i32
  }
  func.func @transform_22(%arg0: i32) -> (i32, i32) {
    %c0_i32 = arith.constant 0 : i32
    %c0_i32_0 = arith.constant 0 : i32
    %c0_i32_1 = arith.constant 0 : i32
    return %c0_i32, %c0_i32_0 : i32, i32
  }
  func.func @transform_23(%arg0: i32) -> (i32, i32, i32) {
    %c0_i32 = arith.constant 0 : i32
    %c0_i32_0 = arith.constant 0 : i32
    %c0_i32_1 = arith.constant 0 : i32
    %c0_i32_2 = arith.constant 0 : i32
    return %c0_i32, %c0_i32_0, %c0_i32_1 : i32, i32, i32
  }
  func.func @transform_24(%arg0: i32) -> (i32, i32, i32) {
    %c0_i32 = arith.constant 0 : i32
    %c0_i32_0 = arith.constant 0 : i32
    %c0_i32_1 = arith.constant 0 : i32
    %c0_i32_2 = arith.constant 0 : i32
    return %c0_i32, %c0_i32_0, %c0_i32_1 : i32, i32, i32
  }
  func.func @transform_25(%arg0: i32) -> (i32, i32, i32) {
    %c0_i32 = arith.constant 0 : i32
    %c0_i32_0 = arith.constant 0 : i32
    %c0_i32_1 = arith.constant 0 : i32
    %c0_i32_2 = arith.constant 0 : i32
    return %c0_i32, %c0_i32_0, %c0_i32_1 : i32, i32, i32
  }
  func.func @transform_26(%arg0: i32) -> (i32, i32, i32) {
    %c0_i32 = arith.constant 0 : i32
    %c0_i32_0 = arith.constant 0 : i32
    %c0_i32_1 = arith.constant 0 : i32
    %c0_i32_2 = arith.constant 0 : i32
    return %c0_i32, %c0_i32_0, %c0_i32_1 : i32, i32, i32
  }
  func.func @transform_27(%arg0: i32) -> (i32, i32, i32) {
    %c0_i32 = arith.constant 0 : i32
    %c0_i32_0 = arith.constant 0 : i32
    %c0_i32_1 = arith.constant 0 : i32
    %c0_i32_2 = arith.constant 0 : i32
    return %c0_i32, %c0_i32_0, %c0_i32_1 : i32, i32, i32
  }
  func.func @transform_28(%arg0: i32) -> (i32, i32, i32) {
    %c0_i32 = arith.constant 0 : i32
    %c0_i32_0 = arith.constant 0 : i32
    %c0_i32_1 = arith.constant 0 : i32
    %c0_i32_2 = arith.constant 0 : i32
    return %c0_i32, %c0_i32_0, %c0_i32_1 : i32, i32, i32
  }
  func.func @transform_29(%arg0: i32) -> (i32, i32, i32) {
    %c0_i32 = arith.constant 0 : i32
    %c0_i32_0 = arith.constant 0 : i32
    %c0_i32_1 = arith.constant 0 : i32
    %c0_i32_2 = arith.constant 0 : i32
    return %c0_i32, %c0_i32_0, %c0_i32_1 : i32, i32, i32
  }
}

</mosaic_0001>

<llo_original>
// kernel: tpu_custom_call.1
$region0: #{tpu_custom_call.1}
  #allocation0 [shape = 'u32[]', space=smem, size = 0x4, offset = 0x4, fixed_abs, tag = 'smem constant byte address 0x4 - core index']
  #allocation1 [shape = 'u32[144,128]{1,0:T(1,128)}', space=vmem, size = 0x12000, scoped, tag = 'internal scratch']
  #allocation2 [shape = 'f32[1,1]{1,0:T(1,128)S(1)}', space=vmem, size = 0x200, scoped, tag = 'scoped memory for tpu_custom_call.1']
  %s0 = inlined_call_operand.smem [shape: u32[30], index: -1, kind: input, shape index: {}]
  %s1 = sld [smem:[%s0]]
  %s2 = scalar_lea.smem %s0, 1
  %s3 = sld [smem:[%s2]]
  %s4 = scalar_lea.smem %s0, 2
  %s5 = sld [smem:[%s4]]
  %s6 = scalar_lea.smem %s0, 3
  %s7 = sld [smem:[%s6]]
  %s8 = scalar_lea.smem %s0, 4
  %s9 = sld [smem:[%s8]]
  %s10 = scalar_lea.smem %s0, 5
  %s11 = sld [smem:[%s10]]
  %s12 = scalar_lea.smem %s0, 6
  %s13 = sld [smem:[%s12]]
  %s14 = scalar_lea.smem %s0, 7
  %s15 = sld [smem:[%s14]]
  %s16 = scalar_lea.smem %s0, 8
  %s17 = sld [smem:[%s16]]
  %s18 = scalar_lea.smem %s0, 9
  %s19 = sld [smem:[%s18]]
  %s20 = scalar_lea.smem %s0, 10
  %s21 = sld [smem:[%s20]]
  %s22 = scalar_lea.smem %s0, 11
  %s23 = sld [smem:[%s22]]
  %s24 = scalar_lea.smem %s0, 12
  %s25 = sld [smem:[%s24]]
  %s26 = scalar_lea.smem %s0, 13
  %s27 = sld [smem:[%s26]]
  %s28 = scalar_lea.smem %s0, 14
  %s29 = sld [smem:[%s28]]
  %s30 = scalar_lea.smem %s0, 15
  %s31 = sld [smem:[%s30]]
  %s32 = scalar_lea.smem %s0, 16
  %s33 = sld [smem:[%s32]]
  %s34 = scalar_lea.smem %s0, 17
  %s35 = sld [smem:[%s34]]
  %s36 = scalar_lea.smem %s0, 18
  %s37 = sld [smem:[%s36]]
  %s38 = scalar_lea.smem %s0, 19
  %s39 = sld [smem:[%s38]]
  %s40 = scalar_lea.smem %s0, 20
  %s41 = sld [smem:[%s40]]
  %s42 = scalar_lea.smem %s0, 21
  %s43 = sld [smem:[%s42]]
  %s44 = scalar_lea.smem %s0, 22
  %s45 = sld [smem:[%s44]]
  %s46 = scalar_lea.smem %s0, 23
  %s47 = sld [smem:[%s46]]
  %s48 = scalar_lea.smem %s0, 24
  %s49 = sld [smem:[%s48]]
  %s50 = scalar_lea.smem %s0, 25
  %s51 = sld [smem:[%s50]]
  %s52 = scalar_lea.smem %s0, 26
  %s53 = sld [smem:[%s52]]
  %s54 = scalar_lea.smem %s0, 27
  %s55 = sld [smem:[%s54]]
  %s56 = scalar_lea.smem %s0, 28
  %s57 = sld [smem:[%s56]]
  %s58 = scalar_lea.smem %s0, 29
  %s59 = sld [smem:[%s58]]
  %60 = xla_tuple %s57, %s59
  %s61 = sld [smem:[#allocation0]]
  $region186: #{tpu_custom_call.1} parent=0
    _
  %s63 = ssub.s32 1, %s61
  %s64 = scalar_select 0, %s63, %s61
  %v65 = vstv %s45
  %66 = vst [vmem:[#allocation2] sm:$0x1] %v65
  $region1: #{tpu_custom_call.1} parent=0
    #allocation3 [shape = 'u8[12288]{0}', space=vmem, size = 0x3000, scoped, tag = 'input window, operand 0, single buffered']
    #allocation4 [shape = 's32[1]{0}', space=sflag, size = 0x4, scoped, tag = 'scoped memory for tpu_custom_call.1']
    #allocation5 [shape = 's32[1]{0}', space=sflag, size = 0x4, scoped, tag = 'scoped memory for tpu_custom_call.1']
    #allocation6 [shape = 'u8[4096]{0}', space=vmem, size = 0x1000, scoped, tag = 'input window, operand 1, single buffered']
    #allocation7 [shape = 's32[1]{0}', space=sflag, size = 0x4, scoped, tag = 'scoped memory for tpu_custom_call.1']
    #allocation8 [shape = 'u8[4096]{0}', space=vmem, size = 0x1000, scoped, tag = 'input window, operand 2, single buffered']
    #allocation9 [shape = 'u8[4096]{0}', space=vmem, size = 0x1000, scoped, tag = 'input window, operand 3, single buffered']
    #allocation10 [shape = 's32[1]{0}', space=sflag, size = 0x4, scoped, tag = 'scoped memory for tpu_custom_call.1']
    #allocation11 [shape = 'u8[4096]{0}', space=vmem, size = 0x1000, scoped, tag = 'input window, operand 4, single buffered']
    #allocation12 [shape = 'u8[512]{0}', space=vmem, size = 0x400, scoped, tag = 'input window, operand 6, single buffered']
    #allocation13 [shape = 's32[1]{0}', space=sflag, size = 0x4, scoped, tag = 'scoped memory for tpu_custom_call.1']
    #allocation14 [shape = 'u8[512]{0}', space=vmem, size = 0x400, scoped, tag = 'input window, operand 8, single buffered']
    #allocation15 [shape = 'u8[512]{0}', space=vmem, size = 0x400, scoped, tag = 'input window, operand 13, single buffered']
    #allocation16 [shape = 's32[1]{0}', space=sflag, size = 0x4, scoped, tag = 'scoped memory for tpu_custom_call.1']
    #allocation17 [shape = 'u8[16384]{0}', space=vmem, size = 0x4000, scoped, tag = 'input window, operand 14, single buffered']
    #allocation18 [shape = 'u8[512]{0}', space=vmem, size = 0x400, scoped, tag = 'input window, operand 15, single buffered']
    #allocation19 [shape = 's32[1]{0}', space=sflag, size = 0x4, scoped, tag = 'scoped memory for tpu_custom_call.1']
    #allocation20 [shape = 'u8[16384]{0}', space=vmem, size = 0x4000, scoped, tag = 'input window, operand 16, single buffered']
    #allocation21 [shape = 'u8[512]{0}', space=vmem, size = 0x400, scoped, tag = 'input window, operand 17, single buffered']
    #allocation22 [shape = 's32[1]{0}', space=sflag, size = 0x4, scoped, tag = 'scoped memory for tpu_custom_call.1']
    #allocation23 [shape = 'u8[1536]{0}', space=vmem, size = 0x800, scoped, tag = 'input window, operand 20, single buffered']
    #allocation24 [shape = 'u8[1536]{0}', space=vmem, size = 0x800, scoped, tag = 'input window, operand 21, single buffered']
    #allocation25 [shape = 's32[1]{0}', space=sflag, size = 0x4, scoped, tag = 'scoped memory for tpu_custom_call.1']
    #allocation26 [shape = 'u8[1024]{0}', space=vmem, size = 0x400, scoped, tag = 'output window, operand 0, single buffered']
    #allocation27 [shape = 'u8[1024]{0}', space=vmem, size = 0x400, scoped, tag = 'output window, operand 1, single buffered']
    #allocation28 [shape = 's32[1]{0}', space=sflag, size = 0x4, scoped, tag = 'scoped memory for tpu_custom_call.1']
    %67 = vsyncpa [#allocation4], 0
    %68 = vsyncpa [#allocation7], 0
    %69 = vsyncpa [#allocation10], 0
    %70 = vsyncpa [#allocation13], 0
    %71 = vsyncpa [#allocation16], 0
    %72 = vsyncpa [#allocation19], 0
    %73 = vsyncpa [#allocation22], 0
    %74 = vsyncpa [#allocation25], 0
    %75 = vsyncpa [#allocation5], 0
    %76 = vsyncpa [#allocation28], 0
    // Predicated region
    $region2: #{tpu_custom_call.1} parent=1 // pred_check
      _
    $region3: #{tpu_custom_call.1} parent=1 // pred_check_branch
      %78 = sbr.rel (0) target = $region5
    $region4: #{tpu_custom_call.1} parent=1 // pred_region
      %s80 = ssub.s32 384, 384
      %81 = vsyncadd [#allocation4], %s80
      %s82 = sshll.u32 [#allocation3], 4
      %s83 = int_to_ptr.vmem [resolvable:$true] %s82
      %88 = dma.hbm_to_vmem [thread:$0]  %s1, 384, %s83, [#allocation4], 128, 128, 8
    $region5: #{tpu_custom_call.1} parent=1 // pred_fallthru
      _
    // Predicated region
    $region6: #{tpu_custom_call.1} parent=1 // pred_check
      _
    $region7: #{tpu_custom_call.1} parent=1 // pred_check_branch
      %90 = sbr.rel (0) target = $region9
    $region8: #{tpu_custom_call.1} parent=1 // pred_region
      %s92 = ssub.s32 128, 128
      %93 = vsyncadd [#allocation7], %s92
      %s95 = sshll.u32 [#allocation6], 4
      %s96 = int_to_ptr.vmem [resolvable:$true] %s95
      %98 = dma.hbm_to_vmem [thread:$0]  %s3, 128, %s96, [#allocation7]
    $region9: #{tpu_custom_call.1} parent=1 // pred_fallthru
      _
    // Predicated region
    $region10: #{tpu_custom_call.1} parent=1 // pred_check
      _
    $region11: #{tpu_custom_call.1} parent=1 // pred_check_branch
      %100 = sbr.rel (0) target = $region13
    $region12: #{tpu_custom_call.1} parent=1 // pred_region
      %s102 = ssub.s32 128, 128
      %103 = vsyncadd [#allocation7], %s102
      %s105 = sshll.u32 [#allocation8], 4
      %s106 = int_to_ptr.vmem [resolvable:$true] %s105
      %108 = dma.hbm_to_vmem [thread:$0]  %s5, 128, %s106, [#allocation7]
    $region13: #{tpu_custom_call.1} parent=1 // pred_fallthru
      _
    // Predicated region
    $region14: #{tpu_custom_call.1} parent=1 // pred_check
      _
    $region15: #{tpu_custom_call.1} parent=1 // pred_check_branch
      %110 = sbr.rel (0) target = $region17
    $region16: #{tpu_custom_call.1} parent=1 // pred_region
      %s112 = ssub.s32 128, 128
      %113 = vsyncadd [#allocation10], %s112
      %s115 = sshll.u32 [#allocation9], 4
      %s116 = int_to_ptr.vmem [resolvable:$true] %s115
      %118 = dma.hbm_to_vmem [thread:$0]  %s7, 128, %s116, [#allocation10]
    $region17: #{tpu_custom_call.1} parent=1 // pred_fallthru
      _
    // Predicated region
    $region18: #{tpu_custom_call.1} parent=1 // pred_check
      _
    $region19: #{tpu_custom_call.1} parent=1 // pred_check_branch
      %120 = sbr.rel (0) target = $region21
    $region20: #{tpu_custom_call.1} parent=1 // pred_region
      %s122 = ssub.s32 128, 128
      %123 = vsyncadd [#allocation10], %s122
      %s125 = sshll.u32 [#allocation11], 4
      %s126 = int_to_ptr.vmem [resolvable:$true] %s125
      %128 = dma.hbm_to_vmem [thread:$0]  %s9, 128, %s126, [#allocation10]
    $region21: #{tpu_custom_call.1} parent=1 // pred_fallthru
      _
    // Predicated region
    $region22: #{tpu_custom_call.1} parent=1 // pred_check
      _
    $region23: #{tpu_custom_call.1} parent=1 // pred_check_branch
      %130 = sbr.rel (0) target = $region25
    $region24: #{tpu_custom_call.1} parent=1 // pred_region
      _
    $region25: #{tpu_custom_call.1} parent=1 // pred_fallthru
      _
    // Predicated region
    $region26: #{tpu_custom_call.1} parent=1 // pred_check
      _
    $region27: #{tpu_custom_call.1} parent=1 // pred_check_branch
      %132 = sbr.rel (0) target = $region29
    $region28: #{tpu_custom_call.1} parent=1 // pred_region
      %s134 = ssub.s32 16, 16
      %135 = vsyncadd [#allocation13], %s134
      %s137 = sshll.u32 [#allocation12], 4
      %s138 = int_to_ptr.vmem [resolvable:$true] %s137
      %140 = dma.hbm_to_vmem [thread:$0]  %s13, 16, %s138, [#allocation13]
    $region29: #{tpu_custom_call.1} parent=1 // pred_fallthru
      _
    // Predicated region
    $region30: #{tpu_custom_call.1} parent=1 // pred_check
      _
    $region31: #{tpu_custom_call.1} parent=1 // pred_check_branch
      %142 = sbr.rel (0) target = $region33
    $region32: #{tpu_custom_call.1} parent=1 // pred_region
      _
    $region33: #{tpu_custom_call.1} parent=1 // pred_fallthru
      _
    // Predicated region
    $region34: #{tpu_custom_call.1} parent=1 // pred_check
      _
    $region35: #{tpu_custom_call.1} parent=1 // pred_check_branch
      %144 = sbr.rel (0) target = $region37
    $region36: #{tpu_custom_call.1} parent=1 // pred_region
      %s146 = ssub.s32 16, 16
      %147 = vsyncadd [#allocation13], %s146
      %s149 = sshll.u32 [#allocation14], 4
      %s150 = int_to_ptr.vmem [resolvable:$true] %s149
      %152 = dma.hbm_to_vmem [thread:$0]  %s17, 16, %s150, [#allocation13]
    $region37: #{tpu_custom_call.1} parent=1 // pred_fallthru
      _
    // Predicated region
    $region38: #{tpu_custom_call.1} parent=1 // pred_check
      _
    $region39: #{tpu_custom_call.1} parent=1 // pred_check_branch
      %154 = sbr.rel (0) target = $region41
    $region40: #{tpu_custom_call.1} parent=1 // pred_region
      _
    $region41: #{tpu_custom_call.1} parent=1 // pred_fallthru
      _
    // Predicated region
    $region42: #{tpu_custom_call.1} parent=1 // pred_check
      _
    $region43: #{tpu_custom_call.1} parent=1 // pred_check_branch
      %156 = sbr.rel (0) target = $region45
    $region44: #{tpu_custom_call.1} parent=1 // pred_region
      _
    $region45: #{tpu_custom_call.1} parent=1 // pred_fallthru
      _
    // Predicated region
    $region46: #{tpu_custom_call.1} parent=1 // pred_check
      _
    $region47: #{tpu_custom_call.1} parent=1 // pred_check_branch
      %158 = sbr.rel (0) target = $region49
    $region48: #{tpu_custom_call.1} parent=1 // pred_region
      _
    $region49: #{tpu_custom_call.1} parent=1 // pred_fallthru
      _
    // Predicated region
    $region50: #{tpu_custom_call.1} parent=1 // pred_check
      _
    $region51: #{tpu_custom_call.1} parent=1 // pred_check_branch
      %160 = sbr.rel (0) target = $region53
    $region52: #{tpu_custom_call.1} parent=1 // pred_region
      _
    $region53: #{tpu_custom_call.1} parent=1 // pred_fallthru
      _
    // Predicated region
    $region54: #{tpu_custom_call.1} parent=1 // pred_check
      _
    $region55: #{tpu_custom_call.1} parent=1 // pred_check_branch
      %162 = sbr.rel (0) target = $region57
    $region56: #{tpu_custom_call.1} parent=1 // pred_region
      %s164 = ssub.s32 16, 16
      %165 = vsyncadd [#allocation16], %s164
      %s167 = sshll.u32 [#allocation15], 4
      %s168 = int_to_ptr.vmem [resolvable:$true] %s167
      %170 = dma.hbm_to_vmem [thread:$0]  %s27, 16, %s168, [#allocation16]
    $region57: #{tpu_custom_call.1} parent=1 // pred_fallthru
      _
    // Predicated region
    $region58: #{tpu_custom_call.1} parent=1 // pred_check
      _
    $region59: #{tpu_custom_call.1} parent=1 // pred_check_branch
      %172 = sbr.rel (0) target = $region61
    $region60: #{tpu_custom_call.1} parent=1 // pred_region
      %s174 = ssub.s32 512, 512
      %175 = vsyncadd [#allocation16], %s174
      %s176 = sshll.u32 [#allocation17], 4
      %s177 = int_to_ptr.vmem [resolvable:$true] %s176
      %182 = dma.hbm_to_vmem [thread:$0]  %s29, 512, %s177, [#allocation16], 128, 128, 8
    $region61: #{tpu_custom_call.1} parent=1 // pred_fallthru
      _
    // Predicated region
    $region62: #{tpu_custom_call.1} parent=1 // pred_check
      _
    $region63: #{tpu_custom_call.1} parent=1 // pred_check_branch
      %184 = sbr.rel (0) target = $region65
    $region64: #{tpu_custom_call.1} parent=1 // pred_region
      %s186 = ssub.s32 16, 16
      %187 = vsyncadd [#allocation19], %s186
      %s189 = sshll.u32 [#allocation18], 4
      %s190 = int_to_ptr.vmem [resolvable:$true] %s189
      %192 = dma.hbm_to_vmem [thread:$0]  %s31, 16, %s190, [#allocation19]
    $region65: #{tpu_custom_call.1} parent=1 // pred_fallthru
      _
    // Predicated region
    $region66: #{tpu_custom_call.1} parent=1 // pred_check
      _
    $region67: #{tpu_custom_call.1} parent=1 // pred_check_branch
      %194 = sbr.rel (0) target = $region69
    $region68: #{tpu_custom_call.1} parent=1 // pred_region
      %s196 = ssub.s32 512, 512
      %197 = vsyncadd [#allocation19], %s196
      %s198 = sshll.u32 [#allocation20], 4
      %s199 = int_to_ptr.vmem [resolvable:$true] %s198
      %204 = dma.hbm_to_vmem [thread:$0]  %s33, 512, %s199, [#allocation19], 128, 128, 8
    $region69: #{tpu_custom_call.1} parent=1 // pred_fallthru
      _
    // Predicated region
    $region70: #{tpu_custom_call.1} parent=1 // pred_check
      _
    $region71: #{tpu_custom_call.1} parent=1 // pred_check_branch
      %206 = sbr.rel (0) target = $region73
    $region72: #{tpu_custom_call.1} parent=1 // pred_region
      %s208 = ssub.s32 16, 16
      %209 = vsyncadd [#allocation22], %s208
      %s211 = sshll.u32 [#allocation21], 4
      %s212 = int_to_ptr.vmem [resolvable:$true] %s211
      %214 = dma.hbm_to_vmem [thread:$0]  %s35, 16, %s212, [#allocation22]
    $region73: #{tpu_custom_call.1} parent=1 // pred_fallthru
      _
    // Predicated region
    $region74: #{tpu_custom_call.1} parent=1 // pred_check
      _
    $region75: #{tpu_custom_call.1} parent=1 // pred_check_branch
      %216 = sbr.rel (0) target = $region77
    $region76: #{tpu_custom_call.1} parent=1 // pred_region
      _
    $region77: #{tpu_custom_call.1} parent=1 // pred_fallthru
      _
    // Predicated region
    $region78: #{tpu_custom_call.1} parent=1 // pred_check
      _
    $region79: #{tpu_custom_call.1} parent=1 // pred_check_branch
      %218 = sbr.rel (0) target = $region81
    $region80: #{tpu_custom_call.1} parent=1 // pred_region
      _
    $region81: #{tpu_custom_call.1} parent=1 // pred_fallthru
      _
    // Predicated region
    $region82: #{tpu_custom_call.1} parent=1 // pred_check
      _
    $region83: #{tpu_custom_call.1} parent=1 // pred_check_branch
      %220 = sbr.rel (0) target = $region85
    $region84: #{tpu_custom_call.1} parent=1 // pred_region
      %s222 = ssub.s32 48, 48
      %223 = vsyncadd [#allocation22], %s222
      %s224 = sshll.u32 [#allocation23], 4
      %s225 = int_to_ptr.vmem [resolvable:$true] %s224
      %230 = dma.hbm_to_vmem [thread:$0]  %s41, 48, %s225, [#allocation22], 16, 16, 1
    $region85: #{tpu_custom_call.1} parent=1 // pred_fallthru
      _
    // Predicated region
    $region86: #{tpu_custom_call.1} parent=1 // pred_check
      _
    $region87: #{tpu_custom_call.1} parent=1 // pred_check_branch
      %232 = sbr.rel (0) target = $region89
    $region88: #{tpu_custom_call.1} parent=1 // pred_region
      %s234 = ssub.s32 48, 48
      %235 = vsyncadd [#allocation25], %s234
      %s236 = sshll.u32 [#allocation24], 4
      %s237 = int_to_ptr.vmem [resolvable:$true] %s236
      %242 = dma.hbm_to_vmem [thread:$0]  %s43, 48, %s237, [#allocation25], 16, 16, 1
    $region89: #{tpu_custom_call.1} parent=1 // pred_fallthru
      _
    // Predicated region
    $region90: #{tpu_custom_call.1} parent=1 // pred_check
      _
    $region91: #{tpu_custom_call.1} parent=1 // pred_check_branch
      %244 = sbr.rel (0) target = $region93
    $region92: #{tpu_custom_call.1} parent=1 // pred_region
      _
    $region93: #{tpu_custom_call.1} parent=1 // pred_fallthru
      _
    // Predicated region
    $region94: #{tpu_custom_call.1} parent=1 // pred_check
      _
    $region95: #{tpu_custom_call.1} parent=1 // pred_check_branch
      %246 = sbr.rel (0) target = $region97
    $region96: #{tpu_custom_call.1} parent=1 // pred_region
      _
    $region97: #{tpu_custom_call.1} parent=1 // pred_fallthru
      _
    // Predicated region
    $region98: #{tpu_custom_call.1} parent=1 // pred_check
      _
    $region99: #{tpu_custom_call.1} parent=1 // pred_check_branch
      %248 = sbr.rel (0) target = $region101
    $region100: #{tpu_custom_call.1} parent=1 // pred_region
      _
    $region101: #{tpu_custom_call.1} parent=1 // pred_fallthru
      _
    // Predicated region
    $region102: #{tpu_custom_call.1} parent=1 // pred_check
      _
    $region103: #{tpu_custom_call.1} parent=1 // pred_check_branch
      %250 = sbr.rel (0) target = $region105
    $region104: #{tpu_custom_call.1} parent=1 // pred_region
      _
    $region105: #{tpu_custom_call.1} parent=1 // pred_fallthru
      _
    // Predicated region
    $region106: #{tpu_custom_call.1} parent=1 // pred_check
      _
    $region107: #{tpu_custom_call.1} parent=1 // pred_check_branch
      %252 = sbr.rel (0) target = $region109
    $region108: #{tpu_custom_call.1} parent=1 // pred_region
      _
    $region109: #{tpu_custom_call.1} parent=1 // pred_fallthru
      _
    // Predicated region
    $region110: #{tpu_custom_call.1} parent=1 // pred_check
      _
    $region111: #{tpu_custom_call.1} parent=1 // pred_check_branch
      %254 = sbr.rel (0) target = $region113
    $region112: #{tpu_custom_call.1} parent=1 // pred_region
      _
    $region113: #{tpu_custom_call.1} parent=1 // pred_fallthru
      _
    // Predicated region
    $region114: #{tpu_custom_call.1} parent=1 // pred_check
      _
    $region115: #{tpu_custom_call.1} parent=1 // pred_check_branch
      %256 = sbr.rel (0) target = $region117
    $region116: #{tpu_custom_call.1} parent=1 // pred_region
      %257 = dma.done [#allocation4], 384
    $region117: #{tpu_custom_call.1} parent=1 // pred_fallthru
      _
    // Predicated region
    $region118: #{tpu_custom_call.1} parent=1 // pred_check
      _
    $region119: #{tpu_custom_call.1} parent=1 // pred_check_branch
      %259 = sbr.rel (0) target = $region121
    $region120: #{tpu_custom_call.1} parent=1 // pred_region
      %260 = dma.done [#allocation7], 128
    $region121: #{tpu_custom_call.1} parent=1 // pred_fallthru
      _
    // Predicated region
    $region122: #{tpu_custom_call.1} parent=1 // pred_check
      _
    $region123: #{tpu_custom_call.1} parent=1 // pred_check_branch
      %262 = sbr.rel (0) target = $region125
    $region124: #{tpu_custom_call.1} parent=1 // pred_region
      %263 = dma.done [#allocation7], 128
    $region125: #{tpu_custom_call.1} parent=1 // pred_fallthru
      _
    // Predicated region
    $region126: #{tpu_custom_call.1} parent=1 // pred_check
      _
    $region127: #{tpu_custom_call.1} parent=1 // pred_check_branch
      %265 = sbr.rel (0) target = $region129
    $region128: #{tpu_custom_call.1} parent=1 // pred_region
      %266 = dma.done [#allocation10], 128
    $region129: #{tpu_custom_call.1} parent=1 // pred_fallthru
      _
    // Predicated region
    $region130: #{tpu_custom_call.1} parent=1 // pred_check
      _
    $region131: #{tpu_custom_call.1} parent=1 // pred_check_branch
      %268 = sbr.rel (0) target = $region133
    $region132: #{tpu_custom_call.1} parent=1 // pred_region
      %269 = dma.done [#allocation10], 128
    $region133: #{tpu_custom_call.1} parent=1 // pred_fallthru
      _
    // Predicated region
    $region134: #{tpu_custom_call.1} parent=1 // pred_check
      _
    $region135: #{tpu_custom_call.1} parent=1 // pred_check_branch
      %271 = sbr.rel (0) target = $region137
    $region136: #{tpu_custom_call.1} parent=1 // pred_region
      %272 = dma.done [#allocation13], 16
    $region137: #{tpu_custom_call.1} parent=1 // pred_fallthru
      _
    // Predicated region
    $region138: #{tpu_custom_call.1} parent=1 // pred_check
      _
    $region139: #{tpu_custom_call.1} parent=1 // pred_check_branch
      %274 = sbr.rel (0) target = $region141
    $region140: #{tpu_custom_call.1} parent=1 // pred_region
      %275 = dma.done [#allocation13], 16
    $region141: #{tpu_custom_call.1} parent=1 // pred_fallthru
      _
    // Predicated region
    $region142: #{tpu_custom_call.1} parent=1 // pred_check
      _
    $region143: #{tpu_custom_call.1} parent=1 // pred_check_branch
      %277 = sbr.rel (0) target = $region145
    $region144: #{tpu_custom_call.1} parent=1 // pred_region
      %278 = dma.done [#allocation16], 16
    $region145: #{tpu_custom_call.1} parent=1 // pred_fallthru
      _
    // Predicated region
    $region146: #{tpu_custom_call.1} parent=1 // pred_check
      _
    $region147: #{tpu_custom_call.1} parent=1 // pred_check_branch
      %280 = sbr.rel (0) target = $region149
    $region148: #{tpu_custom_call.1} parent=1 // pred_region
      %281 = dma.done [#allocation16], 512
    $region149: #{tpu_custom_call.1} parent=1 // pred_fallthru
      _
    // Predicated region
    $region150: #{tpu_custom_call.1} parent=1 // pred_check
      _
    $region151: #{tpu_custom_call.1} parent=1 // pred_check_branch
      %283 = sbr.rel (0) target = $region153
    $region152: #{tpu_custom_call.1} parent=1 // pred_region
      %284 = dma.done [#allocation19], 16
    $region153: #{tpu_custom_call.1} parent=1 // pred_fallthru
      _
    // Predicated region
    $region154: #{tpu_custom_call.1} parent=1 // pred_check
      _
    $region155: #{tpu_custom_call.1} parent=1 // pred_check_branch
      %286 = sbr.rel (0) target = $region157
    $region156: #{tpu_custom_call.1} parent=1 // pred_region
      %287 = dma.done [#allocation19], 512
    $region157: #{tpu_custom_call.1} parent=1 // pred_fallthru
      _
    // Predicated region
    $region158: #{tpu_custom_call.1} parent=1 // pred_check
      _
    $region159: #{tpu_custom_call.1} parent=1 // pred_check_branch
      %289 = sbr.rel (0) target = $region161
    $region160: #{tpu_custom_call.1} parent=1 // pred_region
      %290 = dma.done [#allocation22], 16
    $region161: #{tpu_custom_call.1} parent=1 // pred_fallthru
      _
    // Predicated region
    $region162: #{tpu_custom_call.1} parent=1 // pred_check
      _
    $region163: #{tpu_custom_call.1} parent=1 // pred_check_branch
      %292 = sbr.rel (0) target = $region165
    $region164: #{tpu_custom_call.1} parent=1 // pred_region
      %293 = dma.done [#allocation22], 48
    $region165: #{tpu_custom_call.1} parent=1 // pred_fallthru
      _
    // Predicated region
    $region166: #{tpu_custom_call.1} parent=1 // pred_check
      _
    $region167: #{tpu_custom_call.1} parent=1 // pred_check_branch
      %295 = sbr.rel (0) target = $region169
    $region168: #{tpu_custom_call.1} parent=1 // pred_region
      %296 = dma.done [#allocation25], 48
    $region169: #{tpu_custom_call.1} parent=1 // pred_fallthru
      _
    %v297 = vld [vmem:[#allocation3] sm:$0xff]
    %v298 = vld [vmem:[#allocation3 + $0x8] sm:$0xff]
    %v299 = vld [vmem:[%s11] sm:$0xff]
    %v300 = vld [vmem:[%s11 + $0x8] sm:$0xff]
    %v301 = vld [vmem:[%s11 + $0x10] sm:$0xff]
    %v302 = vld [vmem:[%s11 + $0x18] sm:$0xff]
    %vm303 = vcmask 261120
    %v305 = vsel %vm303, %v297, 0
    %307 = vmatprep.subr.mxu0 0.0
    %308 = vmatpush1.msra.mxu0 %v299
    %309 = vmatprep.subr.mxu0 0.0
    %310 = vmatpush1.msra.mxu0 %v300
    %311 = vmatprep.subr.mxu0 0.0
    %312 = vmatpush1.msra.mxu0 %v301
    %313 = vmatprep.subr.mxu0 0.0
    %314 = vmatpush1.msra.mxu0 %v302
    %315 = vmatprep.subr.mxu0 0.0
    %316 = vmatpush1.msra.mxu0 0.0
    %317 = vmatprep.subr.mxu0 0.0
    %318 = vmatpush1.msra.mxu0 0.0
    %319 = vmatprep.subr.mxu0 0.0
    %320 = vmatpush1.msra.mxu0 0.0
    %321 = vmatprep.subr.mxu0 0.0
    %322 = vmatpush1.msra.mxu0 0.0
    %323 = vmatprep.subr.mxu0 0.0
    %324 = vmatpush1.msra.mxu0 0.0
    %325 = vmatprep.subr.mxu0 0.0
    %326 = vmatpush1.msra.mxu0 0.0
    %327 = vmatprep.subr.mxu0 0.0
    %328 = vmatpush1.msra.mxu0 0.0
    %329 = vmatprep.subr.mxu0 0.0
    %330 = vmatpush1.msra.mxu0 0.0
    %331 = vmatprep.subr.mxu0 0.0
    %332 = vmatpush1.msra.mxu0 0.0
    %333 = vmatprep.subr.mxu0 0.0
    %334 = vmatpush1.msra.mxu0 0.0
    %335 = vmatprep.subr.mxu0 0.0
    %336 = vmatpush1.msra.mxu0 0.0
    %337 = vmatprep.subr.mxu0 0.0
    %338 = vmatpush1.msra.mxu0 0.0
    %339 = vmatprep.subr.mxu0 0.0
    %340 = vmatpush1.msra.mxu0 0.0
    %341 = vmatprep.subr.mxu0 0.0
    %342 = vmatpush1.msra.mxu0 0.0
    %343 = vmatprep.subr.mxu0 0.0
    %344 = vmatpush1.msra.mxu0 0.0
    %345 = vmatprep.subr.mxu0 0.0
    %346 = vmatpush1.msra.mxu0 0.0
    %347 = vmatprep.subr.mxu0 0.0
    %348 = vmatpush1.msra.mxu0 0.0
    %349 = vmatprep.subr.mxu0 0.0
    %350 = vmatpush1.msra.mxu0 0.0
    %351 = vmatprep.subr.mxu0 0.0
    %352 = vmatpush1.msra.mxu0 0.0
    %353 = vmatprep.subr.mxu0 0.0
    %354 = vmatpush1.msra.mxu0 0.0
    %355 = vmatprep.subr.mxu0 0.0
    %356 = vmatpush1.msra.mxu0 0.0
    %357 = vmatprep.subr.mxu0 0.0
    %358 = vmatpush1.msra.mxu0 0.0
    %359 = vmatprep.subr.mxu0 0.0
    %360 = vmatpush1.msra.mxu0 0.0
    %361 = vmatprep.subr.mxu0 0.0
    %362 = vmatpush1.msra.mxu0 0.0
    %363 = vmatprep.subr.mxu0 0.0
    %364 = vmatpush1.msra.mxu0 0.0
    %365 = vmatprep.subr.mxu0 0.0
    %366 = vmatpush1.msra.mxu0 0.0
    %367 = vmatprep.subr.mxu0 0.0
    %368 = vmatpush1.msra.mxu0 0.0
    %369 = vmatprep.subr.mxu0 0.0
    %370 = vmatpush1.msra.mxu0 0.0
    %371 = vmatprep.mubr.f32.mxu0 0.0
    %372 = vmatmul.mubr.f32.gmra.mrb[0].mxu0 %v305
    %v373 = vpop.f32.mrb[0].mxu0
    %v374 = vadd.f32 0.0, %v373
    %v375 = vpop.f32.mrb[0].mxu0
    %376 = vdwg.mxu0
    %v377 = vld [vmem:[#allocation12] sm:$0x1]
    %v378 = vld [vmem:[#allocation6] sm:$0x3f]
    %v380 = vlaneseq
    %v381 = vshrl.u32 %v380, 7
    %v382 = vsub.s32 0, %v381
    %v383 = vrot.slane %v377, %v382
    %vm385 = vcmask 48128
    %v387 = vsel %vm385, %v378, 0
    %vm389 = vcmask 1045504
    %v391 = vsel %vm389, %v374, 0
    %393 = vmatprep.subr.mxu0 0.0
    %394 = vmatpush1.msra.mxu0 %v391
    %395 = vmatprep.subr.mxu0 0.0
    %396 = vmatpush1.msra.mxu0 0.0
    %397 = vmatprep.subr.mxu0 0.0
    %398 = vmatpush1.msra.mxu0 0.0
    %399 = vmatprep.subr.mxu0 0.0
    %400 = vmatpush1.msra.mxu0 0.0
    %401 = vmatprep.subr.mxu0 0.0
    %402 = vmatpush1.msra.mxu0 0.0
    %403 = vmatprep.subr.mxu0 0.0
    %404 = vmatpush1.msra.mxu0 0.0
    %405 = vmatprep.subr.mxu0 0.0
    %406 = vmatpush1.msra.mxu0 0.0
    %407 = vmatprep.subr.mxu0 0.0
    %408 = vmatpush1.msra.mxu0 0.0
    %409 = vmatprep.subr.mxu0 0.0
    %410 = vmatpush1.msra.mxu0 0.0
    %411 = vmatprep.subr.mxu0 0.0
    %412 = vmatpush1.msra.mxu0 0.0
    %413 = vmatprep.subr.mxu0 0.0
    %414 = vmatpush1.msra.mxu0 0.0
    %415 = vmatprep.subr.mxu0 0.0
    %416 = vmatpush1.msra.mxu0 0.0
    %417 = vmatprep.subr.mxu0 0.0
    %418 = vmatpush1.msra.mxu0 0.0
    %419 = vmatprep.subr.mxu0 0.0
    %420 = vmatpush1.msra.mxu0 0.0
    %421 = vmatprep.subr.mxu0 0.0
    %422 = vmatpush1.msra.mxu0 0.0
    %423 = vmatprep.subr.mxu0 0.0
    %424 = vmatpush1.msra.mxu0 0.0
    %425 = vmatprep.subr.mxu0 0.0
    %426 = vmatpush1.msra.mxu0 0.0
    %427 = vmatprep.subr.mxu0 0.0
    %428 = vmatpush1.msra.mxu0 0.0
    %429 = vmatprep.subr.mxu0 0.0
    %430 = vmatpush1.msra.mxu0 0.0
    %431 = vmatprep.subr.mxu0 0.0
    %432 = vmatpush1.msra.mxu0 0.0
    %433 = vmatprep.subr.mxu0 0.0
    %434 = vmatpush1.msra.mxu0 0.0
    %435 = vmatprep.subr.mxu0 0.0
    %436 = vmatpush1.msra.mxu0 0.0
    %437 = vmatprep.subr.mxu0 0.0
    %438 = vmatpush1.msra.mxu0 0.0
    %439 = vmatprep.subr.mxu0 0.0
    %440 = vmatpush1.msra.mxu0 0.0
    %441 = vmatprep.subr.mxu0 0.0
    %442 = vmatpush1.msra.mxu0 0.0
    %443 = vmatprep.subr.mxu0 0.0
    %444 = vmatpush1.msra.mxu0 0.0
    %445 = vmatprep.subr.mxu0 0.0
    %446 = vmatpush1.msra.mxu0 0.0
    %447 = vmatprep.subr.mxu0 0.0
    %448 = vmatpush1.msra.mxu0 0.0
    %449 = vmatprep.subr.mxu0 0.0
    %450 = vmatpush1.msra.mxu0 0.0
    %451 = vmatprep.subr.mxu0 0.0
    %452 = vmatpush1.msra.mxu0 0.0
    %453 = vmatprep.subr.mxu0 0.0
    %454 = vmatpush1.msra.mxu0 0.0
    %455 = vmatprep.subr.mxu0 0.0
    %456 = vmatpush1.msra.mxu0 0.0
    %457 = vmatprep.mubr.f32.mxu0 0.0
    %458 = vmatmul.mubr.f32.gmra.mrb[0].mxu0 %v387
    %v459 = vpop.f32.mrb[0].mxu0
    %v460 = vadd.f32 %v383, %v459
    %v461 = vpop.f32.mrb[0].mxu0
    %462 = vdwg.mxu0
    %vm463 = vcmp.gt.f32.partialorder %v460, 0.0
    %v464 = vmul.f32 %v460, 0.2
    %v465 = vsel %vm463, %v460, %v464
    %v466 = vld [vmem:[#allocation8] sm:$0xff]
    %467 = vrot.lane.b32.xlu0 %v374, 96
    %v468 = vpop.permute.xlu0 %467
    %469 = vrot.lane.b32.xlu0 %v383, 96
    %v470 = vpop.permute.xlu0 %469
    %v473 = vsel %vm385, %v466, 0
    %v475 = vsel %vm389, %v468, 0
    %477 = vmatprep.subr.mxu0 0.0
    %478 = vmatpush1.msra.mxu0 %v475
    %479 = vmatprep.subr.mxu0 0.0
    %480 = vmatpush1.msra.mxu0 0.0
    %481 = vmatprep.subr.mxu0 0.0
    %482 = vmatpush1.msra.mxu0 0.0
    %483 = vmatprep.subr.mxu0 0.0
    %484 = vmatpush1.msra.mxu0 0.0
    %485 = vmatprep.subr.mxu0 0.0
    %486 = vmatpush1.msra.mxu0 0.0
    %487 = vmatprep.subr.mxu0 0.0
    %488 = vmatpush1.msra.mxu0 0.0
    %489 = vmatprep.subr.mxu0 0.0
    %490 = vmatpush1.msra.mxu0 0.0
    %491 = vmatprep.subr.mxu0 0.0
    %492 = vmatpush1.msra.mxu0 0.0
    %493 = vmatprep.subr.mxu0 0.0
    %494 = vmatpush1.msra.mxu0 0.0
    %495 = vmatprep.subr.mxu0 0.0
    %496 = vmatpush1.msra.mxu0 0.0
    %497 = vmatprep.subr.mxu0 0.0
    %498 = vmatpush1.msra.mxu0 0.0
    %499 = vmatprep.subr.mxu0 0.0
    %500 = vmatpush1.msra.mxu0 0.0
    %501 = vmatprep.subr.mxu0 0.0
    %502 = vmatpush1.msra.mxu0 0.0
    %503 = vmatprep.subr.mxu0 0.0
    %504 = vmatpush1.msra.mxu0 0.0
    %505 = vmatprep.subr.mxu0 0.0
    %506 = vmatpush1.msra.mxu0 0.0
    %507 = vmatprep.subr.mxu0 0.0
    %508 = vmatpush1.msra.mxu0 0.0
    %509 = vmatprep.subr.mxu0 0.0
    %510 = vmatpush1.msra.mxu0 0.0
    %511 = vmatprep.subr.mxu0 0.0
    %512 = vmatpush1.msra.mxu0 0.0
    %513 = vmatprep.subr.mxu0 0.0
    %514 = vmatpush1.msra.mxu0 0.0
    %515 = vmatprep.subr.mxu0 0.0
    %516 = vmatpush1.msra.mxu0 0.0
    %517 = vmatprep.subr.mxu0 0.0
    %518 = vmatpush1.msra.mxu0 0.0
    %519 = vmatprep.subr.mxu0 0.0
    %520 = vmatpush1.msra.mxu0 0.0
    %521 = vmatprep.subr.mxu0 0.0
    %522 = vmatpush1.msra.mxu0 0.0
    %523 = vmatprep.subr.mxu0 0.0
    %524 = vmatpush1.msra.mxu0 0.0
    %525 = vmatprep.subr.mxu0 0.0
    %526 = vmatpush1.msra.mxu0 0.0
    %527 = vmatprep.subr.mxu0 0.0
    %528 = vmatpush1.msra.mxu0 0.0
    %529 = vmatprep.subr.mxu0 0.0
    %530 = vmatpush1.msra.mxu0 0.0
    %531 = vmatprep.subr.mxu0 0.0
    %532 = vmatpush1.msra.mxu0 0.0
    %533 = vmatprep.subr.mxu0 0.0
    %534 = vmatpush1.msra.mxu0 0.0
    %535 = vmatprep.subr.mxu0 0.0
    %536 = vmatpush1.msra.mxu0 0.0
    %537 = vmatprep.subr.mxu0 0.0
    %538 = vmatpush1.msra.mxu0 0.0
    %539 = vmatprep.subr.mxu0 0.0
    %540 = vmatpush1.msra.mxu0 0.0
    %541 = vmatprep.mubr.f32.mxu0 0.0
    %542 = vmatmul.mubr.f32.gmra.mrb[0].mxu0 %v473
    %v543 = vpop.f32.mrb[0].mxu0
    %v544 = vadd.f32 %v470, %v543
    %v545 = vpop.f32.mrb[0].mxu0
    %546 = vdwg.mxu0
    %vm547 = vcmp.gt.f32.partialorder %v544, 0.0
    %v548 = vmul.f32 %v544, 0.2
    %v549 = vsel %vm547, %v544, %v548
    %v550 = vld [vmem:[#allocation9] sm:$0x3f]
    %551 = vrot.lane.b32.xlu0 %v374, 64
    %v552 = vpop.permute.xlu0 %551
    %553 = vrot.lane.b32.xlu0 %v383, 64
    %v554 = vpop.permute.xlu0 %553
    %v557 = vsel %vm385, %v550, 0
    %v559 = vsel %vm389, %v552, 0
    %561 = vmatprep.subr.mxu0 0.0
    %562 = vmatpush1.msra.mxu0 %v559
    %563 = vmatprep.subr.mxu0 0.0
    %564 = vmatpush1.msra.mxu0 0.0
    %565 = vmatprep.subr.mxu0 0.0
    %566 = vmatpush1.msra.mxu0 0.0
    %567 = vmatprep.subr.mxu0 0.0
    %568 = vmatpush1.msra.mxu0 0.0
    %569 = vmatprep.subr.mxu0 0.0
    %570 = vmatpush1.msra.mxu0 0.0
    %571 = vmatprep.subr.mxu0 0.0
    %572 = vmatpush1.msra.mxu0 0.0
    %573 = vmatprep.subr.mxu0 0.0
    %574 = vmatpush1.msra.mxu0 0.0
    %575 = vmatprep.subr.mxu0 0.0
    %576 = vmatpush1.msra.mxu0 0.0
    %577 = vmatprep.subr.mxu0 0.0
    %578 = vmatpush1.msra.mxu0 0.0
    %579 = vmatprep.subr.mxu0 0.0
    %580 = vmatpush1.msra.mxu0 0.0
    %581 = vmatprep.subr.mxu0 0.0
    %582 = vmatpush1.msra.mxu0 0.0
    %583 = vmatprep.subr.mxu0 0.0
    %584 = vmatpush1.msra.mxu0 0.0
    %585 = vmatprep.subr.mxu0 0.0
    %586 = vmatpush1.msra.mxu0 0.0
    %587 = vmatprep.subr.mxu0 0.0
    %588 = vmatpush1.msra.mxu0 0.0
    %589 = vmatprep.subr.mxu0 0.0
    %590 = vmatpush1.msra.mxu0 0.0
    %591 = vmatprep.subr.mxu0 0.0
    %592 = vmatpush1.msra.mxu0 0.0
    %593 = vmatprep.subr.mxu0 0.0
    %594 = vmatpush1.msra.mxu0 0.0
    %595 = vmatprep.subr.mxu0 0.0
    %596 = vmatpush1.msra.mxu0 0.0
    %597 = vmatprep.subr.mxu0 0.0
    %598 = vmatpush1.msra.mxu0 0.0
    %599 = vmatprep.subr.mxu0 0.0
    %600 = vmatpush1.msra.mxu0 0.0
    %601 = vmatprep.subr.mxu0 0.0
    %602 = vmatpush1.msra.mxu0 0.0
    %603 = vmatprep.subr.mxu0 0.0
    %604 = vmatpush1.msra.mxu0 0.0
    %605 = vmatprep.subr.mxu0 0.0
    %606 = vmatpush1.msra.mxu0 0.0
    %607 = vmatprep.subr.mxu0 0.0
    %608 = vmatpush1.msra.mxu0 0.0
    %609 = vmatprep.subr.mxu0 0.0
    %610 = vmatpush1.msra.mxu0 0.0
    %611 = vmatprep.subr.mxu0 0.0
    %612 = vmatpush1.msra.mxu0 0.0
    %613 = vmatprep.subr.mxu0 0.0
    %614 = vmatpush1.msra.mxu0 0.0
    %615 = vmatprep.subr.mxu0 0.0
    %616 = vmatpush1.msra.mxu0 0.0
    %617 = vmatprep.subr.mxu0 0.0
    %618 = vmatpush1.msra.mxu0 0.0
    %619 = vmatprep.subr.mxu0 0.0
    %620 = vmatpush1.msra.mxu0 0.0
    %621 = vmatprep.subr.mxu0 0.0
    %622 = vmatpush1.msra.mxu0 0.0
    %623 = vmatprep.subr.mxu0 0.0
    %624 = vmatpush1.msra.mxu0 0.0
    %625 = vmatprep.mubr.f32.mxu0 0.0
    %626 = vmatmul.mubr.f32.gmra.mrb[0].mxu0 %v557
    %v627 = vpop.f32.mrb[0].mxu0
    %v628 = vadd.f32 %v554, %v627
    %v629 = vpop.f32.mrb[0].mxu0
    %630 = vdwg.mxu0
    %v631 = vld [vmem:[#allocation11] sm:$0x3f]
    %v632 = vld [vmem:[%s15] sm:$0xff]
    %v633 = vld [vmem:[%s15 + $0x8] sm:$0xff]
    %v634 = vld [vmem:[%s15 + $0x10] sm:$0xff]
    %v635 = vld [vmem:[%s15 + $0x18] sm:$0xff]
    %vm637 = vcmask 1041408
    %v638 = vrot.slane %v297, 6
    %v639 = vrot.slane %v298, 6
    %v640 = vsel %vm637, %v638, %v639
    %v641 = vsel %vm303, %v640, 0
    %643 = vmatprep.subr.mxu0 0.0
    %644 = vmatpush1.msra.mxu0 %v632
    %645 = vmatprep.subr.mxu0 0.0
    %646 = vmatpush1.msra.mxu0 %v633
    %647 = vmatprep.subr.mxu0 0.0
    %648 = vmatpush1.msra.mxu0 %v634
    %649 = vmatprep.subr.mxu0 0.0
    %650 = vmatpush1.msra.mxu0 %v635
    %651 = vmatprep.subr.mxu0 0.0
    %652 = vmatpush1.msra.mxu0 0.0
    %653 = vmatprep.subr.mxu0 0.0
    %654 = vmatpush1.msra.mxu0 0.0
    %655 = vmatprep.subr.mxu0 0.0
    %656 = vmatpush1.msra.mxu0 0.0
    %657 = vmatprep.subr.mxu0 0.0
    %658 = vmatpush1.msra.mxu0 0.0
    %659 = vmatprep.subr.mxu0 0.0
    %660 = vmatpush1.msra.mxu0 0.0
    %661 = vmatprep.subr.mxu0 0.0
    %662 = vmatpush1.msra.mxu0 0.0
    %663 = vmatprep.subr.mxu0 0.0
    %664 = vmatpush1.msra.mxu0 0.0
    %665 = vmatprep.subr.mxu0 0.0
    %666 = vmatpush1.msra.mxu0 0.0
    %667 = vmatprep.subr.mxu0 0.0
    %668 = vmatpush1.msra.mxu0 0.0
    %669 = vmatprep.subr.mxu0 0.0
    %670 = vmatpush1.msra.mxu0 0.0
    %671 = vmatprep.subr.mxu0 0.0
    %672 = vmatpush1.msra.mxu0 0.0
    %673 = vmatprep.subr.mxu0 0.0
    %674 = vmatpush1.msra.mxu0 0.0
    %675 = vmatprep.subr.mxu0 0.0
    %676 = vmatpush1.msra.mxu0 0.0
    %677 = vmatprep.subr.mxu0 0.0
    %678 = vmatpush1.msra.mxu0 0.0
    %679 = vmatprep.subr.mxu0 0.0
    %680 = vmatpush1.msra.mxu0 0.0
    %681 = vmatprep.subr.mxu0 0.0
    %682 = vmatpush1.msra.mxu0 0.0
    %683 = vmatprep.subr.mxu0 0.0
    %684 = vmatpush1.msra.mxu0 0.0
    %685 = vmatprep.subr.mxu0 0.0
    %686 = vmatpush1.msra.mxu0 0.0
    %687 = vmatprep.subr.mxu0 0.0
    %688 = vmatpush1.msra.mxu0 0.0
    %689 = vmatprep.subr.mxu0 0.0
    %690 = vmatpush1.msra.mxu0 0.0
    %691 = vmatprep.subr.mxu0 0.0
    %692 = vmatpush1.msra.mxu0 0.0
    %693 = vmatprep.subr.mxu0 0.0
    %694 = vmatpush1.msra.mxu0 0.0
    %695 = vmatprep.subr.mxu0 0.0
    %696 = vmatpush1.msra.mxu0 0.0
    %697 = vmatprep.subr.mxu0 0.0
    %698 = vmatpush1.msra.mxu0 0.0
    %699 = vmatprep.subr.mxu0 0.0
    %700 = vmatpush1.msra.mxu0 0.0
    %701 = vmatprep.subr.mxu0 0.0
    %702 = vmatpush1.msra.mxu0 0.0
    %703 = vmatprep.subr.mxu0 0.0
    %704 = vmatpush1.msra.mxu0 0.0
    %705 = vmatprep.subr.mxu0 0.0
    %706 = vmatpush1.msra.mxu0 0.0
    %707 = vmatprep.mubr.f32.mxu0 0.0
    %708 = vmatmul.mubr.f32.gmra.mrb[0].mxu0 %v641
    %v709 = vpop.f32.mrb[0].mxu0
    %v710 = vadd.f32 0.0, %v709
    %v711 = vpop.f32.mrb[0].mxu0
    %712 = vdwg.mxu0
    %v713 = vld [vmem:[#allocation14] sm:$0x1]
    %v715 = vlaneseq
    %v716 = vshrl.u32 %v715, 7
    %v717 = vsub.s32 0, %v716
    %v718 = vrot.slane %v713, %v717
    %vm720 = vcmask 64512
    %v722 = vsel %vm720, %v631, 0
    %724 = vmatprep.subr.mxu0 0.0
    %725 = vmatpush1.msra.mxu0 %v710
    %726 = vmatprep.subr.mxu0 0.0
    %727 = vmatpush1.msra.mxu0 0.0
    %728 = vmatprep.subr.mxu0 0.0
    %729 = vmatpush1.msra.mxu0 0.0
    %730 = vmatprep.subr.mxu0 0.0
    %731 = vmatpush1.msra.mxu0 0.0
    %732 = vmatprep.subr.mxu0 0.0
    %733 = vmatpush1.msra.mxu0 0.0
    %734 = vmatprep.subr.mxu0 0.0
    %735 = vmatpush1.msra.mxu0 0.0
    %736 = vmatprep.subr.mxu0 0.0
    %737 = vmatpush1.msra.mxu0 0.0
    %738 = vmatprep.subr.mxu0 0.0
    %739 = vmatpush1.msra.mxu0 0.0
    %740 = vmatprep.subr.mxu0 0.0
    %741 = vmatpush1.msra.mxu0 0.0
    %742 = vmatprep.subr.mxu0 0.0
    %743 = vmatpush1.msra.mxu0 0.0
    %744 = vmatprep.subr.mxu0 0.0
    %745 = vmatpush1.msra.mxu0 0.0
    %746 = vmatprep.subr.mxu0 0.0
    %747 = vmatpush1.msra.mxu0 0.0
    %748 = vmatprep.subr.mxu0 0.0
    %749 = vmatpush1.msra.mxu0 0.0
    %750 = vmatprep.subr.mxu0 0.0
    %751 = vmatpush1.msra.mxu0 0.0
    %752 = vmatprep.subr.mxu0 0.0
    %753 = vmatpush1.msra.mxu0 0.0
    %754 = vmatprep.subr.mxu0 0.0
    %755 = vmatpush1.msra.mxu0 0.0
    %756 = vmatprep.subr.mxu0 0.0
    %757 = vmatpush1.msra.mxu0 0.0
    %758 = vmatprep.subr.mxu0 0.0
    %759 = vmatpush1.msra.mxu0 0.0
    %760 = vmatprep.subr.mxu0 0.0
    %761 = vmatpush1.msra.mxu0 0.0
    %762 = vmatprep.subr.mxu0 0.0
    %763 = vmatpush1.msra.mxu0 0.0
    %764 = vmatprep.subr.mxu0 0.0
    %765 = vmatpush1.msra.mxu0 0.0
    %766 = vmatprep.subr.mxu0 0.0
    %767 = vmatpush1.msra.mxu0 0.0
    %768 = vmatprep.subr.mxu0 0.0
    %769 = vmatpush1.msra.mxu0 0.0
    %770 = vmatprep.subr.mxu0 0.0
    %771 = vmatpush1.msra.mxu0 0.0
    %772 = vmatprep.subr.mxu0 0.0
    %773 = vmatpush1.msra.mxu0 0.0
    %774 = vmatprep.subr.mxu0 0.0
    %775 = vmatpush1.msra.mxu0 0.0
    %776 = vmatprep.subr.mxu0 0.0
    %777 = vmatpush1.msra.mxu0 0.0
    %778 = vmatprep.subr.mxu0 0.0
    %779 = vmatpush1.msra.mxu0 0.0
    %780 = vmatprep.subr.mxu0 0.0
    %781 = vmatpush1.msra.mxu0 0.0
    %782 = vmatprep.subr.mxu0 0.0
    %783 = vmatpush1.msra.mxu0 0.0
    %784 = vmatprep.subr.mxu0 0.0
    %785 = vmatpush1.msra.mxu0 0.0
    %786 = vmatprep.subr.mxu0 0.0
    %787 = vmatpush1.msra.mxu0 0.0
    %788 = vmatprep.mubr.f32.mxu0 0.0
    %789 = vmatmul.mubr.f32.gmra.mrb[0].mxu0 %v722
    %v790 = vpop.f32.mrb[0].mxu0
    %v791 = vadd.f32 %v718, %v790
    %v792 = vpop.f32.mrb[0].mxu0
    %793 = vdwg.mxu0
    %v794 = vadd.f32 %v628, %v791
    %v795 = vmul.f32 %v794, 0.5
    %vm796 = vcmp.gt.f32.partialorder %v795, 0.0
    %v797 = vmul.f32 %v795, 0.2
    %v798 = vsel %vm796, %v795, %v797
    %v799 = vld [vmem:[%s19] sm:$0xff]
    %v800 = vld [vmem:[%s19 + $0x8] sm:$0xff]
    %v801 = vld [vmem:[%s19 + $0x10] sm:$0xf]
    %v802 = vld [vmem:[%s21] sm:$0xff]
    %v803 = vld [vmem:[%s21 + $0x8] sm:$0xff]
    %v804 = vld [vmem:[%s21 + $0x10] sm:$0xf]
    %v806 = vsel %vm720, %v802, 0
    %v809 = vsel %vm720, %v803, 0
    %v812 = vsel %vm720, %v804, 0
    %814 = vmatprep.subr.mxu0 0.0
    %815 = vmatpush1.msra.mxu0 %v549
    %816 = vmatprep.subr.mxu0 0.0
    %817 = vmatpush1.msra.mxu0 0.0
    %818 = vmatprep.subr.mxu0 0.0
    %819 = vmatpush1.msra.mxu0 0.0
    %820 = vmatprep.subr.mxu0 0.0
    %821 = vmatpush1.msra.mxu0 0.0
    %822 = vmatprep.subr.mxu0 0.0
    %823 = vmatpush1.msra.mxu0 0.0
    %824 = vmatprep.subr.mxu0 0.0
    %825 = vmatpush1.msra.mxu0 0.0
    %826 = vmatprep.subr.mxu0 0.0
    %827 = vmatpush1.msra.mxu0 0.0
    %828 = vmatprep.subr.mxu0 0.0
    %829 = vmatpush1.msra.mxu0 0.0
    %830 = vmatprep.subr.mxu0 0.0
    %831 = vmatpush1.msra.mxu0 0.0
    %832 = vmatprep.subr.mxu0 0.0
    %833 = vmatpush1.msra.mxu0 0.0
    %834 = vmatprep.subr.mxu0 0.0
    %835 = vmatpush1.msra.mxu0 0.0
    %836 = vmatprep.subr.mxu0 0.0
    %837 = vmatpush1.msra.mxu0 0.0
    %838 = vmatprep.subr.mxu0 0.0
    %839 = vmatpush1.msra.mxu0 0.0
    %840 = vmatprep.subr.mxu0 0.0
    %841 = vmatpush1.msra.mxu0 0.0
    %842 = vmatprep.subr.mxu0 0.0
    %843 = vmatpush1.msra.mxu0 0.0
    %844 = vmatprep.subr.mxu0 0.0
    %845 = vmatpush1.msra.mxu0 0.0
    %846 = vmatprep.subr.mxu0 0.0
    %847 = vmatpush1.msra.mxu0 0.0
    %848 = vmatprep.subr.mxu0 0.0
    %849 = vmatpush1.msra.mxu0 0.0
    %850 = vmatprep.subr.mxu0 0.0
    %851 = vmatpush1.msra.mxu0 0.0
    %852 = vmatprep.subr.mxu0 0.0
    %853 = vmatpush1.msra.mxu0 0.0
    %854 = vmatprep.subr.mxu0 0.0
    %855 = vmatpush1.msra.mxu0 0.0
    %856 = vmatprep.subr.mxu0 0.0
    %857 = vmatpush1.msra.mxu0 0.0
    %858 = vmatprep.subr.mxu0 0.0
    %859 = vmatpush1.msra.mxu0 0.0
    %860 = vmatprep.subr.mxu0 0.0
    %861 = vmatpush1.msra.mxu0 0.0
    %862 = vmatprep.subr.mxu0 0.0
    %863 = vmatpush1.msra.mxu0 0.0
    %864 = vmatprep.subr.mxu0 0.0
    %865 = vmatpush1.msra.mxu0 0.0
    %866 = vmatprep.subr.mxu0 0.0
    %867 = vmatpush1.msra.mxu0 0.0
    %868 = vmatprep.subr.mxu0 0.0
    %869 = vmatpush1.msra.mxu0 0.0
    %870 = vmatprep.subr.mxu0 0.0
    %871 = vmatpush1.msra.mxu0 0.0
    %872 = vmatprep.subr.mxu0 0.0
    %873 = vmatpush1.msra.mxu0 0.0
    %874 = vmatprep.subr.mxu0 0.0
    %875 = vmatpush1.msra.mxu0 0.0
    %876 = vmatprep.subr.mxu0 0.0
    %877 = vmatpush1.msra.mxu0 0.0
    %878 = vmatprep.mubr.f32.mxu0 0.0
    %879 = vmatmul.mubr.f32.gmra.mrb[0].mxu0 %v806
    %v880 = vpop.f32.mrb[0].mxu0
    %v881 = vadd.f32 0.0, %v880
    %v882 = vpop.f32.mrb[0].mxu0
    %883 = vmatprep.mubr.f32.mxu0 0.0
    %884 = vmatmul.mubr.f32.gmra.mrb[0].mxu0 %v809
    %v885 = vpop.f32.mrb[0].mxu0
    %v886 = vadd.f32 0.0, %v885
    %v887 = vpop.f32.mrb[0].mxu0
    %888 = vmatprep.mubr.f32.mxu0 0.0
    %889 = vmatmul.mubr.f32.gmra.mrb[0].mxu0 %v812
    %v890 = vpop.f32.mrb[0].mxu0
    %v891 = vadd.f32 0.0, %v890
    %v892 = vpop.f32.mrb[0].mxu0
    %893 = vdwg.mxu0
    %v895 = vsel %vm385, %v799, 0
    %v898 = vsel %vm385, %v800, 0
    %v901 = vsel %vm385, %v801, 0
    %v904 = vsel %vm389, %v465, 0
    %906 = vmatprep.subr.mxu0 0.0
    %907 = vmatpush1.msra.mxu0 %v904
    %908 = vmatprep.subr.mxu0 0.0
    %909 = vmatpush1.msra.mxu0 0.0
    %910 = vmatprep.subr.mxu0 0.0
    %911 = vmatpush1.msra.mxu0 0.0
    %912 = vmatprep.subr.mxu0 0.0
    %913 = vmatpush1.msra.mxu0 0.0
    %914 = vmatprep.subr.mxu0 0.0
    %915 = vmatpush1.msra.mxu0 0.0
    %916 = vmatprep.subr.mxu0 0.0
    %917 = vmatpush1.msra.mxu0 0.0
    %918 = vmatprep.subr.mxu0 0.0
    %919 = vmatpush1.msra.mxu0 0.0
    %920 = vmatprep.subr.mxu0 0.0
    %921 = vmatpush1.msra.mxu0 0.0
    %922 = vmatprep.subr.mxu0 0.0
    %923 = vmatpush1.msra.mxu0 0.0
    %924 = vmatprep.subr.mxu0 0.0
    %925 = vmatpush1.msra.mxu0 0.0
    %926 = vmatprep.subr.mxu0 0.0
    %927 = vmatpush1.msra.mxu0 0.0
    %928 = vmatprep.subr.mxu0 0.0
    %929 = vmatpush1.msra.mxu0 0.0
    %930 = vmatprep.subr.mxu0 0.0
    %931 = vmatpush1.msra.mxu0 0.0
    %932 = vmatprep.subr.mxu0 0.0
    %933 = vmatpush1.msra.mxu0 0.0
    %934 = vmatprep.subr.mxu0 0.0
    %935 = vmatpush1.msra.mxu0 0.0
    %936 = vmatprep.subr.mxu0 0.0
    %937 = vmatpush1.msra.mxu0 0.0
    %938 = vmatprep.subr.mxu0 0.0
    %939 = vmatpush1.msra.mxu0 0.0
    %940 = vmatprep.subr.mxu0 0.0
    %941 = vmatpush1.msra.mxu0 0.0
    %942 = vmatprep.subr.mxu0 0.0
    %943 = vmatpush1.msra.mxu0 0.0
    %944 = vmatprep.subr.mxu0 0.0
    %945 = vmatpush1.msra.mxu0 0.0
    %946 = vmatprep.subr.mxu0 0.0
    %947 = vmatpush1.msra.mxu0 0.0
    %948 = vmatprep.subr.mxu0 0.0
    %949 = vmatpush1.msra.mxu0 0.0
    %950 = vmatprep.subr.mxu0 0.0
    %951 = vmatpush1.msra.mxu0 0.0
    %952 = vmatprep.subr.mxu0 0.0
    %953 = vmatpush1.msra.mxu0 0.0
    %954 = vmatprep.subr.mxu0 0.0
    %955 = vmatpush1.msra.mxu0 0.0
    %956 = vmatprep.subr.mxu0 0.0
    %957 = vmatpush1.msra.mxu0 0.0
    %958 = vmatprep.subr.mxu0 0.0
    %959 = vmatpush1.msra.mxu0 0.0
    %960 = vmatprep.subr.mxu0 0.0
    %961 = vmatpush1.msra.mxu0 0.0
    %962 = vmatprep.subr.mxu0 0.0
    %963 = vmatpush1.msra.mxu0 0.0
    %964 = vmatprep.subr.mxu0 0.0
    %965 = vmatpush1.msra.mxu0 0.0
    %966 = vmatprep.subr.mxu0 0.0
    %967 = vmatpush1.msra.mxu0 0.0
    %968 = vmatprep.subr.mxu0 0.0
    %969 = vmatpush1.msra.mxu0 0.0
    %970 = vmatprep.mubr.f32.mxu0 0.0
    %971 = vmatmul.mubr.f32.gmra.mrb[0].mxu0 %v895
    %v972 = vpop.f32.mrb[0].mxu0
    %v973 = vadd.f32 %v881, %v972
    %v974 = vpop.f32.mrb[0].mxu0
    %975 = vmatprep.mubr.f32.mxu0 0.0
    %976 = vmatmul.mubr.f32.gmra.mrb[0].mxu0 %v898
    %v977 = vpop.f32.mrb[0].mxu0
    %v978 = vadd.f32 %v886, %v977
    %v979 = vpop.f32.mrb[0].mxu0
    %980 = vmatprep.mubr.f32.mxu0 0.0
    %981 = vmatmul.mubr.f32.gmra.mrb[0].mxu0 %v901
    %v982 = vpop.f32.mrb[0].mxu0
    %v983 = vadd.f32 %v891, %v982
    %v984 = vpop.f32.mrb[0].mxu0
    %985 = vdwg.mxu0
    %v986 = vld [vmem:[%s23] sm:$0xff]
    %v987 = vld [vmem:[%s23 + $0x8] sm:$0xff]
    %v988 = vld [vmem:[%s23 + $0x10] sm:$0xf]
    %v990 = vsel %vm385, %v986, 0
    %v993 = vsel %vm385, %v987, 0
    %v996 = vsel %vm385, %v988, 0
    %v999 = vsel %vm389, %v798, 0
    %1001 = vmatprep.subr.mxu0 0.0
    %1002 = vmatpush1.msra.mxu0 %v999
    %1003 = vmatprep.subr.mxu0 0.0
    %1004 = vmatpush1.msra.mxu0 0.0
    %1005 = vmatprep.subr.mxu0 0.0
    %1006 = vmatpush1.msra.mxu0 0.0
    %1007 = vmatprep.subr.mxu0 0.0
    %1008 = vmatpush1.msra.mxu0 0.0
    %1009 = vmatprep.subr.mxu0 0.0
    %1010 = vmatpush1.msra.mxu0 0.0
    %1011 = vmatprep.subr.mxu0 0.0
    %1012 = vmatpush1.msra.mxu0 0.0
    %1013 = vmatprep.subr.mxu0 0.0
    %1014 = vmatpush1.msra.mxu0 0.0
    %1015 = vmatprep.subr.mxu0 0.0
    %1016 = vmatpush1.msra.mxu0 0.0
    %1017 = vmatprep.subr.mxu0 0.0
    %1018 = vmatpush1.msra.mxu0 0.0
    %1019 = vmatprep.subr.mxu0 0.0
    %1020 = vmatpush1.msra.mxu0 0.0
    %1021 = vmatprep.subr.mxu0 0.0
    %1022 = vmatpush1.msra.mxu0 0.0
    %1023 = vmatprep.subr.mxu0 0.0
    %1024 = vmatpush1.msra.mxu0 0.0
    %1025 = vmatprep.subr.mxu0 0.0
    %1026 = vmatpush1.msra.mxu0 0.0
    %1027 = vmatprep.subr.mxu0 0.0
    %1028 = vmatpush1.msra.mxu0 0.0
    %1029 = vmatprep.subr.mxu0 0.0
    %1030 = vmatpush1.msra.mxu0 0.0
    %1031 = vmatprep.subr.mxu0 0.0
    %1032 = vmatpush1.msra.mxu0 0.0
    %1033 = vmatprep.subr.mxu0 0.0
    %1034 = vmatpush1.msra.mxu0 0.0
    %1035 = vmatprep.subr.mxu0 0.0
    %1036 = vmatpush1.msra.mxu0 0.0
    %1037 = vmatprep.subr.mxu0 0.0
    %1038 = vmatpush1.msra.mxu0 0.0
    %1039 = vmatprep.subr.mxu0 0.0
    %1040 = vmatpush1.msra.mxu0 0.0
    %1041 = vmatprep.subr.mxu0 0.0
    %1042 = vmatpush1.msra.mxu0 0.0
    %1043 = vmatprep.subr.mxu0 0.0
    %1044 = vmatpush1.msra.mxu0 0.0
    %1045 = vmatprep.subr.mxu0 0.0
    %1046 = vmatpush1.msra.mxu0 0.0
    %1047 = vmatprep.subr.mxu0 0.0
    %1048 = vmatpush1.msra.mxu0 0.0
    %1049 = vmatprep.subr.mxu0 0.0
    %1050 = vmatpush1.msra.mxu0 0.0
    %1051 = vmatprep.subr.mxu0 0.0
    %1052 = vmatpush1.msra.mxu0 0.0
    %1053 = vmatprep.subr.mxu0 0.0
    %1054 = vmatpush1.msra.mxu0 0.0
    %1055 = vmatprep.subr.mxu0 0.0
    %1056 = vmatpush1.msra.mxu0 0.0
    %1057 = vmatprep.subr.mxu0 0.0
    %1058 = vmatpush1.msra.mxu0 0.0
    %1059 = vmatprep.subr.mxu0 0.0
    %1060 = vmatpush1.msra.mxu0 0.0
    %1061 = vmatprep.subr.mxu0 0.0
    %1062 = vmatpush1.msra.mxu0 0.0
    %1063 = vmatprep.subr.mxu0 0.0
    %1064 = vmatpush1.msra.mxu0 0.0
    %1065 = vmatprep.mubr.f32.mxu0 0.0
    %1066 = vmatmul.mubr.f32.gmra.mrb[0].mxu0 %v990
    %v1067 = vpop.f32.mrb[0].mxu0
    %v1068 = vadd.f32 0.0, %v1067
    %v1069 = vpop.f32.mrb[0].mxu0
    %1070 = vmatprep.mubr.f32.mxu0 0.0
    %1071 = vmatmul.mubr.f32.gmra.mrb[0].mxu0 %v993
    %v1072 = vpop.f32.mrb[0].mxu0
    %v1073 = vadd.f32 0.0, %v1072
    %v1074 = vpop.f32.mrb[0].mxu0
    %1075 = vmatprep.mubr.f32.mxu0 0.0
    %1076 = vmatmul.mubr.f32.gmra.mrb[0].mxu0 %v996
    %v1077 = vpop.f32.mrb[0].mxu0
    %v1078 = vadd.f32 0.0, %v1077
    %v1079 = vpop.f32.mrb[0].mxu0
    %1080 = vdwg.mxu0
    %v1081 = vadd.f32 %v973, %v1068
    %v1082 = vadd.f32 %v978, %v1073
    %v1083 = vadd.f32 %v983, %v1078
    %v1084 = vld [vmem:[#allocation2] sm:$0x1]
    %v1085 = vsub.f32 1.0, %v1084
    %v1086 = vld [vmem:[%s25] sm:$0xff]
    %v1087 = vld [vmem:[%s25 + $0x8] sm:$0xff]
    %v1088 = vld [vmem:[%s25 + $0x10] sm:$0xff]
    %v1089 = vld [vmem:[%s25 + $0x18] sm:$0xff]
    %v1090 = vld [vmem:[#allocation15] sm:$0x1]
    %v1091 = vld [vmem:[%s37] sm:$0xff]
    %v1092 = vld [vmem:[%s37 + $0x8] sm:$0xff]
    %v1093 = vld [vmem:[%s37 + $0x10] sm:$0xff]
    %v1094 = vld [vmem:[%s37 + $0x18] sm:$0xff]
    %s1095 = scalar_lea.vmem %s37, 32
    %v1096 = vld [vmem:[%s1095] sm:$0xff]
    %v1097 = vld [vmem:[%s1095 + $0x8] sm:$0xff]
    %v1098 = vld [vmem:[%s1095 + $0x10] sm:$0xff]
    %v1099 = vld [vmem:[%s1095 + $0x18] sm:$0xff]
    %s1100 = scalar_lea.vmem %s37, 64
    %v1101 = vld [vmem:[%s1100] sm:$0xff]
    %v1102 = vld [vmem:[%s1100 + $0x8] sm:$0xff]
    %v1103 = vld [vmem:[%s1100 + $0x10] sm:$0xff]
    %v1104 = vld [vmem:[%s1100 + $0x18] sm:$0xff]
    %v1105 = vld [vmem:[%s39] sm:$0xff]
    %v1106 = vld [vmem:[%s39 + $0x8] sm:$0xff]
    %v1107 = vld [vmem:[%s39 + $0x10] sm:$0xff]
    %v1108 = vld [vmem:[%s39 + $0x18] sm:$0xff]
    %s1109 = scalar_lea.vmem %s39, 32
    %v1110 = vld [vmem:[%s1109] sm:$0xff]
    %v1111 = vld [vmem:[%s1109 + $0x8] sm:$0xff]
    %v1112 = vld [vmem:[%s1109 + $0x10] sm:$0xff]
    %v1113 = vld [vmem:[%s1109 + $0x18] sm:$0xff]
    %s1114 = scalar_lea.vmem %s39, 64
    %v1115 = vld [vmem:[%s1114] sm:$0xff]
    %v1116 = vld [vmem:[%s1114 + $0x8] sm:$0xff]
    %v1117 = vld [vmem:[%s1114 + $0x10] sm:$0xff]
    %v1118 = vld [vmem:[%s1114 + $0x18] sm:$0xff]
    %v1119 = vld [vmem:[#allocation23] sm:$0x1]
    %s1120 = scalar_lea.vmem [#allocation23], 1
    %v1121 = vld [vmem:[%s1120] sm:$0x1]
    %s1122 = scalar_lea.vmem [#allocation23], 2
    %v1123 = vld [vmem:[%s1122] sm:$0x1]
    %v1124 = vld [vmem:[#allocation24] sm:$0x1]
    %s1125 = scalar_lea.vmem [#allocation24], 1
    %v1126 = vld [vmem:[%s1125] sm:$0x1]
    %s1127 = scalar_lea.vmem [#allocation24], 2
    %v1128 = vld [vmem:[%s1127] sm:$0x1]
    %v1129 = vld [vmem:[#allocation20] sm:$0xff]
    %v1130 = vld [vmem:[#allocation20 + $0x8] sm:$0xff]
    %v1131 = vld [vmem:[#allocation20 + $0x10] sm:$0xff]
    %v1132 = vld [vmem:[#allocation20 + $0x18] sm:$0xff]
    %v1133 = vld [vmem:[#allocation21] sm:$0x1]
    %v1134 = vld [vmem:[#allocation17] sm:$0xff]
    %v1135 = vld [vmem:[#allocation17 + $0x8] sm:$0xff]
    %v1136 = vld [vmem:[#allocation17 + $0x10] sm:$0xff]
    %v1137 = vld [vmem:[#allocation17 + $0x18] sm:$0xff]
    %v1138 = vld [vmem:[#allocation18] sm:$0x1]
    %v1139 = vld [vmem:[%s47] sm:$0xff]
    %v1140 = vld [vmem:[%s47 + $0x8] sm:$0xf]
    %v1142 = vsel %vm303, %v1139, 0
    %v1145 = vsel %vm303, %v1140, 0
    %1147 = vmatprep.subr.mxu0 0.0
    %1148 = vmatpush1.msra.mxu0 %v1086
    %1149 = vmatprep.subr.mxu0 0.0
    %1150 = vmatpush1.msra.mxu0 %v1087
    %1151 = vmatprep.subr.mxu0 0.0
    %1152 = vmatpush1.msra.mxu0 %v1088
    %1153 = vmatprep.subr.mxu0 0.0
    %1154 = vmatpush1.msra.mxu0 %v1089
    %1155 = vmatprep.subr.mxu0 0.0
    %1156 = vmatpush1.msra.mxu0 0.0
    %1157 = vmatprep.subr.mxu0 0.0
    %1158 = vmatpush1.msra.mxu0 0.0
    %1159 = vmatprep.subr.mxu0 0.0
    %1160 = vmatpush1.msra.mxu0 0.0
    %1161 = vmatprep.subr.mxu0 0.0
    %1162 = vmatpush1.msra.mxu0 0.0
    %1163 = vmatprep.subr.mxu0 0.0
    %1164 = vmatpush1.msra.mxu0 0.0
    %1165 = vmatprep.subr.mxu0 0.0
    %1166 = vmatpush1.msra.mxu0 0.0
    %1167 = vmatprep.subr.mxu0 0.0
    %1168 = vmatpush1.msra.mxu0 0.0
    %1169 = vmatprep.subr.mxu0 0.0
    %1170 = vmatpush1.msra.mxu0 0.0
    %1171 = vmatprep.subr.mxu0 0.0
    %1172 = vmatpush1.msra.mxu0 0.0
    %1173 = vmatprep.subr.mxu0 0.0
    %1174 = vmatpush1.msra.mxu0 0.0
    %1175 = vmatprep.subr.mxu0 0.0
    %1176 = vmatpush1.msra.mxu0 0.0
    %1177 = vmatprep.subr.mxu0 0.0
    %1178 = vmatpush1.msra.mxu0 0.0
    %1179 = vmatprep.subr.mxu0 0.0
    %1180 = vmatpush1.msra.mxu0 0.0
    %1181 = vmatprep.subr.mxu0 0.0
    %1182 = vmatpush1.msra.mxu0 0.0
    %1183 = vmatprep.subr.mxu0 0.0
    %1184 = vmatpush1.msra.mxu0 0.0
    %1185 = vmatprep.subr.mxu0 0.0
    %1186 = vmatpush1.msra.mxu0 0.0
    %1187 = vmatprep.subr.mxu0 0.0
    %1188 = vmatpush1.msra.mxu0 0.0
    %1189 = vmatprep.subr.mxu0 0.0
    %1190 = vmatpush1.msra.mxu0 0.0
    %1191 = vmatprep.subr.mxu0 0.0
    %1192 = vmatpush1.msra.mxu0 0.0
    %1193 = vmatprep.subr.mxu0 0.0
    %1194 = vmatpush1.msra.mxu0 0.0
    %1195 = vmatprep.subr.mxu0 0.0
    %1196 = vmatpush1.msra.mxu0 0.0
    %1197 = vmatprep.subr.mxu0 0.0
    %1198 = vmatpush1.msra.mxu0 0.0
    %1199 = vmatprep.subr.mxu0 0.0
    %1200 = vmatpush1.msra.mxu0 0.0
    %1201 = vmatprep.subr.mxu0 0.0
    %1202 = vmatpush1.msra.mxu0 0.0
    %1203 = vmatprep.subr.mxu0 0.0
    %1204 = vmatpush1.msra.mxu0 0.0
    %1205 = vmatprep.subr.mxu0 0.0
    %1206 = vmatpush1.msra.mxu0 0.0
    %1207 = vmatprep.subr.mxu0 0.0
    %1208 = vmatpush1.msra.mxu0 0.0
    %1209 = vmatprep.subr.mxu0 0.0
    %1210 = vmatpush1.msra.mxu0 0.0
    %1211 = vmatprep.mubr.f32.mxu0 0.0
    %1212 = vmatmul.mubr.f32.gmra.mrb[0].mxu0 %v1142
    %v1213 = vpop.f32.mrb[0].mxu0
    %v1214 = vadd.f32 0.0, %v1213
    %v1215 = vpop.f32.mrb[0].mxu0
    %1216 = vmatprep.mubr.f32.mxu0 0.0
    %1217 = vmatmul.mubr.f32.gmra.mrb[0].mxu0 %v1145
    %v1218 = vpop.f32.mrb[0].mxu0
    %v1219 = vadd.f32 0.0, %v1218
    %v1220 = vpop.f32.mrb[0].mxu0
    %1221 = vdwg.mxu0
    %v1222 = vld [vmem:[%s49] sm:$0xff]
    %v1223 = vld [vmem:[%s49 + $0x8] sm:$0xf]
    %v1225 = vlaneseq
    %v1226 = vshrl.u32 %v1225, 7
    %v1227 = vsub.s32 0, %v1226
    %v1228 = vrot.slane %v1090, %v1227
    %vm1230 = vcmask 97280
    %v1232 = vsel %vm1230, %v1222, 0
    %v1235 = vsel %vm1230, %v1223, 0
    %vm1237 = vcmask 1043456
    %v1239 = vsel %vm1237, %v1219, 0
    %1241 = vmatprep.subr.mxu0 0.0
    %1242 = vmatpush1.msra.mxu0 %v1214
    %1243 = vmatprep.subr.mxu0 0.0
    %1244 = vmatpush1.msra.mxu0 %v1239
    %1245 = vmatprep.subr.mxu0 0.0
    %1246 = vmatpush1.msra.mxu0 0.0
    %1247 = vmatprep.subr.mxu0 0.0
    %1248 = vmatpush1.msra.mxu0 0.0
    %1249 = vmatprep.subr.mxu0 0.0
    %1250 = vmatpush1.msra.mxu0 0.0
    %1251 = vmatprep.subr.mxu0 0.0
    %1252 = vmatpush1.msra.mxu0 0.0
    %1253 = vmatprep.subr.mxu0 0.0
    %1254 = vmatpush1.msra.mxu0 0.0
    %1255 = vmatprep.subr.mxu0 0.0
    %1256 = vmatpush1.msra.mxu0 0.0
    %1257 = vmatprep.subr.mxu0 0.0
    %1258 = vmatpush1.msra.mxu0 0.0
    %1259 = vmatprep.subr.mxu0 0.0
    %1260 = vmatpush1.msra.mxu0 0.0
    %1261 = vmatprep.subr.mxu0 0.0
    %1262 = vmatpush1.msra.mxu0 0.0
    %1263 = vmatprep.subr.mxu0 0.0
    %1264 = vmatpush1.msra.mxu0 0.0
    %1265 = vmatprep.subr.mxu0 0.0
    %1266 = vmatpush1.msra.mxu0 0.0
    %1267 = vmatprep.subr.mxu0 0.0
    %1268 = vmatpush1.msra.mxu0 0.0
    %1269 = vmatprep.subr.mxu0 0.0
    %1270 = vmatpush1.msra.mxu0 0.0
    %1271 = vmatprep.subr.mxu0 0.0
    %1272 = vmatpush1.msra.mxu0 0.0
    %1273 = vmatprep.subr.mxu0 0.0
    %1274 = vmatpush1.msra.mxu0 0.0
    %1275 = vmatprep.subr.mxu0 0.0
    %1276 = vmatpush1.msra.mxu0 0.0
    %1277 = vmatprep.subr.mxu0 0.0
    %1278 = vmatpush1.msra.mxu0 0.0
    %1279 = vmatprep.subr.mxu0 0.0
    %1280 = vmatpush1.msra.mxu0 0.0
    %1281 = vmatprep.subr.mxu0 0.0
    %1282 = vmatpush1.msra.mxu0 0.0
    %1283 = vmatprep.subr.mxu0 0.0
    %1284 = vmatpush1.msra.mxu0 0.0
    %1285 = vmatprep.subr.mxu0 0.0
    %1286 = vmatpush1.msra.mxu0 0.0
    %1287 = vmatprep.subr.mxu0 0.0
    %1288 = vmatpush1.msra.mxu0 0.0
    %1289 = vmatprep.subr.mxu0 0.0
    %1290 = vmatpush1.msra.mxu0 0.0
    %1291 = vmatprep.subr.mxu0 0.0
    %1292 = vmatpush1.msra.mxu0 0.0
    %1293 = vmatprep.subr.mxu0 0.0
    %1294 = vmatpush1.msra.mxu0 0.0
    %1295 = vmatprep.subr.mxu0 0.0
    %1296 = vmatpush1.msra.mxu0 0.0
    %1297 = vmatprep.subr.mxu0 0.0
    %1298 = vmatpush1.msra.mxu0 0.0
    %1299 = vmatprep.subr.mxu0 0.0
    %1300 = vmatpush1.msra.mxu0 0.0
    %1301 = vmatprep.subr.mxu0 0.0
    %1302 = vmatpush1.msra.mxu0 0.0
    %1303 = vmatprep.subr.mxu0 0.0
    %1304 = vmatpush1.msra.mxu0 0.0
    %1305 = vmatprep.mubr.f32.mxu0 0.0
    %1306 = vmatmul.mubr.f32.gmra.mrb[0].mxu0 %v1232
    %v1307 = vpop.f32.mrb[0].mxu0
    %v1308 = vadd.f32 %v1228, %v1307
    %v1309 = vpop.f32.mrb[0].mxu0
    %1310 = vmatprep.mubr.f32.mxu0 0.0
    %1311 = vmatmul.mubr.f32.gmra.mrb[0].mxu0 %v1235
    %v1312 = vpop.f32.mrb[0].mxu0
    %v1313 = vpop.f32.mrb[0].mxu0
    %1314 = vdwg.mxu0
    %v1315 = vld [vmem:[%s51] sm:$0x3f]
    %vm1316 = vcmask 162816
    %v1318 = vsel %vm1316, %v1315, 0
    %v1321 = vsel %vm1237, %v1083, 0
    %1323 = vmatprep.subr.mxu0 0.0
    %1324 = vmatpush1.msra.mxu0 %v1081
    %1325 = vmatprep.subr.mxu0 0.0
    %1326 = vmatpush1.msra.mxu0 %v1082
    %1327 = vmatprep.subr.mxu0 0.0
    %1328 = vmatpush1.msra.mxu0 %v1321
    %1329 = vmatprep.subr.mxu0 0.0
    %1330 = vmatpush1.msra.mxu0 0.0
    %1331 = vmatprep.subr.mxu0 0.0
    %1332 = vmatpush1.msra.mxu0 0.0
    %1333 = vmatprep.subr.mxu0 0.0
    %1334 = vmatpush1.msra.mxu0 0.0
    %1335 = vmatprep.subr.mxu0 0.0
    %1336 = vmatpush1.msra.mxu0 0.0
    %1337 = vmatprep.subr.mxu0 0.0
    %1338 = vmatpush1.msra.mxu0 0.0
    %1339 = vmatprep.subr.mxu0 0.0
    %1340 = vmatpush1.msra.mxu0 0.0
    %1341 = vmatprep.subr.mxu0 0.0
    %1342 = vmatpush1.msra.mxu0 0.0
    %1343 = vmatprep.subr.mxu0 0.0
    %1344 = vmatpush1.msra.mxu0 0.0
    %1345 = vmatprep.subr.mxu0 0.0
    %1346 = vmatpush1.msra.mxu0 0.0
    %1347 = vmatprep.subr.mxu0 0.0
    %1348 = vmatpush1.msra.mxu0 0.0
    %1349 = vmatprep.subr.mxu0 0.0
    %1350 = vmatpush1.msra.mxu0 0.0
    %1351 = vmatprep.subr.mxu0 0.0
    %1352 = vmatpush1.msra.mxu0 0.0
    %1353 = vmatprep.subr.mxu0 0.0
    %1354 = vmatpush1.msra.mxu0 0.0
    %1355 = vmatprep.subr.mxu0 0.0
    %1356 = vmatpush1.msra.mxu0 0.0
    %1357 = vmatprep.subr.mxu0 0.0
    %1358 = vmatpush1.msra.mxu0 0.0
    %1359 = vmatprep.subr.mxu0 0.0
    %1360 = vmatpush1.msra.mxu0 0.0
    %1361 = vmatprep.subr.mxu0 0.0
    %1362 = vmatpush1.msra.mxu0 0.0
    %1363 = vmatprep.subr.mxu0 0.0
    %1364 = vmatpush1.msra.mxu0 0.0
    %1365 = vmatprep.subr.mxu0 0.0
    %1366 = vmatpush1.msra.mxu0 0.0
    %1367 = vmatprep.subr.mxu0 0.0
    %1368 = vmatpush1.msra.mxu0 0.0
    %1369 = vmatprep.subr.mxu0 0.0
    %1370 = vmatpush1.msra.mxu0 0.0
    %1371 = vmatprep.subr.mxu0 0.0
    %1372 = vmatpush1.msra.mxu0 0.0
    %1373 = vmatprep.subr.mxu0 0.0
    %1374 = vmatpush1.msra.mxu0 0.0
    %1375 = vmatprep.subr.mxu0 0.0
    %1376 = vmatpush1.msra.mxu0 0.0
    %1377 = vmatprep.subr.mxu0 0.0
    %1378 = vmatpush1.msra.mxu0 0.0
    %1379 = vmatprep.subr.mxu0 0.0
    %1380 = vmatpush1.msra.mxu0 0.0
    %1381 = vmatprep.subr.mxu0 0.0
    %1382 = vmatpush1.msra.mxu0 0.0
    %1383 = vmatprep.subr.mxu0 0.0
    %1384 = vmatpush1.msra.mxu0 0.0
    %1385 = vmatprep.subr.mxu0 0.0
    %1386 = vmatpush1.msra.mxu0 0.0
    %1387 = vmatprep.mubr.f32.mxu0 0.0
    %1388 = vmatmul.mubr.f32.gmra.mrb[0].mxu0 %v1318
    %v1389 = vpop.f32.mrb[0].mxu0
    %v1390 = vadd.f32 0.0, %v1389
    %v1391 = vpop.f32.mrb[0].mxu0
    %1392 = vdwg.mxu0
    %v1393 = vld [vmem:[%s53] sm:$0x3f]
    %v1395 = vlaneseq
    %v1396 = vshrl.u32 %v1395, 7
    %v1397 = vsub.s32 0, %v1396
    %v1398 = vrot.slane %v1085, %v1397
    %1399 = vset.pattern.permute.xlu0 0
    %1400 = vperm.xlu0 %1399, %v1398
    %v1401 = vpop.permute.xlu0 %1400
    %v1403 = vmul.f32 %v1401, %v1308
    %v1405 = vlaneseq
    %v1406 = vshrl.u32 %v1405, 7
    %v1407 = vsub.s32 0, %v1406
    %v1408 = vrot.slane %v1084, %v1407
    %1409 = vset.pattern.permute.xlu0 0
    %1410 = vperm.xlu0 %1409, %v1408
    %v1411 = vpop.permute.xlu0 %1410
    %v1413 = vmul.f32 %v1411, %v1390
    %v1414 = vadd.f32 %v1403, %v1413
    %1416 = vset.pattern.permute.xlu0 0
    %1417 = vperm.xlu0 %1416, %v1393
    %v1418 = vpop.permute.xlu0 %1417
    %v1420 = vmul.f32 %v1418, %v1414
    %v1421 = vld [vmem:[%s55] sm:$0x1]
    %v1423 = vsel %vm1316, %v1421, 0
    %1425 = vmatprep.subr.mxu0 0.0
    %1426 = vmatpush1.msra.mxu0 %v1081
    %1427 = vmatprep.subr.mxu0 0.0
    %1428 = vmatpush1.msra.mxu0 %v1082
    %1429 = vmatprep.subr.mxu0 0.0
    %1430 = vmatpush1.msra.mxu0 %v1321
    %1431 = vmatprep.subr.mxu0 0.0
    %1432 = vmatpush1.msra.mxu0 0.0
    %1433 = vmatprep.subr.mxu0 0.0
    %1434 = vmatpush1.msra.mxu0 0.0
    %1435 = vmatprep.subr.mxu0 0.0
    %1436 = vmatpush1.msra.mxu0 0.0
    %1437 = vmatprep.subr.mxu0 0.0
    %1438 = vmatpush1.msra.mxu0 0.0
    %1439 = vmatprep.subr.mxu0 0.0
    %1440 = vmatpush1.msra.mxu0 0.0
    %1441 = vmatprep.subr.mxu0 0.0
    %1442 = vmatpush1.msra.mxu0 0.0
    %1443 = vmatprep.subr.mxu0 0.0
    %1444 = vmatpush1.msra.mxu0 0.0
    %1445 = vmatprep.subr.mxu0 0.0
    %1446 = vmatpush1.msra.mxu0 0.0
    %1447 = vmatprep.subr.mxu0 0.0
    %1448 = vmatpush1.msra.mxu0 0.0
    %1449 = vmatprep.subr.mxu0 0.0
    %1450 = vmatpush1.msra.mxu0 0.0
    %1451 = vmatprep.subr.mxu0 0.0
    %1452 = vmatpush1.msra.mxu0 0.0
    %1453 = vmatprep.subr.mxu0 0.0
    %1454 = vmatpush1.msra.mxu0 0.0
    %1455 = vmatprep.subr.mxu0 0.0
    %1456 = vmatpush1.msra.mxu0 0.0
    %1457 = vmatprep.subr.mxu0 0.0
    %1458 = vmatpush1.msra.mxu0 0.0
    %1459 = vmatprep.subr.mxu0 0.0
    %1460 = vmatpush1.msra.mxu0 0.0
    %1461 = vmatprep.subr.mxu0 0.0
    %1462 = vmatpush1.msra.mxu0 0.0
    %1463 = vmatprep.subr.mxu0 0.0
    %1464 = vmatpush1.msra.mxu0 0.0
    %1465 = vmatprep.subr.mxu0 0.0
    %1466 = vmatpush1.msra.mxu0 0.0
    %1467 = vmatprep.subr.mxu0 0.0
    %1468 = vmatpush1.msra.mxu0 0.0
    %1469 = vmatprep.subr.mxu0 0.0
    %1470 = vmatpush1.msra.mxu0 0.0
    %1471 = vmatprep.subr.mxu0 0.0
    %1472 = vmatpush1.msra.mxu0 0.0
    %1473 = vmatprep.subr.mxu0 0.0
    %1474 = vmatpush1.msra.mxu0 0.0
    %1475 = vmatprep.subr.mxu0 0.0
    %1476 = vmatpush1.msra.mxu0 0.0
    %1477 = vmatprep.subr.mxu0 0.0
    %1478 = vmatpush1.msra.mxu0 0.0
    %1479 = vmatprep.subr.mxu0 0.0
    %1480 = vmatpush1.msra.mxu0 0.0
    %1481 = vmatprep.subr.mxu0 0.0
    %1482 = vmatpush1.msra.mxu0 0.0
    %1483 = vmatprep.subr.mxu0 0.0
    %1484 = vmatpush1.msra.mxu0 0.0
    %1485 = vmatprep.subr.mxu0 0.0
    %1486 = vmatpush1.msra.mxu0 0.0
    %1487 = vmatprep.subr.mxu0 0.0
    %1488 = vmatpush1.msra.mxu0 0.0
    %1489 = vmatprep.mubr.f32.mxu0 0.0
    %1490 = vmatmul.mubr.f32.gmra.mrb[0].mxu0 %v1423
    %v1491 = vpop.f32.mrb[0].mxu0
    %v1492 = vadd.f32 0.0, %v1491
    %v1493 = vpop.f32.mrb[0].mxu0
    %1494 = vdwg.mxu0
    %v1496 = vsel %vm303, %v1492, 0
    %1498 = vmatprep.subr.mxu0 0.0
    %1499 = vmatpush1.msra.mxu0 %v1134
    %1500 = vmatprep.subr.mxu0 0.0
    %1501 = vmatpush1.msra.mxu0 %v1135
    %1502 = vmatprep.subr.mxu0 0.0
    %1503 = vmatpush1.msra.mxu0 %v1136
    %1504 = vmatprep.subr.mxu0 0.0
    %1505 = vmatpush1.msra.mxu0 %v1137
    %1506 = vmatprep.subr.mxu0 0.0
    %1507 = vmatpush1.msra.mxu0 0.0
    %1508 = vmatprep.subr.mxu0 0.0
    %1509 = vmatpush1.msra.mxu0 0.0
    %1510 = vmatprep.subr.mxu0 0.0
    %1511 = vmatpush1.msra.mxu0 0.0
    %1512 = vmatprep.subr.mxu0 0.0
    %1513 = vmatpush1.msra.mxu0 0.0
    %1514 = vmatprep.subr.mxu0 0.0
    %1515 = vmatpush1.msra.mxu0 0.0
    %1516 = vmatprep.subr.mxu0 0.0
    %1517 = vmatpush1.msra.mxu0 0.0
    %1518 = vmatprep.subr.mxu0 0.0
    %1519 = vmatpush1.msra.mxu0 0.0
    %1520 = vmatprep.subr.mxu0 0.0
    %1521 = vmatpush1.msra.mxu0 0.0
    %1522 = vmatprep.subr.mxu0 0.0
    %1523 = vmatpush1.msra.mxu0 0.0
    %1524 = vmatprep.subr.mxu0 0.0
    %1525 = vmatpush1.msra.mxu0 0.0
    %1526 = vmatprep.subr.mxu0 0.0
    %1527 = vmatpush1.msra.mxu0 0.0
    %1528 = vmatprep.subr.mxu0 0.0
    %1529 = vmatpush1.msra.mxu0 0.0
    %1530 = vmatprep.subr.mxu0 0.0
    %1531 = vmatpush1.msra.mxu0 0.0
    %1532 = vmatprep.subr.mxu0 0.0
    %1533 = vmatpush1.msra.mxu0 0.0
    %1534 = vmatprep.subr.mxu0 0.0
    %1535 = vmatpush1.msra.mxu0 0.0
    %1536 = vmatprep.subr.mxu0 0.0
    %1537 = vmatpush1.msra.mxu0 0.0
    %1538 = vmatprep.subr.mxu0 0.0
    %1539 = vmatpush1.msra.mxu0 0.0
    %1540 = vmatprep.subr.mxu0 0.0
    %1541 = vmatpush1.msra.mxu0 0.0
    %1542 = vmatprep.subr.mxu0 0.0
    %1543 = vmatpush1.msra.mxu0 0.0
    %1544 = vmatprep.subr.mxu0 0.0
    %1545 = vmatpush1.msra.mxu0 0.0
    %1546 = vmatprep.subr.mxu0 0.0
    %1547 = vmatpush1.msra.mxu0 0.0
    %1548 = vmatprep.subr.mxu0 0.0
    %1549 = vmatpush1.msra.mxu0 0.0
    %1550 = vmatprep.subr.mxu0 0.0
    %1551 = vmatpush1.msra.mxu0 0.0
    %1552 = vmatprep.subr.mxu0 0.0
    %1553 = vmatpush1.msra.mxu0 0.0
    %1554 = vmatprep.subr.mxu0 0.0
    %1555 = vmatpush1.msra.mxu0 0.0
    %1556 = vmatprep.subr.mxu0 0.0
    %1557 = vmatpush1.msra.mxu0 0.0
    %1558 = vmatprep.subr.mxu0 0.0
    %1559 = vmatpush1.msra.mxu0 0.0
    %1560 = vmatprep.subr.mxu0 0.0
    %1561 = vmatpush1.msra.mxu0 0.0
    %1562 = vmatprep.mubr.f32.mxu0 0.0
    %1563 = vmatmul.mubr.f32.gmra.mrb[0].mxu0 %v1496
    %v1564 = vpop.f32.mrb[0].mxu0
    %v1565 = vadd.f32 %v1138, %v1564
    %v1566 = vpop.f32.mrb[0].mxu0
    %1567 = vdwg.mxu0
    %v1568 = vmax.f32 %v1565, 0.0
    %vm1569 = vcmask 253952
    %1570 = vst.msk [vmem:[#allocation27] sm:$0x1] %vm1569, %v1568
    %v1572 = vlaneseq
    %v1573 = vshrl.u32 %v1572, 7
    %v1574 = vsub.s32 0, %v1573
    %v1575 = vrot.slane %v1119, %v1574
    %v1578 = vsel %vm303, %v1420, 0
    %1580 = vmatprep.subr.mxu0 0.0
    %1581 = vmatpush1.msra.mxu0 %v1091
    %1582 = vmatprep.subr.mxu0 0.0
    %1583 = vmatpush1.msra.mxu0 %v1092
    %1584 = vmatprep.subr.mxu0 0.0
    %1585 = vmatpush1.msra.mxu0 %v1093
    %1586 = vmatprep.subr.mxu0 0.0
    %1587 = vmatpush1.msra.mxu0 %v1094
    %1588 = vmatprep.subr.mxu0 0.0
    %1589 = vmatpush1.msra.mxu0 0.0
    %1590 = vmatprep.subr.mxu0 0.0
    %1591 = vmatpush1.msra.mxu0 0.0
    %1592 = vmatprep.subr.mxu0 0.0
    %1593 = vmatpush1.msra.mxu0 0.0
    %1594 = vmatprep.subr.mxu0 0.0
    %1595 = vmatpush1.msra.mxu0 0.0
    %1596 = vmatprep.subr.mxu0 0.0
    %1597 = vmatpush1.msra.mxu0 0.0
    %1598 = vmatprep.subr.mxu0 0.0
    %1599 = vmatpush1.msra.mxu0 0.0
    %1600 = vmatprep.subr.mxu0 0.0
    %1601 = vmatpush1.msra.mxu0 0.0
    %1602 = vmatprep.subr.mxu0 0.0
    %1603 = vmatpush1.msra.mxu0 0.0
    %1604 = vmatprep.subr.mxu0 0.0
    %1605 = vmatpush1.msra.mxu0 0.0
    %1606 = vmatprep.subr.mxu0 0.0
    %1607 = vmatpush1.msra.mxu0 0.0
    %1608 = vmatprep.subr.mxu0 0.0
    %1609 = vmatpush1.msra.mxu0 0.0
    %1610 = vmatprep.subr.mxu0 0.0
    %1611 = vmatpush1.msra.mxu0 0.0
    %1612 = vmatprep.subr.mxu0 0.0
    %1613 = vmatpush1.msra.mxu0 0.0
    %1614 = vmatprep.subr.mxu0 0.0
    %1615 = vmatpush1.msra.mxu0 0.0
    %1616 = vmatprep.subr.mxu0 0.0
    %1617 = vmatpush1.msra.mxu0 0.0
    %1618 = vmatprep.subr.mxu0 0.0
    %1619 = vmatpush1.msra.mxu0 0.0
    %1620 = vmatprep.subr.mxu0 0.0
    %1621 = vmatpush1.msra.mxu0 0.0
    %1622 = vmatprep.subr.mxu0 0.0
    %1623 = vmatpush1.msra.mxu0 0.0
    %1624 = vmatprep.subr.mxu0 0.0
    %1625 = vmatpush1.msra.mxu0 0.0
    %1626 = vmatprep.subr.mxu0 0.0
    %1627 = vmatpush1.msra.mxu0 0.0
    %1628 = vmatprep.subr.mxu0 0.0
    %1629 = vmatpush1.msra.mxu0 0.0
    %1630 = vmatprep.subr.mxu0 0.0
    %1631 = vmatpush1.msra.mxu0 0.0
    %1632 = vmatprep.subr.mxu0 0.0
    %1633 = vmatpush1.msra.mxu0 0.0
    %1634 = vmatprep.subr.mxu0 0.0
    %1635 = vmatpush1.msra.mxu0 0.0
    %1636 = vmatprep.subr.mxu0 0.0
    %1637 = vmatpush1.msra.mxu0 0.0
    %1638 = vmatprep.subr.mxu0 0.0
    %1639 = vmatpush1.msra.mxu0 0.0
    %1640 = vmatprep.subr.mxu0 0.0
    %1641 = vmatpush1.msra.mxu0 0.0
    %1642 = vmatprep.subr.mxu0 0.0
    %1643 = vmatpush1.msra.mxu0 0.0
    %1644 = vmatprep.mubr.f32.mxu0 0.0
    %1645 = vmatmul.mubr.f32.gmra.mrb[0].mxu0 %v1578
    %v1646 = vpop.f32.mrb[0].mxu0
    %v1647 = vadd.f32 %v1575, %v1646
    %v1648 = vpop.f32.mrb[0].mxu0
    %1649 = vdwg.mxu0
    %v1651 = vlaneseq
    %v1652 = vshrl.u32 %v1651, 7
    %v1653 = vsub.s32 0, %v1652
    %v1654 = vrot.slane %v1121, %v1653
    %1656 = vmatprep.subr.mxu0 0.0
    %1657 = vmatpush1.msra.mxu0 %v1096
    %1658 = vmatprep.subr.mxu0 0.0
    %1659 = vmatpush1.msra.mxu0 %v1097
    %1660 = vmatprep.subr.mxu0 0.0
    %1661 = vmatpush1.msra.mxu0 %v1098
    %1662 = vmatprep.subr.mxu0 0.0
    %1663 = vmatpush1.msra.mxu0 %v1099
    %1664 = vmatprep.subr.mxu0 0.0
    %1665 = vmatpush1.msra.mxu0 0.0
    %1666 = vmatprep.subr.mxu0 0.0
    %1667 = vmatpush1.msra.mxu0 0.0
    %1668 = vmatprep.subr.mxu0 0.0
    %1669 = vmatpush1.msra.mxu0 0.0
    %1670 = vmatprep.subr.mxu0 0.0
    %1671 = vmatpush1.msra.mxu0 0.0
    %1672 = vmatprep.subr.mxu0 0.0
    %1673 = vmatpush1.msra.mxu0 0.0
    %1674 = vmatprep.subr.mxu0 0.0
    %1675 = vmatpush1.msra.mxu0 0.0
    %1676 = vmatprep.subr.mxu0 0.0
    %1677 = vmatpush1.msra.mxu0 0.0
    %1678 = vmatprep.subr.mxu0 0.0
    %1679 = vmatpush1.msra.mxu0 0.0
    %1680 = vmatprep.subr.mxu0 0.0
    %1681 = vmatpush1.msra.mxu0 0.0
    %1682 = vmatprep.subr.mxu0 0.0
    %1683 = vmatpush1.msra.mxu0 0.0
    %1684 = vmatprep.subr.mxu0 0.0
    %1685 = vmatpush1.msra.mxu0 0.0
    %1686 = vmatprep.subr.mxu0 0.0
    %1687 = vmatpush1.msra.mxu0 0.0
    %1688 = vmatprep.subr.mxu0 0.0
    %1689 = vmatpush1.msra.mxu0 0.0
    %1690 = vmatprep.subr.mxu0 0.0
    %1691 = vmatpush1.msra.mxu0 0.0
    %1692 = vmatprep.subr.mxu0 0.0
    %1693 = vmatpush1.msra.mxu0 0.0
    %1694 = vmatprep.subr.mxu0 0.0
    %1695 = vmatpush1.msra.mxu0 0.0
    %1696 = vmatprep.subr.mxu0 0.0
    %1697 = vmatpush1.msra.mxu0 0.0
    %1698 = vmatprep.subr.mxu0 0.0
    %1699 = vmatpush1.msra.mxu0 0.0
    %1700 = vmatprep.subr.mxu0 0.0
    %1701 = vmatpush1.msra.mxu0 0.0
    %1702 = vmatprep.subr.mxu0 0.0
    %1703 = vmatpush1.msra.mxu0 0.0
    %1704 = vmatprep.subr.mxu0 0.0
    %1705 = vmatpush1.msra.mxu0 0.0
    %1706 = vmatprep.subr.mxu0 0.0
    %1707 = vmatpush1.msra.mxu0 0.0
    %1708 = vmatprep.subr.mxu0 0.0
    %1709 = vmatpush1.msra.mxu0 0.0
    %1710 = vmatprep.subr.mxu0 0.0
    %1711 = vmatpush1.msra.mxu0 0.0
    %1712 = vmatprep.subr.mxu0 0.0
    %1713 = vmatpush1.msra.mxu0 0.0
    %1714 = vmatprep.subr.mxu0 0.0
    %1715 = vmatpush1.msra.mxu0 0.0
    %1716 = vmatprep.subr.mxu0 0.0
    %1717 = vmatpush1.msra.mxu0 0.0
    %1718 = vmatprep.subr.mxu0 0.0
    %1719 = vmatpush1.msra.mxu0 0.0
    %1720 = vmatprep.mubr.f32.mxu0 0.0
    %1721 = vmatmul.mubr.f32.gmra.mrb[0].mxu0 %v1578
    %v1722 = vpop.f32.mrb[0].mxu0
    %v1723 = vadd.f32 %v1654, %v1722
    %v1724 = vpop.f32.mrb[0].mxu0
    %1725 = vdwg.mxu0
    %v1727 = vlaneseq
    %v1728 = vshrl.u32 %v1727, 7
    %v1729 = vsub.s32 0, %v1728
    %v1730 = vrot.slane %v1123, %v1729
    %1732 = vmatprep.subr.mxu0 0.0
    %1733 = vmatpush1.msra.mxu0 %v1101
    %1734 = vmatprep.subr.mxu0 0.0
    %1735 = vmatpush1.msra.mxu0 %v1102
    %1736 = vmatprep.subr.mxu0 0.0
    %1737 = vmatpush1.msra.mxu0 %v1103
    %1738 = vmatprep.subr.mxu0 0.0
    %1739 = vmatpush1.msra.mxu0 %v1104
    %1740 = vmatprep.subr.mxu0 0.0
    %1741 = vmatpush1.msra.mxu0 0.0
    %1742 = vmatprep.subr.mxu0 0.0
    %1743 = vmatpush1.msra.mxu0 0.0
    %1744 = vmatprep.subr.mxu0 0.0
    %1745 = vmatpush1.msra.mxu0 0.0
    %1746 = vmatprep.subr.mxu0 0.0
    %1747 = vmatpush1.msra.mxu0 0.0
    %1748 = vmatprep.subr.mxu0 0.0
    %1749 = vmatpush1.msra.mxu0 0.0
    %1750 = vmatprep.subr.mxu0 0.0
    %1751 = vmatpush1.msra.mxu0 0.0
    %1752 = vmatprep.subr.mxu0 0.0
    %1753 = vmatpush1.msra.mxu0 0.0
    %1754 = vmatprep.subr.mxu0 0.0
    %1755 = vmatpush1.msra.mxu0 0.0
    %1756 = vmatprep.subr.mxu0 0.0
    %1757 = vmatpush1.msra.mxu0 0.0
    %1758 = vmatprep.subr.mxu0 0.0
    %1759 = vmatpush1.msra.mxu0 0.0
    %1760 = vmatprep.subr.mxu0 0.0
    %1761 = vmatpush1.msra.mxu0 0.0
    %1762 = vmatprep.subr.mxu0 0.0
    %1763 = vmatpush1.msra.mxu0 0.0
    %1764 = vmatprep.subr.mxu0 0.0
    %1765 = vmatpush1.msra.mxu0 0.0
    %1766 = vmatprep.subr.mxu0 0.0
    %1767 = vmatpush1.msra.mxu0 0.0
    %1768 = vmatprep.subr.mxu0 0.0
    %1769 = vmatpush1.msra.mxu0 0.0
    %1770 = vmatprep.subr.mxu0 0.0
    %1771 = vmatpush1.msra.mxu0 0.0
    %1772 = vmatprep.subr.mxu0 0.0
    %1773 = vmatpush1.msra.mxu0 0.0
    %1774 = vmatprep.subr.mxu0 0.0
    %1775 = vmatpush1.msra.mxu0 0.0
    %1776 = vmatprep.subr.mxu0 0.0
    %1777 = vmatpush1.msra.mxu0 0.0
    %1778 = vmatprep.subr.mxu0 0.0
    %1779 = vmatpush1.msra.mxu0 0.0
    %1780 = vmatprep.subr.mxu0 0.0
    %1781 = vmatpush1.msra.mxu0 0.0
    %1782 = vmatprep.subr.mxu0 0.0
    %1783 = vmatpush1.msra.mxu0 0.0
    %1784 = vmatprep.subr.mxu0 0.0
    %1785 = vmatpush1.msra.mxu0 0.0
    %1786 = vmatprep.subr.mxu0 0.0
    %1787 = vmatpush1.msra.mxu0 0.0
    %1788 = vmatprep.subr.mxu0 0.0
    %1789 = vmatpush1.msra.mxu0 0.0
    %1790 = vmatprep.subr.mxu0 0.0
    %1791 = vmatpush1.msra.mxu0 0.0
    %1792 = vmatprep.subr.mxu0 0.0
    %1793 = vmatpush1.msra.mxu0 0.0
    %1794 = vmatprep.subr.mxu0 0.0
    %1795 = vmatpush1.msra.mxu0 0.0
    %1796 = vmatprep.mubr.f32.mxu0 0.0
    %1797 = vmatmul.mubr.f32.gmra.mrb[0].mxu0 %v1578
    %v1798 = vpop.f32.mrb[0].mxu0
    %v1799 = vadd.f32 %v1730, %v1798
    %v1800 = vpop.f32.mrb[0].mxu0
    %1801 = vdwg.mxu0
    %v1803 = vsel %vm303, 0.0, 0
    %1805 = vmatprep.subr.mxu0 0.0
    %1806 = vmatpush1.msra.mxu0 %v1105
    %1807 = vmatprep.subr.mxu0 0.0
    %1808 = vmatpush1.msra.mxu0 %v1106
    %1809 = vmatprep.subr.mxu0 0.0
    %1810 = vmatpush1.msra.mxu0 %v1107
    %1811 = vmatprep.subr.mxu0 0.0
    %1812 = vmatpush1.msra.mxu0 %v1108
    %1813 = vmatprep.subr.mxu0 0.0
    %1814 = vmatpush1.msra.mxu0 0.0
    %1815 = vmatprep.subr.mxu0 0.0
    %1816 = vmatpush1.msra.mxu0 0.0
    %1817 = vmatprep.subr.mxu0 0.0
    %1818 = vmatpush1.msra.mxu0 0.0
    %1819 = vmatprep.subr.mxu0 0.0
    %1820 = vmatpush1.msra.mxu0 0.0
    %1821 = vmatprep.subr.mxu0 0.0
    %1822 = vmatpush1.msra.mxu0 0.0
    %1823 = vmatprep.subr.mxu0 0.0
    %1824 = vmatpush1.msra.mxu0 0.0
    %1825 = vmatprep.subr.mxu0 0.0
    %1826 = vmatpush1.msra.mxu0 0.0
    %1827 = vmatprep.subr.mxu0 0.0
    %1828 = vmatpush1.msra.mxu0 0.0
    %1829 = vmatprep.subr.mxu0 0.0
    %1830 = vmatpush1.msra.mxu0 0.0
    %1831 = vmatprep.subr.mxu0 0.0
    %1832 = vmatpush1.msra.mxu0 0.0
    %1833 = vmatprep.subr.mxu0 0.0
    %1834 = vmatpush1.msra.mxu0 0.0
    %1835 = vmatprep.subr.mxu0 0.0
    %1836 = vmatpush1.msra.mxu0 0.0
    %1837 = vmatprep.subr.mxu0 0.0
    %1838 = vmatpush1.msra.mxu0 0.0
    %1839 = vmatprep.subr.mxu0 0.0
    %1840 = vmatpush1.msra.mxu0 0.0
    %1841 = vmatprep.subr.mxu0 0.0
    %1842 = vmatpush1.msra.mxu0 0.0
    %1843 = vmatprep.subr.mxu0 0.0
    %1844 = vmatpush1.msra.mxu0 0.0
    %1845 = vmatprep.subr.mxu0 0.0
    %1846 = vmatpush1.msra.mxu0 0.0
    %1847 = vmatprep.subr.mxu0 0.0
    %1848 = vmatpush1.msra.mxu0 0.0
    %1849 = vmatprep.subr.mxu0 0.0
    %1850 = vmatpush1.msra.mxu0 0.0
    %1851 = vmatprep.subr.mxu0 0.0
    %1852 = vmatpush1.msra.mxu0 0.0
    %1853 = vmatprep.subr.mxu0 0.0
    %1854 = vmatpush1.msra.mxu0 0.0
    %1855 = vmatprep.subr.mxu0 0.0
    %1856 = vmatpush1.msra.mxu0 0.0
    %1857 = vmatprep.subr.mxu0 0.0
    %1858 = vmatpush1.msra.mxu0 0.0
    %1859 = vmatprep.subr.mxu0 0.0
    %1860 = vmatpush1.msra.mxu0 0.0
    %1861 = vmatprep.subr.mxu0 0.0
    %1862 = vmatpush1.msra.mxu0 0.0
    %1863 = vmatprep.subr.mxu0 0.0
    %1864 = vmatpush1.msra.mxu0 0.0
    %1865 = vmatprep.subr.mxu0 0.0
    %1866 = vmatpush1.msra.mxu0 0.0
    %1867 = vmatprep.subr.mxu0 0.0
    %1868 = vmatpush1.msra.mxu0 0.0
    %1869 = vmatprep.mubr.f32.mxu0 0.0
    %1870 = vmatmul.mubr.f32.gmra.mrb[0].mxu0 %v1803
    %v1871 = vpop.f32.mrb[0].mxu0
    %v1872 = vadd.f32 %v1124, %v1871
    %v1873 = vpop.f32.mrb[0].mxu0
    %1874 = vdwg.mxu0
    %1875 = vmatprep.subr.mxu0 0.0
    %1876 = vmatpush1.msra.mxu0 %v1110
    %1877 = vmatprep.subr.mxu0 0.0
    %1878 = vmatpush1.msra.mxu0 %v1111
    %1879 = vmatprep.subr.mxu0 0.0
    %1880 = vmatpush1.msra.mxu0 %v1112
    %1881 = vmatprep.subr.mxu0 0.0
    %1882 = vmatpush1.msra.mxu0 %v1113
    %1883 = vmatprep.subr.mxu0 0.0
    %1884 = vmatpush1.msra.mxu0 0.0
    %1885 = vmatprep.subr.mxu0 0.0
    %1886 = vmatpush1.msra.mxu0 0.0
    %1887 = vmatprep.subr.mxu0 0.0
    %1888 = vmatpush1.msra.mxu0 0.0
    %1889 = vmatprep.subr.mxu0 0.0
    %1890 = vmatpush1.msra.mxu0 0.0
    %1891 = vmatprep.subr.mxu0 0.0
    %1892 = vmatpush1.msra.mxu0 0.0
    %1893 = vmatprep.subr.mxu0 0.0
    %1894 = vmatpush1.msra.mxu0 0.0
    %1895 = vmatprep.subr.mxu0 0.0
    %1896 = vmatpush1.msra.mxu0 0.0
    %1897 = vmatprep.subr.mxu0 0.0
    %1898 = vmatpush1.msra.mxu0 0.0
    %1899 = vmatprep.subr.mxu0 0.0
    %1900 = vmatpush1.msra.mxu0 0.0
    %1901 = vmatprep.subr.mxu0 0.0
    %1902 = vmatpush1.msra.mxu0 0.0
    %1903 = vmatprep.subr.mxu0 0.0
    %1904 = vmatpush1.msra.mxu0 0.0
    %1905 = vmatprep.subr.mxu0 0.0
    %1906 = vmatpush1.msra.mxu0 0.0
    %1907 = vmatprep.subr.mxu0 0.0
    %1908 = vmatpush1.msra.mxu0 0.0
    %1909 = vmatprep.subr.mxu0 0.0
    %1910 = vmatpush1.msra.mxu0 0.0
    %1911 = vmatprep.subr.mxu0 0.0
    %1912 = vmatpush1.msra.mxu0 0.0
    %1913 = vmatprep.subr.mxu0 0.0
    %1914 = vmatpush1.msra.mxu0 0.0
    %1915 = vmatprep.subr.mxu0 0.0
    %1916 = vmatpush1.msra.mxu0 0.0
    %1917 = vmatprep.subr.mxu0 0.0
    %1918 = vmatpush1.msra.mxu0 0.0
    %1919 = vmatprep.subr.mxu0 0.0
    %1920 = vmatpush1.msra.mxu0 0.0
    %1921 = vmatprep.subr.mxu0 0.0
    %1922 = vmatpush1.msra.mxu0 0.0
    %1923 = vmatprep.subr.mxu0 0.0
    %1924 = vmatpush1.msra.mxu0 0.0
    %1925 = vmatprep.subr.mxu0 0.0
    %1926 = vmatpush1.msra.mxu0 0.0
    %1927 = vmatprep.subr.mxu0 0.0
    %1928 = vmatpush1.msra.mxu0 0.0
    %1929 = vmatprep.subr.mxu0 0.0
    %1930 = vmatpush1.msra.mxu0 0.0
    %1931 = vmatprep.subr.mxu0 0.0
    %1932 = vmatpush1.msra.mxu0 0.0
    %1933 = vmatprep.subr.mxu0 0.0
    %1934 = vmatpush1.msra.mxu0 0.0
    %1935 = vmatprep.subr.mxu0 0.0
    %1936 = vmatpush1.msra.mxu0 0.0
    %1937 = vmatprep.subr.mxu0 0.0
    %1938 = vmatpush1.msra.mxu0 0.0
    %1939 = vmatprep.mubr.f32.mxu0 0.0
    %1940 = vmatmul.mubr.f32.gmra.mrb[0].mxu0 %v1803
    %v1941 = vpop.f32.mrb[0].mxu0
    %v1942 = vadd.f32 %v1126, %v1941
    %v1943 = vpop.f32.mrb[0].mxu0
    %1944 = vdwg.mxu0
    %1945 = vmatprep.subr.mxu0 0.0
    %1946 = vmatpush1.msra.mxu0 %v1115
    %1947 = vmatprep.subr.mxu0 0.0
    %1948 = vmatpush1.msra.mxu0 %v1116
    %1949 = vmatprep.subr.mxu0 0.0
    %1950 = vmatpush1.msra.mxu0 %v1117
    %1951 = vmatprep.subr.mxu0 0.0
    %1952 = vmatpush1.msra.mxu0 %v1118
    %1953 = vmatprep.subr.mxu0 0.0
    %1954 = vmatpush1.msra.mxu0 0.0
    %1955 = vmatprep.subr.mxu0 0.0
    %1956 = vmatpush1.msra.mxu0 0.0
    %1957 = vmatprep.subr.mxu0 0.0
    %1958 = vmatpush1.msra.mxu0 0.0
    %1959 = vmatprep.subr.mxu0 0.0
    %1960 = vmatpush1.msra.mxu0 0.0
    %1961 = vmatprep.subr.mxu0 0.0
    %1962 = vmatpush1.msra.mxu0 0.0
    %1963 = vmatprep.subr.mxu0 0.0
    %1964 = vmatpush1.msra.mxu0 0.0
    %1965 = vmatprep.subr.mxu0 0.0
    %1966 = vmatpush1.msra.mxu0 0.0
    %1967 = vmatprep.subr.mxu0 0.0
    %1968 = vmatpush1.msra.mxu0 0.0
    %1969 = vmatprep.subr.mxu0 0.0
    %1970 = vmatpush1.msra.mxu0 0.0
    %1971 = vmatprep.subr.mxu0 0.0
    %1972 = vmatpush1.msra.mxu0 0.0
    %1973 = vmatprep.subr.mxu0 0.0
    %1974 = vmatpush1.msra.mxu0 0.0
    %1975 = vmatprep.subr.mxu0 0.0
    %1976 = vmatpush1.msra.mxu0 0.0
    %1977 = vmatprep.subr.mxu0 0.0
    %1978 = vmatpush1.msra.mxu0 0.0
    %1979 = vmatprep.subr.mxu0 0.0
    %1980 = vmatpush1.msra.mxu0 0.0
    %1981 = vmatprep.subr.mxu0 0.0
    %1982 = vmatpush1.msra.mxu0 0.0
    %1983 = vmatprep.subr.mxu0 0.0
    %1984 = vmatpush1.msra.mxu0 0.0
    %1985 = vmatprep.subr.mxu0 0.0
    %1986 = vmatpush1.msra.mxu0 0.0
    %1987 = vmatprep.subr.mxu0 0.0
    %1988 = vmatpush1.msra.mxu0 0.0
    %1989 = vmatprep.subr.mxu0 0.0
    %1990 = vmatpush1.msra.mxu0 0.0
    %1991 = vmatprep.subr.mxu0 0.0
    %1992 = vmatpush1.msra.mxu0 0.0
    %1993 = vmatprep.subr.mxu0 0.0
    %1994 = vmatpush1.msra.mxu0 0.0
    %1995 = vmatprep.subr.mxu0 0.0
    %1996 = vmatpush1.msra.mxu0 0.0
    %1997 = vmatprep.subr.mxu0 0.0
    %1998 = vmatpush1.msra.mxu0 0.0
    %1999 = vmatprep.subr.mxu0 0.0
    %2000 = vmatpush1.msra.mxu0 0.0
    %2001 = vmatprep.subr.mxu0 0.0
    %2002 = vmatpush1.msra.mxu0 0.0
    %2003 = vmatprep.subr.mxu0 0.0
    %2004 = vmatpush1.msra.mxu0 0.0
    %2005 = vmatprep.subr.mxu0 0.0
    %2006 = vmatpush1.msra.mxu0 0.0
    %2007 = vmatprep.subr.mxu0 0.0
    %2008 = vmatpush1.msra.mxu0 0.0
    %2009 = vmatprep.mubr.f32.mxu0 0.0
    %2010 = vmatmul.mubr.f32.gmra.mrb[0].mxu0 %v1803
    %v2011 = vpop.f32.mrb[0].mxu0
    %v2012 = vadd.f32 %v1128, %v2011
    %v2013 = vpop.f32.mrb[0].mxu0
    %2014 = vdwg.mxu0
    %v2015 = vadd.f32 %v1647, %v1872
    %v2016 = vxor.u32 %v2015, 2147483648
    %v2017 = vmul.f32 %v2016, 1.442695
    %v2018 = vpow.pop %v2017
    %v2019 = vadd.f32 %v2018, 1.0
    %v2020 = vrcp.pop %v2019
    %v2021 = vmul.f32 1.0, %v2020
    %v2022 = vadd.f32 %v1723, %v1942
    %v2023 = vxor.u32 %v2022, 2147483648
    %v2024 = vmul.f32 %v2023, 1.442695
    %v2025 = vpow.pop %v2024
    %v2026 = vadd.f32 %v2025, 1.0
    %v2027 = vrcp.pop %v2026
    %v2028 = vmul.f32 1.0, %v2027
    %v2029 = vmul.f32 %v2021, %v2012
    %v2030 = vadd.f32 %v1799, %v2029
    %v2031 = vtanh.pop %v2030
    %v2032 = vsub.f32 1.0, %v2028
    %v2033 = vmul.f32 %v2032, %v2031
    %v2034 = vmul.f32 %v2028, 0.0
    %v2035 = vadd.f32 %v2033, %v2034
    %v2037 = vsel %vm303, %v2035, 0
    %2039 = vmatprep.subr.mxu0 0.0
    %2040 = vmatpush1.msra.mxu0 %v1105
    %2041 = vmatprep.subr.mxu0 0.0
    %2042 = vmatpush1.msra.mxu0 %v1106
    %2043 = vmatprep.subr.mxu0 0.0
    %2044 = vmatpush1.msra.mxu0 %v1107
    %2045 = vmatprep.subr.mxu0 0.0
    %2046 = vmatpush1.msra.mxu0 %v1108
    %2047 = vmatprep.subr.mxu0 0.0
    %2048 = vmatpush1.msra.mxu0 0.0
    %2049 = vmatprep.subr.mxu0 0.0
    %2050 = vmatpush1.msra.mxu0 0.0
    %2051 = vmatprep.subr.mxu0 0.0
    %2052 = vmatpush1.msra.mxu0 0.0
    %2053 = vmatprep.subr.mxu0 0.0
    %2054 = vmatpush1.msra.mxu0 0.0
    %2055 = vmatprep.subr.mxu0 0.0
    %2056 = vmatpush1.msra.mxu0 0.0
    %2057 = vmatprep.subr.mxu0 0.0
    %2058 = vmatpush1.msra.mxu0 0.0
    %2059 = vmatprep.subr.mxu0 0.0
    %2060 = vmatpush1.msra.mxu0 0.0
    %2061 = vmatprep.subr.mxu0 0.0
    %2062 = vmatpush1.msra.mxu0 0.0
    %2063 = vmatprep.subr.mxu0 0.0
    %2064 = vmatpush1.msra.mxu0 0.0
    %2065 = vmatprep.subr.mxu0 0.0
    %2066 = vmatpush1.msra.mxu0 0.0
    %2067 = vmatprep.subr.mxu0 0.0
    %2068 = vmatpush1.msra.mxu0 0.0
    %2069 = vmatprep.subr.mxu0 0.0
    %2070 = vmatpush1.msra.mxu0 0.0
    %2071 = vmatprep.subr.mxu0 0.0
    %2072 = vmatpush1.msra.mxu0 0.0
    %2073 = vmatprep.subr.mxu0 0.0
    %2074 = vmatpush1.msra.mxu0 0.0
    %2075 = vmatprep.subr.mxu0 0.0
    %2076 = vmatpush1.msra.mxu0 0.0
    %2077 = vmatprep.subr.mxu0 0.0
    %2078 = vmatpush1.msra.mxu0 0.0
    %2079 = vmatprep.subr.mxu0 0.0
    %2080 = vmatpush1.msra.mxu0 0.0
    %2081 = vmatprep.subr.mxu0 0.0
    %2082 = vmatpush1.msra.mxu0 0.0
    %2083 = vmatprep.subr.mxu0 0.0
    %2084 = vmatpush1.msra.mxu0 0.0
    %2085 = vmatprep.subr.mxu0 0.0
    %2086 = vmatpush1.msra.mxu0 0.0
    %2087 = vmatprep.subr.mxu0 0.0
    %2088 = vmatpush1.msra.mxu0 0.0
    %2089 = vmatprep.subr.mxu0 0.0
    %2090 = vmatpush1.msra.mxu0 0.0
    %2091 = vmatprep.subr.mxu0 0.0
    %2092 = vmatpush1.msra.mxu0 0.0
    %2093 = vmatprep.subr.mxu0 0.0
    %2094 = vmatpush1.msra.mxu0 0.0
    %2095 = vmatprep.subr.mxu0 0.0
    %2096 = vmatpush1.msra.mxu0 0.0
    %2097 = vmatprep.subr.mxu0 0.0
    %2098 = vmatpush1.msra.mxu0 0.0
    %2099 = vmatprep.subr.mxu0 0.0
    %2100 = vmatpush1.msra.mxu0 0.0
    %2101 = vmatprep.subr.mxu0 0.0
    %2102 = vmatpush1.msra.mxu0 0.0
    %2103 = vmatprep.mubr.f32.mxu0 0.0
    %2104 = vmatmul.mubr.f32.gmra.mrb[0].mxu0 %v2037
    %v2105 = vpop.f32.mrb[0].mxu0
    %v2106 = vadd.f32 %v1124, %v2105
    %v2107 = vpop.f32.mrb[0].mxu0
    %2108 = vdwg.mxu0
    %2109 = vmatprep.subr.mxu0 0.0
    %2110 = vmatpush1.msra.mxu0 %v1110
    %2111 = vmatprep.subr.mxu0 0.0
    %2112 = vmatpush1.msra.mxu0 %v1111
    %2113 = vmatprep.subr.mxu0 0.0
    %2114 = vmatpush1.msra.mxu0 %v1112
    %2115 = vmatprep.subr.mxu0 0.0
    %2116 = vmatpush1.msra.mxu0 %v1113
    %2117 = vmatprep.subr.mxu0 0.0
    %2118 = vmatpush1.msra.mxu0 0.0
    %2119 = vmatprep.subr.mxu0 0.0
    %2120 = vmatpush1.msra.mxu0 0.0
    %2121 = vmatprep.subr.mxu0 0.0
    %2122 = vmatpush1.msra.mxu0 0.0
    %2123 = vmatprep.subr.mxu0 0.0
    %2124 = vmatpush1.msra.mxu0 0.0
    %2125 = vmatprep.subr.mxu0 0.0
    %2126 = vmatpush1.msra.mxu0 0.0
    %2127 = vmatprep.subr.mxu0 0.0
    %2128 = vmatpush1.msra.mxu0 0.0
    %2129 = vmatprep.subr.mxu0 0.0
    %2130 = vmatpush1.msra.mxu0 0.0
    %2131 = vmatprep.subr.mxu0 0.0
    %2132 = vmatpush1.msra.mxu0 0.0
    %2133 = vmatprep.subr.mxu0 0.0
    %2134 = vmatpush1.msra.mxu0 0.0
    %2135 = vmatprep.subr.mxu0 0.0
    %2136 = vmatpush1.msra.mxu0 0.0
    %2137 = vmatprep.subr.mxu0 0.0
    %2138 = vmatpush1.msra.mxu0 0.0
    %2139 = vmatprep.subr.mxu0 0.0
    %2140 = vmatpush1.msra.mxu0 0.0
    %2141 = vmatprep.subr.mxu0 0.0
    %2142 = vmatpush1.msra.mxu0 0.0
    %2143 = vmatprep.subr.mxu0 0.0
    %2144 = vmatpush1.msra.mxu0 0.0
    %2145 = vmatprep.subr.mxu0 0.0
    %2146 = vmatpush1.msra.mxu0 0.0
    %2147 = vmatprep.subr.mxu0 0.0
    %2148 = vmatpush1.msra.mxu0 0.0
    %2149 = vmatprep.subr.mxu0 0.0
    %2150 = vmatpush1.msra.mxu0 0.0
    %2151 = vmatprep.subr.mxu0 0.0
    %2152 = vmatpush1.msra.mxu0 0.0
    %2153 = vmatprep.subr.mxu0 0.0
    %2154 = vmatpush1.msra.mxu0 0.0
    %2155 = vmatprep.subr.mxu0 0.0
    %2156 = vmatpush1.msra.mxu0 0.0
    %2157 = vmatprep.subr.mxu0 0.0
    %2158 = vmatpush1.msra.mxu0 0.0
    %2159 = vmatprep.subr.mxu0 0.0
    %2160 = vmatpush1.msra.mxu0 0.0
    %2161 = vmatprep.subr.mxu0 0.0
    %2162 = vmatpush1.msra.mxu0 0.0
    %2163 = vmatprep.subr.mxu0 0.0
    %2164 = vmatpush1.msra.mxu0 0.0
    %2165 = vmatprep.subr.mxu0 0.0
    %2166 = vmatpush1.msra.mxu0 0.0
    %2167 = vmatprep.subr.mxu0 0.0
    %2168 = vmatpush1.msra.mxu0 0.0
    %2169 = vmatprep.subr.mxu0 0.0
    %2170 = vmatpush1.msra.mxu0 0.0
    %2171 = vmatprep.subr.mxu0 0.0
    %2172 = vmatpush1.msra.mxu0 0.0
    %2173 = vmatprep.mubr.f32.mxu0 0.0
    %2174 = vmatmul.mubr.f32.gmra.mrb[0].mxu0 %v2037
    %v2175 = vpop.f32.mrb[0].mxu0
    %v2176 = vadd.f32 %v1126, %v2175
    %v2177 = vpop.f32.mrb[0].mxu0
    %2178 = vdwg.mxu0
    %2179 = vmatprep.subr.mxu0 0.0
    %2180 = vmatpush1.msra.mxu0 %v1115
    %2181 = vmatprep.subr.mxu0 0.0
    %2182 = vmatpush1.msra.mxu0 %v1116
    %2183 = vmatprep.subr.mxu0 0.0
    %2184 = vmatpush1.msra.mxu0 %v1117
    %2185 = vmatprep.subr.mxu0 0.0
    %2186 = vmatpush1.msra.mxu0 %v1118
    %2187 = vmatprep.subr.mxu0 0.0
    %2188 = vmatpush1.msra.mxu0 0.0
    %2189 = vmatprep.subr.mxu0 0.0
    %2190 = vmatpush1.msra.mxu0 0.0
    %2191 = vmatprep.subr.mxu0 0.0
    %2192 = vmatpush1.msra.mxu0 0.0
    %2193 = vmatprep.subr.mxu0 0.0
    %2194 = vmatpush1.msra.mxu0 0.0
    %2195 = vmatprep.subr.mxu0 0.0
    %2196 = vmatpush1.msra.mxu0 0.0
    %2197 = vmatprep.subr.mxu0 0.0
    %2198 = vmatpush1.msra.mxu0 0.0
    %2199 = vmatprep.subr.mxu0 0.0
    %2200 = vmatpush1.msra.mxu0 0.0
    %2201 = vmatprep.subr.mxu0 0.0
    %2202 = vmatpush1.msra.mxu0 0.0
    %2203 = vmatprep.subr.mxu0 0.0
    %2204 = vmatpush1.msra.mxu0 0.0
    %2205 = vmatprep.subr.mxu0 0.0
    %2206 = vmatpush1.msra.mxu0 0.0
    %2207 = vmatprep.subr.mxu0 0.0
    %2208 = vmatpush1.msra.mxu0 0.0
    %2209 = vmatprep.subr.mxu0 0.0
    %2210 = vmatpush1.msra.mxu0 0.0
    %2211 = vmatprep.subr.mxu0 0.0
    %2212 = vmatpush1.msra.mxu0 0.0
    %2213 = vmatprep.subr.mxu0 0.0
    %2214 = vmatpush1.msra.mxu0 0.0
    %2215 = vmatprep.subr.mxu0 0.0
    %2216 = vmatpush1.msra.mxu0 0.0
    %2217 = vmatprep.subr.mxu0 0.0
    %2218 = vmatpush1.msra.mxu0 0.0
    %2219 = vmatprep.subr.mxu0 0.0
    %2220 = vmatpush1.msra.mxu0 0.0
    %2221 = vmatprep.subr.mxu0 0.0
    %2222 = vmatpush1.msra.mxu0 0.0
    %2223 = vmatprep.subr.mxu0 0.0
    %2224 = vmatpush1.msra.mxu0 0.0
    %2225 = vmatprep.subr.mxu0 0.0
    %2226 = vmatpush1.msra.mxu0 0.0
    %2227 = vmatprep.subr.mxu0 0.0
    %2228 = vmatpush1.msra.mxu0 0.0
    %2229 = vmatprep.subr.mxu0 0.0
    %2230 = vmatpush1.msra.mxu0 0.0
    %2231 = vmatprep.subr.mxu0 0.0
    %2232 = vmatpush1.msra.mxu0 0.0
    %2233 = vmatprep.subr.mxu0 0.0
    %2234 = vmatpush1.msra.mxu0 0.0
    %2235 = vmatprep.subr.mxu0 0.0
    %2236 = vmatpush1.msra.mxu0 0.0
    %2237 = vmatprep.subr.mxu0 0.0
    %2238 = vmatpush1.msra.mxu0 0.0
    %2239 = vmatprep.subr.mxu0 0.0
    %2240 = vmatpush1.msra.mxu0 0.0
    %2241 = vmatprep.subr.mxu0 0.0
    %2242 = vmatpush1.msra.mxu0 0.0
    %2243 = vmatprep.mubr.f32.mxu0 0.0
    %2244 = vmatmul.mubr.f32.gmra.mrb[0].mxu0 %v2037
    %v2245 = vpop.f32.mrb[0].mxu0
    %v2246 = vadd.f32 %v1128, %v2245
    %v2247 = vpop.f32.mrb[0].mxu0
    %2248 = vdwg.mxu0
    %v2250 = vrot.slane %v2106, 7
    %v2252 = vadd.f32 %v1647, %v2250
    %v2253 = vxor.u32 %v2252, 2147483648
    %v2254 = vmul.f32 %v2253, 1.442695
    %v2255 = vpow.pop %v2254
    %v2256 = vadd.f32 %v2255, 1.0
    %v2257 = vrcp.pop %v2256
    %v2258 = vmul.f32 1.0, %v2257
    %v2260 = vrot.slane %v2176, 7
    %v2262 = vadd.f32 %v1723, %v2260
    %v2263 = vxor.u32 %v2262, 2147483648
    %v2264 = vmul.f32 %v2263, 1.442695
    %v2265 = vpow.pop %v2264
    %v2266 = vadd.f32 %v2265, 1.0
    %v2267 = vrcp.pop %v2266
    %v2268 = vmul.f32 1.0, %v2267
    %v2270 = vrot.slane %v2246, 7
    %v2272 = vmul.f32 %v2258, %v2270
    %v2273 = vadd.f32 %v1799, %v2272
    %v2274 = vtanh.pop %v2273
    %v2275 = vsub.f32 1.0, %v2268
    %v2276 = vmul.f32 %v2275, %v2274
    %v2277 = vrot.slane %v2035, 7
    %v2279 = vmul.f32 %v2268, %v2277
    %v2280 = vadd.f32 %v2276, %v2279
    %v2282 = vrot.slane %v2280, 1
    %v2283 = vsel %vm303, %v2282, 0
    %2285 = vmatprep.subr.mxu0 0.0
    %2286 = vmatpush1.msra.mxu0 %v1105
    %2287 = vmatprep.subr.mxu0 0.0
    %2288 = vmatpush1.msra.mxu0 %v1106
    %2289 = vmatprep.subr.mxu0 0.0
    %2290 = vmatpush1.msra.mxu0 %v1107
    %2291 = vmatprep.subr.mxu0 0.0
    %2292 = vmatpush1.msra.mxu0 %v1108
    %2293 = vmatprep.subr.mxu0 0.0
    %2294 = vmatpush1.msra.mxu0 0.0
    %2295 = vmatprep.subr.mxu0 0.0
    %2296 = vmatpush1.msra.mxu0 0.0
    %2297 = vmatprep.subr.mxu0 0.0
    %2298 = vmatpush1.msra.mxu0 0.0
    %2299 = vmatprep.subr.mxu0 0.0
    %2300 = vmatpush1.msra.mxu0 0.0
    %2301 = vmatprep.subr.mxu0 0.0
    %2302 = vmatpush1.msra.mxu0 0.0
    %2303 = vmatprep.subr.mxu0 0.0
    %2304 = vmatpush1.msra.mxu0 0.0
    %2305 = vmatprep.subr.mxu0 0.0
    %2306 = vmatpush1.msra.mxu0 0.0
    %2307 = vmatprep.subr.mxu0 0.0
    %2308 = vmatpush1.msra.mxu0 0.0
    %2309 = vmatprep.subr.mxu0 0.0
    %2310 = vmatpush1.msra.mxu0 0.0
    %2311 = vmatprep.subr.mxu0 0.0
    %2312 = vmatpush1.msra.mxu0 0.0
    %2313 = vmatprep.subr.mxu0 0.0
    %2314 = vmatpush1.msra.mxu0 0.0
    %2315 = vmatprep.subr.mxu0 0.0
    %2316 = vmatpush1.msra.mxu0 0.0
    %2317 = vmatprep.subr.mxu0 0.0
    %2318 = vmatpush1.msra.mxu0 0.0
    %2319 = vmatprep.subr.mxu0 0.0
    %2320 = vmatpush1.msra.mxu0 0.0
    %2321 = vmatprep.subr.mxu0 0.0
    %2322 = vmatpush1.msra.mxu0 0.0
    %2323 = vmatprep.subr.mxu0 0.0
    %2324 = vmatpush1.msra.mxu0 0.0
    %2325 = vmatprep.subr.mxu0 0.0
    %2326 = vmatpush1.msra.mxu0 0.0
    %2327 = vmatprep.subr.mxu0 0.0
    %2328 = vmatpush1.msra.mxu0 0.0
    %2329 = vmatprep.subr.mxu0 0.0
    %2330 = vmatpush1.msra.mxu0 0.0
    %2331 = vmatprep.subr.mxu0 0.0
    %2332 = vmatpush1.msra.mxu0 0.0
    %2333 = vmatprep.subr.mxu0 0.0
    %2334 = vmatpush1.msra.mxu0 0.0
    %2335 = vmatprep.subr.mxu0 0.0
    %2336 = vmatpush1.msra.mxu0 0.0
    %2337 = vmatprep.subr.mxu0 0.0
    %2338 = vmatpush1.msra.mxu0 0.0
    %2339 = vmatprep.subr.mxu0 0.0
    %2340 = vmatpush1.msra.mxu0 0.0
    %2341 = vmatprep.subr.mxu0 0.0
    %2342 = vmatpush1.msra.mxu0 0.0
    %2343 = vmatprep.subr.mxu0 0.0
    %2344 = vmatpush1.msra.mxu0 0.0
    %2345 = vmatprep.subr.mxu0 0.0
    %2346 = vmatpush1.msra.mxu0 0.0
    %2347 = vmatprep.subr.mxu0 0.0
    %2348 = vmatpush1.msra.mxu0 0.0
    %2349 = vmatprep.mubr.f32.mxu0 0.0
    %2350 = vmatmul.mubr.f32.gmra.mrb[0].mxu0 %v2283
    %v2351 = vpop.f32.mrb[0].mxu0
    %v2352 = vadd.f32 %v1124, %v2351
    %v2353 = vpop.f32.mrb[0].mxu0
    %2354 = vdwg.mxu0
    %2355 = vmatprep.subr.mxu0 0.0
    %2356 = vmatpush1.msra.mxu0 %v1110
    %2357 = vmatprep.subr.mxu0 0.0
    %2358 = vmatpush1.msra.mxu0 %v1111
    %2359 = vmatprep.subr.mxu0 0.0
    %2360 = vmatpush1.msra.mxu0 %v1112
    %2361 = vmatprep.subr.mxu0 0.0
    %2362 = vmatpush1.msra.mxu0 %v1113
    %2363 = vmatprep.subr.mxu0 0.0
    %2364 = vmatpush1.msra.mxu0 0.0
    %2365 = vmatprep.subr.mxu0 0.0
    %2366 = vmatpush1.msra.mxu0 0.0
    %2367 = vmatprep.subr.mxu0 0.0
    %2368 = vmatpush1.msra.mxu0 0.0
    %2369 = vmatprep.subr.mxu0 0.0
    %2370 = vmatpush1.msra.mxu0 0.0
    %2371 = vmatprep.subr.mxu0 0.0
    %2372 = vmatpush1.msra.mxu0 0.0
    %2373 = vmatprep.subr.mxu0 0.0
    %2374 = vmatpush1.msra.mxu0 0.0
    %2375 = vmatprep.subr.mxu0 0.0
    %2376 = vmatpush1.msra.mxu0 0.0
    %2377 = vmatprep.subr.mxu0 0.0
    %2378 = vmatpush1.msra.mxu0 0.0
    %2379 = vmatprep.subr.mxu0 0.0
    %2380 = vmatpush1.msra.mxu0 0.0
    %2381 = vmatprep.subr.mxu0 0.0
    %2382 = vmatpush1.msra.mxu0 0.0
    %2383 = vmatprep.subr.mxu0 0.0
    %2384 = vmatpush1.msra.mxu0 0.0
    %2385 = vmatprep.subr.mxu0 0.0
    %2386 = vmatpush1.msra.mxu0 0.0
    %2387 = vmatprep.subr.mxu0 0.0
    %2388 = vmatpush1.msra.mxu0 0.0
    %2389 = vmatprep.subr.mxu0 0.0
    %2390 = vmatpush1.msra.mxu0 0.0
    %2391 = vmatprep.subr.mxu0 0.0
    %2392 = vmatpush1.msra.mxu0 0.0
    %2393 = vmatprep.subr.mxu0 0.0
    %2394 = vmatpush1.msra.mxu0 0.0
    %2395 = vmatprep.subr.mxu0 0.0
    %2396 = vmatpush1.msra.mxu0 0.0
    %2397 = vmatprep.subr.mxu0 0.0
    %2398 = vmatpush1.msra.mxu0 0.0
    %2399 = vmatprep.subr.mxu0 0.0
    %2400 = vmatpush1.msra.mxu0 0.0
    %2401 = vmatprep.subr.mxu0 0.0
    %2402 = vmatpush1.msra.mxu0 0.0
    %2403 = vmatprep.subr.mxu0 0.0
    %2404 = vmatpush1.msra.mxu0 0.0
    %2405 = vmatprep.subr.mxu0 0.0
    %2406 = vmatpush1.msra.mxu0 0.0
    %2407 = vmatprep.subr.mxu0 0.0
    %2408 = vmatpush1.msra.mxu0 0.0
    %2409 = vmatprep.subr.mxu0 0.0
    %2410 = vmatpush1.msra.mxu0 0.0
    %2411 = vmatprep.subr.mxu0 0.0
    %2412 = vmatpush1.msra.mxu0 0.0
    %2413 = vmatprep.subr.mxu0 0.0
    %2414 = vmatpush1.msra.mxu0 0.0
    %2415 = vmatprep.subr.mxu0 0.0
    %2416 = vmatpush1.msra.mxu0 0.0
    %2417 = vmatprep.subr.mxu0 0.0
    %2418 = vmatpush1.msra.mxu0 0.0
    %2419 = vmatprep.mubr.f32.mxu0 0.0
    %2420 = vmatmul.mubr.f32.gmra.mrb[0].mxu0 %v2283
    %v2421 = vpop.f32.mrb[0].mxu0
    %v2422 = vadd.f32 %v1126, %v2421
    %v2423 = vpop.f32.mrb[0].mxu0
    %2424 = vdwg.mxu0
    %2425 = vmatprep.subr.mxu0 0.0
    %2426 = vmatpush1.msra.mxu0 %v1115
    %2427 = vmatprep.subr.mxu0 0.0
    %2428 = vmatpush1.msra.mxu0 %v1116
    %2429 = vmatprep.subr.mxu0 0.0
    %2430 = vmatpush1.msra.mxu0 %v1117
    %2431 = vmatprep.subr.mxu0 0.0
    %2432 = vmatpush1.msra.mxu0 %v1118
    %2433 = vmatprep.subr.mxu0 0.0
    %2434 = vmatpush1.msra.mxu0 0.0
    %2435 = vmatprep.subr.mxu0 0.0
    %2436 = vmatpush1.msra.mxu0 0.0
    %2437 = vmatprep.subr.mxu0 0.0
    %2438 = vmatpush1.msra.mxu0 0.0
    %2439 = vmatprep.subr.mxu0 0.0
    %2440 = vmatpush1.msra.mxu0 0.0
    %2441 = vmatprep.subr.mxu0 0.0
    %2442 = vmatpush1.msra.mxu0 0.0
    %2443 = vmatprep.subr.mxu0 0.0
    %2444 = vmatpush1.msra.mxu0 0.0
    %2445 = vmatprep.subr.mxu0 0.0
    %2446 = vmatpush1.msra.mxu0 0.0
    %2447 = vmatprep.subr.mxu0 0.0
    %2448 = vmatpush1.msra.mxu0 0.0
    %2449 = vmatprep.subr.mxu0 0.0
    %2450 = vmatpush1.msra.mxu0 0.0
    %2451 = vmatprep.subr.mxu0 0.0
    %2452 = vmatpush1.msra.mxu0 0.0
    %2453 = vmatprep.subr.mxu0 0.0
    %2454 = vmatpush1.msra.mxu0 0.0
    %2455 = vmatprep.subr.mxu0 0.0
    %2456 = vmatpush1.msra.mxu0 0.0
    %2457 = vmatprep.subr.mxu0 0.0
    %2458 = vmatpush1.msra.mxu0 0.0
    %2459 = vmatprep.subr.mxu0 0.0
    %2460 = vmatpush1.msra.mxu0 0.0
    %2461 = vmatprep.subr.mxu0 0.0
    %2462 = vmatpush1.msra.mxu0 0.0
    %2463 = vmatprep.subr.mxu0 0.0
    %2464 = vmatpush1.msra.mxu0 0.0
    %2465 = vmatprep.subr.mxu0 0.0
    %2466 = vmatpush1.msra.mxu0 0.0
    %2467 = vmatprep.subr.mxu0 0.0
    %2468 = vmatpush1.msra.mxu0 0.0
    %2469 = vmatprep.subr.mxu0 0.0
    %2470 = vmatpush1.msra.mxu0 0.0
    %2471 = vmatprep.subr.mxu0 0.0
    %2472 = vmatpush1.msra.mxu0 0.0
    %2473 = vmatprep.subr.mxu0 0.0
    %2474 = vmatpush1.msra.mxu0 0.0
    %2475 = vmatprep.subr.mxu0 0.0
    %2476 = vmatpush1.msra.mxu0 0.0
    %2477 = vmatprep.subr.mxu0 0.0
    %2478 = vmatpush1.msra.mxu0 0.0
    %2479 = vmatprep.subr.mxu0 0.0
    %2480 = vmatpush1.msra.mxu0 0.0
    %2481 = vmatprep.subr.mxu0 0.0
    %2482 = vmatpush1.msra.mxu0 0.0
    %2483 = vmatprep.subr.mxu0 0.0
    %2484 = vmatpush1.msra.mxu0 0.0
    %2485 = vmatprep.subr.mxu0 0.0
    %2486 = vmatpush1.msra.mxu0 0.0
    %2487 = vmatprep.subr.mxu0 0.0
    %2488 = vmatpush1.msra.mxu0 0.0
    %2489 = vmatprep.mubr.f32.mxu0 0.0
    %2490 = vmatmul.mubr.f32.gmra.mrb[0].mxu0 %v2283
    %v2491 = vpop.f32.mrb[0].mxu0
    %v2492 = vadd.f32 %v1128, %v2491
    %v2493 = vpop.f32.mrb[0].mxu0
    %2494 = vdwg.mxu0
    %v2496 = vrot.slane %v2352, 6
    %v2498 = vadd.f32 %v1647, %v2496
    %v2499 = vxor.u32 %v2498, 2147483648
    %v2500 = vmul.f32 %v2499, 1.442695
    %v2501 = vpow.pop %v2500
    %v2502 = vadd.f32 %v2501, 1.0
    %v2503 = vrcp.pop %v2502
    %v2504 = vmul.f32 1.0, %v2503
    %v2506 = vrot.slane %v2422, 6
    %v2508 = vadd.f32 %v1723, %v2506
    %v2509 = vxor.u32 %v2508, 2147483648
    %v2510 = vmul.f32 %v2509, 1.442695
    %v2511 = vpow.pop %v2510
    %v2512 = vadd.f32 %v2511, 1.0
    %v2513 = vrcp.pop %v2512
    %v2514 = vmul.f32 1.0, %v2513
    %v2516 = vrot.slane %v2492, 6
    %v2518 = vmul.f32 %v2504, %v2516
    %v2519 = vadd.f32 %v1799, %v2518
    %v2520 = vtanh.pop %v2519
    %v2521 = vsub.f32 1.0, %v2514
    %v2522 = vmul.f32 %v2521, %v2520
    %v2523 = vrot.slane %v2280, 7
    %v2525 = vmul.f32 %v2514, %v2523
    %v2526 = vadd.f32 %v2522, %v2525
    %v2528 = vrot.slane %v2526, 2
    %v2529 = vsel %vm303, %v2528, 0
    %2531 = vmatprep.subr.mxu0 0.0
    %2532 = vmatpush1.msra.mxu0 %v1105
    %2533 = vmatprep.subr.mxu0 0.0
    %2534 = vmatpush1.msra.mxu0 %v1106
    %2535 = vmatprep.subr.mxu0 0.0
    %2536 = vmatpush1.msra.mxu0 %v1107
    %2537 = vmatprep.subr.mxu0 0.0
    %2538 = vmatpush1.msra.mxu0 %v1108
    %2539 = vmatprep.subr.mxu0 0.0
    %2540 = vmatpush1.msra.mxu0 0.0
    %2541 = vmatprep.subr.mxu0 0.0
    %2542 = vmatpush1.msra.mxu0 0.0
    %2543 = vmatprep.subr.mxu0 0.0
    %2544 = vmatpush1.msra.mxu0 0.0
    %2545 = vmatprep.subr.mxu0 0.0
    %2546 = vmatpush1.msra.mxu0 0.0
    %2547 = vmatprep.subr.mxu0 0.0
    %2548 = vmatpush1.msra.mxu0 0.0
    %2549 = vmatprep.subr.mxu0 0.0
    %2550 = vmatpush1.msra.mxu0 0.0
    %2551 = vmatprep.subr.mxu0 0.0
    %2552 = vmatpush1.msra.mxu0 0.0
    %2553 = vmatprep.subr.mxu0 0.0
    %2554 = vmatpush1.msra.mxu0 0.0
    %2555 = vmatprep.subr.mxu0 0.0
    %2556 = vmatpush1.msra.mxu0 0.0
    %2557 = vmatprep.subr.mxu0 0.0
    %2558 = vmatpush1.msra.mxu0 0.0
    %2559 = vmatprep.subr.mxu0 0.0
    %2560 = vmatpush1.msra.mxu0 0.0
    %2561 = vmatprep.subr.mxu0 0.0
    %2562 = vmatpush1.msra.mxu0 0.0
    %2563 = vmatprep.subr.mxu0 0.0
    %2564 = vmatpush1.msra.mxu0 0.0
    %2565 = vmatprep.subr.mxu0 0.0
    %2566 = vmatpush1.msra.mxu0 0.0
    %2567 = vmatprep.subr.mxu0 0.0
    %2568 = vmatpush1.msra.mxu0 0.0
    %2569 = vmatprep.subr.mxu0 0.0
    %2570 = vmatpush1.msra.mxu0 0.0
    %2571 = vmatprep.subr.mxu0 0.0
    %2572 = vmatpush1.msra.mxu0 0.0
    %2573 = vmatprep.subr.mxu0 0.0
    %2574 = vmatpush1.msra.mxu0 0.0
    %2575 = vmatprep.subr.mxu0 0.0
    %2576 = vmatpush1.msra.mxu0 0.0
    %2577 = vmatprep.subr.mxu0 0.0
    %2578 = vmatpush1.msra.mxu0 0.0
    %2579 = vmatprep.subr.mxu0 0.0
    %2580 = vmatpush1.msra.mxu0 0.0
    %2581 = vmatprep.subr.mxu0 0.0
    %2582 = vmatpush1.msra.mxu0 0.0
    %2583 = vmatprep.subr.mxu0 0.0
    %2584 = vmatpush1.msra.mxu0 0.0
    %2585 = vmatprep.subr.mxu0 0.0
    %2586 = vmatpush1.msra.mxu0 0.0
    %2587 = vmatprep.subr.mxu0 0.0
    %2588 = vmatpush1.msra.mxu0 0.0
    %2589 = vmatprep.subr.mxu0 0.0
    %2590 = vmatpush1.msra.mxu0 0.0
    %2591 = vmatprep.subr.mxu0 0.0
    %2592 = vmatpush1.msra.mxu0 0.0
    %2593 = vmatprep.subr.mxu0 0.0
    %2594 = vmatpush1.msra.mxu0 0.0
    %2595 = vmatprep.mubr.f32.mxu0 0.0
    %2596 = vmatmul.mubr.f32.gmra.mrb[0].mxu0 %v2529
    %v2597 = vpop.f32.mrb[0].mxu0
    %v2598 = vadd.f32 %v1124, %v2597
    %v2599 = vpop.f32.mrb[0].mxu0
    %2600 = vdwg.mxu0
    %2601 = vmatprep.subr.mxu0 0.0
    %2602 = vmatpush1.msra.mxu0 %v1110
    %2603 = vmatprep.subr.mxu0 0.0
    %2604 = vmatpush1.msra.mxu0 %v1111
    %2605 = vmatprep.subr.mxu0 0.0
    %2606 = vmatpush1.msra.mxu0 %v1112
    %2607 = vmatprep.subr.mxu0 0.0
    %2608 = vmatpush1.msra.mxu0 %v1113
    %2609 = vmatprep.subr.mxu0 0.0
    %2610 = vmatpush1.msra.mxu0 0.0
    %2611 = vmatprep.subr.mxu0 0.0
    %2612 = vmatpush1.msra.mxu0 0.0
    %2613 = vmatprep.subr.mxu0 0.0
    %2614 = vmatpush1.msra.mxu0 0.0
    %2615 = vmatprep.subr.mxu0 0.0
    %2616 = vmatpush1.msra.mxu0 0.0
    %2617 = vmatprep.subr.mxu0 0.0
    %2618 = vmatpush1.msra.mxu0 0.0
    %2619 = vmatprep.subr.mxu0 0.0
    %2620 = vmatpush1.msra.mxu0 0.0
    %2621 = vmatprep.subr.mxu0 0.0
    %2622 = vmatpush1.msra.mxu0 0.0
    %2623 = vmatprep.subr.mxu0 0.0
    %2624 = vmatpush1.msra.mxu0 0.0
    %2625 = vmatprep.subr.mxu0 0.0
    %2626 = vmatpush1.msra.mxu0 0.0
    %2627 = vmatprep.subr.mxu0 0.0
    %2628 = vmatpush1.msra.mxu0 0.0
    %2629 = vmatprep.subr.mxu0 0.0
    %2630 = vmatpush1.msra.mxu0 0.0
    %2631 = vmatprep.subr.mxu0 0.0
    %2632 = vmatpush1.msra.mxu0 0.0
    %2633 = vmatprep.subr.mxu0 0.0
    %2634 = vmatpush1.msra.mxu0 0.0
    %2635 = vmatprep.subr.mxu0 0.0
    %2636 = vmatpush1.msra.mxu0 0.0
    %2637 = vmatprep.subr.mxu0 0.0
    %2638 = vmatpush1.msra.mxu0 0.0
    %2639 = vmatprep.subr.mxu0 0.0
    %2640 = vmatpush1.msra.mxu0 0.0
    %2641 = vmatprep.subr.mxu0 0.0
    %2642 = vmatpush1.msra.mxu0 0.0
    %2643 = vmatprep.subr.mxu0 0.0
    %2644 = vmatpush1.msra.mxu0 0.0
    %2645 = vmatprep.subr.mxu0 0.0
    %2646 = vmatpush1.msra.mxu0 0.0
    %2647 = vmatprep.subr.mxu0 0.0
    %2648 = vmatpush1.msra.mxu0 0.0
    %2649 = vmatprep.subr.mxu0 0.0
    %2650 = vmatpush1.msra.mxu0 0.0
    %2651 = vmatprep.subr.mxu0 0.0
    %2652 = vmatpush1.msra.mxu0 0.0
    %2653 = vmatprep.subr.mxu0 0.0
    %2654 = vmatpush1.msra.mxu0 0.0
    %2655 = vmatprep.subr.mxu0 0.0
    %2656 = vmatpush1.msra.mxu0 0.0
    %2657 = vmatprep.subr.mxu0 0.0
    %2658 = vmatpush1.msra.mxu0 0.0
    %2659 = vmatprep.subr.mxu0 0.0
    %2660 = vmatpush1.msra.mxu0 0.0
    %2661 = vmatprep.subr.mxu0 0.0
    %2662 = vmatpush1.msra.mxu0 0.0
    %2663 = vmatprep.subr.mxu0 0.0
    %2664 = vmatpush1.msra.mxu0 0.0
    %2665 = vmatprep.mubr.f32.mxu0 0.0
    %2666 = vmatmul.mubr.f32.gmra.mrb[0].mxu0 %v2529
    %v2667 = vpop.f32.mrb[0].mxu0
    %v2668 = vadd.f32 %v1126, %v2667
    %v2669 = vpop.f32.mrb[0].mxu0
    %2670 = vdwg.mxu0
    %2671 = vmatprep.subr.mxu0 0.0
    %2672 = vmatpush1.msra.mxu0 %v1115
    %2673 = vmatprep.subr.mxu0 0.0
    %2674 = vmatpush1.msra.mxu0 %v1116
    %2675 = vmatprep.subr.mxu0 0.0
    %2676 = vmatpush1.msra.mxu0 %v1117
    %2677 = vmatprep.subr.mxu0 0.0
    %2678 = vmatpush1.msra.mxu0 %v1118
    %2679 = vmatprep.subr.mxu0 0.0
    %2680 = vmatpush1.msra.mxu0 0.0
    %2681 = vmatprep.subr.mxu0 0.0
    %2682 = vmatpush1.msra.mxu0 0.0
    %2683 = vmatprep.subr.mxu0 0.0
    %2684 = vmatpush1.msra.mxu0 0.0
    %2685 = vmatprep.subr.mxu0 0.0
    %2686 = vmatpush1.msra.mxu0 0.0
    %2687 = vmatprep.subr.mxu0 0.0
    %2688 = vmatpush1.msra.mxu0 0.0
    %2689 = vmatprep.subr.mxu0 0.0
    %2690 = vmatpush1.msra.mxu0 0.0
    %2691 = vmatprep.subr.mxu0 0.0
    %2692 = vmatpush1.msra.mxu0 0.0
    %2693 = vmatprep.subr.mxu0 0.0
    %2694 = vmatpush1.msra.mxu0 0.0
    %2695 = vmatprep.subr.mxu0 0.0
    %2696 = vmatpush1.msra.mxu0 0.0
    %2697 = vmatprep.subr.mxu0 0.0
    %2698 = vmatpush1.msra.mxu0 0.0
    %2699 = vmatprep.subr.mxu0 0.0
    %2700 = vmatpush1.msra.mxu0 0.0
    %2701 = vmatprep.subr.mxu0 0.0
    %2702 = vmatpush1.msra.mxu0 0.0
    %2703 = vmatprep.subr.mxu0 0.0
    %2704 = vmatpush1.msra.mxu0 0.0
    %2705 = vmatprep.subr.mxu0 0.0
    %2706 = vmatpush1.msra.mxu0 0.0
    %2707 = vmatprep.subr.mxu0 0.0
    %2708 = vmatpush1.msra.mxu0 0.0
    %2709 = vmatprep.subr.mxu0 0.0
    %2710 = vmatpush1.msra.mxu0 0.0
    %2711 = vmatprep.subr.mxu0 0.0
    %2712 = vmatpush1.msra.mxu0 0.0
    %2713 = vmatprep.subr.mxu0 0.0
    %2714 = vmatpush1.msra.mxu0 0.0
    %2715 = vmatprep.subr.mxu0 0.0
    %2716 = vmatpush1.msra.mxu0 0.0
    %2717 = vmatprep.subr.mxu0 0.0
    %2718 = vmatpush1.msra.mxu0 0.0
    %2719 = vmatprep.subr.mxu0 0.0
    %2720 = vmatpush1.msra.mxu0 0.0
    %2721 = vmatprep.subr.mxu0 0.0
    %2722 = vmatpush1.msra.mxu0 0.0
    %2723 = vmatprep.subr.mxu0 0.0
    %2724 = vmatpush1.msra.mxu0 0.0
    %2725 = vmatprep.subr.mxu0 0.0
    %2726 = vmatpush1.msra.mxu0 0.0
    %2727 = vmatprep.subr.mxu0 0.0
    %2728 = vmatpush1.msra.mxu0 0.0
    %2729 = vmatprep.subr.mxu0 0.0
    %2730 = vmatpush1.msra.mxu0 0.0
    %2731 = vmatprep.subr.mxu0 0.0
    %2732 = vmatpush1.msra.mxu0 0.0
    %2733 = vmatprep.subr.mxu0 0.0
    %2734 = vmatpush1.msra.mxu0 0.0
    %2735 = vmatprep.mubr.f32.mxu0 0.0
    %2736 = vmatmul.mubr.f32.gmra.mrb[0].mxu0 %v2529
    %v2737 = vpop.f32.mrb[0].mxu0
    %v2738 = vadd.f32 %v1128, %v2737
    %v2739 = vpop.f32.mrb[0].mxu0
    %2740 = vdwg.mxu0
    %v2742 = vrot.slane %v2598, 5
    %v2744 = vadd.f32 %v1647, %v2742
    %v2745 = vxor.u32 %v2744, 2147483648
    %v2746 = vmul.f32 %v2745, 1.442695
    %v2747 = vpow.pop %v2746
    %v2748 = vadd.f32 %v2747, 1.0
    %v2749 = vrcp.pop %v2748
    %v2750 = vmul.f32 1.0, %v2749
    %v2752 = vrot.slane %v2668, 5
    %v2754 = vadd.f32 %v1723, %v2752
    %v2755 = vxor.u32 %v2754, 2147483648
    %v2756 = vmul.f32 %v2755, 1.442695
    %v2757 = vpow.pop %v2756
    %v2758 = vadd.f32 %v2757, 1.0
    %v2759 = vrcp.pop %v2758
    %v2760 = vmul.f32 1.0, %v2759
    %v2762 = vrot.slane %v2738, 5
    %v2764 = vmul.f32 %v2750, %v2762
    %v2765 = vadd.f32 %v1799, %v2764
    %v2766 = vtanh.pop %v2765
    %v2767 = vsub.f32 1.0, %v2760
    %v2768 = vmul.f32 %v2767, %v2766
    %v2769 = vrot.slane %v2526, 7
    %v2771 = vmul.f32 %v2760, %v2769
    %v2772 = vadd.f32 %v2768, %v2771
    %v2774 = vrot.slane %v2772, 3
    %v2775 = vsel %vm303, %v2774, 0
    %2777 = vmatprep.subr.mxu0 0.0
    %2778 = vmatpush1.msra.mxu0 %v1105
    %2779 = vmatprep.subr.mxu0 0.0
    %2780 = vmatpush1.msra.mxu0 %v1106
    %2781 = vmatprep.subr.mxu0 0.0
    %2782 = vmatpush1.msra.mxu0 %v1107
    %2783 = vmatprep.subr.mxu0 0.0
    %2784 = vmatpush1.msra.mxu0 %v1108
    %2785 = vmatprep.subr.mxu0 0.0
    %2786 = vmatpush1.msra.mxu0 0.0
    %2787 = vmatprep.subr.mxu0 0.0
    %2788 = vmatpush1.msra.mxu0 0.0
    %2789 = vmatprep.subr.mxu0 0.0
    %2790 = vmatpush1.msra.mxu0 0.0
    %2791 = vmatprep.subr.mxu0 0.0
    %2792 = vmatpush1.msra.mxu0 0.0
    %2793 = vmatprep.subr.mxu0 0.0
    %2794 = vmatpush1.msra.mxu0 0.0
    %2795 = vmatprep.subr.mxu0 0.0
    %2796 = vmatpush1.msra.mxu0 0.0
    %2797 = vmatprep.subr.mxu0 0.0
    %2798 = vmatpush1.msra.mxu0 0.0
    %2799 = vmatprep.subr.mxu0 0.0
    %2800 = vmatpush1.msra.mxu0 0.0
    %2801 = vmatprep.subr.mxu0 0.0
    %2802 = vmatpush1.msra.mxu0 0.0
    %2803 = vmatprep.subr.mxu0 0.0
    %2804 = vmatpush1.msra.mxu0 0.0
    %2805 = vmatprep.subr.mxu0 0.0
    %2806 = vmatpush1.msra.mxu0 0.0
    %2807 = vmatprep.subr.mxu0 0.0
    %2808 = vmatpush1.msra.mxu0 0.0
    %2809 = vmatprep.subr.mxu0 0.0
    %2810 = vmatpush1.msra.mxu0 0.0
    %2811 = vmatprep.subr.mxu0 0.0
    %2812 = vmatpush1.msra.mxu0 0.0
    %2813 = vmatprep.subr.mxu0 0.0
    %2814 = vmatpush1.msra.mxu0 0.0
    %2815 = vmatprep.subr.mxu0 0.0
    %2816 = vmatpush1.msra.mxu0 0.0
    %2817 = vmatprep.subr.mxu0 0.0
    %2818 = vmatpush1.msra.mxu0 0.0
    %2819 = vmatprep.subr.mxu0 0.0
    %2820 = vmatpush1.msra.mxu0 0.0
    %2821 = vmatprep.subr.mxu0 0.0
    %2822 = vmatpush1.msra.mxu0 0.0
    %2823 = vmatprep.subr.mxu0 0.0
    %2824 = vmatpush1.msra.mxu0 0.0
    %2825 = vmatprep.subr.mxu0 0.0
    %2826 = vmatpush1.msra.mxu0 0.0
    %2827 = vmatprep.subr.mxu0 0.0
    %2828 = vmatpush1.msra.mxu0 0.0
    %2829 = vmatprep.subr.mxu0 0.0
    %2830 = vmatpush1.msra.mxu0 0.0
    %2831 = vmatprep.subr.mxu0 0.0
    %2832 = vmatpush1.msra.mxu0 0.0
    %2833 = vmatprep.subr.mxu0 0.0
    %2834 = vmatpush1.msra.mxu0 0.0
    %2835 = vmatprep.subr.mxu0 0.0
    %2836 = vmatpush1.msra.mxu0 0.0
    %2837 = vmatprep.subr.mxu0 0.0
    %2838 = vmatpush1.msra.mxu0 0.0
    %2839 = vmatprep.subr.mxu0 0.0
    %2840 = vmatpush1.msra.mxu0 0.0
    %2841 = vmatprep.mubr.f32.mxu0 0.0
    %2842 = vmatmul.mubr.f32.gmra.mrb[0].mxu0 %v2775
    %v2843 = vpop.f32.mrb[0].mxu0
    %v2844 = vadd.f32 %v1124, %v2843
    %v2845 = vpop.f32.mrb[0].mxu0
    %2846 = vdwg.mxu0
    %2847 = vmatprep.subr.mxu0 0.0
    %2848 = vmatpush1.msra.mxu0 %v1110
    %2849 = vmatprep.subr.mxu0 0.0
    %2850 = vmatpush1.msra.mxu0 %v1111
    %2851 = vmatprep.subr.mxu0 0.0
    %2852 = vmatpush1.msra.mxu0 %v1112
    %2853 = vmatprep.subr.mxu0 0.0
    %2854 = vmatpush1.msra.mxu0 %v1113
    %2855 = vmatprep.subr.mxu0 0.0
    %2856 = vmatpush1.msra.mxu0 0.0
    %2857 = vmatprep.subr.mxu0 0.0
    %2858 = vmatpush1.msra.mxu0 0.0
    %2859 = vmatprep.subr.mxu0 0.0
    %2860 = vmatpush1.msra.mxu0 0.0
    %2861 = vmatprep.subr.mxu0 0.0
    %2862 = vmatpush1.msra.mxu0 0.0
    %2863 = vmatprep.subr.mxu0 0.0
    %2864 = vmatpush1.msra.mxu0 0.0
    %2865 = vmatprep.subr.mxu0 0.0
    %2866 = vmatpush1.msra.mxu0 0.0
    %2867 = vmatprep.subr.mxu0 0.0
    %2868 = vmatpush1.msra.mxu0 0.0
    %2869 = vmatprep.subr.mxu0 0.0
    %2870 = vmatpush1.msra.mxu0 0.0
    %2871 = vmatprep.subr.mxu0 0.0
    %2872 = vmatpush1.msra.mxu0 0.0
    %2873 = vmatprep.subr.mxu0 0.0
    %2874 = vmatpush1.msra.mxu0 0.0
    %2875 = vmatprep.subr.mxu0 0.0
    %2876 = vmatpush1.msra.mxu0 0.0
    %2877 = vmatprep.subr.mxu0 0.0
    %2878 = vmatpush1.msra.mxu0 0.0
    %2879 = vmatprep.subr.mxu0 0.0
    %2880 = vmatpush1.msra.mxu0 0.0
    %2881 = vmatprep.subr.mxu0 0.0
    %2882 = vmatpush1.msra.mxu0 0.0
    %2883 = vmatprep.subr.mxu0 0.0
    %2884 = vmatpush1.msra.mxu0 0.0
    %2885 = vmatprep.subr.mxu0 0.0
    %2886 = vmatpush1.msra.mxu0 0.0
    %2887 = vmatprep.subr.mxu0 0.0
    %2888 = vmatpush1.msra.mxu0 0.0
    %2889 = vmatprep.subr.mxu0 0.0
    %2890 = vmatpush1.msra.mxu0 0.0
    %2891 = vmatprep.subr.mxu0 0.0
    %2892 = vmatpush1.msra.mxu0 0.0
    %2893 = vmatprep.subr.mxu0 0.0
    %2894 = vmatpush1.msra.mxu0 0.0
    %2895 = vmatprep.subr.mxu0 0.0
    %2896 = vmatpush1.msra.mxu0 0.0
    %2897 = vmatprep.subr.mxu0 0.0
    %2898 = vmatpush1.msra.mxu0 0.0
    %2899 = vmatprep.subr.mxu0 0.0
    %2900 = vmatpush1.msra.mxu0 0.0
    %2901 = vmatprep.subr.mxu0 0.0
    %2902 = vmatpush1.msra.mxu0 0.0
    %2903 = vmatprep.subr.mxu0 0.0
    %2904 = vmatpush1.msra.mxu0 0.0
    %2905 = vmatprep.subr.mxu0 0.0
    %2906 = vmatpush1.msra.mxu0 0.0
    %2907 = vmatprep.subr.mxu0 0.0
    %2908 = vmatpush1.msra.mxu0 0.0
    %2909 = vmatprep.subr.mxu0 0.0
    %2910 = vmatpush1.msra.mxu0 0.0
    %2911 = vmatprep.mubr.f32.mxu0 0.0
    %2912 = vmatmul.mubr.f32.gmra.mrb[0].mxu0 %v2775
    %v2913 = vpop.f32.mrb[0].mxu0
    %v2914 = vadd.f32 %v1126, %v2913
    %v2915 = vpop.f32.mrb[0].mxu0
    %2916 = vdwg.mxu0
    %2917 = vmatprep.subr.mxu0 0.0
    %2918 = vmatpush1.msra.mxu0 %v1115
    %2919 = vmatprep.subr.mxu0 0.0
    %2920 = vmatpush1.msra.mxu0 %v1116
    %2921 = vmatprep.subr.mxu0 0.0
    %2922 = vmatpush1.msra.mxu0 %v1117
    %2923 = vmatprep.subr.mxu0 0.0
    %2924 = vmatpush1.msra.mxu0 %v1118
    %2925 = vmatprep.subr.mxu0 0.0
    %2926 = vmatpush1.msra.mxu0 0.0
    %2927 = vmatprep.subr.mxu0 0.0
    %2928 = vmatpush1.msra.mxu0 0.0
    %2929 = vmatprep.subr.mxu0 0.0
    %2930 = vmatpush1.msra.mxu0 0.0
    %2931 = vmatprep.subr.mxu0 0.0
    %2932 = vmatpush1.msra.mxu0 0.0
    %2933 = vmatprep.subr.mxu0 0.0
    %2934 = vmatpush1.msra.mxu0 0.0
    %2935 = vmatprep.subr.mxu0 0.0
    %2936 = vmatpush1.msra.mxu0 0.0
    %2937 = vmatprep.subr.mxu0 0.0
    %2938 = vmatpush1.msra.mxu0 0.0
    %2939 = vmatprep.subr.mxu0 0.0
    %2940 = vmatpush1.msra.mxu0 0.0
    %2941 = vmatprep.subr.mxu0 0.0
    %2942 = vmatpush1.msra.mxu0 0.0
    %2943 = vmatprep.subr.mxu0 0.0
    %2944 = vmatpush1.msra.mxu0 0.0
    %2945 = vmatprep.subr.mxu0 0.0
    %2946 = vmatpush1.msra.mxu0 0.0
    %2947 = vmatprep.subr.mxu0 0.0
    %2948 = vmatpush1.msra.mxu0 0.0
    %2949 = vmatprep.subr.mxu0 0.0
    %2950 = vmatpush1.msra.mxu0 0.0
    %2951 = vmatprep.subr.mxu0 0.0
    %2952 = vmatpush1.msra.mxu0 0.0
    %2953 = vmatprep.subr.mxu0 0.0
    %2954 = vmatpush1.msra.mxu0 0.0
    %2955 = vmatprep.subr.mxu0 0.0
    %2956 = vmatpush1.msra.mxu0 0.0
    %2957 = vmatprep.subr.mxu0 0.0
    %2958 = vmatpush1.msra.mxu0 0.0
    %2959 = vmatprep.subr.mxu0 0.0
    %2960 = vmatpush1.msra.mxu0 0.0
    %2961 = vmatprep.subr.mxu0 0.0
    %2962 = vmatpush1.msra.mxu0 0.0
    %2963 = vmatprep.subr.mxu0 0.0
    %2964 = vmatpush1.msra.mxu0 0.0
    %2965 = vmatprep.subr.mxu0 0.0
    %2966 = vmatpush1.msra.mxu0 0.0
    %2967 = vmatprep.subr.mxu0 0.0
    %2968 = vmatpush1.msra.mxu0 0.0
    %2969 = vmatprep.subr.mxu0 0.0
    %2970 = vmatpush1.msra.mxu0 0.0
    %2971 = vmatprep.subr.mxu0 0.0
    %2972 = vmatpush1.msra.mxu0 0.0
    %2973 = vmatprep.subr.mxu0 0.0
    %2974 = vmatpush1.msra.mxu0 0.0
    %2975 = vmatprep.subr.mxu0 0.0
    %2976 = vmatpush1.msra.mxu0 0.0
    %2977 = vmatprep.subr.mxu0 0.0
    %2978 = vmatpush1.msra.mxu0 0.0
    %2979 = vmatprep.subr.mxu0 0.0
    %2980 = vmatpush1.msra.mxu0 0.0
    %2981 = vmatprep.mubr.f32.mxu0 0.0
    %2982 = vmatmul.mubr.f32.gmra.mrb[0].mxu0 %v2775
    %v2983 = vpop.f32.mrb[0].mxu0
    %v2984 = vadd.f32 %v1128, %v2983
    %v2985 = vpop.f32.mrb[0].mxu0
    %2986 = vdwg.mxu0
    %v2988 = vrot.slane %v2844, 4
    %v2990 = vadd.f32 %v1647, %v2988
    %v2991 = vxor.u32 %v2990, 2147483648
    %v2992 = vmul.f32 %v2991, 1.442695
    %v2993 = vpow.pop %v2992
    %v2994 = vadd.f32 %v2993, 1.0
    %v2995 = vrcp.pop %v2994
    %v2996 = vmul.f32 1.0, %v2995
    %v2998 = vrot.slane %v2914, 4
    %v3000 = vadd.f32 %v1723, %v2998
    %v3001 = vxor.u32 %v3000, 2147483648
    %v3002 = vmul.f32 %v3001, 1.442695
    %v3003 = vpow.pop %v3002
    %v3004 = vadd.f32 %v3003, 1.0
    %v3005 = vrcp.pop %v3004
    %v3006 = vmul.f32 1.0, %v3005
    %v3008 = vrot.slane %v2984, 4
    %v3010 = vmul.f32 %v2996, %v3008
    %v3011 = vadd.f32 %v1799, %v3010
    %v3012 = vtanh.pop %v3011
    %v3013 = vsub.f32 1.0, %v3006
    %v3014 = vmul.f32 %v3013, %v3012
    %v3015 = vrot.slane %v2772, 7
    %v3017 = vmul.f32 %v3006, %v3015
    %v3018 = vadd.f32 %v3014, %v3017
    %v3020 = vrot.slane %v3018, 4
    %v3021 = vsel %vm303, %v3020, 0
    %3023 = vmatprep.subr.mxu0 0.0
    %3024 = vmatpush1.msra.mxu0 %v1105
    %3025 = vmatprep.subr.mxu0 0.0
    %3026 = vmatpush1.msra.mxu0 %v1106
    %3027 = vmatprep.subr.mxu0 0.0
    %3028 = vmatpush1.msra.mxu0 %v1107
    %3029 = vmatprep.subr.mxu0 0.0
    %3030 = vmatpush1.msra.mxu0 %v1108
    %3031 = vmatprep.subr.mxu0 0.0
    %3032 = vmatpush1.msra.mxu0 0.0
    %3033 = vmatprep.subr.mxu0 0.0
    %3034 = vmatpush1.msra.mxu0 0.0
    %3035 = vmatprep.subr.mxu0 0.0
    %3036 = vmatpush1.msra.mxu0 0.0
    %3037 = vmatprep.subr.mxu0 0.0
    %3038 = vmatpush1.msra.mxu0 0.0
    %3039 = vmatprep.subr.mxu0 0.0
    %3040 = vmatpush1.msra.mxu0 0.0
    %3041 = vmatprep.subr.mxu0 0.0
    %3042 = vmatpush1.msra.mxu0 0.0
    %3043 = vmatprep.subr.mxu0 0.0
    %3044 = vmatpush1.msra.mxu0 0.0
    %3045 = vmatprep.subr.mxu0 0.0
    %3046 = vmatpush1.msra.mxu0 0.0
    %3047 = vmatprep.subr.mxu0 0.0
    %3048 = vmatpush1.msra.mxu0 0.0
    %3049 = vmatprep.subr.mxu0 0.0
    %3050 = vmatpush1.msra.mxu0 0.0
    %3051 = vmatprep.subr.mxu0 0.0
    %3052 = vmatpush1.msra.mxu0 0.0
    %3053 = vmatprep.subr.mxu0 0.0
    %3054 = vmatpush1.msra.mxu0 0.0
    %3055 = vmatprep.subr.mxu0 0.0
    %3056 = vmatpush1.msra.mxu0 0.0
    %3057 = vmatprep.subr.mxu0 0.0
    %3058 = vmatpush1.msra.mxu0 0.0
    %3059 = vmatprep.subr.mxu0 0.0
    %3060 = vmatpush1.msra.mxu0 0.0
    %3061 = vmatprep.subr.mxu0 0.0
    %3062 = vmatpush1.msra.mxu0 0.0
    %3063 = vmatprep.subr.mxu0 0.0
    %3064 = vmatpush1.msra.mxu0 0.0
    %3065 = vmatprep.subr.mxu0 0.0
    %3066 = vmatpush1.msra.mxu0 0.0
    %3067 = vmatprep.subr.mxu0 0.0
    %3068 = vmatpush1.msra.mxu0 0.0
    %3069 = vmatprep.subr.mxu0 0.0
    %3070 = vmatpush1.msra.mxu0 0.0
    %3071 = vmatprep.subr.mxu0 0.0
    %3072 = vmatpush1.msra.mxu0 0.0
    %3073 = vmatprep.subr.mxu0 0.0
    %3074 = vmatpush1.msra.mxu0 0.0
    %3075 = vmatprep.subr.mxu0 0.0
    %3076 = vmatpush1.msra.mxu0 0.0
    %3077 = vmatprep.subr.mxu0 0.0
    %3078 = vmatpush1.msra.mxu0 0.0
    %3079 = vmatprep.subr.mxu0 0.0
    %3080 = vmatpush1.msra.mxu0 0.0
    %3081 = vmatprep.subr.mxu0 0.0
    %3082 = vmatpush1.msra.mxu0 0.0
    %3083 = vmatprep.subr.mxu0 0.0
    %3084 = vmatpush1.msra.mxu0 0.0
    %3085 = vmatprep.subr.mxu0 0.0
    %3086 = vmatpush1.msra.mxu0 0.0
    %3087 = vmatprep.mubr.f32.mxu0 0.0
    %3088 = vmatmul.mubr.f32.gmra.mrb[0].mxu0 %v3021
    %v3089 = vpop.f32.mrb[0].mxu0
    %v3090 = vadd.f32 %v1124, %v3089
    %v3091 = vpop.f32.mrb[0].mxu0
    %3092 = vdwg.mxu0
    %3093 = vmatprep.subr.mxu0 0.0
    %3094 = vmatpush1.msra.mxu0 %v1110
    %3095 = vmatprep.subr.mxu0 0.0
    %3096 = vmatpush1.msra.mxu0 %v1111
    %3097 = vmatprep.subr.mxu0 0.0
    %3098 = vmatpush1.msra.mxu0 %v1112
    %3099 = vmatprep.subr.mxu0 0.0
    %3100 = vmatpush1.msra.mxu0 %v1113
    %3101 = vmatprep.subr.mxu0 0.0
    %3102 = vmatpush1.msra.mxu0 0.0
    %3103 = vmatprep.subr.mxu0 0.0
    %3104 = vmatpush1.msra.mxu0 0.0
    %3105 = vmatprep.subr.mxu0 0.0
    %3106 = vmatpush1.msra.mxu0 0.0
    %3107 = vmatprep.subr.mxu0 0.0
    %3108 = vmatpush1.msra.mxu0 0.0
    %3109 = vmatprep.subr.mxu0 0.0
    %3110 = vmatpush1.msra.mxu0 0.0
    %3111 = vmatprep.subr.mxu0 0.0
    %3112 = vmatpush1.msra.mxu0 0.0
    %3113 = vmatprep.subr.mxu0 0.0
    %3114 = vmatpush1.msra.mxu0 0.0
    %3115 = vmatprep.subr.mxu0 0.0
    %3116 = vmatpush1.msra.mxu0 0.0
    %3117 = vmatprep.subr.mxu0 0.0
    %3118 = vmatpush1.msra.mxu0 0.0
    %3119 = vmatprep.subr.mxu0 0.0
    %3120 = vmatpush1.msra.mxu0 0.0
    %3121 = vmatprep.subr.mxu0 0.0
    %3122 = vmatpush1.msra.mxu0 0.0
    %3123 = vmatprep.subr.mxu0 0.0
    %3124 = vmatpush1.msra.mxu0 0.0
    %3125 = vmatprep.subr.mxu0 0.0
    %3126 = vmatpush1.msra.mxu0 0.0
    %3127 = vmatprep.subr.mxu0 0.0
    %3128 = vmatpush1.msra.mxu0 0.0
    %3129 = vmatprep.subr.mxu0 0.0
    %3130 = vmatpush1.msra.mxu0 0.0
    %3131 = vmatprep.subr.mxu0 0.0
    %3132 = vmatpush1.msra.mxu0 0.0
    %3133 = vmatprep.subr.mxu0 0.0
    %3134 = vmatpush1.msra.mxu0 0.0
    %3135 = vmatprep.subr.mxu0 0.0
    %3136 = vmatpush1.msra.mxu0 0.0
    %3137 = vmatprep.subr.mxu0 0.0
    %3138 = vmatpush1.msra.mxu0 0.0
    %3139 = vmatprep.subr.mxu0 0.0
    %3140 = vmatpush1.msra.mxu0 0.0
    %3141 = vmatprep.subr.mxu0 0.0
    %3142 = vmatpush1.msra.mxu0 0.0
    %3143 = vmatprep.subr.mxu0 0.0
    %3144 = vmatpush1.msra.mxu0 0.0
    %3145 = vmatprep.subr.mxu0 0.0
    %3146 = vmatpush1.msra.mxu0 0.0
    %3147 = vmatprep.subr.mxu0 0.0
    %3148 = vmatpush1.msra.mxu0 0.0
    %3149 = vmatprep.subr.mxu0 0.0
    %3150 = vmatpush1.msra.mxu0 0.0
    %3151 = vmatprep.subr.mxu0 0.0
    %3152 = vmatpush1.msra.mxu0 0.0
    %3153 = vmatprep.subr.mxu0 0.0
    %3154 = vmatpush1.msra.mxu0 0.0
    %3155 = vmatprep.subr.mxu0 0.0
    %3156 = vmatpush1.msra.mxu0 0.0
    %3157 = vmatprep.mubr.f32.mxu0 0.0
    %3158 = vmatmul.mubr.f32.gmra.mrb[0].mxu0 %v3021
    %v3159 = vpop.f32.mrb[0].mxu0
    %v3160 = vadd.f32 %v1126, %v3159
    %v3161 = vpop.f32.mrb[0].mxu0
    %3162 = vdwg.mxu0
    %3163 = vmatprep.subr.mxu0 0.0
    %3164 = vmatpush1.msra.mxu0 %v1115
    %3165 = vmatprep.subr.mxu0 0.0
    %3166 = vmatpush1.msra.mxu0 %v1116
    %3167 = vmatprep.subr.mxu0 0.0
    %3168 = vmatpush1.msra.mxu0 %v1117
    %3169 = vmatprep.subr.mxu0 0.0
    %3170 = vmatpush1.msra.mxu0 %v1118
    %3171 = vmatprep.subr.mxu0 0.0
    %3172 = vmatpush1.msra.mxu0 0.0
    %3173 = vmatprep.subr.mxu0 0.0
    %3174 = vmatpush1.msra.mxu0 0.0
    %3175 = vmatprep.subr.mxu0 0.0
    %3176 = vmatpush1.msra.mxu0 0.0
    %3177 = vmatprep.subr.mxu0 0.0
    %3178 = vmatpush1.msra.mxu0 0.0
    %3179 = vmatprep.subr.mxu0 0.0
    %3180 = vmatpush1.msra.mxu0 0.0
    %3181 = vmatprep.subr.mxu0 0.0
    %3182 = vmatpush1.msra.mxu0 0.0
    %3183 = vmatprep.subr.mxu0 0.0
    %3184 = vmatpush1.msra.mxu0 0.0
    %3185 = vmatprep.subr.mxu0 0.0
    %3186 = vmatpush1.msra.mxu0 0.0
    %3187 = vmatprep.subr.mxu0 0.0
    %3188 = vmatpush1.msra.mxu0 0.0
    %3189 = vmatprep.subr.mxu0 0.0
    %3190 = vmatpush1.msra.mxu0 0.0
    %3191 = vmatprep.subr.mxu0 0.0
    %3192 = vmatpush1.msra.mxu0 0.0
    %3193 = vmatprep.subr.mxu0 0.0
    %3194 = vmatpush1.msra.mxu0 0.0
    %3195 = vmatprep.subr.mxu0 0.0
    %3196 = vmatpush1.msra.mxu0 0.0
    %3197 = vmatprep.subr.mxu0 0.0
    %3198 = vmatpush1.msra.mxu0 0.0
    %3199 = vmatprep.subr.mxu0 0.0
    %3200 = vmatpush1.msra.mxu0 0.0
    %3201 = vmatprep.subr.mxu0 0.0
    %3202 = vmatpush1.msra.mxu0 0.0
    %3203 = vmatprep.subr.mxu0 0.0
    %3204 = vmatpush1.msra.mxu0 0.0
    %3205 = vmatprep.subr.mxu0 0.0
    %3206 = vmatpush1.msra.mxu0 0.0
    %3207 = vmatprep.subr.mxu0 0.0
    %3208 = vmatpush1.msra.mxu0 0.0
    %3209 = vmatprep.subr.mxu0 0.0
    %3210 = vmatpush1.msra.mxu0 0.0
    %3211 = vmatprep.subr.mxu0 0.0
    %3212 = vmatpush1.msra.mxu0 0.0
    %3213 = vmatprep.subr.mxu0 0.0
    %3214 = vmatpush1.msra.mxu0 0.0
    %3215 = vmatprep.subr.mxu0 0.0
    %3216 = vmatpush1.msra.mxu0 0.0
    %3217 = vmatprep.subr.mxu0 0.0
    %3218 = vmatpush1.msra.mxu0 0.0
    %3219 = vmatprep.subr.mxu0 0.0
    %3220 = vmatpush1.msra.mxu0 0.0
    %3221 = vmatprep.subr.mxu0 0.0
    %3222 = vmatpush1.msra.mxu0 0.0
    %3223 = vmatprep.subr.mxu0 0.0
    %3224 = vmatpush1.msra.mxu0 0.0
    %3225 = vmatprep.subr.mxu0 0.0
    %3226 = vmatpush1.msra.mxu0 0.0
    %3227 = vmatprep.mubr.f32.mxu0 0.0
    %3228 = vmatmul.mubr.f32.gmra.mrb[0].mxu0 %v3021
    %v3229 = vpop.f32.mrb[0].mxu0
    %v3230 = vadd.f32 %v1128, %v3229
    %v3231 = vpop.f32.mrb[0].mxu0
    %3232 = vdwg.mxu0
    %v3234 = vrot.slane %v3090, 3
    %v3236 = vadd.f32 %v1647, %v3234
    %v3237 = vxor.u32 %v3236, 2147483648
    %v3238 = vmul.f32 %v3237, 1.442695
    %v3239 = vpow.pop %v3238
    %v3240 = vadd.f32 %v3239, 1.0
    %v3241 = vrcp.pop %v3240
    %v3242 = vmul.f32 1.0, %v3241
    %v3244 = vrot.slane %v3160, 3
    %v3246 = vadd.f32 %v1723, %v3244
    %v3247 = vxor.u32 %v3246, 2147483648
    %v3248 = vmul.f32 %v3247, 1.442695
    %v3249 = vpow.pop %v3248
    %v3250 = vadd.f32 %v3249, 1.0
    %v3251 = vrcp.pop %v3250
    %v3252 = vmul.f32 1.0, %v3251
    %v3254 = vrot.slane %v3230, 3
    %v3256 = vmul.f32 %v3242, %v3254
    %v3257 = vadd.f32 %v1799, %v3256
    %v3258 = vtanh.pop %v3257
    %v3259 = vsub.f32 1.0, %v3252
    %v3260 = vmul.f32 %v3259, %v3258
    %v3261 = vrot.slane %v3018, 7
    %v3263 = vmul.f32 %v3252, %v3261
    %v3264 = vadd.f32 %v3260, %v3263
    %v3266 = vrot.slane %v3264, 5
    %v3267 = vsel %vm303, %v3266, 0
    %3269 = vmatprep.subr.mxu0 0.0
    %3270 = vmatpush1.msra.mxu0 %v1129
    %3271 = vmatprep.subr.mxu0 0.0
    %3272 = vmatpush1.msra.mxu0 %v1130
    %3273 = vmatprep.subr.mxu0 0.0
    %3274 = vmatpush1.msra.mxu0 %v1131
    %3275 = vmatprep.subr.mxu0 0.0
    %3276 = vmatpush1.msra.mxu0 %v1132
    %3277 = vmatprep.subr.mxu0 0.0
    %3278 = vmatpush1.msra.mxu0 0.0
    %3279 = vmatprep.subr.mxu0 0.0
    %3280 = vmatpush1.msra.mxu0 0.0
    %3281 = vmatprep.subr.mxu0 0.0
    %3282 = vmatpush1.msra.mxu0 0.0
    %3283 = vmatprep.subr.mxu0 0.0
    %3284 = vmatpush1.msra.mxu0 0.0
    %3285 = vmatprep.subr.mxu0 0.0
    %3286 = vmatpush1.msra.mxu0 0.0
    %3287 = vmatprep.subr.mxu0 0.0
    %3288 = vmatpush1.msra.mxu0 0.0
    %3289 = vmatprep.subr.mxu0 0.0
    %3290 = vmatpush1.msra.mxu0 0.0
    %3291 = vmatprep.subr.mxu0 0.0
    %3292 = vmatpush1.msra.mxu0 0.0
    %3293 = vmatprep.subr.mxu0 0.0
    %3294 = vmatpush1.msra.mxu0 0.0
    %3295 = vmatprep.subr.mxu0 0.0
    %3296 = vmatpush1.msra.mxu0 0.0
    %3297 = vmatprep.subr.mxu0 0.0
    %3298 = vmatpush1.msra.mxu0 0.0
    %3299 = vmatprep.subr.mxu0 0.0
    %3300 = vmatpush1.msra.mxu0 0.0
    %3301 = vmatprep.subr.mxu0 0.0
    %3302 = vmatpush1.msra.mxu0 0.0
    %3303 = vmatprep.subr.mxu0 0.0
    %3304 = vmatpush1.msra.mxu0 0.0
    %3305 = vmatprep.subr.mxu0 0.0
    %3306 = vmatpush1.msra.mxu0 0.0
    %3307 = vmatprep.subr.mxu0 0.0
    %3308 = vmatpush1.msra.mxu0 0.0
    %3309 = vmatprep.subr.mxu0 0.0
    %3310 = vmatpush1.msra.mxu0 0.0
    %3311 = vmatprep.subr.mxu0 0.0
    %3312 = vmatpush1.msra.mxu0 0.0
    %3313 = vmatprep.subr.mxu0 0.0
    %3314 = vmatpush1.msra.mxu0 0.0
    %3315 = vmatprep.subr.mxu0 0.0
    %3316 = vmatpush1.msra.mxu0 0.0
    %3317 = vmatprep.subr.mxu0 0.0
    %3318 = vmatpush1.msra.mxu0 0.0
    %3319 = vmatprep.subr.mxu0 0.0
    %3320 = vmatpush1.msra.mxu0 0.0
    %3321 = vmatprep.subr.mxu0 0.0
    %3322 = vmatpush1.msra.mxu0 0.0
    %3323 = vmatprep.subr.mxu0 0.0
    %3324 = vmatpush1.msra.mxu0 0.0
    %3325 = vmatprep.subr.mxu0 0.0
    %3326 = vmatpush1.msra.mxu0 0.0
    %3327 = vmatprep.subr.mxu0 0.0
    %3328 = vmatpush1.msra.mxu0 0.0
    %3329 = vmatprep.subr.mxu0 0.0
    %3330 = vmatpush1.msra.mxu0 0.0
    %3331 = vmatprep.subr.mxu0 0.0
    %3332 = vmatpush1.msra.mxu0 0.0
    %3333 = vmatprep.mubr.f32.mxu0 0.0
    %3334 = vmatmul.mubr.f32.gmra.mrb[0].mxu0 %v3267
    %v3335 = vpop.f32.mrb[0].mxu0
    %v3336 = vadd.f32 %v1133, %v3335
    %v3337 = vpop.f32.mrb[0].mxu0
    %3338 = vdwg.mxu0
    %v3339 = vmax.f32 %v3336, 0.0
    %3340 = vst.msk [vmem:[#allocation26] sm:$0x1] %vm1569, %v3339
    %s3341 = scalar_lea.vmem %s47, 16
    %v3342 = vld [vmem:[%s3341] sm:$0xff]
    %v3343 = vld [vmem:[%s3341 + $0x8] sm:$0xf]
    %v3345 = vsel %vm303, %v3342, 0
    %v3348 = vsel %vm303, %v3343, 0
    %3350 = vmatprep.subr.mxu0 0.0
    %3351 = vmatpush1.msra.mxu0 %v1086
    %3352 = vmatprep.subr.mxu0 0.0
    %3353 = vmatpush1.msra.mxu0 %v1087
    %3354 = vmatprep.subr.mxu0 0.0
    %3355 = vmatpush1.msra.mxu0 %v1088
    %3356 = vmatprep.subr.mxu0 0.0
    %3357 = vmatpush1.msra.mxu0 %v1089
    %3358 = vmatprep.subr.mxu0 0.0
    %3359 = vmatpush1.msra.mxu0 0.0
    %3360 = vmatprep.subr.mxu0 0.0
    %3361 = vmatpush1.msra.mxu0 0.0
    %3362 = vmatprep.subr.mxu0 0.0
    %3363 = vmatpush1.msra.mxu0 0.0
    %3364 = vmatprep.subr.mxu0 0.0
    %3365 = vmatpush1.msra.mxu0 0.0
    %3366 = vmatprep.subr.mxu0 0.0
    %3367 = vmatpush1.msra.mxu0 0.0
    %3368 = vmatprep.subr.mxu0 0.0
    %3369 = vmatpush1.msra.mxu0 0.0
    %3370 = vmatprep.subr.mxu0 0.0
    %3371 = vmatpush1.msra.mxu0 0.0
    %3372 = vmatprep.subr.mxu0 0.0
    %3373 = vmatpush1.msra.mxu0 0.0
    %3374 = vmatprep.subr.mxu0 0.0
    %3375 = vmatpush1.msra.mxu0 0.0
    %3376 = vmatprep.subr.mxu0 0.0
    %3377 = vmatpush1.msra.mxu0 0.0
    %3378 = vmatprep.subr.mxu0 0.0
    %3379 = vmatpush1.msra.mxu0 0.0
    %3380 = vmatprep.subr.mxu0 0.0
    %3381 = vmatpush1.msra.mxu0 0.0
    %3382 = vmatprep.subr.mxu0 0.0
    %3383 = vmatpush1.msra.mxu0 0.0
    %3384 = vmatprep.subr.mxu0 0.0
    %3385 = vmatpush1.msra.mxu0 0.0
    %3386 = vmatprep.subr.mxu0 0.0
    %3387 = vmatpush1.msra.mxu0 0.0
    %3388 = vmatprep.subr.mxu0 0.0
    %3389 = vmatpush1.msra.mxu0 0.0
    %3390 = vmatprep.subr.mxu0 0.0
    %3391 = vmatpush1.msra.mxu0 0.0
    %3392 = vmatprep.subr.mxu0 0.0
    %3393 = vmatpush1.msra.mxu0 0.0
    %3394 = vmatprep.subr.mxu0 0.0
    %3395 = vmatpush1.msra.mxu0 0.0
    %3396 = vmatprep.subr.mxu0 0.0
    %3397 = vmatpush1.msra.mxu0 0.0
    %3398 = vmatprep.subr.mxu0 0.0
    %3399 = vmatpush1.msra.mxu0 0.0
    %3400 = vmatprep.subr.mxu0 0.0
    %3401 = vmatpush1.msra.mxu0 0.0
    %3402 = vmatprep.subr.mxu0 0.0
    %3403 = vmatpush1.msra.mxu0 0.0
    %3404 = vmatprep.subr.mxu0 0.0
    %3405 = vmatpush1.msra.mxu0 0.0
    %3406 = vmatprep.subr.mxu0 0.0
    %3407 = vmatpush1.msra.mxu0 0.0
    %3408 = vmatprep.subr.mxu0 0.0
    %3409 = vmatpush1.msra.mxu0 0.0
    %3410 = vmatprep.subr.mxu0 0.0
    %3411 = vmatpush1.msra.mxu0 0.0
    %3412 = vmatprep.subr.mxu0 0.0
    %3413 = vmatpush1.msra.mxu0 0.0
    %3414 = vmatprep.mubr.f32.mxu0 0.0
    %3415 = vmatmul.mubr.f32.gmra.mrb[0].mxu0 %v3345
    %v3416 = vpop.f32.mrb[0].mxu0
    %v3417 = vadd.f32 0.0, %v3416
    %v3418 = vpop.f32.mrb[0].mxu0
    %3419 = vmatprep.mubr.f32.mxu0 0.0
    %3420 = vmatmul.mubr.f32.gmra.mrb[0].mxu0 %v3348
    %v3421 = vpop.f32.mrb[0].mxu0
    %v3422 = vadd.f32 0.0, %v3421
    %v3423 = vpop.f32.mrb[0].mxu0
    %3424 = vdwg.mxu0
    %s3425 = scalar_lea.vmem %s49, 16
    %v3426 = vld [vmem:[%s3425] sm:$0xff]
    %v3427 = vld [vmem:[%s3425 + $0x8] sm:$0xf]
    %v3429 = vsel %vm1230, %v3426, 0
    %v3432 = vsel %vm1230, %v3427, 0
    %v3435 = vsel %vm1237, %v3422, 0
    %3437 = vmatprep.subr.mxu0 0.0
    %3438 = vmatpush1.msra.mxu0 %v3417
    %3439 = vmatprep.subr.mxu0 0.0
    %3440 = vmatpush1.msra.mxu0 %v3435
    %3441 = vmatprep.subr.mxu0 0.0
    %3442 = vmatpush1.msra.mxu0 0.0
    %3443 = vmatprep.subr.mxu0 0.0
    %3444 = vmatpush1.msra.mxu0 0.0
    %3445 = vmatprep.subr.mxu0 0.0
    %3446 = vmatpush1.msra.mxu0 0.0
    %3447 = vmatprep.subr.mxu0 0.0
    %3448 = vmatpush1.msra.mxu0 0.0
    %3449 = vmatprep.subr.mxu0 0.0
    %3450 = vmatpush1.msra.mxu0 0.0
    %3451 = vmatprep.subr.mxu0 0.0
    %3452 = vmatpush1.msra.mxu0 0.0
    %3453 = vmatprep.subr.mxu0 0.0
    %3454 = vmatpush1.msra.mxu0 0.0
    %3455 = vmatprep.subr.mxu0 0.0
    %3456 = vmatpush1.msra.mxu0 0.0
    %3457 = vmatprep.subr.mxu0 0.0
    %3458 = vmatpush1.msra.mxu0 0.0
    %3459 = vmatprep.subr.mxu0 0.0
    %3460 = vmatpush1.msra.mxu0 0.0
    %3461 = vmatprep.subr.mxu0 0.0
    %3462 = vmatpush1.msra.mxu0 0.0
    %3463 = vmatprep.subr.mxu0 0.0
    %3464 = vmatpush1.msra.mxu0 0.0
    %3465 = vmatprep.subr.mxu0 0.0
    %3466 = vmatpush1.msra.mxu0 0.0
    %3467 = vmatprep.subr.mxu0 0.0
    %3468 = vmatpush1.msra.mxu0 0.0
    %3469 = vmatprep.subr.mxu0 0.0
    %3470 = vmatpush1.msra.mxu0 0.0
    %3471 = vmatprep.subr.mxu0 0.0
    %3472 = vmatpush1.msra.mxu0 0.0
    %3473 = vmatprep.subr.mxu0 0.0
    %3474 = vmatpush1.msra.mxu0 0.0
    %3475 = vmatprep.subr.mxu0 0.0
    %3476 = vmatpush1.msra.mxu0 0.0
    %3477 = vmatprep.subr.mxu0 0.0
    %3478 = vmatpush1.msra.mxu0 0.0
    %3479 = vmatprep.subr.mxu0 0.0
    %3480 = vmatpush1.msra.mxu0 0.0
    %3481 = vmatprep.subr.mxu0 0.0
    %3482 = vmatpush1.msra.mxu0 0.0
    %3483 = vmatprep.subr.mxu0 0.0
    %3484 = vmatpush1.msra.mxu0 0.0
    %3485 = vmatprep.subr.mxu0 0.0
    %3486 = vmatpush1.msra.mxu0 0.0
    %3487 = vmatprep.subr.mxu0 0.0
    %3488 = vmatpush1.msra.mxu0 0.0
    %3489 = vmatprep.subr.mxu0 0.0
    %3490 = vmatpush1.msra.mxu0 0.0
    %3491 = vmatprep.subr.mxu0 0.0
    %3492 = vmatpush1.msra.mxu0 0.0
    %3493 = vmatprep.subr.mxu0 0.0
    %3494 = vmatpush1.msra.mxu0 0.0
    %3495 = vmatprep.subr.mxu0 0.0
    %3496 = vmatpush1.msra.mxu0 0.0
    %3497 = vmatprep.subr.mxu0 0.0
    %3498 = vmatpush1.msra.mxu0 0.0
    %3499 = vmatprep.subr.mxu0 0.0
    %3500 = vmatpush1.msra.mxu0 0.0
    %3501 = vmatprep.mubr.f32.mxu0 0.0
    %3502 = vmatmul.mubr.f32.gmra.mrb[0].mxu0 %v3429
    %v3503 = vpop.f32.mrb[0].mxu0
    %v3504 = vadd.f32 %v1228, %v3503
    %v3505 = vpop.f32.mrb[0].mxu0
    %3506 = vmatprep.mubr.f32.mxu0 0.0
    %3507 = vmatmul.mubr.f32.gmra.mrb[0].mxu0 %v3432
    %v3508 = vpop.f32.mrb[0].mxu0
    %v3509 = vpop.f32.mrb[0].mxu0
    %3510 = vdwg.mxu0
    %s3511 = scalar_lea.vmem %s51, 8
    %v3512 = vld [vmem:[%s3511] sm:$0x3f]
    %v3514 = vsel %vm1316, %v3512, 0
    %3516 = vmatprep.subr.mxu0 0.0
    %3517 = vmatpush1.msra.mxu0 %v1081
    %3518 = vmatprep.subr.mxu0 0.0
    %3519 = vmatpush1.msra.mxu0 %v1082
    %3520 = vmatprep.subr.mxu0 0.0
    %3521 = vmatpush1.msra.mxu0 %v1321
    %3522 = vmatprep.subr.mxu0 0.0
    %3523 = vmatpush1.msra.mxu0 0.0
    %3524 = vmatprep.subr.mxu0 0.0
    %3525 = vmatpush1.msra.mxu0 0.0
    %3526 = vmatprep.subr.mxu0 0.0
    %3527 = vmatpush1.msra.mxu0 0.0
    %3528 = vmatprep.subr.mxu0 0.0
    %3529 = vmatpush1.msra.mxu0 0.0
    %3530 = vmatprep.subr.mxu0 0.0
    %3531 = vmatpush1.msra.mxu0 0.0
    %3532 = vmatprep.subr.mxu0 0.0
    %3533 = vmatpush1.msra.mxu0 0.0
    %3534 = vmatprep.subr.mxu0 0.0
    %3535 = vmatpush1.msra.mxu0 0.0
    %3536 = vmatprep.subr.mxu0 0.0
    %3537 = vmatpush1.msra.mxu0 0.0
    %3538 = vmatprep.subr.mxu0 0.0
    %3539 = vmatpush1.msra.mxu0 0.0
    %3540 = vmatprep.subr.mxu0 0.0
    %3541 = vmatpush1.msra.mxu0 0.0
    %3542 = vmatprep.subr.mxu0 0.0
    %3543 = vmatpush1.msra.mxu0 0.0
    %3544 = vmatprep.subr.mxu0 0.0
    %3545 = vmatpush1.msra.mxu0 0.0
    %3546 = vmatprep.subr.mxu0 0.0
    %3547 = vmatpush1.msra.mxu0 0.0
    %3548 = vmatprep.subr.mxu0 0.0
    %3549 = vmatpush1.msra.mxu0 0.0
    %3550 = vmatprep.subr.mxu0 0.0
    %3551 = vmatpush1.msra.mxu0 0.0
    %3552 = vmatprep.subr.mxu0 0.0
    %3553 = vmatpush1.msra.mxu0 0.0
    %3554 = vmatprep.subr.mxu0 0.0
    %3555 = vmatpush1.msra.mxu0 0.0
    %3556 = vmatprep.subr.mxu0 0.0
    %3557 = vmatpush1.msra.mxu0 0.0
    %3558 = vmatprep.subr.mxu0 0.0
    %3559 = vmatpush1.msra.mxu0 0.0
    %3560 = vmatprep.subr.mxu0 0.0
    %3561 = vmatpush1.msra.mxu0 0.0
    %3562 = vmatprep.subr.mxu0 0.0
    %3563 = vmatpush1.msra.mxu0 0.0
    %3564 = vmatprep.subr.mxu0 0.0
    %3565 = vmatpush1.msra.mxu0 0.0
    %3566 = vmatprep.subr.mxu0 0.0
    %3567 = vmatpush1.msra.mxu0 0.0
    %3568 = vmatprep.subr.mxu0 0.0
    %3569 = vmatpush1.msra.mxu0 0.0
    %3570 = vmatprep.subr.mxu0 0.0
    %3571 = vmatpush1.msra.mxu0 0.0
    %3572 = vmatprep.subr.mxu0 0.0
    %3573 = vmatpush1.msra.mxu0 0.0
    %3574 = vmatprep.subr.mxu0 0.0
    %3575 = vmatpush1.msra.mxu0 0.0
    %3576 = vmatprep.subr.mxu0 0.0
    %3577 = vmatpush1.msra.mxu0 0.0
    %3578 = vmatprep.subr.mxu0 0.0
    %3579 = vmatpush1.msra.mxu0 0.0
    %3580 = vmatprep.mubr.f32.mxu0 0.0
    %3581 = vmatmul.mubr.f32.gmra.mrb[0].mxu0 %v3514
    %v3582 = vpop.f32.mrb[0].mxu0
    %v3583 = vadd.f32 0.0, %v3582
    %v3584 = vpop.f32.mrb[0].mxu0
    %3585 = vdwg.mxu0
    %s3586 = scalar_lea.vmem %s53, 8
    %v3587 = vld [vmem:[%s3586] sm:$0x3f]
    %v3588 = vmul.f32 %v1401, %v3504
    %v3589 = vmul.f32 %v1411, %v3583
    %v3590 = vadd.f32 %v3588, %v3589
    %3592 = vset.pattern.permute.xlu0 0
    %3593 = vperm.xlu0 %3592, %v3587
    %v3594 = vpop.permute.xlu0 %3593
    %v3596 = vmul.f32 %v3594, %v3590
    %s3597 = scalar_lea.vmem %s55, 1
    %v3598 = vld [vmem:[%s3597] sm:$0x1]
    %v3600 = vsel %vm1316, %v3598, 0
    %3602 = vmatprep.subr.mxu0 0.0
    %3603 = vmatpush1.msra.mxu0 %v1081
    %3604 = vmatprep.subr.mxu0 0.0
    %3605 = vmatpush1.msra.mxu0 %v1082
    %3606 = vmatprep.subr.mxu0 0.0
    %3607 = vmatpush1.msra.mxu0 %v1321
    %3608 = vmatprep.subr.mxu0 0.0
    %3609 = vmatpush1.msra.mxu0 0.0
    %3610 = vmatprep.subr.mxu0 0.0
    %3611 = vmatpush1.msra.mxu0 0.0
    %3612 = vmatprep.subr.mxu0 0.0
    %3613 = vmatpush1.msra.mxu0 0.0
    %3614 = vmatprep.subr.mxu0 0.0
    %3615 = vmatpush1.msra.mxu0 0.0
    %3616 = vmatprep.subr.mxu0 0.0
    %3617 = vmatpush1.msra.mxu0 0.0
    %3618 = vmatprep.subr.mxu0 0.0
    %3619 = vmatpush1.msra.mxu0 0.0
    %3620 = vmatprep.subr.mxu0 0.0
    %3621 = vmatpush1.msra.mxu0 0.0
    %3622 = vmatprep.subr.mxu0 0.0
    %3623 = vmatpush1.msra.mxu0 0.0
    %3624 = vmatprep.subr.mxu0 0.0
    %3625 = vmatpush1.msra.mxu0 0.0
    %3626 = vmatprep.subr.mxu0 0.0
    %3627 = vmatpush1.msra.mxu0 0.0
    %3628 = vmatprep.subr.mxu0 0.0
    %3629 = vmatpush1.msra.mxu0 0.0
    %3630 = vmatprep.subr.mxu0 0.0
    %3631 = vmatpush1.msra.mxu0 0.0
    %3632 = vmatprep.subr.mxu0 0.0
    %3633 = vmatpush1.msra.mxu0 0.0
    %3634 = vmatprep.subr.mxu0 0.0
    %3635 = vmatpush1.msra.mxu0 0.0
    %3636 = vmatprep.subr.mxu0 0.0
    %3637 = vmatpush1.msra.mxu0 0.0
    %3638 = vmatprep.subr.mxu0 0.0
    %3639 = vmatpush1.msra.mxu0 0.0
    %3640 = vmatprep.subr.mxu0 0.0
    %3641 = vmatpush1.msra.mxu0 0.0
    %3642 = vmatprep.subr.mxu0 0.0
    %3643 = vmatpush1.msra.mxu0 0.0
    %3644 = vmatprep.subr.mxu0 0.0
    %3645 = vmatpush1.msra.mxu0 0.0
    %3646 = vmatprep.subr.mxu0 0.0
    %3647 = vmatpush1.msra.mxu0 0.0
    %3648 = vmatprep.subr.mxu0 0.0
    %3649 = vmatpush1.msra.mxu0 0.0
    %3650 = vmatprep.subr.mxu0 0.0
    %3651 = vmatpush1.msra.mxu0 0.0
    %3652 = vmatprep.subr.mxu0 0.0
    %3653 = vmatpush1.msra.mxu0 0.0
    %3654 = vmatprep.subr.mxu0 0.0
    %3655 = vmatpush1.msra.mxu0 0.0
    %3656 = vmatprep.subr.mxu0 0.0
    %3657 = vmatpush1.msra.mxu0 0.0
    %3658 = vmatprep.subr.mxu0 0.0
    %3659 = vmatpush1.msra.mxu0 0.0
    %3660 = vmatprep.subr.mxu0 0.0
    %3661 = vmatpush1.msra.mxu0 0.0
    %3662 = vmatprep.subr.mxu0 0.0
    %3663 = vmatpush1.msra.mxu0 0.0
    %3664 = vmatprep.subr.mxu0 0.0
    %3665 = vmatpush1.msra.mxu0 0.0
    %3666 = vmatprep.mubr.f32.mxu0 0.0
    %3667 = vmatmul.mubr.f32.gmra.mrb[0].mxu0 %v3600
    %v3668 = vpop.f32.mrb[0].mxu0
    %v3669 = vadd.f32 0.0, %v3668
    %v3670 = vpop.f32.mrb[0].mxu0
    %3671 = vdwg.mxu0
    %v3673 = vsel %vm303, %v3669, 0
    %3675 = vmatprep.subr.mxu0 0.0
    %3676 = vmatpush1.msra.mxu0 %v1134
    %3677 = vmatprep.subr.mxu0 0.0
    %3678 = vmatpush1.msra.mxu0 %v1135
    %3679 = vmatprep.subr.mxu0 0.0
    %3680 = vmatpush1.msra.mxu0 %v1136
    %3681 = vmatprep.subr.mxu0 0.0
    %3682 = vmatpush1.msra.mxu0 %v1137
    %3683 = vmatprep.subr.mxu0 0.0
    %3684 = vmatpush1.msra.mxu0 0.0
    %3685 = vmatprep.subr.mxu0 0.0
    %3686 = vmatpush1.msra.mxu0 0.0
    %3687 = vmatprep.subr.mxu0 0.0
    %3688 = vmatpush1.msra.mxu0 0.0
    %3689 = vmatprep.subr.mxu0 0.0
    %3690 = vmatpush1.msra.mxu0 0.0
    %3691 = vmatprep.subr.mxu0 0.0
    %3692 = vmatpush1.msra.mxu0 0.0
    %3693 = vmatprep.subr.mxu0 0.0
    %3694 = vmatpush1.msra.mxu0 0.0
    %3695 = vmatprep.subr.mxu0 0.0
    %3696 = vmatpush1.msra.mxu0 0.0
    %3697 = vmatprep.subr.mxu0 0.0
    %3698 = vmatpush1.msra.mxu0 0.0
    %3699 = vmatprep.subr.mxu0 0.0
    %3700 = vmatpush1.msra.mxu0 0.0
    %3701 = vmatprep.subr.mxu0 0.0
    %3702 = vmatpush1.msra.mxu0 0.0
    %3703 = vmatprep.subr.mxu0 0.0
    %3704 = vmatpush1.msra.mxu0 0.0
    %3705 = vmatprep.subr.mxu0 0.0
    %3706 = vmatpush1.msra.mxu0 0.0
    %3707 = vmatprep.subr.mxu0 0.0
    %3708 = vmatpush1.msra.mxu0 0.0
    %3709 = vmatprep.subr.mxu0 0.0
    %3710 = vmatpush1.msra.mxu0 0.0
    %3711 = vmatprep.subr.mxu0 0.0
    %3712 = vmatpush1.msra.mxu0 0.0
    %3713 = vmatprep.subr.mxu0 0.0
    %3714 = vmatpush1.msra.mxu0 0.0
    %3715 = vmatprep.subr.mxu0 0.0
    %3716 = vmatpush1.msra.mxu0 0.0
    %3717 = vmatprep.subr.mxu0 0.0
    %3718 = vmatpush1.msra.mxu0 0.0
    %3719 = vmatprep.subr.mxu0 0.0
    %3720 = vmatpush1.msra.mxu0 0.0
    %3721 = vmatprep.subr.mxu0 0.0
    %3722 = vmatpush1.msra.mxu0 0.0
    %3723 = vmatprep.subr.mxu0 0.0
    %3724 = vmatpush1.msra.mxu0 0.0
    %3725 = vmatprep.subr.mxu0 0.0
    %3726 = vmatpush1.msra.mxu0 0.0
    %3727 = vmatprep.subr.mxu0 0.0
    %3728 = vmatpush1.msra.mxu0 0.0
    %3729 = vmatprep.subr.mxu0 0.0
    %3730 = vmatpush1.msra.mxu0 0.0
    %3731 = vmatprep.subr.mxu0 0.0
    %3732 = vmatpush1.msra.mxu0 0.0
    %3733 = vmatprep.subr.mxu0 0.0
    %3734 = vmatpush1.msra.mxu0 0.0
    %3735 = vmatprep.subr.mxu0 0.0
    %3736 = vmatpush1.msra.mxu0 0.0
    %3737 = vmatprep.subr.mxu0 0.0
    %3738 = vmatpush1.msra.mxu0 0.0
    %3739 = vmatprep.mubr.f32.mxu0 0.0
    %3740 = vmatmul.mubr.f32.gmra.mrb[0].mxu0 %v3673
    %v3741 = vpop.f32.mrb[0].mxu0
    %v3742 = vadd.f32 %v1138, %v3741
    %v3743 = vpop.f32.mrb[0].mxu0
    %3744 = vdwg.mxu0
    %v3745 = vmax.f32 %v3742, 0.0
    %s3746 = scalar_lea.vmem [#allocation27], 1
    %3747 = vst.msk [vmem:[%s3746] sm:$0x1] %vm1569, %v3745
    %v3749 = vsel %vm303, %v3596, 0
    %3751 = vmatprep.subr.mxu0 0.0
    %3752 = vmatpush1.msra.mxu0 %v1091
    %3753 = vmatprep.subr.mxu0 0.0
    %3754 = vmatpush1.msra.mxu0 %v1092
    %3755 = vmatprep.subr.mxu0 0.0
    %3756 = vmatpush1.msra.mxu0 %v1093
    %3757 = vmatprep.subr.mxu0 0.0
    %3758 = vmatpush1.msra.mxu0 %v1094
    %3759 = vmatprep.subr.mxu0 0.0
    %3760 = vmatpush1.msra.mxu0 0.0
    %3761 = vmatprep.subr.mxu0 0.0
    %3762 = vmatpush1.msra.mxu0 0.0
    %3763 = vmatprep.subr.mxu0 0.0
    %3764 = vmatpush1.msra.mxu0 0.0
    %3765 = vmatprep.subr.mxu0 0.0
    %3766 = vmatpush1.msra.mxu0 0.0
    %3767 = vmatprep.subr.mxu0 0.0
    %3768 = vmatpush1.msra.mxu0 0.0
    %3769 = vmatprep.subr.mxu0 0.0
    %3770 = vmatpush1.msra.mxu0 0.0
    %3771 = vmatprep.subr.mxu0 0.0
    %3772 = vmatpush1.msra.mxu0 0.0
    %3773 = vmatprep.subr.mxu0 0.0
    %3774 = vmatpush1.msra.mxu0 0.0
    %3775 = vmatprep.subr.mxu0 0.0
    %3776 = vmatpush1.msra.mxu0 0.0
    %3777 = vmatprep.subr.mxu0 0.0
    %3778 = vmatpush1.msra.mxu0 0.0
    %3779 = vmatprep.subr.mxu0 0.0
    %3780 = vmatpush1.msra.mxu0 0.0
    %3781 = vmatprep.subr.mxu0 0.0
    %3782 = vmatpush1.msra.mxu0 0.0
    %3783 = vmatprep.subr.mxu0 0.0
    %3784 = vmatpush1.msra.mxu0 0.0
    %3785 = vmatprep.subr.mxu0 0.0
    %3786 = vmatpush1.msra.mxu0 0.0
    %3787 = vmatprep.subr.mxu0 0.0
    %3788 = vmatpush1.msra.mxu0 0.0
    %3789 = vmatprep.subr.mxu0 0.0
    %3790 = vmatpush1.msra.mxu0 0.0
    %3791 = vmatprep.subr.mxu0 0.0
    %3792 = vmatpush1.msra.mxu0 0.0
    %3793 = vmatprep.subr.mxu0 0.0
    %3794 = vmatpush1.msra.mxu0 0.0
    %3795 = vmatprep.subr.mxu0 0.0
    %3796 = vmatpush1.msra.mxu0 0.0
    %3797 = vmatprep.subr.mxu0 0.0
    %3798 = vmatpush1.msra.mxu0 0.0
    %3799 = vmatprep.subr.mxu0 0.0
    %3800 = vmatpush1.msra.mxu0 0.0
    %3801 = vmatprep.subr.mxu0 0.0
    %3802 = vmatpush1.msra.mxu0 0.0
    %3803 = vmatprep.subr.mxu0 0.0
    %3804 = vmatpush1.msra.mxu0 0.0
    %3805 = vmatprep.subr.mxu0 0.0
    %3806 = vmatpush1.msra.mxu0 0.0
    %3807 = vmatprep.subr.mxu0 0.0
    %3808 = vmatpush1.msra.mxu0 0.0
    %3809 = vmatprep.subr.mxu0 0.0
    %3810 = vmatpush1.msra.mxu0 0.0
    %3811 = vmatprep.subr.mxu0 0.0
    %3812 = vmatpush1.msra.mxu0 0.0
    %3813 = vmatprep.subr.mxu0 0.0
    %3814 = vmatpush1.msra.mxu0 0.0
    %3815 = vmatprep.mubr.f32.mxu0 0.0
    %3816 = vmatmul.mubr.f32.gmra.mrb[0].mxu0 %v3749
    %v3817 = vpop.f32.mrb[0].mxu0
    %v3818 = vadd.f32 %v1575, %v3817
    %v3819 = vpop.f32.mrb[0].mxu0
    %3820 = vdwg.mxu0
    %3821 = vmatprep.subr.mxu0 0.0
    %3822 = vmatpush1.msra.mxu0 %v1096
    %3823 = vmatprep.subr.mxu0 0.0
    %3824 = vmatpush1.msra.mxu0 %v1097
    %3825 = vmatprep.subr.mxu0 0.0
    %3826 = vmatpush1.msra.mxu0 %v1098
    %3827 = vmatprep.subr.mxu0 0.0
    %3828 = vmatpush1.msra.mxu0 %v1099
    %3829 = vmatprep.subr.mxu0 0.0
    %3830 = vmatpush1.msra.mxu0 0.0
    %3831 = vmatprep.subr.mxu0 0.0
    %3832 = vmatpush1.msra.mxu0 0.0
    %3833 = vmatprep.subr.mxu0 0.0
    %3834 = vmatpush1.msra.mxu0 0.0
    %3835 = vmatprep.subr.mxu0 0.0
    %3836 = vmatpush1.msra.mxu0 0.0
    %3837 = vmatprep.subr.mxu0 0.0
    %3838 = vmatpush1.msra.mxu0 0.0
    %3839 = vmatprep.subr.mxu0 0.0
    %3840 = vmatpush1.msra.mxu0 0.0
    %3841 = vmatprep.subr.mxu0 0.0
    %3842 = vmatpush1.msra.mxu0 0.0
    %3843 = vmatprep.subr.mxu0 0.0
    %3844 = vmatpush1.msra.mxu0 0.0
    %3845 = vmatprep.subr.mxu0 0.0
    %3846 = vmatpush1.msra.mxu0 0.0
    %3847 = vmatprep.subr.mxu0 0.0
    %3848 = vmatpush1.msra.mxu0 0.0
    %3849 = vmatprep.subr.mxu0 0.0
    %3850 = vmatpush1.msra.mxu0 0.0
    %3851 = vmatprep.subr.mxu0 0.0
    %3852 = vmatpush1.msra.mxu0 0.0
    %3853 = vmatprep.subr.mxu0 0.0
    %3854 = vmatpush1.msra.mxu0 0.0
    %3855 = vmatprep.subr.mxu0 0.0
    %3856 = vmatpush1.msra.mxu0 0.0
    %3857 = vmatprep.subr.mxu0 0.0
    %3858 = vmatpush1.msra.mxu0 0.0
    %3859 = vmatprep.subr.mxu0 0.0
    %3860 = vmatpush1.msra.mxu0 0.0
    %3861 = vmatprep.subr.mxu0 0.0
    %3862 = vmatpush1.msra.mxu0 0.0
    %3863 = vmatprep.subr.mxu0 0.0
    %3864 = vmatpush1.msra.mxu0 0.0
    %3865 = vmatprep.subr.mxu0 0.0
    %3866 = vmatpush1.msra.mxu0 0.0
    %3867 = vmatprep.subr.mxu0 0.0
    %3868 = vmatpush1.msra.mxu0 0.0
    %3869 = vmatprep.subr.mxu0 0.0
    %3870 = vmatpush1.msra.mxu0 0.0
    %3871 = vmatprep.subr.mxu0 0.0
    %3872 = vmatpush1.msra.mxu0 0.0
    %3873 = vmatprep.subr.mxu0 0.0
    %3874 = vmatpush1.msra.mxu0 0.0
    %3875 = vmatprep.subr.mxu0 0.0
    %3876 = vmatpush1.msra.mxu0 0.0
    %3877 = vmatprep.subr.mxu0 0.0
    %3878 = vmatpush1.msra.mxu0 0.0
    %3879 = vmatprep.subr.mxu0 0.0
    %3880 = vmatpush1.msra.mxu0 0.0
    %3881 = vmatprep.subr.mxu0 0.0
    %3882 = vmatpush1.msra.mxu0 0.0
    %3883 = vmatprep.subr.mxu0 0.0
    %3884 = vmatpush1.msra.mxu0 0.0
    %3885 = vmatprep.mubr.f32.mxu0 0.0
    %3886 = vmatmul.mubr.f32.gmra.mrb[0].mxu0 %v3749
    %v3887 = vpop.f32.mrb[0].mxu0
    %v3888 = vadd.f32 %v1654, %v3887
    %v3889 = vpop.f32.mrb[0].mxu0
    %3890 = vdwg.mxu0
    %3891 = vmatprep.subr.mxu0 0.0
    %3892 = vmatpush1.msra.mxu0 %v1101
    %3893 = vmatprep.subr.mxu0 0.0
    %3894 = vmatpush1.msra.mxu0 %v1102
    %3895 = vmatprep.subr.mxu0 0.0
    %3896 = vmatpush1.msra.mxu0 %v1103
    %3897 = vmatprep.subr.mxu0 0.0
    %3898 = vmatpush1.msra.mxu0 %v1104
    %3899 = vmatprep.subr.mxu0 0.0
    %3900 = vmatpush1.msra.mxu0 0.0
    %3901 = vmatprep.subr.mxu0 0.0
    %3902 = vmatpush1.msra.mxu0 0.0
    %3903 = vmatprep.subr.mxu0 0.0
    %3904 = vmatpush1.msra.mxu0 0.0
    %3905 = vmatprep.subr.mxu0 0.0
    %3906 = vmatpush1.msra.mxu0 0.0
    %3907 = vmatprep.subr.mxu0 0.0
    %3908 = vmatpush1.msra.mxu0 0.0
    %3909 = vmatprep.subr.mxu0 0.0
    %3910 = vmatpush1.msra.mxu0 0.0
    %3911 = vmatprep.subr.mxu0 0.0
    %3912 = vmatpush1.msra.mxu0 0.0
    %3913 = vmatprep.subr.mxu0 0.0
    %3914 = vmatpush1.msra.mxu0 0.0
    %3915 = vmatprep.subr.mxu0 0.0
    %3916 = vmatpush1.msra.mxu0 0.0
    %3917 = vmatprep.subr.mxu0 0.0
    %3918 = vmatpush1.msra.mxu0 0.0
    %3919 = vmatprep.subr.mxu0 0.0
    %3920 = vmatpush1.msra.mxu0 0.0
    %3921 = vmatprep.subr.mxu0 0.0
    %3922 = vmatpush1.msra.mxu0 0.0
    %3923 = vmatprep.subr.mxu0 0.0
    %3924 = vmatpush1.msra.mxu0 0.0
    %3925 = vmatprep.subr.mxu0 0.0
    %3926 = vmatpush1.msra.mxu0 0.0
    %3927 = vmatprep.subr.mxu0 0.0
    %3928 = vmatpush1.msra.mxu0 0.0
    %3929 = vmatprep.subr.mxu0 0.0
    %3930 = vmatpush1.msra.mxu0 0.0
    %3931 = vmatprep.subr.mxu0 0.0
    %3932 = vmatpush1.msra.mxu0 0.0
    %3933 = vmatprep.subr.mxu0 0.0
    %3934 = vmatpush1.msra.mxu0 0.0
    %3935 = vmatprep.subr.mxu0 0.0
    %3936 = vmatpush1.msra.mxu0 0.0
    %3937 = vmatprep.subr.mxu0 0.0
    %3938 = vmatpush1.msra.mxu0 0.0
    %3939 = vmatprep.subr.mxu0 0.0
    %3940 = vmatpush1.msra.mxu0 0.0
    %3941 = vmatprep.subr.mxu0 0.0
    %3942 = vmatpush1.msra.mxu0 0.0
    %3943 = vmatprep.subr.mxu0 0.0
    %3944 = vmatpush1.msra.mxu0 0.0
    %3945 = vmatprep.subr.mxu0 0.0
    %3946 = vmatpush1.msra.mxu0 0.0
    %3947 = vmatprep.subr.mxu0 0.0
    %3948 = vmatpush1.msra.mxu0 0.0
    %3949 = vmatprep.subr.mxu0 0.0
    %3950 = vmatpush1.msra.mxu0 0.0
    %3951 = vmatprep.subr.mxu0 0.0
    %3952 = vmatpush1.msra.mxu0 0.0
    %3953 = vmatprep.subr.mxu0 0.0
    %3954 = vmatpush1.msra.mxu0 0.0
    %3955 = vmatprep.mubr.f32.mxu0 0.0
    %3956 = vmatmul.mubr.f32.gmra.mrb[0].mxu0 %v3749
    %v3957 = vpop.f32.mrb[0].mxu0
    %v3958 = vadd.f32 %v1730, %v3957
    %v3959 = vpop.f32.mrb[0].mxu0
    %3960 = vdwg.mxu0
    %v3961 = vadd.f32 %v3818, %v1872
    %v3962 = vxor.u32 %v3961, 2147483648
    %v3963 = vmul.f32 %v3962, 1.442695
    %v3964 = vpow.pop %v3963
    %v3965 = vadd.f32 %v3964, 1.0
    %v3966 = vrcp.pop %v3965
    %v3967 = vmul.f32 1.0, %v3966
    %v3968 = vadd.f32 %v3888, %v1942
    %v3969 = vxor.u32 %v3968, 2147483648
    %v3970 = vmul.f32 %v3969, 1.442695
    %v3971 = vpow.pop %v3970
    %v3972 = vadd.f32 %v3971, 1.0
    %v3973 = vrcp.pop %v3972
    %v3974 = vmul.f32 1.0, %v3973
    %v3975 = vmul.f32 %v3967, %v2012
    %v3976 = vadd.f32 %v3958, %v3975
    %v3977 = vtanh.pop %v3976
    %v3978 = vsub.f32 1.0, %v3974
    %v3979 = vmul.f32 %v3978, %v3977
    %v3980 = vmul.f32 %v3974, 0.0
    %v3981 = vadd.f32 %v3979, %v3980
    %v3983 = vsel %vm303, %v3981, 0
    %3985 = vmatprep.subr.mxu0 0.0
    %3986 = vmatpush1.msra.mxu0 %v1105
    %3987 = vmatprep.subr.mxu0 0.0
    %3988 = vmatpush1.msra.mxu0 %v1106
    %3989 = vmatprep.subr.mxu0 0.0
    %3990 = vmatpush1.msra.mxu0 %v1107
    %3991 = vmatprep.subr.mxu0 0.0
    %3992 = vmatpush1.msra.mxu0 %v1108
    %3993 = vmatprep.subr.mxu0 0.0
    %3994 = vmatpush1.msra.mxu0 0.0
    %3995 = vmatprep.subr.mxu0 0.0
    %3996 = vmatpush1.msra.mxu0 0.0
    %3997 = vmatprep.subr.mxu0 0.0
    %3998 = vmatpush1.msra.mxu0 0.0
    %3999 = vmatprep.subr.mxu0 0.0
    %4000 = vmatpush1.msra.mxu0 0.0
    %4001 = vmatprep.subr.mxu0 0.0
    %4002 = vmatpush1.msra.mxu0 0.0
    %4003 = vmatprep.subr.mxu0 0.0
    %4004 = vmatpush1.msra.mxu0 0.0
    %4005 = vmatprep.subr.mxu0 0.0
    %4006 = vmatpush1.msra.mxu0 0.0
    %4007 = vmatprep.subr.mxu0 0.0
    %4008 = vmatpush1.msra.mxu0 0.0
    %4009 = vmatprep.subr.mxu0 0.0
    %4010 = vmatpush1.msra.mxu0 0.0
    %4011 = vmatprep.subr.mxu0 0.0
    %4012 = vmatpush1.msra.mxu0 0.0
    %4013 = vmatprep.subr.mxu0 0.0
    %4014 = vmatpush1.msra.mxu0 0.0
    %4015 = vmatprep.subr.mxu0 0.0
    %4016 = vmatpush1.msra.mxu0 0.0
    %4017 = vmatprep.subr.mxu0 0.0
    %4018 = vmatpush1.msra.mxu0 0.0
    %4019 = vmatprep.subr.mxu0 0.0
    %4020 = vmatpush1.msra.mxu0 0.0
    %4021 = vmatprep.subr.mxu0 0.0
    %4022 = vmatpush1.msra.mxu0 0.0
    %4023 = vmatprep.subr.mxu0 0.0
    %4024 = vmatpush1.msra.mxu0 0.0
    %4025 = vmatprep.subr.mxu0 0.0
    %4026 = vmatpush1.msra.mxu0 0.0
    %4027 = vmatprep.subr.mxu0 0.0
    %4028 = vmatpush1.msra.mxu0 0.0
    %4029 = vmatprep.subr.mxu0 0.0
    %4030 = vmatpush1.msra.mxu0 0.0
    %4031 = vmatprep.subr.mxu0 0.0
    %4032 = vmatpush1.msra.mxu0 0.0
    %4033 = vmatprep.subr.mxu0 0.0
    %4034 = vmatpush1.msra.mxu0 0.0
    %4035 = vmatprep.subr.mxu0 0.0
    %4036 = vmatpush1.msra.mxu0 0.0
    %4037 = vmatprep.subr.mxu0 0.0
    %4038 = vmatpush1.msra.mxu0 0.0
    %4039 = vmatprep.subr.mxu0 0.0
    %4040 = vmatpush1.msra.mxu0 0.0
    %4041 = vmatprep.subr.mxu0 0.0
    %4042 = vmatpush1.msra.mxu0 0.0
    %4043 = vmatprep.subr.mxu0 0.0
    %4044 = vmatpush1.msra.mxu0 0.0
    %4045 = vmatprep.subr.mxu0 0.0
    %4046 = vmatpush1.msra.mxu0 0.0
    %4047 = vmatprep.subr.mxu0 0.0
    %4048 = vmatpush1.msra.mxu0 0.0
    %4049 = vmatprep.mubr.f32.mxu0 0.0
    %4050 = vmatmul.mubr.f32.gmra.mrb[0].mxu0 %v3983
    %v4051 = vpop.f32.mrb[0].mxu0
    %v4052 = vadd.f32 %v1124, %v4051
    %v4053 = vpop.f32.mrb[0].mxu0
    %4054 = vdwg.mxu0
    %4055 = vmatprep.subr.mxu0 0.0
    %4056 = vmatpush1.msra.mxu0 %v1110
    %4057 = vmatprep.subr.mxu0 0.0
    %4058 = vmatpush1.msra.mxu0 %v1111
    %4059 = vmatprep.subr.mxu0 0.0
    %4060 = vmatpush1.msra.mxu0 %v1112
    %4061 = vmatprep.subr.mxu0 0.0
    %4062 = vmatpush1.msra.mxu0 %v1113
    %4063 = vmatprep.subr.mxu0 0.0
    %4064 = vmatpush1.msra.mxu0 0.0
    %4065 = vmatprep.subr.mxu0 0.0
    %4066 = vmatpush1.msra.mxu0 0.0
    %4067 = vmatprep.subr.mxu0 0.0
    %4068 = vmatpush1.msra.mxu0 0.0
    %4069 = vmatprep.subr.mxu0 0.0
    %4070 = vmatpush1.msra.mxu0 0.0
    %4071 = vmatprep.subr.mxu0 0.0
    %4072 = vmatpush1.msra.mxu0 0.0
    %4073 = vmatprep.subr.mxu0 0.0
    %4074 = vmatpush1.msra.mxu0 0.0
    %4075 = vmatprep.subr.mxu0 0.0
    %4076 = vmatpush1.msra.mxu0 0.0
    %4077 = vmatprep.subr.mxu0 0.0
    %4078 = vmatpush1.msra.mxu0 0.0
    %4079 = vmatprep.subr.mxu0 0.0
    %4080 = vmatpush1.msra.mxu0 0.0
    %4081 = vmatprep.subr.mxu0 0.0
    %4082 = vmatpush1.msra.mxu0 0.0
    %4083 = vmatprep.subr.mxu0 0.0
    %4084 = vmatpush1.msra.mxu0 0.0
    %4085 = vmatprep.subr.mxu0 0.0
    %4086 = vmatpush1.msra.mxu0 0.0
    %4087 = vmatprep.subr.mxu0 0.0
    %4088 = vmatpush1.msra.mxu0 0.0
    %4089 = vmatprep.subr.mxu0 0.0
    %4090 = vmatpush1.msra.mxu0 0.0
    %4091 = vmatprep.subr.mxu0 0.0
    %4092 = vmatpush1.msra.mxu0 0.0
    %4093 = vmatprep.subr.mxu0 0.0
    %4094 = vmatpush1.msra.mxu0 0.0
    %4095 = vmatprep.subr.mxu0 0.0
    %4096 = vmatpush1.msra.mxu0 0.0
    %4097 = vmatprep.subr.mxu0 0.0
    %4098 = vmatpush1.msra.mxu0 0.0
    %4099 = vmatprep.subr.mxu0 0.0
    %4100 = vmatpush1.msra.mxu0 0.0
    %4101 = vmatprep.subr.mxu0 0.0
    %4102 = vmatpush1.msra.mxu0 0.0
    %4103 = vmatprep.subr.mxu0 0.0
    %4104 = vmatpush1.msra.mxu0 0.0
    %4105 = vmatprep.subr.mxu0 0.0
    %4106 = vmatpush1.msra.mxu0 0.0
    %4107 = vmatprep.subr.mxu0 0.0
    %4108 = vmatpush1.msra.mxu0 0.0
    %4109 = vmatprep.subr.mxu0 0.0
    %4110 = vmatpush1.msra.mxu0 0.0
    %4111 = vmatprep.subr.mxu0 0.0
    %4112 = vmatpush1.msra.mxu0 0.0
    %4113 = vmatprep.subr.mxu0 0.0
    %4114 = vmatpush1.msra.mxu0 0.0
    %4115 = vmatprep.subr.mxu0 0.0
    %4116 = vmatpush1.msra.mxu0 0.0
    %4117 = vmatprep.subr.mxu0 0.0
    %4118 = vmatpush1.msra.mxu0 0.0
    %4119 = vmatprep.mubr.f32.mxu0 0.0
    %4120 = vmatmul.mubr.f32.gmra.mrb[0].mxu0 %v3983
    %v4121 = vpop.f32.mrb[0].mxu0
    %v4122 = vadd.f32 %v1126, %v4121
    %v4123 = vpop.f32.mrb[0].mxu0
    %4124 = vdwg.mxu0
    %4125 = vmatprep.subr.mxu0 0.0
    %4126 = vmatpush1.msra.mxu0 %v1115
    %4127 = vmatprep.subr.mxu0 0.0
    %4128 = vmatpush1.msra.mxu0 %v1116
    %4129 = vmatprep.subr.mxu0 0.0
    %4130 = vmatpush1.msra.mxu0 %v1117
    %4131 = vmatprep.subr.mxu0 0.0
    %4132 = vmatpush1.msra.mxu0 %v1118
    %4133 = vmatprep.subr.mxu0 0.0
    %4134 = vmatpush1.msra.mxu0 0.0
    %4135 = vmatprep.subr.mxu0 0.0
    %4136 = vmatpush1.msra.mxu0 0.0
    %4137 = vmatprep.subr.mxu0 0.0
    %4138 = vmatpush1.msra.mxu0 0.0
    %4139 = vmatprep.subr.mxu0 0.0
    %4140 = vmatpush1.msra.mxu0 0.0
    %4141 = vmatprep.subr.mxu0 0.0
    %4142 = vmatpush1.msra.mxu0 0.0
    %4143 = vmatprep.subr.mxu0 0.0
    %4144 = vmatpush1.msra.mxu0 0.0
    %4145 = vmatprep.subr.mxu0 0.0
    %4146 = vmatpush1.msra.mxu0 0.0
    %4147 = vmatprep.subr.mxu0 0.0
    %4148 = vmatpush1.msra.mxu0 0.0
    %4149 = vmatprep.subr.mxu0 0.0
    %4150 = vmatpush1.msra.mxu0 0.0
    %4151 = vmatprep.subr.mxu0 0.0
    %4152 = vmatpush1.msra.mxu0 0.0
    %4153 = vmatprep.subr.mxu0 0.0
    %4154 = vmatpush1.msra.mxu0 0.0
    %4155 = vmatprep.subr.mxu0 0.0
    %4156 = vmatpush1.msra.mxu0 0.0
    %4157 = vmatprep.subr.mxu0 0.0
    %4158 = vmatpush1.msra.mxu0 0.0
    %4159 = vmatprep.subr.mxu0 0.0
    %4160 = vmatpush1.msra.mxu0 0.0
    %4161 = vmatprep.subr.mxu0 0.0
    %4162 = vmatpush1.msra.mxu0 0.0
    %4163 = vmatprep.subr.mxu0 0.0
    %4164 = vmatpush1.msra.mxu0 0.0
    %4165 = vmatprep.subr.mxu0 0.0
    %4166 = vmatpush1.msra.mxu0 0.0
    %4167 = vmatprep.subr.mxu0 0.0
    %4168 = vmatpush1.msra.mxu0 0.0
    %4169 = vmatprep.subr.mxu0 0.0
    %4170 = vmatpush1.msra.mxu0 0.0
    %4171 = vmatprep.subr.mxu0 0.0
    %4172 = vmatpush1.msra.mxu0 0.0
    %4173 = vmatprep.subr.mxu0 0.0
    %4174 = vmatpush1.msra.mxu0 0.0
    %4175 = vmatprep.subr.mxu0 0.0
    %4176 = vmatpush1.msra.mxu0 0.0
    %4177 = vmatprep.subr.mxu0 0.0
    %4178 = vmatpush1.msra.mxu0 0.0
    %4179 = vmatprep.subr.mxu0 0.0
    %4180 = vmatpush1.msra.mxu0 0.0
    %4181 = vmatprep.subr.mxu0 0.0
    %4182 = vmatpush1.msra.mxu0 0.0
    %4183 = vmatprep.subr.mxu0 0.0
    %4184 = vmatpush1.msra.mxu0 0.0
    %4185 = vmatprep.subr.mxu0 0.0
    %4186 = vmatpush1.msra.mxu0 0.0
    %4187 = vmatprep.subr.mxu0 0.0
    %4188 = vmatpush1.msra.mxu0 0.0
    %4189 = vmatprep.mubr.f32.mxu0 0.0
    %4190 = vmatmul.mubr.f32.gmra.mrb[0].mxu0 %v3983
    %v4191 = vpop.f32.mrb[0].mxu0
    %v4192 = vadd.f32 %v1128, %v4191
    %v4193 = vpop.f32.mrb[0].mxu0
    %4194 = vdwg.mxu0
    %v4196 = vrot.slane %v4052, 7
    %v4198 = vadd.f32 %v3818, %v4196
    %v4199 = vxor.u32 %v4198, 2147483648
    %v4200 = vmul.f32 %v4199, 1.442695
    %v4201 = vpow.pop %v4200
    %v4202 = vadd.f32 %v4201, 1.0
    %v4203 = vrcp.pop %v4202
    %v4204 = vmul.f32 1.0, %v4203
    %v4206 = vrot.slane %v4122, 7
    %v4208 = vadd.f32 %v3888, %v4206
    %v4209 = vxor.u32 %v4208, 2147483648
    %v4210 = vmul.f32 %v4209, 1.442695
    %v4211 = vpow.pop %v4210
    %v4212 = vadd.f32 %v4211, 1.0
    %v4213 = vrcp.pop %v4212
    %v4214 = vmul.f32 1.0, %v4213
    %v4216 = vrot.slane %v4192, 7
    %v4218 = vmul.f32 %v4204, %v4216
    %v4219 = vadd.f32 %v3958, %v4218
    %v4220 = vtanh.pop %v4219
    %v4221 = vsub.f32 1.0, %v4214
    %v4222 = vmul.f32 %v4221, %v4220
    %v4223 = vrot.slane %v3981, 7
    %v4225 = vmul.f32 %v4214, %v4223
    %v4226 = vadd.f32 %v4222, %v4225
    %v4228 = vrot.slane %v4226, 1
    %v4229 = vsel %vm303, %v4228, 0
    %4231 = vmatprep.subr.mxu0 0.0
    %4232 = vmatpush1.msra.mxu0 %v1105
    %4233 = vmatprep.subr.mxu0 0.0
    %4234 = vmatpush1.msra.mxu0 %v1106
    %4235 = vmatprep.subr.mxu0 0.0
    %4236 = vmatpush1.msra.mxu0 %v1107
    %4237 = vmatprep.subr.mxu0 0.0
    %4238 = vmatpush1.msra.mxu0 %v1108
    %4239 = vmatprep.subr.mxu0 0.0
    %4240 = vmatpush1.msra.mxu0 0.0
    %4241 = vmatprep.subr.mxu0 0.0
    %4242 = vmatpush1.msra.mxu0 0.0
    %4243 = vmatprep.subr.mxu0 0.0
    %4244 = vmatpush1.msra.mxu0 0.0
    %4245 = vmatprep.subr.mxu0 0.0
    %4246 = vmatpush1.msra.mxu0 0.0
    %4247 = vmatprep.subr.mxu0 0.0
    %4248 = vmatpush1.msra.mxu0 0.0
    %4249 = vmatprep.subr.mxu0 0.0
    %4250 = vmatpush1.msra.mxu0 0.0
    %4251 = vmatprep.subr.mxu0 0.0
    %4252 = vmatpush1.msra.mxu0 0.0
    %4253 = vmatprep.subr.mxu0 0.0
    %4254 = vmatpush1.msra.mxu0 0.0
    %4255 = vmatprep.subr.mxu0 0.0
    %4256 = vmatpush1.msra.mxu0 0.0
    %4257 = vmatprep.subr.mxu0 0.0
    %4258 = vmatpush1.msra.mxu0 0.0
    %4259 = vmatprep.subr.mxu0 0.0
    %4260 = vmatpush1.msra.mxu0 0.0
    %4261 = vmatprep.subr.mxu0 0.0
    %4262 = vmatpush1.msra.mxu0 0.0
    %4263 = vmatprep.subr.mxu0 0.0
    %4264 = vmatpush1.msra.mxu0 0.0
    %4265 = vmatprep.subr.mxu0 0.0
    %4266 = vmatpush1.msra.mxu0 0.0
    %4267 = vmatprep.subr.mxu0 0.0
    %4268 = vmatpush1.msra.mxu0 0.0
    %4269 = vmatprep.subr.mxu0 0.0
    %4270 = vmatpush1.msra.mxu0 0.0
    %4271 = vmatprep.subr.mxu0 0.0
    %4272 = vmatpush1.msra.mxu0 0.0
    %4273 = vmatprep.subr.mxu0 0.0
    %4274 = vmatpush1.msra.mxu0 0.0
    %4275 = vmatprep.subr.mxu0 0.0
    %4276 = vmatpush1.msra.mxu0 0.0
    %4277 = vmatprep.subr.mxu0 0.0
    %4278 = vmatpush1.msra.mxu0 0.0
    %4279 = vmatprep.subr.mxu0 0.0
    %4280 = vmatpush1.msra.mxu0 0.0
    %4281 = vmatprep.subr.mxu0 0.0
    %4282 = vmatpush1.msra.mxu0 0.0
    %4283 = vmatprep.subr.mxu0 0.0
    %4284 = vmatpush1.msra.mxu0 0.0
    %4285 = vmatprep.subr.mxu0 0.0
    %4286 = vmatpush1.msra.mxu0 0.0
    %4287 = vmatprep.subr.mxu0 0.0
    %4288 = vmatpush1.msra.mxu0 0.0
    %4289 = vmatprep.subr.mxu0 0.0
    %4290 = vmatpush1.msra.mxu0 0.0
    %4291 = vmatprep.subr.mxu0 0.0
    %4292 = vmatpush1.msra.mxu0 0.0
    %4293 = vmatprep.subr.mxu0 0.0
    %4294 = vmatpush1.msra.mxu0 0.0
    %4295 = vmatprep.mubr.f32.mxu0 0.0
    %4296 = vmatmul.mubr.f32.gmra.mrb[0].mxu0 %v4229
    %v4297 = vpop.f32.mrb[0].mxu0
    %v4298 = vadd.f32 %v1124, %v4297
    %v4299 = vpop.f32.mrb[0].mxu0
    %4300 = vdwg.mxu0
    %4301 = vmatprep.subr.mxu0 0.0
    %4302 = vmatpush1.msra.mxu0 %v1110
    %4303 = vmatprep.subr.mxu0 0.0
    %4304 = vmatpush1.msra.mxu0 %v1111
    %4305 = vmatprep.subr.mxu0 0.0
    %4306 = vmatpush1.msra.mxu0 %v1112
    %4307 = vmatprep.subr.mxu0 0.0
    %4308 = vmatpush1.msra.mxu0 %v1113
    %4309 = vmatprep.subr.mxu0 0.0
    %4310 = vmatpush1.msra.mxu0 0.0
    %4311 = vmatprep.subr.mxu0 0.0
    %4312 = vmatpush1.msra.mxu0 0.0
    %4313 = vmatprep.subr.mxu0 0.0
    %4314 = vmatpush1.msra.mxu0 0.0
    %4315 = vmatprep.subr.mxu0 0.0
    %4316 = vmatpush1.msra.mxu0 0.0
    %4317 = vmatprep.subr.mxu0 0.0
    %4318 = vmatpush1.msra.mxu0 0.0
    %4319 = vmatprep.subr.mxu0 0.0
    %4320 = vmatpush1.msra.mxu0 0.0
    %4321 = vmatprep.subr.mxu0 0.0
    %4322 = vmatpush1.msra.mxu0 0.0
    %4323 = vmatprep.subr.mxu0 0.0
    %4324 = vmatpush1.msra.mxu0 0.0
    %4325 = vmatprep.subr.mxu0 0.0
    %4326 = vmatpush1.msra.mxu0 0.0
    %4327 = vmatprep.subr.mxu0 0.0
    %4328 = vmatpush1.msra.mxu0 0.0
    %4329 = vmatprep.subr.mxu0 0.0
    %4330 = vmatpush1.msra.mxu0 0.0
    %4331 = vmatprep.subr.mxu0 0.0
    %4332 = vmatpush1.msra.mxu0 0.0
    %4333 = vmatprep.subr.mxu0 0.0
    %4334 = vmatpush1.msra.mxu0 0.0
    %4335 = vmatprep.subr.mxu0 0.0
    %4336 = vmatpush1.msra.mxu0 0.0
    %4337 = vmatprep.subr.mxu0 0.0
    %4338 = vmatpush1.msra.mxu0 0.0
    %4339 = vmatprep.subr.mxu0 0.0
    %4340 = vmatpush1.msra.mxu0 0.0
    %4341 = vmatprep.subr.mxu0 0.0
    %4342 = vmatpush1.msra.mxu0 0.0
    %4343 = vmatprep.subr.mxu0 0.0
    %4344 = vmatpush1.msra.mxu0 0.0
    %4345 = vmatprep.subr.mxu0 0.0
    %4346 = vmatpush1.msra.mxu0 0.0
    %4347 = vmatprep.subr.mxu0 0.0
    %4348 = vmatpush1.msra.mxu0 0.0
    %4349 = vmatprep.subr.mxu0 0.0
    %4350 = vmatpush1.msra.mxu0 0.0
    %4351 = vmatprep.subr.mxu0 0.0
    %4352 = vmatpush1.msra.mxu0 0.0
    %4353 = vmatprep.subr.mxu0 0.0
    %4354 = vmatpush1.msra.mxu0 0.0
    %4355 = vmatprep.subr.mxu0 0.0
    %4356 = vmatpush1.msra.mxu0 0.0
    %4357 = vmatprep.subr.mxu0 0.0
    %4358 = vmatpush1.msra.mxu0 0.0
    %4359 = vmatprep.subr.mxu0 0.0
    %4360 = vmatpush1.msra.mxu0 0.0
    %4361 = vmatprep.subr.mxu0 0.0
    %4362 = vmatpush1.msra.mxu0 0.0
    %4363 = vmatprep.subr.mxu0 0.0
    %4364 = vmatpush1.msra.mxu0 0.0
    %4365 = vmatprep.mubr.f32.mxu0 0.0
    %4366 = vmatmul.mubr.f32.gmra.mrb[0].mxu0 %v4229
    %v4367 = vpop.f32.mrb[0].mxu0
    %v4368 = vadd.f32 %v1126, %v4367
    %v4369 = vpop.f32.mrb[0].mxu0
    %4370 = vdwg.mxu0
    %4371 = vmatprep.subr.mxu0 0.0
    %4372 = vmatpush1.msra.mxu0 %v1115
    %4373 = vmatprep.subr.mxu0 0.0
    %4374 = vmatpush1.msra.mxu0 %v1116
    %4375 = vmatprep.subr.mxu0 0.0
    %4376 = vmatpush1.msra.mxu0 %v1117
    %4377 = vmatprep.subr.mxu0 0.0
    %4378 = vmatpush1.msra.mxu0 %v1118
    %4379 = vmatprep.subr.mxu0 0.0
    %4380 = vmatpush1.msra.mxu0 0.0
    %4381 = vmatprep.subr.mxu0 0.0
    %4382 = vmatpush1.msra.mxu0 0.0
    %4383 = vmatprep.subr.mxu0 0.0
    %4384 = vmatpush1.msra.mxu0 0.0
    %4385 = vmatprep.subr.mxu0 0.0
    %4386 = vmatpush1.msra.mxu0 0.0
    %4387 = vmatprep.subr.mxu0 0.0
    %4388 = vmatpush1.msra.mxu0 0.0
    %4389 = vmatprep.subr.mxu0 0.0
    %4390 = vmatpush1.msra.mxu0 0.0
    %4391 = vmatprep.subr.mxu0 0.0
    %4392 = vmatpush1.msra.mxu0 0.0
    %4393 = vmatprep.subr.mxu0 0.0
    %4394 = vmatpush1.msra.mxu0 0.0
    %4395 = vmatprep.subr.mxu0 0.0
    %4396 = vmatpush1.msra.mxu0 0.0
    %4397 = vmatprep.subr.mxu0 0.0
    %4398 = vmatpush1.msra.mxu0 0.0
    %4399 = vmatprep.subr.mxu0 0.0
    %4400 = vmatpush1.msra.mxu0 0.0
    %4401 = vmatprep.subr.mxu0 0.0
    %4402 = vmatpush1.msra.mxu0 0.0
    %4403 = vmatprep.subr.mxu0 0.0
    %4404 = vmatpush1.msra.mxu0 0.0
    %4405 = vmatprep.subr.mxu0 0.0
    %4406 = vmatpush1.msra.mxu0 0.0
    %4407 = vmatprep.subr.mxu0 0.0
    %4408 = vmatpush1.msra.mxu0 0.0
    %4409 = vmatprep.subr.mxu0 0.0
    %4410 = vmatpush1.msra.mxu0 0.0
    %4411 = vmatprep.subr.mxu0 0.0
    %4412 = vmatpush1.msra.mxu0 0.0
    %4413 = vmatprep.subr.mxu0 0.0
    %4414 = vmatpush1.msra.mxu0 0.0
    %4415 = vmatprep.subr.mxu0 0.0
    %4416 = vmatpush1.msra.mxu0 0.0
    %4417 = vmatprep.subr.mxu0 0.0
    %4418 = vmatpush1.msra.mxu0 0.0
    %4419 = vmatprep.subr.mxu0 0.0
    %4420 = vmatpush1.msra.mxu0 0.0
    %4421 = vmatprep.subr.mxu0 0.0
    %4422 = vmatpush1.msra.mxu0 0.0
    %4423 = vmatprep.subr.mxu0 0.0
    %4424 = vmatpush1.msra.mxu0 0.0
    %4425 = vmatprep.subr.mxu0 0.0
    %4426 = vmatpush1.msra.mxu0 0.0
    %4427 = vmatprep.subr.mxu0 0.0
    %4428 = vmatpush1.msra.mxu0 0.0
    %4429 = vmatprep.subr.mxu0 0.0
    %4430 = vmatpush1.msra.mxu0 0.0
    %4431 = vmatprep.subr.mxu0 0.0
    %4432 = vmatpush1.msra.mxu0 0.0
    %4433 = vmatprep.subr.mxu0 0.0
    %4434 = vmatpush1.msra.mxu0 0.0
    %4435 = vmatprep.mubr.f32.mxu0 0.0
    %4436 = vmatmul.mubr.f32.gmra.mrb[0].mxu0 %v4229
    %v4437 = vpop.f32.mrb[0].mxu0
    %v4438 = vadd.f32 %v1128, %v4437
    %v4439 = vpop.f32.mrb[0].mxu0
    %4440 = vdwg.mxu0
    %v4442 = vrot.slane %v4298, 6
    %v4444 = vadd.f32 %v3818, %v4442
    %v4445 = vxor.u32 %v4444, 2147483648
    %v4446 = vmul.f32 %v4445, 1.442695
    %v4447 = vpow.pop %v4446
    %v4448 = vadd.f32 %v4447, 1.0
    %v4449 = vrcp.pop %v4448
    %v4450 = vmul.f32 1.0, %v4449
    %v4452 = vrot.slane %v4368, 6
    %v4454 = vadd.f32 %v3888, %v4452
    %v4455 = vxor.u32 %v4454, 2147483648
    %v4456 = vmul.f32 %v4455, 1.442695
    %v4457 = vpow.pop %v4456
    %v4458 = vadd.f32 %v4457, 1.0
    %v4459 = vrcp.pop %v4458
    %v4460 = vmul.f32 1.0, %v4459
    %v4462 = vrot.slane %v4438, 6
    %v4464 = vmul.f32 %v4450, %v4462
    %v4465 = vadd.f32 %v3958, %v4464
    %v4466 = vtanh.pop %v4465
    %v4467 = vsub.f32 1.0, %v4460
    %v4468 = vmul.f32 %v4467, %v4466
    %v4469 = vrot.slane %v4226, 7
    %v4471 = vmul.f32 %v4460, %v4469
    %v4472 = vadd.f32 %v4468, %v4471
    %v4474 = vrot.slane %v4472, 2
    %v4475 = vsel %vm303, %v4474, 0
    %4477 = vmatprep.subr.mxu0 0.0
    %4478 = vmatpush1.msra.mxu0 %v1105
    %4479 = vmatprep.subr.mxu0 0.0
    %4480 = vmatpush1.msra.mxu0 %v1106
    %4481 = vmatprep.subr.mxu0 0.0
    %4482 = vmatpush1.msra.mxu0 %v1107
    %4483 = vmatprep.subr.mxu0 0.0
    %4484 = vmatpush1.msra.mxu0 %v1108
    %4485 = vmatprep.subr.mxu0 0.0
    %4486 = vmatpush1.msra.mxu0 0.0
    %4487 = vmatprep.subr.mxu0 0.0
    %4488 = vmatpush1.msra.mxu0 0.0
    %4489 = vmatprep.subr.mxu0 0.0
    %4490 = vmatpush1.msra.mxu0 0.0
    %4491 = vmatprep.subr.mxu0 0.0
    %4492 = vmatpush1.msra.mxu0 0.0
    %4493 = vmatprep.subr.mxu0 0.0
    %4494 = vmatpush1.msra.mxu0 0.0
    %4495 = vmatprep.subr.mxu0 0.0
    %4496 = vmatpush1.msra.mxu0 0.0
    %4497 = vmatprep.subr.mxu0 0.0
    %4498 = vmatpush1.msra.mxu0 0.0
    %4499 = vmatprep.subr.mxu0 0.0
    %4500 = vmatpush1.msra.mxu0 0.0
    %4501 = vmatprep.subr.mxu0 0.0
    %4502 = vmatpush1.msra.mxu0 0.0
    %4503 = vmatprep.subr.mxu0 0.0
    %4504 = vmatpush1.msra.mxu0 0.0
    %4505 = vmatprep.subr.mxu0 0.0
    %4506 = vmatpush1.msra.mxu0 0.0
    %4507 = vmatprep.subr.mxu0 0.0
    %4508 = vmatpush1.msra.mxu0 0.0
    %4509 = vmatprep.subr.mxu0 0.0
    %4510 = vmatpush1.msra.mxu0 0.0
    %4511 = vmatprep.subr.mxu0 0.0
    %4512 = vmatpush1.msra.mxu0 0.0
    %4513 = vmatprep.subr.mxu0 0.0
    %4514 = vmatpush1.msra.mxu0 0.0
    %4515 = vmatprep.subr.mxu0 0.0
    %4516 = vmatpush1.msra.mxu0 0.0
    %4517 = vmatprep.subr.mxu0 0.0
    %4518 = vmatpush1.msra.mxu0 0.0
    %4519 = vmatprep.subr.mxu0 0.0
    %4520 = vmatpush1.msra.mxu0 0.0
    %4521 = vmatprep.subr.mxu0 0.0
    %4522 = vmatpush1.msra.mxu0 0.0
    %4523 = vmatprep.subr.mxu0 0.0
    %4524 = vmatpush1.msra.mxu0 0.0
    %4525 = vmatprep.subr.mxu0 0.0
    %4526 = vmatpush1.msra.mxu0 0.0
    %4527 = vmatprep.subr.mxu0 0.0
    %4528 = vmatpush1.msra.mxu0 0.0
    %4529 = vmatprep.subr.mxu0 0.0
    %4530 = vmatpush1.msra.mxu0 0.0
    %4531 = vmatprep.subr.mxu0 0.0
    %4532 = vmatpush1.msra.mxu0 0.0
    %4533 = vmatprep.subr.mxu0 0.0
    %4534 = vmatpush1.msra.mxu0 0.0
    %4535 = vmatprep.subr.mxu0 0.0
    %4536 = vmatpush1.msra.mxu0 0.0
    %4537 = vmatprep.subr.mxu0 0.0
    %4538 = vmatpush1.msra.mxu0 0.0
    %4539 = vmatprep.subr.mxu0 0.0
    %4540 = vmatpush1.msra.mxu0 0.0
    %4541 = vmatprep.mubr.f32.mxu0 0.0
    %4542 = vmatmul.mubr.f32.gmra.mrb[0].mxu0 %v4475
    %v4543 = vpop.f32.mrb[0].mxu0
    %v4544 = vadd.f32 %v1124, %v4543
    %v4545 = vpop.f32.mrb[0].mxu0
    %4546 = vdwg.mxu0
    %4547 = vmatprep.subr.mxu0 0.0
    %4548 = vmatpush1.msra.mxu0 %v1110
    %4549 = vmatprep.subr.mxu0 0.0
    %4550 = vmatpush1.msra.mxu0 %v1111
    %4551 = vmatprep.subr.mxu0 0.0
    %4552 = vmatpush1.msra.mxu0 %v1112
    %4553 = vmatprep.subr.mxu0 0.0
    %4554 = vmatpush1.msra.mxu0 %v1113
    %4555 = vmatprep.subr.mxu0 0.0
    %4556 = vmatpush1.msra.mxu0 0.0
    %4557 = vmatprep.subr.mxu0 0.0
    %4558 = vmatpush1.msra.mxu0 0.0
    %4559 = vmatprep.subr.mxu0 0.0
    %4560 = vmatpush1.msra.mxu0 0.0
    %4561 = vmatprep.subr.mxu0 0.0
    %4562 = vmatpush1.msra.mxu0 0.0
    %4563 = vmatprep.subr.mxu0 0.0
    %4564 = vmatpush1.msra.mxu0 0.0
    %4565 = vmatprep.subr.mxu0 0.0
    %4566 = vmatpush1.msra.mxu0 0.0
    %4567 = vmatprep.subr.mxu0 0.0
    %4568 = vmatpush1.msra.mxu0 0.0
    %4569 = vmatprep.subr.mxu0 0.0
    %4570 = vmatpush1.msra.mxu0 0.0
    %4571 = vmatprep.subr.mxu0 0.0
    %4572 = vmatpush1.msra.mxu0 0.0
    %4573 = vmatprep.subr.mxu0 0.0
    %4574 = vmatpush1.msra.mxu0 0.0
    %4575 = vmatprep.subr.mxu0 0.0
    %4576 = vmatpush1.msra.mxu0 0.0
    %4577 = vmatprep.subr.mxu0 0.0
    %4578 = vmatpush1.msra.mxu0 0.0
    %4579 = vmatprep.subr.mxu0 0.0
    %4580 = vmatpush1.msra.mxu0 0.0
    %4581 = vmatprep.subr.mxu0 0.0
    %4582 = vmatpush1.msra.mxu0 0.0
    %4583 = vmatprep.subr.mxu0 0.0
    %4584 = vmatpush1.msra.mxu0 0.0
    %4585 = vmatprep.subr.mxu0 0.0
    %4586 = vmatpush1.msra.mxu0 0.0
    %4587 = vmatprep.subr.mxu0 0.0
    %4588 = vmatpush1.msra.mxu0 0.0
    %4589 = vmatprep.subr.mxu0 0.0
    %4590 = vmatpush1.msra.mxu0 0.0
    %4591 = vmatprep.subr.mxu0 0.0
    %4592 = vmatpush1.msra.mxu0 0.0
    %4593 = vmatprep.subr.mxu0 0.0
    %4594 = vmatpush1.msra.mxu0 0.0
    %4595 = vmatprep.subr.mxu0 0.0
    %4596 = vmatpush1.msra.mxu0 0.0
    %4597 = vmatprep.subr.mxu0 0.0
    %4598 = vmatpush1.msra.mxu0 0.0
    %4599 = vmatprep.subr.mxu0 0.0
    %4600 = vmatpush1.msra.mxu0 0.0
    %4601 = vmatprep.subr.mxu0 0.0
    %4602 = vmatpush1.msra.mxu0 0.0
    %4603 = vmatprep.subr.mxu0 0.0
    %4604 = vmatpush1.msra.mxu0 0.0
    %4605 = vmatprep.subr.mxu0 0.0
    %4606 = vmatpush1.msra.mxu0 0.0
    %4607 = vmatprep.subr.mxu0 0.0
    %4608 = vmatpush1.msra.mxu0 0.0
    %4609 = vmatprep.subr.mxu0 0.0
    %4610 = vmatpush1.msra.mxu0 0.0
    %4611 = vmatprep.mubr.f32.mxu0 0.0
    %4612 = vmatmul.mubr.f32.gmra.mrb[0].mxu0 %v4475
    %v4613 = vpop.f32.mrb[0].mxu0
    %v4614 = vadd.f32 %v1126, %v4613
    %v4615 = vpop.f32.mrb[0].mxu0
    %4616 = vdwg.mxu0
    %4617 = vmatprep.subr.mxu0 0.0
    %4618 = vmatpush1.msra.mxu0 %v1115
    %4619 = vmatprep.subr.mxu0 0.0
    %4620 = vmatpush1.msra.mxu0 %v1116
    %4621 = vmatprep.subr.mxu0 0.0
    %4622 = vmatpush1.msra.mxu0 %v1117
    %4623 = vmatprep.subr.mxu0 0.0
    %4624 = vmatpush1.msra.mxu0 %v1118
    %4625 = vmatprep.subr.mxu0 0.0
    %4626 = vmatpush1.msra.mxu0 0.0
    %4627 = vmatprep.subr.mxu0 0.0
    %4628 = vmatpush1.msra.mxu0 0.0
    %4629 = vmatprep.subr.mxu0 0.0
    %4630 = vmatpush1.msra.mxu0 0.0
    %4631 = vmatprep.subr.mxu0 0.0
    %4632 = vmatpush1.msra.mxu0 0.0
    %4633 = vmatprep.subr.mxu0 0.0
    %4634 = vmatpush1.msra.mxu0 0.0
    %4635 = vmatprep.subr.mxu0 0.0
    %4636 = vmatpush1.msra.mxu0 0.0
    %4637 = vmatprep.subr.mxu0 0.0
    %4638 = vmatpush1.msra.mxu0 0.0
    %4639 = vmatprep.subr.mxu0 0.0
    %4640 = vmatpush1.msra.mxu0 0.0
    %4641 = vmatprep.subr.mxu0 0.0
    %4642 = vmatpush1.msra.mxu0 0.0
    %4643 = vmatprep.subr.mxu0 0.0
    %4644 = vmatpush1.msra.mxu0 0.0
    %4645 = vmatprep.subr.mxu0 0.0
    %4646 = vmatpush1.msra.mxu0 0.0
    %4647 = vmatprep.subr.mxu0 0.0
    %4648 = vmatpush1.msra.mxu0 0.0
    %4649 = vmatprep.subr.mxu0 0.0
    %4650 = vmatpush1.msra.mxu0 0.0
    %4651 = vmatprep.subr.mxu0 0.0
    %4652 = vmatpush1.msra.mxu0 0.0
    %4653 = vmatprep.subr.mxu0 0.0
    %4654 = vmatpush1.msra.mxu0 0.0
    %4655 = vmatprep.subr.mxu0 0.0
    %4656 = vmatpush1.msra.mxu0 0.0
    %4657 = vmatprep.subr.mxu0 0.0
    %4658 = vmatpush1.msra.mxu0 0.0
    %4659 = vmatprep.subr.mxu0 0.0
    %4660 = vmatpush1.msra.mxu0 0.0
    %4661 = vmatprep.subr.mxu0 0.0
    %4662 = vmatpush1.msra.mxu0 0.0
    %4663 = vmatprep.subr.mxu0 0.0
    %4664 = vmatpush1.msra.mxu0 0.0
    %4665 = vmatprep.subr.mxu0 0.0
    %4666 = vmatpush1.msra.mxu0 0.0
    %4667 = vmatprep.subr.mxu0 0.0
    %4668 = vmatpush1.msra.mxu0 0.0
    %4669 = vmatprep.subr.mxu0 0.0
    %4670 = vmatpush1.msra.mxu0 0.0
    %4671 = vmatprep.subr.mxu0 0.0
    %4672 = vmatpush1.msra.mxu0 0.0
    %4673 = vmatprep.subr.mxu0 0.0
    %4674 = vmatpush1.msra.mxu0 0.0
    %4675 = vmatprep.subr.mxu0 0.0
    %4676 = vmatpush1.msra.mxu0 0.0
    %4677 = vmatprep.subr.mxu0 0.0
    %4678 = vmatpush1.msra.mxu0 0.0
    %4679 = vmatprep.subr.mxu0 0.0
    %4680 = vmatpush1.msra.mxu0 0.0
    %4681 = vmatprep.mubr.f32.mxu0 0.0
    %4682 = vmatmul.mubr.f32.gmra.mrb[0].mxu0 %v4475
    %v4683 = vpop.f32.mrb[0].mxu0
    %v4684 = vadd.f32 %v1128, %v4683
    %v4685 = vpop.f32.mrb[0].mxu0
    %4686 = vdwg.mxu0
    %v4688 = vrot.slane %v4544, 5
    %v4690 = vadd.f32 %v3818, %v4688
    %v4691 = vxor.u32 %v4690, 2147483648
    %v4692 = vmul.f32 %v4691, 1.442695
    %v4693 = vpow.pop %v4692
    %v4694 = vadd.f32 %v4693, 1.0
    %v4695 = vrcp.pop %v4694
    %v4696 = vmul.f32 1.0, %v4695
    %v4698 = vrot.slane %v4614, 5
    %v4700 = vadd.f32 %v3888, %v4698
    %v4701 = vxor.u32 %v4700, 2147483648
    %v4702 = vmul.f32 %v4701, 1.442695
    %v4703 = vpow.pop %v4702
    %v4704 = vadd.f32 %v4703, 1.0
    %v4705 = vrcp.pop %v4704
    %v4706 = vmul.f32 1.0, %v4705
    %v4708 = vrot.slane %v4684, 5
    %v4710 = vmul.f32 %v4696, %v4708
    %v4711 = vadd.f32 %v3958, %v4710
    %v4712 = vtanh.pop %v4711
    %v4713 = vsub.f32 1.0, %v4706
    %v4714 = vmul.f32 %v4713, %v4712
    %v4715 = vrot.slane %v4472, 7
    %v4717 = vmul.f32 %v4706, %v4715
    %v4718 = vadd.f32 %v4714, %v4717
    %v4720 = vrot.slane %v4718, 3
    %v4721 = vsel %vm303, %v4720, 0
    %4723 = vmatprep.subr.mxu0 0.0
    %4724 = vmatpush1.msra.mxu0 %v1105
    %4725 = vmatprep.subr.mxu0 0.0
    %4726 = vmatpush1.msra.mxu0 %v1106
    %4727 = vmatprep.subr.mxu0 0.0
    %4728 = vmatpush1.msra.mxu0 %v1107
    %4729 = vmatprep.subr.mxu0 0.0
    %4730 = vmatpush1.msra.mxu0 %v1108
    %4731 = vmatprep.subr.mxu0 0.0
    %4732 = vmatpush1.msra.mxu0 0.0
    %4733 = vmatprep.subr.mxu0 0.0
    %4734 = vmatpush1.msra.mxu0 0.0
    %4735 = vmatprep.subr.mxu0 0.0
    %4736 = vmatpush1.msra.mxu0 0.0
    %4737 = vmatprep.subr.mxu0 0.0
    %4738 = vmatpush1.msra.mxu0 0.0
    %4739 = vmatprep.subr.mxu0 0.0
    %4740 = vmatpush1.msra.mxu0 0.0
    %4741 = vmatprep.subr.mxu0 0.0
    %4742 = vmatpush1.msra.mxu0 0.0
    %4743 = vmatprep.subr.mxu0 0.0
    %4744 = vmatpush1.msra.mxu0 0.0
    %4745 = vmatprep.subr.mxu0 0.0
    %4746 = vmatpush1.msra.mxu0 0.0
    %4747 = vmatprep.subr.mxu0 0.0
    %4748 = vmatpush1.msra.mxu0 0.0
    %4749 = vmatprep.subr.mxu0 0.0
    %4750 = vmatpush1.msra.mxu0 0.0
    %4751 = vmatprep.subr.mxu0 0.0
    %4752 = vmatpush1.msra.mxu0 0.0
    %4753 = vmatprep.subr.mxu0 0.0
    %4754 = vmatpush1.msra.mxu0 0.0
    %4755 = vmatprep.subr.mxu0 0.0
    %4756 = vmatpush1.msra.mxu0 0.0
    %4757 = vmatprep.subr.mxu0 0.0
    %4758 = vmatpush1.msra.mxu0 0.0
    %4759 = vmatprep.subr.mxu0 0.0
    %4760 = vmatpush1.msra.mxu0 0.0
    %4761 = vmatprep.subr.mxu0 0.0
    %4762 = vmatpush1.msra.mxu0 0.0
    %4763 = vmatprep.subr.mxu0 0.0
    %4764 = vmatpush1.msra.mxu0 0.0
    %4765 = vmatprep.subr.mxu0 0.0
    %4766 = vmatpush1.msra.mxu0 0.0
    %4767 = vmatprep.subr.mxu0 0.0
    %4768 = vmatpush1.msra.mxu0 0.0
    %4769 = vmatprep.subr.mxu0 0.0
    %4770 = vmatpush1.msra.mxu0 0.0
    %4771 = vmatprep.subr.mxu0 0.0
    %4772 = vmatpush1.msra.mxu0 0.0
    %4773 = vmatprep.subr.mxu0 0.0
    %4774 = vmatpush1.msra.mxu0 0.0
    %4775 = vmatprep.subr.mxu0 0.0
    %4776 = vmatpush1.msra.mxu0 0.0
    %4777 = vmatprep.subr.mxu0 0.0
    %4778 = vmatpush1.msra.mxu0 0.0
    %4779 = vmatprep.subr.mxu0 0.0
    %4780 = vmatpush1.msra.mxu0 0.0
    %4781 = vmatprep.subr.mxu0 0.0
    %4782 = vmatpush1.msra.mxu0 0.0
    %4783 = vmatprep.subr.mxu0 0.0
    %4784 = vmatpush1.msra.mxu0 0.0
    %4785 = vmatprep.subr.mxu0 0.0
    %4786 = vmatpush1.msra.mxu0 0.0
    %4787 = vmatprep.mubr.f32.mxu0 0.0
    %4788 = vmatmul.mubr.f32.gmra.mrb[0].mxu0 %v4721
    %v4789 = vpop.f32.mrb[0].mxu0
    %v4790 = vadd.f32 %v1124, %v4789
    %v4791 = vpop.f32.mrb[0].mxu0
    %4792 = vdwg.mxu0
    %4793 = vmatprep.subr.mxu0 0.0
    %4794 = vmatpush1.msra.mxu0 %v1110
    %4795 = vmatprep.subr.mxu0 0.0
    %4796 = vmatpush1.msra.mxu0 %v1111
    %4797 = vmatprep.subr.mxu0 0.0
    %4798 = vmatpush1.msra.mxu0 %v1112
    %4799 = vmatprep.subr.mxu0 0.0
    %4800 = vmatpush1.msra.mxu0 %v1113
    %4801 = vmatprep.subr.mxu0 0.0
    %4802 = vmatpush1.msra.mxu0 0.0
    %4803 = vmatprep.subr.mxu0 0.0
    %4804 = vmatpush1.msra.mxu0 0.0
    %4805 = vmatprep.subr.mxu0 0.0
    %4806 = vmatpush1.msra.mxu0 0.0
    %4807 = vmatprep.subr.mxu0 0.0
    %4808 = vmatpush1.msra.mxu0 0.0
    %4809 = vmatprep.subr.mxu0 0.0
    %4810 = vmatpush1.msra.mxu0 0.0
    %4811 = vmatprep.subr.mxu0 0.0
    %4812 = vmatpush1.msra.mxu0 0.0
    %4813 = vmatprep.subr.mxu0 0.0
    %4814 = vmatpush1.msra.mxu0 0.0
    %4815 = vmatprep.subr.mxu0 0.0
    %4816 = vmatpush1.msra.mxu0 0.0
    %4817 = vmatprep.subr.mxu0 0.0
    %4818 = vmatpush1.msra.mxu0 0.0
    %4819 = vmatprep.subr.mxu0 0.0
    %4820 = vmatpush1.msra.mxu0 0.0
    %4821 = vmatprep.subr.mxu0 0.0
    %4822 = vmatpush1.msra.mxu0 0.0
    %4823 = vmatprep.subr.mxu0 0.0
    %4824 = vmatpush1.msra.mxu0 0.0
    %4825 = vmatprep.subr.mxu0 0.0
    %4826 = vmatpush1.msra.mxu0 0.0
    %4827 = vmatprep.subr.mxu0 0.0
    %4828 = vmatpush1.msra.mxu0 0.0
    %4829 = vmatprep.subr.mxu0 0.0
    %4830 = vmatpush1.msra.mxu0 0.0
    %4831 = vmatprep.subr.mxu0 0.0
    %4832 = vmatpush1.msra.mxu0 0.0
    %4833 = vmatprep.subr.mxu0 0.0
    %4834 = vmatpush1.msra.mxu0 0.0
    %4835 = vmatprep.subr.mxu0 0.0
    %4836 = vmatpush1.msra.mxu0 0.0
    %4837 = vmatprep.subr.mxu0 0.0
    %4838 = vmatpush1.msra.mxu0 0.0
    %4839 = vmatprep.subr.mxu0 0.0
    %4840 = vmatpush1.msra.mxu0 0.0
    %4841 = vmatprep.subr.mxu0 0.0
    %4842 = vmatpush1.msra.mxu0 0.0
    %4843 = vmatprep.subr.mxu0 0.0
    %4844 = vmatpush1.msra.mxu0 0.0
    %4845 = vmatprep.subr.mxu0 0.0
    %4846 = vmatpush1.msra.mxu0 0.0
    %4847 = vmatprep.subr.mxu0 0.0
    %4848 = vmatpush1.msra.mxu0 0.0
    %4849 = vmatprep.subr.mxu0 0.0
    %4850 = vmatpush1.msra.mxu0 0.0
    %4851 = vmatprep.subr.mxu0 0.0
    %4852 = vmatpush1.msra.mxu0 0.0
    %4853 = vmatprep.subr.mxu0 0.0
    %4854 = vmatpush1.msra.mxu0 0.0
    %4855 = vmatprep.subr.mxu0 0.0
    %4856 = vmatpush1.msra.mxu0 0.0
    %4857 = vmatprep.mubr.f32.mxu0 0.0
    %4858 = vmatmul.mubr.f32.gmra.mrb[0].mxu0 %v4721
    %v4859 = vpop.f32.mrb[0].mxu0
    %v4860 = vadd.f32 %v1126, %v4859
    %v4861 = vpop.f32.mrb[0].mxu0
    %4862 = vdwg.mxu0
    %4863 = vmatprep.subr.mxu0 0.0
    %4864 = vmatpush1.msra.mxu0 %v1115
    %4865 = vmatprep.subr.mxu0 0.0
    %4866 = vmatpush1.msra.mxu0 %v1116
    %4867 = vmatprep.subr.mxu0 0.0
    %4868 = vmatpush1.msra.mxu0 %v1117
    %4869 = vmatprep.subr.mxu0 0.0
    %4870 = vmatpush1.msra.mxu0 %v1118
    %4871 = vmatprep.subr.mxu0 0.0
    %4872 = vmatpush1.msra.mxu0 0.0
    %4873 = vmatprep.subr.mxu0 0.0
    %4874 = vmatpush1.msra.mxu0 0.0
    %4875 = vmatprep.subr.mxu0 0.0
    %4876 = vmatpush1.msra.mxu0 0.0
    %4877 = vmatprep.subr.mxu0 0.0
    %4878 = vmatpush1.msra.mxu0 0.0
    %4879 = vmatprep.subr.mxu0 0.0
    %4880 = vmatpush1.msra.mxu0 0.0
    %4881 = vmatprep.subr.mxu0 0.0
    %4882 = vmatpush1.msra.mxu0 0.0
    %4883 = vmatprep.subr.mxu0 0.0
    %4884 = vmatpush1.msra.mxu0 0.0
    %4885 = vmatprep.subr.mxu0 0.0
    %4886 = vmatpush1.msra.mxu0 0.0
    %4887 = vmatprep.subr.mxu0 0.0
    %4888 = vmatpush1.msra.mxu0 0.0
    %4889 = vmatprep.subr.mxu0 0.0
    %4890 = vmatpush1.msra.mxu0 0.0
    %4891 = vmatprep.subr.mxu0 0.0
    %4892 = vmatpush1.msra.mxu0 0.0
    %4893 = vmatprep.subr.mxu0 0.0
    %4894 = vmatpush1.msra.mxu0 0.0
    %4895 = vmatprep.subr.mxu0 0.0
    %4896 = vmatpush1.msra.mxu0 0.0
    %4897 = vmatprep.subr.mxu0 0.0
    %4898 = vmatpush1.msra.mxu0 0.0
    %4899 = vmatprep.subr.mxu0 0.0
    %4900 = vmatpush1.msra.mxu0 0.0
    %4901 = vmatprep.subr.mxu0 0.0
    %4902 = vmatpush1.msra.mxu0 0.0
    %4903 = vmatprep.subr.mxu0 0.0
    %4904 = vmatpush1.msra.mxu0 0.0
    %4905 = vmatprep.subr.mxu0 0.0
    %4906 = vmatpush1.msra.mxu0 0.0
    %4907 = vmatprep.subr.mxu0 0.0
    %4908 = vmatpush1.msra.mxu0 0.0
    %4909 = vmatprep.subr.mxu0 0.0
    %4910 = vmatpush1.msra.mxu0 0.0
    %4911 = vmatprep.subr.mxu0 0.0
    %4912 = vmatpush1.msra.mxu0 0.0
    %4913 = vmatprep.subr.mxu0 0.0
    %4914 = vmatpush1.msra.mxu0 0.0
    %4915 = vmatprep.subr.mxu0 0.0
    %4916 = vmatpush1.msra.mxu0 0.0
    %4917 = vmatprep.subr.mxu0 0.0
    %4918 = vmatpush1.msra.mxu0 0.0
    %4919 = vmatprep.subr.mxu0 0.0
    %4920 = vmatpush1.msra.mxu0 0.0
    %4921 = vmatprep.subr.mxu0 0.0
    %4922 = vmatpush1.msra.mxu0 0.0
    %4923 = vmatprep.subr.mxu0 0.0
    %4924 = vmatpush1.msra.mxu0 0.0
    %4925 = vmatprep.subr.mxu0 0.0
    %4926 = vmatpush1.msra.mxu0 0.0
    %4927 = vmatprep.mubr.f32.mxu0 0.0
    %4928 = vmatmul.mubr.f32.gmra.mrb[0].mxu0 %v4721
    %v4929 = vpop.f32.mrb[0].mxu0
    %v4930 = vadd.f32 %v1128, %v4929
    %v4931 = vpop.f32.mrb[0].mxu0
    %4932 = vdwg.mxu0
    %v4934 = vrot.slane %v4790, 4
    %v4936 = vadd.f32 %v3818, %v4934
    %v4937 = vxor.u32 %v4936, 2147483648
    %v4938 = vmul.f32 %v4937, 1.442695
    %v4939 = vpow.pop %v4938
    %v4940 = vadd.f32 %v4939, 1.0
    %v4941 = vrcp.pop %v4940
    %v4942 = vmul.f32 1.0, %v4941
    %v4944 = vrot.slane %v4860, 4
    %v4946 = vadd.f32 %v3888, %v4944
    %v4947 = vxor.u32 %v4946, 2147483648
    %v4948 = vmul.f32 %v4947, 1.442695
    %v4949 = vpow.pop %v4948
    %v4950 = vadd.f32 %v4949, 1.0
    %v4951 = vrcp.pop %v4950
    %v4952 = vmul.f32 1.0, %v4951
    %v4954 = vrot.slane %v4930, 4
    %v4956 = vmul.f32 %v4942, %v4954
    %v4957 = vadd.f32 %v3958, %v4956
    %v4958 = vtanh.pop %v4957
    %v4959 = vsub.f32 1.0, %v4952
    %v4960 = vmul.f32 %v4959, %v4958
    %v4961 = vrot.slane %v4718, 7
    %v4963 = vmul.f32 %v4952, %v4961
    %v4964 = vadd.f32 %v4960, %v4963
    %v4966 = vrot.slane %v4964, 4
    %v4967 = vsel %vm303, %v4966, 0
    %4969 = vmatprep.subr.mxu0 0.0
    %4970 = vmatpush1.msra.mxu0 %v1105
    %4971 = vmatprep.subr.mxu0 0.0
    %4972 = vmatpush1.msra.mxu0 %v1106
    %4973 = vmatprep.subr.mxu0 0.0
    %4974 = vmatpush1.msra.mxu0 %v1107
    %4975 = vmatprep.subr.mxu0 0.0
    %4976 = vmatpush1.msra.mxu0 %v1108
    %4977 = vmatprep.subr.mxu0 0.0
    %4978 = vmatpush1.msra.mxu0 0.0
    %4979 = vmatprep.subr.mxu0 0.0
    %4980 = vmatpush1.msra.mxu0 0.0
    %4981 = vmatprep.subr.mxu0 0.0
    %4982 = vmatpush1.msra.mxu0 0.0
    %4983 = vmatprep.subr.mxu0 0.0
    %4984 = vmatpush1.msra.mxu0 0.0
    %4985 = vmatprep.subr.mxu0 0.0
    %4986 = vmatpush1.msra.mxu0 0.0
    %4987 = vmatprep.subr.mxu0 0.0
    %4988 = vmatpush1.msra.mxu0 0.0
    %4989 = vmatprep.subr.mxu0 0.0
    %4990 = vmatpush1.msra.mxu0 0.0
    %4991 = vmatprep.subr.mxu0 0.0
    %4992 = vmatpush1.msra.mxu0 0.0
    %4993 = vmatprep.subr.mxu0 0.0
    %4994 = vmatpush1.msra.mxu0 0.0
    %4995 = vmatprep.subr.mxu0 0.0
    %4996 = vmatpush1.msra.mxu0 0.0
    %4997 = vmatprep.subr.mxu0 0.0
    %4998 = vmatpush1.msra.mxu0 0.0
    %4999 = vmatprep.subr.mxu0 0.0
    %5000 = vmatpush1.msra.mxu0 0.0
    %5001 = vmatprep.subr.mxu0 0.0
    %5002 = vmatpush1.msra.mxu0 0.0
    %5003 = vmatprep.subr.mxu0 0.0
    %5004 = vmatpush1.msra.mxu0 0.0
    %5005 = vmatprep.subr.mxu0 0.0
    %5006 = vmatpush1.msra.mxu0 0.0
    %5007 = vmatprep.subr.mxu0 0.0
    %5008 = vmatpush1.msra.mxu0 0.0
    %5009 = vmatprep.subr.mxu0 0.0
    %5010 = vmatpush1.msra.mxu0 0.0
    %5011 = vmatprep.subr.mxu0 0.0
    %5012 = vmatpush1.msra.mxu0 0.0
    %5013 = vmatprep.subr.mxu0 0.0
    %5014 = vmatpush1.msra.mxu0 0.0
    %5015 = vmatprep.subr.mxu0 0.0
    %5016 = vmatpush1.msra.mxu0 0.0
    %5017 = vmatprep.subr.mxu0 0.0
    %5018 = vmatpush1.msra.mxu0 0.0
    %5019 = vmatprep.subr.mxu0 0.0
    %5020 = vmatpush1.msra.mxu0 0.0
    %5021 = vmatprep.subr.mxu0 0.0
    %5022 = vmatpush1.msra.mxu0 0.0
    %5023 = vmatprep.subr.mxu0 0.0
    %5024 = vmatpush1.msra.mxu0 0.0
    %5025 = vmatprep.subr.mxu0 0.0
    %5026 = vmatpush1.msra.mxu0 0.0
    %5027 = vmatprep.subr.mxu0 0.0
    %5028 = vmatpush1.msra.mxu0 0.0
    %5029 = vmatprep.subr.mxu0 0.0
    %5030 = vmatpush1.msra.mxu0 0.0
    %5031 = vmatprep.subr.mxu0 0.0
    %5032 = vmatpush1.msra.mxu0 0.0
    %5033 = vmatprep.mubr.f32.mxu0 0.0
    %5034 = vmatmul.mubr.f32.gmra.mrb[0].mxu0 %v4967
    %v5035 = vpop.f32.mrb[0].mxu0
    %v5036 = vadd.f32 %v1124, %v5035
    %v5037 = vpop.f32.mrb[0].mxu0
    %5038 = vdwg.mxu0
    %5039 = vmatprep.subr.mxu0 0.0
    %5040 = vmatpush1.msra.mxu0 %v1110
    %5041 = vmatprep.subr.mxu0 0.0
    %5042 = vmatpush1.msra.mxu0 %v1111
    %5043 = vmatprep.subr.mxu0 0.0
    %5044 = vmatpush1.msra.mxu0 %v1112
    %5045 = vmatprep.subr.mxu0 0.0
    %5046 = vmatpush1.msra.mxu0 %v1113
    %5047 = vmatprep.subr.mxu0 0.0
    %5048 = vmatpush1.msra.mxu0 0.0
    %5049 = vmatprep.subr.mxu0 0.0
    %5050 = vmatpush1.msra.mxu0 0.0
    %5051 = vmatprep.subr.mxu0 0.0
    %5052 = vmatpush1.msra.mxu0 0.0
    %5053 = vmatprep.subr.mxu0 0.0
    %5054 = vmatpush1.msra.mxu0 0.0
    %5055 = vmatprep.subr.mxu0 0.0
    %5056 = vmatpush1.msra.mxu0 0.0
    %5057 = vmatprep.subr.mxu0 0.0
    %5058 = vmatpush1.msra.mxu0 0.0
    %5059 = vmatprep.subr.mxu0 0.0
    %5060 = vmatpush1.msra.mxu0 0.0
    %5061 = vmatprep.subr.mxu0 0.0
    %5062 = vmatpush1.msra.mxu0 0.0
    %5063 = vmatprep.subr.mxu0 0.0
    %5064 = vmatpush1.msra.mxu0 0.0
    %5065 = vmatprep.subr.mxu0 0.0
    %5066 = vmatpush1.msra.mxu0 0.0
    %5067 = vmatprep.subr.mxu0 0.0
    %5068 = vmatpush1.msra.mxu0 0.0
    %5069 = vmatprep.subr.mxu0 0.0
    %5070 = vmatpush1.msra.mxu0 0.0
    %5071 = vmatprep.subr.mxu0 0.0
    %5072 = vmatpush1.msra.mxu0 0.0
    %5073 = vmatprep.subr.mxu0 0.0
    %5074 = vmatpush1.msra.mxu0 0.0
    %5075 = vmatprep.subr.mxu0 0.0
    %5076 = vmatpush1.msra.mxu0 0.0
    %5077 = vmatprep.subr.mxu0 0.0
    %5078 = vmatpush1.msra.mxu0 0.0
    %5079 = vmatprep.subr.mxu0 0.0
    %5080 = vmatpush1.msra.mxu0 0.0
    %5081 = vmatprep.subr.mxu0 0.0
    %5082 = vmatpush1.msra.mxu0 0.0
    %5083 = vmatprep.subr.mxu0 0.0
    %5084 = vmatpush1.msra.mxu0 0.0
    %5085 = vmatprep.subr.mxu0 0.0
    %5086 = vmatpush1.msra.mxu0 0.0
    %5087 = vmatprep.subr.mxu0 0.0
    %5088 = vmatpush1.msra.mxu0 0.0
    %5089 = vmatprep.subr.mxu0 0.0
    %5090 = vmatpush1.msra.mxu0 0.0
    %5091 = vmatprep.subr.mxu0 0.0
    %5092 = vmatpush1.msra.mxu0 0.0
    %5093 = vmatprep.subr.mxu0 0.0
    %5094 = vmatpush1.msra.mxu0 0.0
    %5095 = vmatprep.subr.mxu0 0.0
    %5096 = vmatpush1.msra.mxu0 0.0
    %5097 = vmatprep.subr.mxu0 0.0
    %5098 = vmatpush1.msra.mxu0 0.0
    %5099 = vmatprep.subr.mxu0 0.0
    %5100 = vmatpush1.msra.mxu0 0.0
    %5101 = vmatprep.subr.mxu0 0.0
    %5102 = vmatpush1.msra.mxu0 0.0
    %5103 = vmatprep.mubr.f32.mxu0 0.0
    %5104 = vmatmul.mubr.f32.gmra.mrb[0].mxu0 %v4967
    %v5105 = vpop.f32.mrb[0].mxu0
    %v5106 = vadd.f32 %v1126, %v5105
    %v5107 = vpop.f32.mrb[0].mxu0
    %5108 = vdwg.mxu0
    %5109 = vmatprep.subr.mxu0 0.0
    %5110 = vmatpush1.msra.mxu0 %v1115
    %5111 = vmatprep.subr.mxu0 0.0
    %5112 = vmatpush1.msra.mxu0 %v1116
    %5113 = vmatprep.subr.mxu0 0.0
    %5114 = vmatpush1.msra.mxu0 %v1117
    %5115 = vmatprep.subr.mxu0 0.0
    %5116 = vmatpush1.msra.mxu0 %v1118
    %5117 = vmatprep.subr.mxu0 0.0
    %5118 = vmatpush1.msra.mxu0 0.0
    %5119 = vmatprep.subr.mxu0 0.0
    %5120 = vmatpush1.msra.mxu0 0.0
    %5121 = vmatprep.subr.mxu0 0.0
    %5122 = vmatpush1.msra.mxu0 0.0
    %5123 = vmatprep.subr.mxu0 0.0
    %5124 = vmatpush1.msra.mxu0 0.0
    %5125 = vmatprep.subr.mxu0 0.0
    %5126 = vmatpush1.msra.mxu0 0.0
    %5127 = vmatprep.subr.mxu0 0.0
    %5128 = vmatpush1.msra.mxu0 0.0
    %5129 = vmatprep.subr.mxu0 0.0
    %5130 = vmatpush1.msra.mxu0 0.0
    %5131 = vmatprep.subr.mxu0 0.0
    %5132 = vmatpush1.msra.mxu0 0.0
    %5133 = vmatprep.subr.mxu0 0.0
    %5134 = vmatpush1.msra.mxu0 0.0
    %5135 = vmatprep.subr.mxu0 0.0
    %5136 = vmatpush1.msra.mxu0 0.0
    %5137 = vmatprep.subr.mxu0 0.0
    %5138 = vmatpush1.msra.mxu0 0.0
    %5139 = vmatprep.subr.mxu0 0.0
    %5140 = vmatpush1.msra.mxu0 0.0
    %5141 = vmatprep.subr.mxu0 0.0
    %5142 = vmatpush1.msra.mxu0 0.0
    %5143 = vmatprep.subr.mxu0 0.0
    %5144 = vmatpush1.msra.mxu0 0.0
    %5145 = vmatprep.subr.mxu0 0.0
    %5146 = vmatpush1.msra.mxu0 0.0
    %5147 = vmatprep.subr.mxu0 0.0
    %5148 = vmatpush1.msra.mxu0 0.0
    %5149 = vmatprep.subr.mxu0 0.0
    %5150 = vmatpush1.msra.mxu0 0.0
    %5151 = vmatprep.subr.mxu0 0.0
    %5152 = vmatpush1.msra.mxu0 0.0
    %5153 = vmatprep.subr.mxu0 0.0
    %5154 = vmatpush1.msra.mxu0 0.0
    %5155 = vmatprep.subr.mxu0 0.0
    %5156 = vmatpush1.msra.mxu0 0.0
    %5157 = vmatprep.subr.mxu0 0.0
    %5158 = vmatpush1.msra.mxu0 0.0
    %5159 = vmatprep.subr.mxu0 0.0
    %5160 = vmatpush1.msra.mxu0 0.0
    %5161 = vmatprep.subr.mxu0 0.0
    %5162 = vmatpush1.msra.mxu0 0.0
    %5163 = vmatprep.subr.mxu0 0.0
    %5164 = vmatpush1.msra.mxu0 0.0
    %5165 = vmatprep.subr.mxu0 0.0
    %5166 = vmatpush1.msra.mxu0 0.0
    %5167 = vmatprep.subr.mxu0 0.0
    %5168 = vmatpush1.msra.mxu0 0.0
    %5169 = vmatprep.subr.mxu0 0.0
    %5170 = vmatpush1.msra.mxu0 0.0
    %5171 = vmatprep.subr.mxu0 0.0
    %5172 = vmatpush1.msra.mxu0 0.0
    %5173 = vmatprep.mubr.f32.mxu0 0.0
    %5174 = vmatmul.mubr.f32.gmra.mrb[0].mxu0 %v4967
    %v5175 = vpop.f32.mrb[0].mxu0
    %v5176 = vadd.f32 %v1128, %v5175
    %v5177 = vpop.f32.mrb[0].mxu0
    %5178 = vdwg.mxu0
    %v5180 = vrot.slane %v5036, 3
    %v5182 = vadd.f32 %v3818, %v5180
    %v5183 = vxor.u32 %v5182, 2147483648
    %v5184 = vmul.f32 %v5183, 1.442695
    %v5185 = vpow.pop %v5184
    %v5186 = vadd.f32 %v5185, 1.0
    %v5187 = vrcp.pop %v5186
    %v5188 = vmul.f32 1.0, %v5187
    %v5190 = vrot.slane %v5106, 3
    %v5192 = vadd.f32 %v3888, %v5190
    %v5193 = vxor.u32 %v5192, 2147483648
    %v5194 = vmul.f32 %v5193, 1.442695
    %v5195 = vpow.pop %v5194
    %v5196 = vadd.f32 %v5195, 1.0
    %v5197 = vrcp.pop %v5196
    %v5198 = vmul.f32 1.0, %v5197
    %v5200 = vrot.slane %v5176, 3
    %v5202 = vmul.f32 %v5188, %v5200
    %v5203 = vadd.f32 %v3958, %v5202
    %v5204 = vtanh.pop %v5203
    %v5205 = vsub.f32 1.0, %v5198
    %v5206 = vmul.f32 %v5205, %v5204
    %v5207 = vrot.slane %v4964, 7
    %v5209 = vmul.f32 %v5198, %v5207
    %v5210 = vadd.f32 %v5206, %v5209
    %v5212 = vrot.slane %v5210, 5
    %v5213 = vsel %vm303, %v5212, 0
    %5215 = vmatprep.subr.mxu0 0.0
    %5216 = vmatpush1.msra.mxu0 %v1129
    %5217 = vmatprep.subr.mxu0 0.0
    %5218 = vmatpush1.msra.mxu0 %v1130
    %5219 = vmatprep.subr.mxu0 0.0
    %5220 = vmatpush1.msra.mxu0 %v1131
    %5221 = vmatprep.subr.mxu0 0.0
    %5222 = vmatpush1.msra.mxu0 %v1132
    %5223 = vmatprep.subr.mxu0 0.0
    %5224 = vmatpush1.msra.mxu0 0.0
    %5225 = vmatprep.subr.mxu0 0.0
    %5226 = vmatpush1.msra.mxu0 0.0
    %5227 = vmatprep.subr.mxu0 0.0
    %5228 = vmatpush1.msra.mxu0 0.0
    %5229 = vmatprep.subr.mxu0 0.0
    %5230 = vmatpush1.msra.mxu0 0.0
    %5231 = vmatprep.subr.mxu0 0.0
    %5232 = vmatpush1.msra.mxu0 0.0
    %5233 = vmatprep.subr.mxu0 0.0
    %5234 = vmatpush1.msra.mxu0 0.0
    %5235 = vmatprep.subr.mxu0 0.0
    %5236 = vmatpush1.msra.mxu0 0.0
    %5237 = vmatprep.subr.mxu0 0.0
    %5238 = vmatpush1.msra.mxu0 0.0
    %5239 = vmatprep.subr.mxu0 0.0
    %5240 = vmatpush1.msra.mxu0 0.0
    %5241 = vmatprep.subr.mxu0 0.0
    %5242 = vmatpush1.msra.mxu0 0.0
    %5243 = vmatprep.subr.mxu0 0.0
    %5244 = vmatpush1.msra.mxu0 0.0
    %5245 = vmatprep.subr.mxu0 0.0
    %5246 = vmatpush1.msra.mxu0 0.0
    %5247 = vmatprep.subr.mxu0 0.0
    %5248 = vmatpush1.msra.mxu0 0.0
    %5249 = vmatprep.subr.mxu0 0.0
    %5250 = vmatpush1.msra.mxu0 0.0
    %5251 = vmatprep.subr.mxu0 0.0
    %5252 = vmatpush1.msra.mxu0 0.0
    %5253 = vmatprep.subr.mxu0 0.0
    %5254 = vmatpush1.msra.mxu0 0.0
    %5255 = vmatprep.subr.mxu0 0.0
    %5256 = vmatpush1.msra.mxu0 0.0
    %5257 = vmatprep.subr.mxu0 0.0
    %5258 = vmatpush1.msra.mxu0 0.0
    %5259 = vmatprep.subr.mxu0 0.0
    %5260 = vmatpush1.msra.mxu0 0.0
    %5261 = vmatprep.subr.mxu0 0.0
    %5262 = vmatpush1.msra.mxu0 0.0
    %5263 = vmatprep.subr.mxu0 0.0
    %5264 = vmatpush1.msra.mxu0 0.0
    %5265 = vmatprep.subr.mxu0 0.0
    %5266 = vmatpush1.msra.mxu0 0.0
    %5267 = vmatprep.subr.mxu0 0.0
    %5268 = vmatpush1.msra.mxu0 0.0
    %5269 = vmatprep.subr.mxu0 0.0
    %5270 = vmatpush1.msra.mxu0 0.0
    %5271 = vmatprep.subr.mxu0 0.0
    %5272 = vmatpush1.msra.mxu0 0.0
    %5273 = vmatprep.subr.mxu0 0.0
    %5274 = vmatpush1.msra.mxu0 0.0
    %5275 = vmatprep.subr.mxu0 0.0
    %5276 = vmatpush1.msra.mxu0 0.0
    %5277 = vmatprep.subr.mxu0 0.0
    %5278 = vmatpush1.msra.mxu0 0.0
    %5279 = vmatprep.mubr.f32.mxu0 0.0
    %5280 = vmatmul.mubr.f32.gmra.mrb[0].mxu0 %v5213
    %v5281 = vpop.f32.mrb[0].mxu0
    %v5282 = vadd.f32 %v1133, %v5281
    %v5283 = vpop.f32.mrb[0].mxu0
    %5284 = vdwg.mxu0
    %v5285 = vmax.f32 %v5282, 0.0
    %s5286 = scalar_lea.vmem [#allocation26], 1
    %5287 = vst.msk [vmem:[%s5286] sm:$0x1] %vm1569, %v5285
    // Predicated region
    $region170: #{tpu_custom_call.1} parent=1 // pred_check
      _
    $region171: #{tpu_custom_call.1} parent=1 // pred_check_branch
      %5289 = sbr.rel (0) target = $region173
    $region172: #{tpu_custom_call.1} parent=1 // pred_region
      %s5291 = ssub.s32 32, 32
      %5292 = vsyncadd [#allocation5], %s5291
      %s5293 = sshll.u32 [#allocation26], 4
      %s5294 = int_to_ptr.vmem [resolvable:$true] %s5293
      %5299 = dma.vmem_to_hbm [thread:$0]  %s5294, 32, %s57, [#allocation5], 16, 16, 1
    $region173: #{tpu_custom_call.1} parent=1 // pred_fallthru
      _
    // Predicated region
    $region174: #{tpu_custom_call.1} parent=1 // pred_check
      _
    $region175: #{tpu_custom_call.1} parent=1 // pred_check_branch
      %5301 = sbr.rel (0) target = $region177
    $region176: #{tpu_custom_call.1} parent=1 // pred_region
      %s5303 = ssub.s32 32, 32
      %5304 = vsyncadd [#allocation28], %s5303
      %s5305 = sshll.u32 [#allocation27], 4
      %s5306 = int_to_ptr.vmem [resolvable:$true] %s5305
      %5311 = dma.vmem_to_hbm [thread:$0]  %s5306, 32, %s59, [#allocation28], 16, 16, 1
    $region177: #{tpu_custom_call.1} parent=1 // pred_fallthru
      _
    // Predicated region
    $region178: #{tpu_custom_call.1} parent=1 // pred_check
      _
    $region179: #{tpu_custom_call.1} parent=1 // pred_check_branch
      %5313 = sbr.rel (0) target = $region181
    $region180: #{tpu_custom_call.1} parent=1 // pred_region
      %5314 = dma.done [#allocation5], 32
    $region181: #{tpu_custom_call.1} parent=1 // pred_fallthru
      _
    // Predicated region
    $region182: #{tpu_custom_call.1} parent=1 // pred_check
      _
    $region183: #{tpu_custom_call.1} parent=1 // pred_check_branch
      %5316 = sbr.rel (0) target = $region185
    $region184: #{tpu_custom_call.1} parent=1 // pred_region
      %5317 = dma.done [#allocation28], 32
    $region185: #{tpu_custom_call.1} parent=1 // pred_fallthru
      _
    %5318 = vsyncpa [#allocation4], 1
    %5319 = vsyncpa [#allocation7], 1
    %5320 = vsyncpa [#allocation10], 1
    %5321 = vsyncpa [#allocation13], 1
    %5322 = vsyncpa [#allocation16], 1
    %5323 = vsyncpa [#allocation19], 1
    %5324 = vsyncpa [#allocation22], 1
    %5325 = vsyncpa [#allocation25], 1
    %5326 = vsyncpa [#allocation5], 1
    %5327 = vsyncpa [#allocation28], 1

</llo_original>
